<compile_context>
chip_gen: v6e
topology: v6e:2x2x1
jax: 0.10.0
libtpu: 0.0.40
codegen_flags: <defaults>
</compile_context>

<pallas_src>
import numpy as np
import jax
import jax.numpy as jnp
from jax.experimental import pallas as pl
from jax.experimental.pallas import tpu as pltpu

SELU_ALPHA = 1.6732632423543772
SELU_SCALE = 1.0507009873554805


def _selu(y):
    neg = SELU_ALPHA * (jnp.exp(jnp.minimum(y, 0.0)) - 1.0)
    return SELU_SCALE * jnp.where(y > 0, y, neg)


# ----------------------------- Pallas kernels -----------------------------
def conv_selu_pool_kernel(p_ref, w_ref, b_ref, o_ref):
    """Per-image: (4*P, 9*Cin) @ (9*Cin, Cout) + bias -> SELU -> fused 2x2 max-pool.

    Patch rows arrive ordered (dy, dx, h', w'), so pooling is an elementwise max over the
    four contiguous row blocks of size P (sublane-aligned static slices, pure VPU)."""
    P = o_ref.shape[0]
    y = jnp.dot(p_ref[...], w_ref[...], preferred_element_type=jnp.float32) + b_ref[...]
    y = _selu(y)
    pooled = jnp.maximum(jnp.maximum(y[0 * P:1 * P], y[1 * P:2 * P]),
                         jnp.maximum(y[2 * P:3 * P], y[3 * P:4 * P]))
    o_ref[...] = pooled.astype(o_ref.dtype)


def fc_head_kernel(x_ref, w1_ref, b1_ref, w2_ref, b2_ref, o_ref):
    """Fused fc1 (+bias, SELU) and fc2 (+bias).  bf16 operands, f32 accumulation."""
    x = x_ref[...].astype(jnp.bfloat16)
    h = jnp.dot(x, w1_ref[...], preferred_element_type=jnp.float32) + b1_ref[...]
    h = _selu(h).astype(jnp.bfloat16)
    y = jnp.dot(h, w2_ref[...], preferred_element_type=jnp.float32) + b2_ref[...]
    o_ref[...] = y.astype(o_ref.dtype)


# ----------------------------- Pallas wrappers -----------------------------
def conv3x3_selu_pool(x_nhwc, w_hwio, bias):
    """3x3 / stride 1 / pad 1 conv + SELU + 2x2 max-pool, one Pallas grid step per image."""
    N, H, W, C = x_nhwc.shape
    Cout = w_hwio.shape[-1]
    Hp, Wp = H // 2, W // 2
    P = Hp * Wp                      # pooled pixels per image (multiple of 8 for 32x32/16x16)
    K = 9 * C

    # im2col (plain-JAX glue).  K ordered (kh, kw, cin) to match w_hwio.reshape(9*C, Cout).
    xp = jnp.pad(x_nhwc, ((0, 0), (1, 1), (1, 1), (0, 0)))
    cols = [xp[:, dh:dh + H, dw:dw + W, :] for dh in range(3) for dw in range(3)]
    patches = jnp.stack(cols, axis=3).reshape(N, Hp, 2, Wp, 2, K)
    # Row order (n, dy, dx, h', w'): the 4 pool quadrants become contiguous row blocks.
    patches = patches.transpose(0, 2, 4, 1, 3, 5).reshape(N * 4 * P, K)
    wmat = w_hwio.reshape(K, Cout)
    b2 = bias.reshape(1, Cout)

    # TODO(synk): Cout=32/64 (< 128 lanes) means masked partial stores on the output; padding the
    # lane dim is not worth the extra HBM write traffic at this problem size.
    out = pl.pallas_call(
        conv_selu_pool_kernel,
        out_shape=jax.ShapeDtypeStruct((N * P, Cout), jnp.float32),
        grid_spec=pltpu.PrefetchScalarGridSpec(
            num_scalar_prefetch=0,
            grid=(N,),
            in_specs=[pl.BlockSpec((4 * P, K), lambda i: (i, 0)),
                      pl.BlockSpec((K, Cout), lambda i: (0, 0)),
                      pl.BlockSpec((1, Cout), lambda i: (0, 0))],
            out_specs=pl.BlockSpec((P, Cout), lambda i: (i, 0))),
        compiler_params=pltpu.CompilerParams(dimension_semantics=("parallel",)),
    )(patches, wmat, b2)
    return out.reshape(N, Hp, Wp, Cout)


def fc_head(x, w1_bf16, b1, w2_bf16, b2):
    """Fused fc1+SELU+fc2 in one pallas_call; all weights resident in VMEM (~2 MiB bf16)."""
    B = x.shape[0]
    O = w2_bf16.shape[1]
    vmem = pl.BlockSpec(memory_space=pltpu.MemorySpace.VMEM)
    return pl.pallas_call(
        fc_head_kernel,
        out_shape=jax.ShapeDtypeStruct((B, O), jnp.float32),
        in_specs=[vmem, vmem, vmem, vmem, vmem],
        out_specs=vmem,
    )(x, w1_bf16, b1.reshape(1, -1), w2_bf16, b2.reshape(1, -1))


def maxpool2_nhwc(x):
    # Used only by the pure-JAX reference (the Pallas path fuses pooling into the conv kernel).
    N, H, W, C = x.shape
    return x.reshape(N, H // 2, 2, W // 2, 2, C).max(axis=(2, 4))


# ----------------------------- Model -----------------------------
def init_params(key, num_classes):
    ks = jax.random.split(key, 8)
    in_f = 64 * 8 * 8
    return {
        "conv1_w": jax.random.normal(ks[0], (3, 3, 3, 32), jnp.float32) / np.sqrt(27.0),
        "conv1_b": jax.random.normal(ks[1], (32,), jnp.float32) * 0.01,
        "conv2_w": jax.random.normal(ks[2], (3, 3, 32, 64), jnp.float32) / np.sqrt(288.0),
        "conv2_b": jax.random.normal(ks[3], (64,), jnp.float32) * 0.01,
        # Linear weights stored (in, out) == torch W^T, in bf16 for HBM/VMEM weight streaming.
        "fc1_w": (jax.random.normal(ks[4], (in_f, 256), jnp.float32)
                  / np.sqrt(in_f)).astype(jnp.bfloat16),
        "fc1_b": jax.random.normal(ks[5], (256,), jnp.float32) * 0.01,
        "fc2_w": (jax.random.normal(ks[6], (256, num_classes), jnp.float32)
                  / np.sqrt(256.0)).astype(jnp.bfloat16),
        "fc2_b": jax.random.normal(ks[7], (num_classes,), jnp.float32) * 0.01,
    }


@jax.jit
def cnn_forward(x_nchw, params):
    x = jnp.transpose(x_nchw, (0, 2, 3, 1))                       # NCHW -> NHWC
    x = conv3x3_selu_pool(x, params["conv1_w"], params["conv1_b"])   # conv1 + SELU + pool1
    x = conv3x3_selu_pool(x, params["conv2_w"], params["conv2_b"])   # conv2 + SELU + pool2
    x = jnp.transpose(x, (0, 3, 1, 2)).reshape(x.shape[0], -1)    # flatten in torch (C,H,W) order
    # TODO(synk): nn.Dropout(0.5) is the identity at inference; training-mode masking not implemented.
    return fc_head(x, params["fc1_w"], params["fc1_b"], params["fc2_w"], params["fc2_b"])


# ----------------------------- Pure-JAX reference (sanity check) -----------------------------
def _forward_ref(x_nchw, params):
    x = jnp.transpose(x_nchw, (0, 2, 3, 1))
    for w_name, b_name in (("conv1_w", "conv1_b"), ("conv2_w", "conv2_b")):
        x = jax.lax.conv_general_dilated(
            x, params[w_name], (1, 1), ((1, 1), (1, 1)),
            dimension_numbers=("NHWC", "HWIO", "NHWC"),
            precision=jax.lax.Precision.HIGHEST) + params[b_name]
        x = jax.nn.selu(x)
        x = maxpool2_nhwc(x)
    x = jnp.transpose(x, (0, 3, 1, 2)).reshape(x.shape[0], -1)
    h = jax.nn.selu(jnp.dot(x, params["fc1_w"].astype(jnp.float32),
                            precision=jax.lax.Precision.HIGHEST) + params["fc1_b"])
    return jnp.dot(h, params["fc2_w"].astype(jnp.float32),
                   precision=jax.lax.Precision.HIGHEST) + params["fc2_b"]


# ----------------------------- Main -----------------------------
if __name__ == "__main__":
    num_classes = 10
    key = jax.random.PRNGKey(0)
    k_in, k_par = jax.random.split(key)
    # fc1 expects 64*8*8 features after two /2 pools -> 32x32 RGB input (small batch of 2).
    x = jax.random.normal(k_in, (2, 3, 32, 32), jnp.float32)
    params = init_params(k_par, num_classes)

    out = jax.block_until_ready(cnn_forward(x, params))
    assert out.shape == (2, num_classes), out.shape

    ref = _forward_ref(x, params)
    # bf16 weight/activation streaming in the FC head -> loosened tolerance vs. the f32 reference.
    np.testing.assert_allclose(np.asarray(out), np.asarray(ref), rtol=2e-2, atol=2e-2)

    print("KERNEL_OK")
</pallas_src>

<mosaic_0001>
module attributes {stable_mosaic.version = 11 : i64} {
  func.func @conv_selu_pool_kernel(%arg0: i32, %arg1: memref<1024x27xf32, #tpu.memory_space<vmem>>, %arg2: memref<27x32xf32, #tpu.memory_space<vmem>>, %arg3: memref<1x32xf32, #tpu.memory_space<vmem>>, %arg4: memref<256x32xf32, #tpu.memory_space<vmem>>) attributes {dimension_semantics = [#tpu.dimension_semantics<parallel>], iteration_bounds = array<i64: 2>, scalar_prefetch = 0 : i64, scratch_operands = 0 : i64, tpu.core_type = #tpu.core_type<tc>, window_params = [{transform_indices = @transform_0, window_bounds = array<i64: 1024, 27>}, {pipeline_mode = #tpu.pipeline_mode<synchronous>, transform_indices = @transform_1, window_bounds = array<i64: 27, 32>}, {pipeline_mode = #tpu.pipeline_mode<synchronous>, transform_indices = @transform_2, window_bounds = array<i64: 1, 32>}, {transform_indices = @transform_3, window_bounds = array<i64: 256, 32>}]} {
    %c0 = arith.constant 0 : index
    %c0_0 = arith.constant 0 : index
    %0 = vector.load %arg1[%c0, %c0_0] : memref<1024x27xf32, #tpu.memory_space<vmem>>, vector<1024x27xf32>
    %c0_1 = arith.constant 0 : index
    %c0_2 = arith.constant 0 : index
    %1 = vector.load %arg2[%c0_1, %c0_2] : memref<27x32xf32, #tpu.memory_space<vmem>>, vector<27x32xf32>
    %cst = arith.constant dense<0.000000e+00> : vector<1024x32xf32>
    %2 = tpu.matmul %0, %1, %cst {dimension_numbers = #tpu.dot_dimension_numbers<[1], [0], [0], [1], [0, 0, 1, 1], [], []>} : vector<1024x27xf32>, vector<27x32xf32>, vector<1024x32xf32> -> vector<1024x32xf32>
    %c0_3 = arith.constant 0 : index
    %c0_4 = arith.constant 0 : index
    %3 = vector.load %arg3[%c0_3, %c0_4] : memref<1x32xf32, #tpu.memory_space<vmem>>, vector<1x32xf32>
    %4 = vector.broadcast %3 : vector<1x32xf32> to vector<1024x32xf32>
    %5 = arith.addf %2, %4 : vector<1024x32xf32>
    %cst_5 = arith.constant 0.000000e+00 : f32
    %6 = vector.broadcast %cst_5 : f32 to vector<1024x32xf32>
    %7 = arith.minimumf %5, %6 : vector<1024x32xf32>
    %8 = math.exp %7 : vector<1024x32xf32>
    %cst_6 = arith.constant 1.000000e+00 : f32
    %9 = vector.broadcast %cst_6 : f32 to vector<1024x32xf32>
    %10 = arith.subf %8, %9 : vector<1024x32xf32>
    %cst_7 = arith.constant 1.67326319 : f32
    %11 = vector.broadcast %cst_7 : f32 to vector<1024x32xf32>
    %12 = arith.mulf %11, %10 : vector<1024x32xf32>
    %cst_8 = arith.constant 0.000000e+00 : f32
    %13 = vector.broadcast %cst_8 : f32 to vector<1024x32xf32>
    %14 = arith.cmpf ogt, %5, %13 : vector<1024x32xf32>
    %15 = arith.select %14, %5, %12 : vector<1024x32xi1>, vector<1024x32xf32>
    %cst_9 = arith.constant 1.05070102 : f32
    %16 = vector.broadcast %cst_9 : f32 to vector<1024x32xf32>
    %17 = arith.mulf %16, %15 : vector<1024x32xf32>
    %18 = vector.extract_strided_slice %17 {offsets = [0, 0], sizes = [256, 32], strides = [1, 1]} : vector<1024x32xf32> to vector<256x32xf32>
    %19 = vector.extract_strided_slice %17 {offsets = [256, 0], sizes = [256, 32], strides = [1, 1]} : vector<1024x32xf32> to vector<256x32xf32>
    %20 = arith.maximumf %18, %19 : vector<256x32xf32>
    %21 = vector.extract_strided_slice %17 {offsets = [512, 0], sizes = [256, 32], strides = [1, 1]} : vector<1024x32xf32> to vector<256x32xf32>
    %22 = vector.extract_strided_slice %17 {offsets = [768, 0], sizes = [256, 32], strides = [1, 1]} : vector<1024x32xf32> to vector<256x32xf32>
    %23 = arith.maximumf %21, %22 : vector<256x32xf32>
    %24 = arith.maximumf %20, %23 : vector<256x32xf32>
    %c0_10 = arith.constant 0 : index
    %c0_11 = arith.constant 0 : index
    %25 = vector.load %arg4[%c0_10, %c0_11] : memref<256x32xf32, #tpu.memory_space<vmem>>, vector<256x32xf32>
    tpu.vector_store %arg4[%c0_10, %c0_11], %24 {strides = array<i32>} : memref<256x32xf32, #tpu.memory_space<vmem>>, vector<256x32xf32>,
    return
  }
  func.func @transform_0(%arg0: i32) -> (i32, i32) {
    %c0_i32 = arith.constant 0 : i32
    %c0_i32_0 = arith.constant 0 : i32
    return %arg0, %c0_i32 : i32, i32
  }
  func.func @transform_1(%arg0: i32) -> (i32, i32) {
    %c0_i32 = arith.constant 0 : i32
    %c0_i32_0 = arith.constant 0 : i32
    %c0_i32_1 = arith.constant 0 : i32
    return %c0_i32, %c0_i32_0 : i32, i32
  }
  func.func @transform_2(%arg0: i32) -> (i32, i32) {
    %c0_i32 = arith.constant 0 : i32
    %c0_i32_0 = arith.constant 0 : i32
    %c0_i32_1 = arith.constant 0 : i32
    return %c0_i32, %c0_i32_0 : i32, i32
  }
  func.func @transform_3(%arg0: i32) -> (i32, i32) {
    %c0_i32 = arith.constant 0 : i32
    %c0_i32_0 = arith.constant 0 : i32
    return %arg0, %c0_i32 : i32, i32
  }
}

module attributes {stable_mosaic.version = 11 : i64} {
  func.func @conv_selu_pool_kernel(%arg0: i32, %arg1: memref<256x288xf32, #tpu.memory_space<vmem>>, %arg2: memref<288x64xf32, #tpu.memory_space<vmem>>, %arg3: memref<1x64xf32, #tpu.memory_space<vmem>>, %arg4: memref<64x64xf32, #tpu.memory_space<vmem>>) attributes {dimension_semantics = [#tpu.dimension_semantics<parallel>], iteration_bounds = array<i64: 2>, scalar_prefetch = 0 : i64, scratch_operands = 0 : i64, tpu.core_type = #tpu.core_type<tc>, window_params = [{transform_indices = @transform_0, window_bounds = array<i64: 256, 288>}, {pipeline_mode = #tpu.pipeline_mode<synchronous>, transform_indices = @transform_1, window_bounds = array<i64: 288, 64>}, {pipeline_mode = #tpu.pipeline_mode<synchronous>, transform_indices = @transform_2, window_bounds = array<i64: 1, 64>}, {transform_indices = @transform_3, window_bounds = array<i64: 64, 64>}]} {
    %c0 = arith.constant 0 : index
    %c0_0 = arith.constant 0 : index
    %0 = vector.load %arg1[%c0, %c0_0] : memref<256x288xf32, #tpu.memory_space<vmem>>, vector<256x288xf32>
    %c0_1 = arith.constant 0 : index
    %c0_2 = arith.constant 0 : index
    %1 = vector.load %arg2[%c0_1, %c0_2] : memref<288x64xf32, #tpu.memory_space<vmem>>, vector<288x64xf32>
    %cst = arith.constant dense<0.000000e+00> : vector<256x64xf32>
    %2 = tpu.matmul %0, %1, %cst {dimension_numbers = #tpu.dot_dimension_numbers<[1], [0], [0], [1], [0, 0, 1, 1], [], []>} : vector<256x288xf32>, vector<288x64xf32>, vector<256x64xf32> -> vector<256x64xf32>
    %c0_3 = arith.constant 0 : index
    %c0_4 = arith.constant 0 : index
    %3 = vector.load %arg3[%c0_3, %c0_4] : memref<1x64xf32, #tpu.memory_space<vmem>>, vector<1x64xf32>
    %4 = vector.broadcast %3 : vector<1x64xf32> to vector<256x64xf32>
    %5 = arith.addf %2, %4 : vector<256x64xf32>
    %cst_5 = arith.constant 0.000000e+00 : f32
    %6 = vector.broadcast %cst_5 : f32 to vector<256x64xf32>
    %7 = arith.minimumf %5, %6 : vector<256x64xf32>
    %8 = math.exp %7 : vector<256x64xf32>
    %cst_6 = arith.constant 1.000000e+00 : f32
    %9 = vector.broadcast %cst_6 : f32 to vector<256x64xf32>
    %10 = arith.subf %8, %9 : vector<256x64xf32>
    %cst_7 = arith.constant 1.67326319 : f32
    %11 = vector.broadcast %cst_7 : f32 to vector<256x64xf32>
    %12 = arith.mulf %11, %10 : vector<256x64xf32>
    %cst_8 = arith.constant 0.000000e+00 : f32
    %13 = vector.broadcast %cst_8 : f32 to vector<256x64xf32>
    %14 = arith.cmpf ogt, %5, %13 : vector<256x64xf32>
    %15 = arith.select %14, %5, %12 : vector<256x64xi1>, vector<256x64xf32>
    %cst_9 = arith.constant 1.05070102 : f32
    %16 = vector.broadcast %cst_9 : f32 to vector<256x64xf32>
    %17 = arith.mulf %16, %15 : vector<256x64xf32>
    %18 = vector.extract_strided_slice %17 {offsets = [0, 0], sizes = [64, 64], strides = [1, 1]} : vector<256x64xf32> to vector<64x64xf32>
    %19 = vector.extract_strided_slice %17 {offsets = [64, 0], sizes = [64, 64], strides = [1, 1]} : vector<256x64xf32> to vector<64x64xf32>
    %20 = arith.maximumf %18, %19 : vector<64x64xf32>
    %21 = vector.extract_strided_slice %17 {offsets = [128, 0], sizes = [64, 64], strides = [1, 1]} : vector<256x64xf32> to vector<64x64xf32>
    %22 = vector.extract_strided_slice %17 {offsets = [192, 0], sizes = [64, 64], strides = [1, 1]} : vector<256x64xf32> to vector<64x64xf32>
    %23 = arith.maximumf %21, %22 : vector<64x64xf32>
    %24 = arith.maximumf %20, %23 : vector<64x64xf32>
    %c0_10 = arith.constant 0 : index
    %c0_11 = arith.constant 0 : index
    %25 = vector.load %arg4[%c0_10, %c0_11] : memref<64x64xf32, #tpu.memory_space<vmem>>, vector<64x64xf32>
    tpu.vector_store %arg4[%c0_10, %c0_11], %24 {strides = array<i32>} : memref<64x64xf32, #tpu.memory_space<vmem>>, vector<64x64xf32>,
    return
  }
  func.func @transform_0(%arg0: i32) -> (i32, i32) {
    %c0_i32 = arith.constant 0 : i32
    %c0_i32_0 = arith.constant 0 : i32
    return %arg0, %c0_i32 : i32, i32
  }
  func.func @transform_1(%arg0: i32) -> (i32, i32) {
    %c0_i32 = arith.constant 0 : i32
    %c0_i32_0 = arith.constant 0 : i32
    %c0_i32_1 = arith.constant 0 : i32
    return %c0_i32, %c0_i32_0 : i32, i32
  }
  func.func @transform_2(%arg0: i32) -> (i32, i32) {
    %c0_i32 = arith.constant 0 : i32
    %c0_i32_0 = arith.constant 0 : i32
    %c0_i32_1 = arith.constant 0 : i32
    return %c0_i32, %c0_i32_0 : i32, i32
  }
  func.func @transform_3(%arg0: i32) -> (i32, i32) {
    %c0_i32 = arith.constant 0 : i32
    %c0_i32_0 = arith.constant 0 : i32
    return %arg0, %c0_i32 : i32, i32
  }
}

module attributes {stable_mosaic.version = 11 : i64} {
  func.func @fc_head_kernel(%arg0: memref<2x4096xf32, #tpu.memory_space<vmem>>, %arg1: memref<4096x256xbf16, #tpu.memory_space<vmem>>, %arg2: memref<1x256xf32, #tpu.memory_space<vmem>>, %arg3: memref<256x10xbf16, #tpu.memory_space<vmem>>, %arg4: memref<1x10xf32, #tpu.memory_space<vmem>>, %arg5: memref<2x10xf32, #tpu.memory_space<vmem>>) attributes {dimension_semantics = [], scalar_prefetch = 0 : i64, scratch_operands = 0 : i64, tpu.core_type = #tpu.core_type<tc>} {
    %c0 = arith.constant 0 : index
    %c0_0 = arith.constant 0 : index
    %0 = vector.load %arg0[%c0, %c0_0] : memref<2x4096xf32, #tpu.memory_space<vmem>>, vector<2x4096xf32>
    %1 = arith.truncf %0 : vector<2x4096xf32> to vector<2x4096xbf16>
    %c0_1 = arith.constant 0 : index
    %c0_2 = arith.constant 0 : index
    %2 = vector.load %arg1[%c0_1, %c0_2] : memref<4096x256xbf16, #tpu.memory_space<vmem>>, vector<4096x256xbf16>
    %cst = arith.constant dense<0.000000e+00> : vector<2x256xf32>
    %3 = tpu.matmul %1, %2, %cst {dimension_numbers = #tpu.dot_dimension_numbers<[1], [0], [0], [1], [0, 0, 1, 1], [], []>} : vector<2x4096xbf16>, vector<4096x256xbf16>, vector<2x256xf32> -> vector<2x256xf32>
    %c0_3 = arith.constant 0 : index
    %c0_4 = arith.constant 0 : index
    %4 = vector.load %arg2[%c0_3, %c0_4] : memref<1x256xf32, #tpu.memory_space<vmem>>, vector<1x256xf32>
    %5 = vector.broadcast %4 : vector<1x256xf32> to vector<2x256xf32>
    %6 = arith.addf %3, %5 : vector<2x256xf32>
    %cst_5 = arith.constant 0.000000e+00 : f32
    %7 = vector.broadcast %cst_5 : f32 to vector<2x256xf32>
    %8 = arith.minimumf %6, %7 : vector<2x256xf32>
    %9 = math.exp %8 : vector<2x256xf32>
    %cst_6 = arith.constant 1.000000e+00 : f32
    %10 = vector.broadcast %cst_6 : f32 to vector<2x256xf32>
    %11 = arith.subf %9, %10 : vector<2x256xf32>
    %cst_7 = arith.constant 1.67326319 : f32
    %12 = vector.broadcast %cst_7 : f32 to vector<2x256xf32>
    %13 = arith.mulf %12, %11 : vector<2x256xf32>
    %cst_8 = arith.constant 0.000000e+00 : f32
    %14 = vector.broadcast %cst_8 : f32 to vector<2x256xf32>
    %15 = arith.cmpf ogt, %6, %14 : vector<2x256xf32>
    %16 = arith.select %15, %6, %13 : vector<2x256xi1>, vector<2x256xf32>
    %cst_9 = arith.constant 1.05070102 : f32
    %17 = vector.broadcast %cst_9 : f32 to vector<2x256xf32>
    %18 = arith.mulf %17, %16 : vector<2x256xf32>
    %19 = arith.truncf %18 : vector<2x256xf32> to vector<2x256xbf16>
    %c0_10 = arith.constant 0 : index
    %c0_11 = arith.constant 0 : index
    %20 = vector.load %arg3[%c0_10, %c0_11] : memref<256x10xbf16, #tpu.memory_space<vmem>>, vector<256x10xbf16>
    %cst_12 = arith.constant dense<0.000000e+00> : vector<2x10xf32>
    %21 = tpu.matmul %19, %20, %cst_12 {dimension_numbers = #tpu.dot_dimension_numbers<[1], [0], [0], [1], [0, 0, 1, 1], [], []>} : vector<2x256xbf16>, vector<256x10xbf16>, vector<2x10xf32> -> vector<2x10xf32>
    %c0_13 = arith.constant 0 : index
    %c0_14 = arith.constant 0 : index
    %22 = vector.load %arg4[%c0_13, %c0_14] : memref<1x10xf32, #tpu.memory_space<vmem>>, vector<1x10xf32>
    %23 = vector.broadcast %22 : vector<1x10xf32> to vector<2x10xf32>
    %24 = arith.addf %21, %23 : vector<2x10xf32>
    %c0_15 = arith.constant 0 : index
    %c0_16 = arith.constant 0 : index
    %25 = vector.load %arg5[%c0_15, %c0_16] : memref<2x10xf32, #tpu.memory_space<vmem>>, vector<2x10xf32>
    tpu.vector_store %arg5[%c0_15, %c0_16], %24 {strides = array<i32>} : memref<2x10xf32, #tpu.memory_space<vmem>>, vector<2x10xf32>,
    return
  }
}

</mosaic_0001>

<llo_original>
// kernel: cnn_forward.3
$region0: #{cnn_forward.3}
  #allocation0 [shape = 'u32[]', space=smem, size = 0x4, offset = 0x4, fixed_abs, tag = 'smem constant byte address 0x4 - core index']
  #allocation1 [shape = 'u32[144,128]{1,0:T(1,128)}', space=vmem, size = 0x12000, scoped, tag = 'internal scratch']
  %s0 = inlined_call_operand.vmem [shape: f32[2048,27], index: 0, kind: input, shape index: {}]
  %s1 = inlined_call_operand.vmem [shape: f32[27,32], index: 1, kind: input, shape index: {}]
  %s2 = inlined_call_operand.vmem [shape: f32[1,32], index: 2, kind: input, shape index: {}]
  %s3 = inlined_call_operand.vmem [shape: f32[512,32], index: 3, kind: output, shape index: {}]
  %s4 = sld [smem:[#allocation0]]
  $region45: #{cnn_forward.3} parent=0
    _
  %s6 = ssub.s32 1, %s4
  %s7 = scalar_select 0, %s6, %s4
  loop: start=0, step=1, limit=4
  $region2: #{cnn_forward.3} parent=0 // loop_pre_header
    _
  $region3: #{cnn_forward.3} parent=0 // loop_header
    %s9 = sphi 0, %s13
    %p10 = scmp.ge.s32.totalorder %s9, 4
    %s19 = sphi 0, %s21
    %s22 = sphi 0, %s19
    %s23 = sphi 0, %s22
    %s39 = sphi 0, %s23
    %s43 = sphi 0, %s43
    %s45 = sphi 0, %s43
    %s46 = sphi 0, %s45
    %s60 = sphi 0, %s46
    %s64 = sphi 0, %s64
    %s66 = sphi 0, %s64
    %s67 = sphi 0, %s66
    %s81 = sphi 0, %s67
    %s87 = sphi 0, %s89
    %s90 = sphi 0, %s87
    %s91 = sphi 0, %s90
    %s107 = sphi 0, %s91
  $region4: #{cnn_forward.3} parent=0 // loop_header_branch
    %12 = sbr.rel (%p10) target = $region8
  $region5: #{cnn_forward.3} parent=0 // loop_body
    %s14 = ssub.s32 %s9, 1
    %s15 = ssub.s32 %s9, 2
    %s16 = sadd.s32 %s9, 1
    %s17 = ssub.s32 %s9, %s16
    %p18 = scmp.eq.s32.totalorder %s17, 0
    %s20 = sadd.s32 %s19, 1
    %s21 = scalar_select %p18, %s19, %s20
    %p24 = pneg %p18
    %p25 = scmp.eq.s32.totalorder %s9, 1
    %p26 = por %p24, %p25
    %p27 = scmp.ne.s32.totalorder %s19, %s22
    %p28 = scmp.eq.s32.totalorder %s9, 0
    %p29 = por %p27, %p28
    %p30 = scmp.ne.s32.totalorder %s19, %s22
    %p31 = scmp.eq.s32.totalorder %s14, 1
    %p32 = por %p30, %p31
    %p33 = scmp.ne.s32.totalorder %s22, %s23
    %p34 = scmp.eq.s32.totalorder %s14, 0
    %p35 = por %p33, %p34
    %p36 = scmp.ne.s32.totalorder %s22, %s23
    %p37 = scmp.eq.s32.totalorder %s15, 1
    %p38 = por %p36, %p37
    %p40 = scmp.ne.s32.totalorder %s23, %s39
    %p41 = scmp.eq.s32.totalorder %s15, 0
    %p42 = por %p40, %p41
    %s44 = sadd.s32 %s43, 1
    %p47 = scmp.eq.s32.totalorder %s9, 1
    %p48 = scmp.ne.s32.totalorder %s43, %s45
    %p49 = scmp.eq.s32.totalorder %s9, 0
    %p50 = por %p48, %p49
    %p51 = scmp.ne.s32.totalorder %s43, %s45
    %p52 = scmp.eq.s32.totalorder %s14, 1
    %p53 = por %p51, %p52
    %p54 = scmp.ne.s32.totalorder %s45, %s46
    %p55 = scmp.eq.s32.totalorder %s14, 0
    %p56 = por %p54, %p55
    %p57 = scmp.ne.s32.totalorder %s45, %s46
    %p58 = scmp.eq.s32.totalorder %s15, 1
    %p59 = por %p57, %p58
    %p61 = scmp.ne.s32.totalorder %s46, %s60
    %p62 = scmp.eq.s32.totalorder %s15, 0
    %p63 = por %p61, %p62
    %s65 = sadd.s32 %s64, 1
    %p68 = scmp.eq.s32.totalorder %s9, 1
    %p69 = scmp.ne.s32.totalorder %s64, %s66
    %p70 = scmp.eq.s32.totalorder %s9, 0
    %p71 = por %p69, %p70
    %p72 = scmp.ne.s32.totalorder %s64, %s66
    %p73 = scmp.eq.s32.totalorder %s14, 1
    %p74 = por %p72, %p73
    %p75 = scmp.ne.s32.totalorder %s66, %s67
    %p76 = scmp.eq.s32.totalorder %s14, 0
    %p77 = por %p75, %p76
    %p78 = scmp.ne.s32.totalorder %s66, %s67
    %p79 = scmp.eq.s32.totalorder %s15, 1
    %p80 = por %p78, %p79
    %p82 = scmp.ne.s32.totalorder %s67, %s81
    %p83 = scmp.eq.s32.totalorder %s15, 0
    %p84 = por %p82, %p83
    %s85 = ssub.s32 %s9, %s16
    %p86 = scmp.eq.s32.totalorder %s85, 0
    %s88 = sadd.s32 %s87, 1
    %s89 = scalar_select %p86, %s87, %s88
    %p92 = pneg %p86
    %p93 = scmp.eq.s32.totalorder %s9, 1
    %p94 = por %p92, %p93
    %p95 = scmp.ne.s32.totalorder %s87, %s90
    %p96 = scmp.eq.s32.totalorder %s9, 0
    %p97 = por %p95, %p96
    %p98 = scmp.ne.s32.totalorder %s87, %s90
    %p99 = scmp.eq.s32.totalorder %s14, 1
    %p100 = por %p98, %p99
    %p101 = scmp.ne.s32.totalorder %s90, %s91
    %p102 = scmp.eq.s32.totalorder %s14, 0
    %p103 = por %p101, %p102
    %p104 = scmp.ne.s32.totalorder %s90, %s91
    %p105 = scmp.eq.s32.totalorder %s15, 1
    %p106 = por %p104, %p105
    %p108 = scmp.ne.s32.totalorder %s91, %s107
    %p109 = scmp.eq.s32.totalorder %s15, 0
    %p110 = por %p108, %p109
    %p111 = scmp.le.s32.totalorder 1, %s9
    %p112 = scmp.lt.s32.totalorder %s9, 3
    %p113 = pnand %p111, %p112
    %p114 = pneg %p113
    // Predicated region
    $region9: #{cnn_forward.3} parent=5 // pred_check
      _
    $region10: #{cnn_forward.3} parent=5 // pred_check_branch
      %116 = sbr.rel (%p113) target = $region12
    $region11: #{cnn_forward.3} parent=5 // pred_region
      %s117 = ssub.s32 %s9, 1
      // Predicated region
      $region13: #{cnn_forward.3} parent=11 // pred_check
        %p118 = pneg %p56
      $region14: #{cnn_forward.3} parent=11 // pred_check_branch
        %120 = sbr.rel (%p118) target = $region16
      $region15: #{cnn_forward.3} parent=11 // pred_region
        _
      $region16: #{cnn_forward.3} parent=11 // pred_fallthru
        _
      // Predicated region
      $region17: #{cnn_forward.3} parent=11 // pred_check
        %p121 = pneg %p77
      $region18: #{cnn_forward.3} parent=11 // pred_check_branch
        %123 = sbr.rel (%p121) target = $region20
      $region19: #{cnn_forward.3} parent=11 // pred_region
        _
      $region20: #{cnn_forward.3} parent=11 // pred_fallthru
        _
    $region12: #{cnn_forward.3} parent=5 // pred_fallthru
      _
    %p124 = scmp.lt.s32.totalorder %s9, 2
    // Predicated region
    $region21: #{cnn_forward.3} parent=5 // pred_check
      %p125 = pneg %p124
    $region22: #{cnn_forward.3} parent=5 // pred_check_branch
      %127 = sbr.rel (%p125) target = $region24
    $region23: #{cnn_forward.3} parent=5 // pred_region
      // Predicated region
      $region25: #{cnn_forward.3} parent=23 // pred_check
        %p128 = pneg %p29
      $region26: #{cnn_forward.3} parent=23 // pred_check_branch
        %130 = sbr.rel (%p128) target = $region28
      $region27: #{cnn_forward.3} parent=23 // pred_region
        %s131 = smul.u32 128, %s9
        %p132 = scmp.lt.s32.totalorder %s131, 255
        %s133 = scalar_select %p132, %s131, 255
        %s134 = smul.addr %s133, 8
        %s135 = scalar_lea.vmem %s0, %s134
        %s136 = smul.u32 128, %s9
      $region28: #{cnn_forward.3} parent=23 // pred_fallthru
        _
    $region24: #{cnn_forward.3} parent=5 // pred_fallthru
      _
    %p137 = scmp.le.s32.totalorder 1, %s9
    %p138 = scmp.lt.s32.totalorder %s9, 3
    %p139 = pnand %p137, %p138
    %p140 = pneg %p139
    // Predicated region
    $region29: #{cnn_forward.3} parent=5 // pred_check
      _
    $region30: #{cnn_forward.3} parent=5 // pred_check_branch
      %142 = sbr.rel (%p139) target = $region32
    $region31: #{cnn_forward.3} parent=5 // pred_region
      %s143 = ssub.s32 %s9, 1
      %s144 = smul.u32 128, %s14
      %p145 = scmp.lt.s32.totalorder %s144, 255
      %s146 = scalar_select %p145, %s144, 255
      %s147 = smul.addr %s146, 8
      %s148 = scalar_lea.vmem %s0, %s147
      %p149 = pneg %p35
      %p150 = pneg %p32
      %p151 = pneg %p56
      %p152 = pneg %p53
      %p153 = pneg %p77
      %p154 = pneg %p74
      %p155 = pneg %p103
      %p156 = pneg %p100
      %s157 = smul.u32 32, %s14
      %p158 = scmp.lt.s32.totalorder %s157, 63
      %s159 = scalar_select %p158, %s157, 63
      %s160 = smul.addr %s159, 8
      %s161 = scalar_lea.vmem %s3, %s160
      %s162 = smul.u32 128, %s14
      %p163 = scmp.lt.s32.totalorder %s162, 255
      %s164 = scalar_select %p163, %s162, 255
      %s165 = smul.addr %s164, 8
      %s166 = scalar_lea.vmem %s0, %s165
      %s167 = smul.u32 128, %s14
      %s168 = smul.u32 32, %s14
      %p169 = scmp.lt.s32.totalorder %s168, 63
      %s170 = scalar_select %p169, %s168, 63
      %s171 = smul.addr %s170, 8
      %s172 = scalar_lea.vmem %s3, %s171
      %s173 = smul.u32 32, %s14
      %v174 = vld [vmem:[%s166] sm:$0xff]
      %v175 = vld [vmem:[%s166 + $0x8] sm:$0xff]
      %v176 = vld [vmem:[%s166 + $0x10] sm:$0xff]
      %v177 = vld [vmem:[%s166 + $0x18] sm:$0xff]
      %v178 = vld [vmem:[%s166 + $0x20] sm:$0xff]
      %v179 = vld [vmem:[%s166 + $0x28] sm:$0xff]
      %v180 = vld [vmem:[%s166 + $0x30] sm:$0xff]
      %v181 = vld [vmem:[%s166 + $0x38] sm:$0xff]
      %v182 = vld [vmem:[%s166 + $0x40] sm:$0xff]
      %v183 = vld [vmem:[%s166 + $0x48] sm:$0xff]
      %v184 = vld [vmem:[%s166 + $0x50] sm:$0xff]
      %v185 = vld [vmem:[%s166 + $0x58] sm:$0xff]
      %v186 = vld [vmem:[%s166 + $0x60] sm:$0xff]
      %v187 = vld [vmem:[%s166 + $0x68] sm:$0xff]
      %v188 = vld [vmem:[%s166 + $0x70] sm:$0xff]
      %v189 = vld [vmem:[%s166 + $0x78] sm:$0xff]
      %v190 = vld [vmem:[%s166 + $0x80] sm:$0xff]
      %v191 = vld [vmem:[%s166 + $0x88] sm:$0xff]
      %v192 = vld [vmem:[%s166 + $0x90] sm:$0xff]
      %v193 = vld [vmem:[%s166 + $0x98] sm:$0xff]
      %v194 = vld [vmem:[%s166 + $0xa0] sm:$0xff]
      %v195 = vld [vmem:[%s166 + $0xa8] sm:$0xff]
      %v196 = vld [vmem:[%s166 + $0xb0] sm:$0xff]
      %v197 = vld [vmem:[%s166 + $0xb8] sm:$0xff]
      %v198 = vld [vmem:[%s166 + $0xc0] sm:$0xff]
      %v199 = vld [vmem:[%s166 + $0xc8] sm:$0xff]
      %v200 = vld [vmem:[%s166 + $0xd0] sm:$0xff]
      %v201 = vld [vmem:[%s166 + $0xd8] sm:$0xff]
      %v202 = vld [vmem:[%s166 + $0xe0] sm:$0xff]
      %v203 = vld [vmem:[%s166 + $0xe8] sm:$0xff]
      %v204 = vld [vmem:[%s166 + $0xf0] sm:$0xff]
      %v205 = vld [vmem:[%s166 + $0xf8] sm:$0xff]
      %v206 = vld [vmem:[%s166 + $0x100] sm:$0xff]
      %v207 = vld [vmem:[%s166 + $0x108] sm:$0xff]
      %v208 = vld [vmem:[%s166 + $0x110] sm:$0xff]
      %v209 = vld [vmem:[%s166 + $0x118] sm:$0xff]
      %v210 = vld [vmem:[%s166 + $0x120] sm:$0xff]
      %v211 = vld [vmem:[%s166 + $0x128] sm:$0xff]
      %v212 = vld [vmem:[%s166 + $0x130] sm:$0xff]
      %v213 = vld [vmem:[%s166 + $0x138] sm:$0xff]
      %v214 = vld [vmem:[%s166 + $0x140] sm:$0xff]
      %v215 = vld [vmem:[%s166 + $0x148] sm:$0xff]
      %v216 = vld [vmem:[%s166 + $0x150] sm:$0xff]
      %v217 = vld [vmem:[%s166 + $0x158] sm:$0xff]
      %v218 = vld [vmem:[%s166 + $0x160] sm:$0xff]
      %v219 = vld [vmem:[%s166 + $0x168] sm:$0xff]
      %v220 = vld [vmem:[%s166 + $0x170] sm:$0xff]
      %v221 = vld [vmem:[%s166 + $0x178] sm:$0xff]
      %v222 = vld [vmem:[%s166 + $0x180] sm:$0xff]
      %v223 = vld [vmem:[%s166 + $0x188] sm:$0xff]
      %v224 = vld [vmem:[%s166 + $0x190] sm:$0xff]
      %v225 = vld [vmem:[%s166 + $0x198] sm:$0xff]
      %v226 = vld [vmem:[%s166 + $0x1a0] sm:$0xff]
      %v227 = vld [vmem:[%s166 + $0x1a8] sm:$0xff]
      %v228 = vld [vmem:[%s166 + $0x1b0] sm:$0xff]
      %v229 = vld [vmem:[%s166 + $0x1b8] sm:$0xff]
      %v230 = vld [vmem:[%s166 + $0x1c0] sm:$0xff]
      %v231 = vld [vmem:[%s166 + $0x1c8] sm:$0xff]
      %v232 = vld [vmem:[%s166 + $0x1d0] sm:$0xff]
      %v233 = vld [vmem:[%s166 + $0x1d8] sm:$0xff]
      %v234 = vld [vmem:[%s166 + $0x1e0] sm:$0xff]
      %v235 = vld [vmem:[%s166 + $0x1e8] sm:$0xff]
      %v236 = vld [vmem:[%s166 + $0x1f0] sm:$0xff]
      %v237 = vld [vmem:[%s166 + $0x1f8] sm:$0xff]
      %v238 = vld [vmem:[%s166 + $0x200] sm:$0xff]
      %v239 = vld [vmem:[%s166 + $0x208] sm:$0xff]
      %v240 = vld [vmem:[%s166 + $0x210] sm:$0xff]
      %v241 = vld [vmem:[%s166 + $0x218] sm:$0xff]
      %v242 = vld [vmem:[%s166 + $0x220] sm:$0xff]
      %v243 = vld [vmem:[%s166 + $0x228] sm:$0xff]
      %v244 = vld [vmem:[%s166 + $0x230] sm:$0xff]
      %v245 = vld [vmem:[%s166 + $0x238] sm:$0xff]
      %v246 = vld [vmem:[%s166 + $0x240] sm:$0xff]
      %v247 = vld [vmem:[%s166 + $0x248] sm:$0xff]
      %v248 = vld [vmem:[%s166 + $0x250] sm:$0xff]
      %v249 = vld [vmem:[%s166 + $0x258] sm:$0xff]
      %v250 = vld [vmem:[%s166 + $0x260] sm:$0xff]
      %v251 = vld [vmem:[%s166 + $0x268] sm:$0xff]
      %v252 = vld [vmem:[%s166 + $0x270] sm:$0xff]
      %v253 = vld [vmem:[%s166 + $0x278] sm:$0xff]
      %v254 = vld [vmem:[%s166 + $0x280] sm:$0xff]
      %v255 = vld [vmem:[%s166 + $0x288] sm:$0xff]
      %v256 = vld [vmem:[%s166 + $0x290] sm:$0xff]
      %v257 = vld [vmem:[%s166 + $0x298] sm:$0xff]
      %v258 = vld [vmem:[%s166 + $0x2a0] sm:$0xff]
      %v259 = vld [vmem:[%s166 + $0x2a8] sm:$0xff]
      %v260 = vld [vmem:[%s166 + $0x2b0] sm:$0xff]
      %v261 = vld [vmem:[%s166 + $0x2b8] sm:$0xff]
      %v262 = vld [vmem:[%s166 + $0x2c0] sm:$0xff]
      %v263 = vld [vmem:[%s166 + $0x2c8] sm:$0xff]
      %v264 = vld [vmem:[%s166 + $0x2d0] sm:$0xff]
      %v265 = vld [vmem:[%s166 + $0x2d8] sm:$0xff]
      %v266 = vld [vmem:[%s166 + $0x2e0] sm:$0xff]
      %v267 = vld [vmem:[%s166 + $0x2e8] sm:$0xff]
      %v268 = vld [vmem:[%s166 + $0x2f0] sm:$0xff]
      %v269 = vld [vmem:[%s166 + $0x2f8] sm:$0xff]
      %v270 = vld [vmem:[%s166 + $0x300] sm:$0xff]
      %v271 = vld [vmem:[%s166 + $0x308] sm:$0xff]
      %v272 = vld [vmem:[%s166 + $0x310] sm:$0xff]
      %v273 = vld [vmem:[%s166 + $0x318] sm:$0xff]
      %v274 = vld [vmem:[%s166 + $0x320] sm:$0xff]
      %v275 = vld [vmem:[%s166 + $0x328] sm:$0xff]
      %v276 = vld [vmem:[%s166 + $0x330] sm:$0xff]
      %v277 = vld [vmem:[%s166 + $0x338] sm:$0xff]
      %v278 = vld [vmem:[%s166 + $0x340] sm:$0xff]
      %v279 = vld [vmem:[%s166 + $0x348] sm:$0xff]
      %v280 = vld [vmem:[%s166 + $0x350] sm:$0xff]
      %v281 = vld [vmem:[%s166 + $0x358] sm:$0xff]
      %v282 = vld [vmem:[%s166 + $0x360] sm:$0xff]
      %v283 = vld [vmem:[%s166 + $0x368] sm:$0xff]
      %v284 = vld [vmem:[%s166 + $0x370] sm:$0xff]
      %v285 = vld [vmem:[%s166 + $0x378] sm:$0xff]
      %v286 = vld [vmem:[%s166 + $0x380] sm:$0xff]
      %v287 = vld [vmem:[%s166 + $0x388] sm:$0xff]
      %v288 = vld [vmem:[%s166 + $0x390] sm:$0xff]
      %v289 = vld [vmem:[%s166 + $0x398] sm:$0xff]
      %v290 = vld [vmem:[%s166 + $0x3a0] sm:$0xff]
      %v291 = vld [vmem:[%s166 + $0x3a8] sm:$0xff]
      %v292 = vld [vmem:[%s166 + $0x3b0] sm:$0xff]
      %v293 = vld [vmem:[%s166 + $0x3b8] sm:$0xff]
      %v294 = vld [vmem:[%s166 + $0x3c0] sm:$0xff]
      %v295 = vld [vmem:[%s166 + $0x3c8] sm:$0xff]
      %v296 = vld [vmem:[%s166 + $0x3d0] sm:$0xff]
      %v297 = vld [vmem:[%s166 + $0x3d8] sm:$0xff]
      %v298 = vld [vmem:[%s166 + $0x3e0] sm:$0xff]
      %v299 = vld [vmem:[%s166 + $0x3e8] sm:$0xff]
      %v300 = vld [vmem:[%s166 + $0x3f0] sm:$0xff]
      %v301 = vld [vmem:[%s166 + $0x3f8] sm:$0xff]
      %v302 = vld [vmem:[%s1] sm:$0xff]
      %v303 = vld [vmem:[%s1 + $0x8] sm:$0xff]
      %v304 = vld [vmem:[%s1 + $0x10] sm:$0xff]
      %v305 = vld [vmem:[%s1 + $0x18] sm:$0x7]
      %v306 = vld [vmem:[%s2] sm:$0x1]
      %v308 = vlaneseq
      %v309 = vshrl.u32 %v308, 7
      %v310 = vsub.s32 0, %v309
      %v311 = vrot.slane %v306, %v310
      %vm313 = vcmask 220160
      %v315 = vsel %vm313, %v174, 0
      %v318 = vsel %vm313, %v175, 0
      %v321 = vsel %vm313, %v176, 0
      %v324 = vsel %vm313, %v177, 0
      %v327 = vsel %vm313, %v178, 0
      %v330 = vsel %vm313, %v179, 0
      %v333 = vsel %vm313, %v180, 0
      %v336 = vsel %vm313, %v181, 0
      %v339 = vsel %vm313, %v182, 0
      %v342 = vsel %vm313, %v183, 0
      %v345 = vsel %vm313, %v184, 0
      %v348 = vsel %vm313, %v185, 0
      %v351 = vsel %vm313, %v186, 0
      %v354 = vsel %vm313, %v187, 0
      %v357 = vsel %vm313, %v188, 0
      %v360 = vsel %vm313, %v189, 0
      %v363 = vsel %vm313, %v190, 0
      %v366 = vsel %vm313, %v191, 0
      %v369 = vsel %vm313, %v192, 0
      %v372 = vsel %vm313, %v193, 0
      %v375 = vsel %vm313, %v194, 0
      %v378 = vsel %vm313, %v195, 0
      %v381 = vsel %vm313, %v196, 0
      %v384 = vsel %vm313, %v197, 0
      %v387 = vsel %vm313, %v198, 0
      %v390 = vsel %vm313, %v199, 0
      %v393 = vsel %vm313, %v200, 0
      %v396 = vsel %vm313, %v201, 0
      %v399 = vsel %vm313, %v202, 0
      %v402 = vsel %vm313, %v203, 0
      %v405 = vsel %vm313, %v204, 0
      %v408 = vsel %vm313, %v205, 0
      %v411 = vsel %vm313, %v206, 0
      %v414 = vsel %vm313, %v207, 0
      %v417 = vsel %vm313, %v208, 0
      %v420 = vsel %vm313, %v209, 0
      %v423 = vsel %vm313, %v210, 0
      %v426 = vsel %vm313, %v211, 0
      %v429 = vsel %vm313, %v212, 0
      %v432 = vsel %vm313, %v213, 0
      %v435 = vsel %vm313, %v214, 0
      %v438 = vsel %vm313, %v215, 0
      %v441 = vsel %vm313, %v216, 0
      %v444 = vsel %vm313, %v217, 0
      %v447 = vsel %vm313, %v218, 0
      %v450 = vsel %vm313, %v219, 0
      %v453 = vsel %vm313, %v220, 0
      %v456 = vsel %vm313, %v221, 0
      %v459 = vsel %vm313, %v222, 0
      %v462 = vsel %vm313, %v223, 0
      %v465 = vsel %vm313, %v224, 0
      %v468 = vsel %vm313, %v225, 0
      %v471 = vsel %vm313, %v226, 0
      %v474 = vsel %vm313, %v227, 0
      %v477 = vsel %vm313, %v228, 0
      %v480 = vsel %vm313, %v229, 0
      %v483 = vsel %vm313, %v230, 0
      %v486 = vsel %vm313, %v231, 0
      %v489 = vsel %vm313, %v232, 0
      %v492 = vsel %vm313, %v233, 0
      %v495 = vsel %vm313, %v234, 0
      %v498 = vsel %vm313, %v235, 0
      %v501 = vsel %vm313, %v236, 0
      %v504 = vsel %vm313, %v237, 0
      %v507 = vsel %vm313, %v238, 0
      %v510 = vsel %vm313, %v239, 0
      %v513 = vsel %vm313, %v240, 0
      %v516 = vsel %vm313, %v241, 0
      %v519 = vsel %vm313, %v242, 0
      %v522 = vsel %vm313, %v243, 0
      %v525 = vsel %vm313, %v244, 0
      %v528 = vsel %vm313, %v245, 0
      %v531 = vsel %vm313, %v246, 0
      %v534 = vsel %vm313, %v247, 0
      %v537 = vsel %vm313, %v248, 0
      %v540 = vsel %vm313, %v249, 0
      %v543 = vsel %vm313, %v250, 0
      %v546 = vsel %vm313, %v251, 0
      %v549 = vsel %vm313, %v252, 0
      %v552 = vsel %vm313, %v253, 0
      %v555 = vsel %vm313, %v254, 0
      %v558 = vsel %vm313, %v255, 0
      %v561 = vsel %vm313, %v256, 0
      %v564 = vsel %vm313, %v257, 0
      %v567 = vsel %vm313, %v258, 0
      %v570 = vsel %vm313, %v259, 0
      %v573 = vsel %vm313, %v260, 0
      %v576 = vsel %vm313, %v261, 0
      %v579 = vsel %vm313, %v262, 0
      %v582 = vsel %vm313, %v263, 0
      %v585 = vsel %vm313, %v264, 0
      %v588 = vsel %vm313, %v265, 0
      %v591 = vsel %vm313, %v266, 0
      %v594 = vsel %vm313, %v267, 0
      %v597 = vsel %vm313, %v268, 0
      %v600 = vsel %vm313, %v269, 0
      %v603 = vsel %vm313, %v270, 0
      %v606 = vsel %vm313, %v271, 0
      %v609 = vsel %vm313, %v272, 0
      %v612 = vsel %vm313, %v273, 0
      %v615 = vsel %vm313, %v274, 0
      %v618 = vsel %vm313, %v275, 0
      %v621 = vsel %vm313, %v276, 0
      %v624 = vsel %vm313, %v277, 0
      %v627 = vsel %vm313, %v278, 0
      %v630 = vsel %vm313, %v279, 0
      %v633 = vsel %vm313, %v280, 0
      %v636 = vsel %vm313, %v281, 0
      %v639 = vsel %vm313, %v282, 0
      %v642 = vsel %vm313, %v283, 0
      %v645 = vsel %vm313, %v284, 0
      %v648 = vsel %vm313, %v285, 0
      %v651 = vsel %vm313, %v286, 0
      %v654 = vsel %vm313, %v287, 0
      %v657 = vsel %vm313, %v288, 0
      %v660 = vsel %vm313, %v289, 0
      %v663 = vsel %vm313, %v290, 0
      %v666 = vsel %vm313, %v291, 0
      %v669 = vsel %vm313, %v292, 0
      %v672 = vsel %vm313, %v293, 0
      %v675 = vsel %vm313, %v294, 0
      %v678 = vsel %vm313, %v295, 0
      %v681 = vsel %vm313, %v296, 0
      %v684 = vsel %vm313, %v297, 0
      %v687 = vsel %vm313, %v298, 0
      %v690 = vsel %vm313, %v299, 0
      %v693 = vsel %vm313, %v300, 0
      %v696 = vsel %vm313, %v301, 0
      %vm698 = vcmask 1042432
      %v700 = vsel %vm698, %v305, 0
      %702 = vmatprep.subr.mxu0 0.0
      %703 = vmatpush1.msra.mxu0 0.0
      %704 = vmatprep.subr.mxu0 0.0
      %705 = vmatpush1.msra.mxu0 0.0
      %706 = vmatprep.subr.mxu0 0.0
      %707 = vmatpush1.msra.mxu0 0.0
      %708 = vmatprep.subr.mxu0 0.0
      %709 = vmatpush1.msra.mxu0 0.0
      %710 = vmatprep.subr.mxu0 0.0
      %711 = vmatpush1.msra.mxu0 0.0
      %712 = vmatprep.subr.mxu0 0.0
      %713 = vmatpush1.msra.mxu0 0.0
      %714 = vmatprep.subr.mxu0 0.0
      %715 = vmatpush1.msra.mxu0 0.0
      %716 = vmatprep.subr.mxu0 0.0
      %717 = vmatpush1.msra.mxu0 0.0
      %718 = vmatprep.subr.mxu0 0.0
      %719 = vmatpush1.msra.mxu0 0.0
      %720 = vmatprep.subr.mxu0 0.0
      %721 = vmatpush1.msra.mxu0 0.0
      %722 = vmatprep.subr.mxu0 0.0
      %723 = vmatpush1.msra.mxu0 0.0
      %724 = vmatprep.subr.mxu0 0.0
      %725 = vmatpush1.msra.mxu0 0.0
      %726 = vmatprep.subr.mxu0 0.0
      %727 = vmatpush1.msra.mxu0 %v700
      %728 = vmatprep.subr.mxu0 0.0
      %729 = vmatpush1.msra.mxu0 %v304
      %730 = vmatprep.subr.mxu0 0.0
      %731 = vmatpush1.msra.mxu0 %v303
      %732 = vmatprep.subr.mxu0 0.0
      %733 = vmatpush1.msra.mxu0 %v302
      %734 = vmatprep.subr.mxu0 0.0
      %735 = vmatpush2.msra.mxu0 0.0
      %736 = vmatprep.subr.mxu0 0.0
      %737 = vmatpush2.msra.mxu0 0.0
      %738 = vmatprep.subr.mxu0 0.0
      %739 = vmatpush2.msra.mxu0 0.0
      %740 = vmatprep.subr.mxu0 0.0
      %741 = vmatpush2.msra.mxu0 0.0
      %742 = vmatprep.subr.mxu0 0.0
      %743 = vmatpush2.msra.mxu0 0.0
      %744 = vmatprep.subr.mxu0 0.0
      %745 = vmatpush2.msra.mxu0 0.0
      %746 = vmatprep.subr.mxu0 0.0
      %747 = vmatpush2.msra.mxu0 0.0
      %748 = vmatprep.subr.mxu0 0.0
      %749 = vmatpush2.msra.mxu0 0.0
      %750 = vmatprep.subr.mxu0 0.0
      %751 = vmatpush2.msra.mxu0 0.0
      %752 = vmatprep.subr.mxu0 0.0
      %753 = vmatpush2.msra.mxu0 0.0
      %754 = vmatprep.subr.mxu0 0.0
      %755 = vmatpush2.msra.mxu0 0.0
      %756 = vmatprep.subr.mxu0 0.0
      %757 = vmatpush2.msra.mxu0 0.0
      %758 = vmatprep.subr.mxu0 0.0
      %759 = vmatpush2.msra.mxu0 0.0
      %760 = vmatprep.subr.mxu0 0.0
      %761 = vmatpush2.msra.mxu0 0.0
      %762 = vmatprep.subr.mxu0 0.0
      %763 = vmatpush2.msra.mxu0 0.0
      %764 = vmatprep.subr.mxu0 0.0
      %765 = vmatpush2.msra.mxu0 0.0
      %766 = vmatprep.mubr.f32.mxu0 0.0
      %767 = vmatmul.mubr.f32.gmra.mxu0 %v315
      %v768 = vpop.f32.mrf.mxu0
      %v769 = vadd.f32 %v311, %v768
      %v770 = vpop.f32.mrf.mxu0
      %771 = vmatprep.mubr.f32.mxu0 0.0
      %772 = vmatmul.mubr.f32.gmra.mxu0 %v318
      %v773 = vpop.f32.mrf.mxu0
      %v774 = vadd.f32 %v311, %v773
      %v775 = vpop.f32.mrf.mxu0
      %776 = vmatprep.mubr.f32.mxu0 0.0
      %777 = vmatmul.mubr.f32.gmra.mxu0 %v321
      %v778 = vpop.f32.mrf.mxu0
      %v779 = vadd.f32 %v311, %v778
      %v780 = vpop.f32.mrf.mxu0
      %781 = vmatprep.mubr.f32.mxu0 0.0
      %782 = vmatmul.mubr.f32.gmra.mxu0 %v324
      %v783 = vpop.f32.mrf.mxu0
      %v784 = vadd.f32 %v311, %v783
      %v785 = vpop.f32.mrf.mxu0
      %786 = vmatprep.mubr.f32.mxu0 0.0
      %787 = vmatmul.mubr.f32.gmra.mxu0 %v327
      %v788 = vpop.f32.mrf.mxu0
      %v789 = vadd.f32 %v311, %v788
      %v790 = vpop.f32.mrf.mxu0
      %791 = vmatprep.mubr.f32.mxu0 0.0
      %792 = vmatmul.mubr.f32.gmra.mxu0 %v330
      %v793 = vpop.f32.mrf.mxu0
      %v794 = vadd.f32 %v311, %v793
      %v795 = vpop.f32.mrf.mxu0
      %796 = vmatprep.mubr.f32.mxu0 0.0
      %797 = vmatmul.mubr.f32.gmra.mxu0 %v333
      %v798 = vpop.f32.mrf.mxu0
      %v799 = vadd.f32 %v311, %v798
      %v800 = vpop.f32.mrf.mxu0
      %801 = vmatprep.mubr.f32.mxu0 0.0
      %802 = vmatmul.mubr.f32.gmra.mxu0 %v336
      %v803 = vpop.f32.mrf.mxu0
      %v804 = vadd.f32 %v311, %v803
      %v805 = vpop.f32.mrf.mxu0
      %806 = vmatprep.mubr.f32.mxu0 0.0
      %807 = vmatmul.mubr.f32.gmra.mxu0 %v339
      %v808 = vpop.f32.mrf.mxu0
      %v809 = vadd.f32 %v311, %v808
      %v810 = vpop.f32.mrf.mxu0
      %811 = vmatprep.mubr.f32.mxu0 0.0
      %812 = vmatmul.mubr.f32.gmra.mxu0 %v342
      %v813 = vpop.f32.mrf.mxu0
      %v814 = vadd.f32 %v311, %v813
      %v815 = vpop.f32.mrf.mxu0
      %816 = vmatprep.mubr.f32.mxu0 0.0
      %817 = vmatmul.mubr.f32.gmra.mxu0 %v345
      %v818 = vpop.f32.mrf.mxu0
      %v819 = vadd.f32 %v311, %v818
      %v820 = vpop.f32.mrf.mxu0
      %821 = vmatprep.mubr.f32.mxu0 0.0
      %822 = vmatmul.mubr.f32.gmra.mxu0 %v348
      %v823 = vpop.f32.mrf.mxu0
      %v824 = vadd.f32 %v311, %v823
      %v825 = vpop.f32.mrf.mxu0
      %826 = vmatprep.mubr.f32.mxu0 0.0
      %827 = vmatmul.mubr.f32.gmra.mxu0 %v351
      %v828 = vpop.f32.mrf.mxu0
      %v829 = vadd.f32 %v311, %v828
      %v830 = vpop.f32.mrf.mxu0
      %831 = vmatprep.mubr.f32.mxu0 0.0
      %832 = vmatmul.mubr.f32.gmra.mxu0 %v354
      %v833 = vpop.f32.mrf.mxu0
      %v834 = vadd.f32 %v311, %v833
      %v835 = vpop.f32.mrf.mxu0
      %836 = vmatprep.mubr.f32.mxu0 0.0
      %837 = vmatmul.mubr.f32.gmra.mxu0 %v357
      %v838 = vpop.f32.mrf.mxu0
      %v839 = vadd.f32 %v311, %v838
      %v840 = vpop.f32.mrf.mxu0
      %841 = vmatprep.mubr.f32.mxu0 0.0
      %842 = vmatmul.mubr.f32.gmra.mxu0 %v360
      %v843 = vpop.f32.mrf.mxu0
      %v844 = vadd.f32 %v311, %v843
      %v845 = vpop.f32.mrf.mxu0
      %846 = vmatprep.mubr.f32.mxu0 0.0
      %847 = vmatmul.mubr.f32.gmra.mxu0 %v363
      %v848 = vpop.f32.mrf.mxu0
      %v849 = vadd.f32 %v311, %v848
      %v850 = vpop.f32.mrf.mxu0
      %851 = vmatprep.mubr.f32.mxu0 0.0
      %852 = vmatmul.mubr.f32.gmra.mxu0 %v366
      %v853 = vpop.f32.mrf.mxu0
      %v854 = vadd.f32 %v311, %v853
      %v855 = vpop.f32.mrf.mxu0
      %856 = vmatprep.mubr.f32.mxu0 0.0
      %857 = vmatmul.mubr.f32.gmra.mxu0 %v369
      %v858 = vpop.f32.mrf.mxu0
      %v859 = vadd.f32 %v311, %v858
      %v860 = vpop.f32.mrf.mxu0
      %861 = vmatprep.mubr.f32.mxu0 0.0
      %862 = vmatmul.mubr.f32.gmra.mxu0 %v372
      %v863 = vpop.f32.mrf.mxu0
      %v864 = vadd.f32 %v311, %v863
      %v865 = vpop.f32.mrf.mxu0
      %866 = vmatprep.mubr.f32.mxu0 0.0
      %867 = vmatmul.mubr.f32.gmra.mxu0 %v375
      %v868 = vpop.f32.mrf.mxu0
      %v869 = vadd.f32 %v311, %v868
      %v870 = vpop.f32.mrf.mxu0
      %871 = vmatprep.mubr.f32.mxu0 0.0
      %872 = vmatmul.mubr.f32.gmra.mxu0 %v378
      %v873 = vpop.f32.mrf.mxu0
      %v874 = vadd.f32 %v311, %v873
      %v875 = vpop.f32.mrf.mxu0
      %876 = vmatprep.mubr.f32.mxu0 0.0
      %877 = vmatmul.mubr.f32.gmra.mxu0 %v381
      %v878 = vpop.f32.mrf.mxu0
      %v879 = vadd.f32 %v311, %v878
      %v880 = vpop.f32.mrf.mxu0
      %881 = vmatprep.mubr.f32.mxu0 0.0
      %882 = vmatmul.mubr.f32.gmra.mxu0 %v384
      %v883 = vpop.f32.mrf.mxu0
      %v884 = vadd.f32 %v311, %v883
      %v885 = vpop.f32.mrf.mxu0
      %886 = vmatprep.mubr.f32.mxu0 0.0
      %887 = vmatmul.mubr.f32.gmra.mxu0 %v387
      %v888 = vpop.f32.mrf.mxu0
      %v889 = vadd.f32 %v311, %v888
      %v890 = vpop.f32.mrf.mxu0
      %891 = vmatprep.mubr.f32.mxu0 0.0
      %892 = vmatmul.mubr.f32.gmra.mxu0 %v390
      %v893 = vpop.f32.mrf.mxu0
      %v894 = vadd.f32 %v311, %v893
      %v895 = vpop.f32.mrf.mxu0
      %896 = vmatprep.mubr.f32.mxu0 0.0
      %897 = vmatmul.mubr.f32.gmra.mxu0 %v393
      %v898 = vpop.f32.mrf.mxu0
      %v899 = vadd.f32 %v311, %v898
      %v900 = vpop.f32.mrf.mxu0
      %901 = vmatprep.mubr.f32.mxu0 0.0
      %902 = vmatmul.mubr.f32.gmra.mxu0 %v396
      %v903 = vpop.f32.mrf.mxu0
      %v904 = vadd.f32 %v311, %v903
      %v905 = vpop.f32.mrf.mxu0
      %906 = vmatprep.mubr.f32.mxu0 0.0
      %907 = vmatmul.mubr.f32.gmra.mxu0 %v399
      %v908 = vpop.f32.mrf.mxu0
      %v909 = vadd.f32 %v311, %v908
      %v910 = vpop.f32.mrf.mxu0
      %911 = vmatprep.mubr.f32.mxu0 0.0
      %912 = vmatmul.mubr.f32.gmra.mxu0 %v402
      %v913 = vpop.f32.mrf.mxu0
      %v914 = vadd.f32 %v311, %v913
      %v915 = vpop.f32.mrf.mxu0
      %916 = vmatprep.mubr.f32.mxu0 0.0
      %917 = vmatmul.mubr.f32.gmra.mxu0 %v405
      %v918 = vpop.f32.mrf.mxu0
      %v919 = vadd.f32 %v311, %v918
      %v920 = vpop.f32.mrf.mxu0
      %921 = vmatprep.mubr.f32.mxu0 0.0
      %922 = vmatmul.mubr.f32.gmra.mxu0 %v408
      %v923 = vpop.f32.mrf.mxu0
      %v924 = vadd.f32 %v311, %v923
      %v925 = vpop.f32.mrf.mxu0
      %926 = vmatprep.mubr.f32.mxu0 0.0
      %927 = vmatmul.mubr.f32.gmra.mxu0 %v411
      %v928 = vpop.f32.mrf.mxu0
      %v929 = vadd.f32 %v311, %v928
      %v930 = vpop.f32.mrf.mxu0
      %931 = vmatprep.mubr.f32.mxu0 0.0
      %932 = vmatmul.mubr.f32.gmra.mxu0 %v414
      %v933 = vpop.f32.mrf.mxu0
      %v934 = vadd.f32 %v311, %v933
      %v935 = vpop.f32.mrf.mxu0
      %936 = vmatprep.mubr.f32.mxu0 0.0
      %937 = vmatmul.mubr.f32.gmra.mxu0 %v417
      %v938 = vpop.f32.mrf.mxu0
      %v939 = vadd.f32 %v311, %v938
      %v940 = vpop.f32.mrf.mxu0
      %941 = vmatprep.mubr.f32.mxu0 0.0
      %942 = vmatmul.mubr.f32.gmra.mxu0 %v420
      %v943 = vpop.f32.mrf.mxu0
      %v944 = vadd.f32 %v311, %v943
      %v945 = vpop.f32.mrf.mxu0
      %946 = vmatprep.mubr.f32.mxu0 0.0
      %947 = vmatmul.mubr.f32.gmra.mxu0 %v423
      %v948 = vpop.f32.mrf.mxu0
      %v949 = vadd.f32 %v311, %v948
      %v950 = vpop.f32.mrf.mxu0
      %951 = vmatprep.mubr.f32.mxu0 0.0
      %952 = vmatmul.mubr.f32.gmra.mxu0 %v426
      %v953 = vpop.f32.mrf.mxu0
      %v954 = vadd.f32 %v311, %v953
      %v955 = vpop.f32.mrf.mxu0
      %956 = vmatprep.mubr.f32.mxu0 0.0
      %957 = vmatmul.mubr.f32.gmra.mxu0 %v429
      %v958 = vpop.f32.mrf.mxu0
      %v959 = vadd.f32 %v311, %v958
      %v960 = vpop.f32.mrf.mxu0
      %961 = vmatprep.mubr.f32.mxu0 0.0
      %962 = vmatmul.mubr.f32.gmra.mxu0 %v432
      %v963 = vpop.f32.mrf.mxu0
      %v964 = vadd.f32 %v311, %v963
      %v965 = vpop.f32.mrf.mxu0
      %966 = vmatprep.mubr.f32.mxu0 0.0
      %967 = vmatmul.mubr.f32.gmra.mxu0 %v435
      %v968 = vpop.f32.mrf.mxu0
      %v969 = vadd.f32 %v311, %v968
      %v970 = vpop.f32.mrf.mxu0
      %971 = vmatprep.mubr.f32.mxu0 0.0
      %972 = vmatmul.mubr.f32.gmra.mxu0 %v438
      %v973 = vpop.f32.mrf.mxu0
      %v974 = vadd.f32 %v311, %v973
      %v975 = vpop.f32.mrf.mxu0
      %976 = vmatprep.mubr.f32.mxu0 0.0
      %977 = vmatmul.mubr.f32.gmra.mxu0 %v441
      %v978 = vpop.f32.mrf.mxu0
      %v979 = vadd.f32 %v311, %v978
      %v980 = vpop.f32.mrf.mxu0
      %981 = vmatprep.mubr.f32.mxu0 0.0
      %982 = vmatmul.mubr.f32.gmra.mxu0 %v444
      %v983 = vpop.f32.mrf.mxu0
      %v984 = vadd.f32 %v311, %v983
      %v985 = vpop.f32.mrf.mxu0
      %986 = vmatprep.mubr.f32.mxu0 0.0
      %987 = vmatmul.mubr.f32.gmra.mxu0 %v447
      %v988 = vpop.f32.mrf.mxu0
      %v989 = vadd.f32 %v311, %v988
      %v990 = vpop.f32.mrf.mxu0
      %991 = vmatprep.mubr.f32.mxu0 0.0
      %992 = vmatmul.mubr.f32.gmra.mxu0 %v450
      %v993 = vpop.f32.mrf.mxu0
      %v994 = vadd.f32 %v311, %v993
      %v995 = vpop.f32.mrf.mxu0
      %996 = vmatprep.mubr.f32.mxu0 0.0
      %997 = vmatmul.mubr.f32.gmra.mxu0 %v453
      %v998 = vpop.f32.mrf.mxu0
      %v999 = vadd.f32 %v311, %v998
      %v1000 = vpop.f32.mrf.mxu0
      %1001 = vmatprep.mubr.f32.mxu0 0.0
      %1002 = vmatmul.mubr.f32.gmra.mxu0 %v456
      %v1003 = vpop.f32.mrf.mxu0
      %v1004 = vadd.f32 %v311, %v1003
      %v1005 = vpop.f32.mrf.mxu0
      %1006 = vmatprep.mubr.f32.mxu0 0.0
      %1007 = vmatmul.mubr.f32.gmra.mxu0 %v459
      %v1008 = vpop.f32.mrf.mxu0
      %v1009 = vadd.f32 %v311, %v1008
      %v1010 = vpop.f32.mrf.mxu0
      %1011 = vmatprep.mubr.f32.mxu0 0.0
      %1012 = vmatmul.mubr.f32.gmra.mxu0 %v462
      %v1013 = vpop.f32.mrf.mxu0
      %v1014 = vadd.f32 %v311, %v1013
      %v1015 = vpop.f32.mrf.mxu0
      %1016 = vmatprep.mubr.f32.mxu0 0.0
      %1017 = vmatmul.mubr.f32.gmra.mxu0 %v465
      %v1018 = vpop.f32.mrf.mxu0
      %v1019 = vadd.f32 %v311, %v1018
      %v1020 = vpop.f32.mrf.mxu0
      %1021 = vmatprep.mubr.f32.mxu0 0.0
      %1022 = vmatmul.mubr.f32.gmra.mxu0 %v468
      %v1023 = vpop.f32.mrf.mxu0
      %v1024 = vadd.f32 %v311, %v1023
      %v1025 = vpop.f32.mrf.mxu0
      %1026 = vmatprep.mubr.f32.mxu0 0.0
      %1027 = vmatmul.mubr.f32.gmra.mxu0 %v471
      %v1028 = vpop.f32.mrf.mxu0
      %v1029 = vadd.f32 %v311, %v1028
      %v1030 = vpop.f32.mrf.mxu0
      %1031 = vmatprep.mubr.f32.mxu0 0.0
      %1032 = vmatmul.mubr.f32.gmra.mxu0 %v474
      %v1033 = vpop.f32.mrf.mxu0
      %v1034 = vadd.f32 %v311, %v1033
      %v1035 = vpop.f32.mrf.mxu0
      %1036 = vmatprep.mubr.f32.mxu0 0.0
      %1037 = vmatmul.mubr.f32.gmra.mxu0 %v477
      %v1038 = vpop.f32.mrf.mxu0
      %v1039 = vadd.f32 %v311, %v1038
      %v1040 = vpop.f32.mrf.mxu0
      %1041 = vmatprep.mubr.f32.mxu0 0.0
      %1042 = vmatmul.mubr.f32.gmra.mxu0 %v480
      %v1043 = vpop.f32.mrf.mxu0
      %v1044 = vadd.f32 %v311, %v1043
      %v1045 = vpop.f32.mrf.mxu0
      %1046 = vmatprep.mubr.f32.mxu0 0.0
      %1047 = vmatmul.mubr.f32.gmra.mxu0 %v483
      %v1048 = vpop.f32.mrf.mxu0
      %v1049 = vadd.f32 %v311, %v1048
      %v1050 = vpop.f32.mrf.mxu0
      %1051 = vmatprep.mubr.f32.mxu0 0.0
      %1052 = vmatmul.mubr.f32.gmra.mxu0 %v486
      %v1053 = vpop.f32.mrf.mxu0
      %v1054 = vadd.f32 %v311, %v1053
      %v1055 = vpop.f32.mrf.mxu0
      %1056 = vmatprep.mubr.f32.mxu0 0.0
      %1057 = vmatmul.mubr.f32.gmra.mxu0 %v489
      %v1058 = vpop.f32.mrf.mxu0
      %v1059 = vadd.f32 %v311, %v1058
      %v1060 = vpop.f32.mrf.mxu0
      %1061 = vmatprep.mubr.f32.mxu0 0.0
      %1062 = vmatmul.mubr.f32.gmra.mxu0 %v492
      %v1063 = vpop.f32.mrf.mxu0
      %v1064 = vadd.f32 %v311, %v1063
      %v1065 = vpop.f32.mrf.mxu0
      %1066 = vmatprep.mubr.f32.mxu0 0.0
      %1067 = vmatmul.mubr.f32.gmra.mxu0 %v495
      %v1068 = vpop.f32.mrf.mxu0
      %v1069 = vadd.f32 %v311, %v1068
      %v1070 = vpop.f32.mrf.mxu0
      %1071 = vmatprep.mubr.f32.mxu0 0.0
      %1072 = vmatmul.mubr.f32.gmra.mxu0 %v498
      %v1073 = vpop.f32.mrf.mxu0
      %v1074 = vadd.f32 %v311, %v1073
      %v1075 = vpop.f32.mrf.mxu0
      %1076 = vmatprep.mubr.f32.mxu0 0.0
      %1077 = vmatmul.mubr.f32.gmra.mxu0 %v501
      %v1078 = vpop.f32.mrf.mxu0
      %v1079 = vadd.f32 %v311, %v1078
      %v1080 = vpop.f32.mrf.mxu0
      %1081 = vmatprep.mubr.f32.mxu0 0.0
      %1082 = vmatmul.mubr.f32.gmra.mxu0 %v504
      %v1083 = vpop.f32.mrf.mxu0
      %v1084 = vadd.f32 %v311, %v1083
      %v1085 = vpop.f32.mrf.mxu0
      %1086 = vmatprep.mubr.f32.mxu0 0.0
      %1087 = vmatmul.mubr.f32.gmra.mxu0 %v507
      %v1088 = vpop.f32.mrf.mxu0
      %v1089 = vadd.f32 %v311, %v1088
      %v1090 = vpop.f32.mrf.mxu0
      %1091 = vmatprep.mubr.f32.mxu0 0.0
      %1092 = vmatmul.mubr.f32.gmra.mxu0 %v510
      %v1093 = vpop.f32.mrf.mxu0
      %v1094 = vadd.f32 %v311, %v1093
      %v1095 = vpop.f32.mrf.mxu0
      %1096 = vmatprep.mubr.f32.mxu0 0.0
      %1097 = vmatmul.mubr.f32.gmra.mxu0 %v513
      %v1098 = vpop.f32.mrf.mxu0
      %v1099 = vadd.f32 %v311, %v1098
      %v1100 = vpop.f32.mrf.mxu0
      %1101 = vmatprep.mubr.f32.mxu0 0.0
      %1102 = vmatmul.mubr.f32.gmra.mxu0 %v516
      %v1103 = vpop.f32.mrf.mxu0
      %v1104 = vadd.f32 %v311, %v1103
      %v1105 = vpop.f32.mrf.mxu0
      %1106 = vmatprep.mubr.f32.mxu0 0.0
      %1107 = vmatmul.mubr.f32.gmra.mxu0 %v519
      %v1108 = vpop.f32.mrf.mxu0
      %v1109 = vadd.f32 %v311, %v1108
      %v1110 = vpop.f32.mrf.mxu0
      %1111 = vmatprep.mubr.f32.mxu0 0.0
      %1112 = vmatmul.mubr.f32.gmra.mxu0 %v522
      %v1113 = vpop.f32.mrf.mxu0
      %v1114 = vadd.f32 %v311, %v1113
      %v1115 = vpop.f32.mrf.mxu0
      %1116 = vmatprep.mubr.f32.mxu0 0.0
      %1117 = vmatmul.mubr.f32.gmra.mxu0 %v525
      %v1118 = vpop.f32.mrf.mxu0
      %v1119 = vadd.f32 %v311, %v1118
      %v1120 = vpop.f32.mrf.mxu0
      %1121 = vmatprep.mubr.f32.mxu0 0.0
      %1122 = vmatmul.mubr.f32.gmra.mxu0 %v528
      %v1123 = vpop.f32.mrf.mxu0
      %v1124 = vadd.f32 %v311, %v1123
      %v1125 = vpop.f32.mrf.mxu0
      %1126 = vmatprep.mubr.f32.mxu0 0.0
      %1127 = vmatmul.mubr.f32.gmra.mxu0 %v531
      %v1128 = vpop.f32.mrf.mxu0
      %v1129 = vadd.f32 %v311, %v1128
      %v1130 = vpop.f32.mrf.mxu0
      %1131 = vmatprep.mubr.f32.mxu0 0.0
      %1132 = vmatmul.mubr.f32.gmra.mxu0 %v534
      %v1133 = vpop.f32.mrf.mxu0
      %v1134 = vadd.f32 %v311, %v1133
      %v1135 = vpop.f32.mrf.mxu0
      %1136 = vmatprep.mubr.f32.mxu0 0.0
      %1137 = vmatmul.mubr.f32.gmra.mxu0 %v537
      %v1138 = vpop.f32.mrf.mxu0
      %v1139 = vadd.f32 %v311, %v1138
      %v1140 = vpop.f32.mrf.mxu0
      %1141 = vmatprep.mubr.f32.mxu0 0.0
      %1142 = vmatmul.mubr.f32.gmra.mxu0 %v540
      %v1143 = vpop.f32.mrf.mxu0
      %v1144 = vadd.f32 %v311, %v1143
      %v1145 = vpop.f32.mrf.mxu0
      %1146 = vmatprep.mubr.f32.mxu0 0.0
      %1147 = vmatmul.mubr.f32.gmra.mxu0 %v543
      %v1148 = vpop.f32.mrf.mxu0
      %v1149 = vadd.f32 %v311, %v1148
      %v1150 = vpop.f32.mrf.mxu0
      %1151 = vmatprep.mubr.f32.mxu0 0.0
      %1152 = vmatmul.mubr.f32.gmra.mxu0 %v546
      %v1153 = vpop.f32.mrf.mxu0
      %v1154 = vadd.f32 %v311, %v1153
      %v1155 = vpop.f32.mrf.mxu0
      %1156 = vmatprep.mubr.f32.mxu0 0.0
      %1157 = vmatmul.mubr.f32.gmra.mxu0 %v549
      %v1158 = vpop.f32.mrf.mxu0
      %v1159 = vadd.f32 %v311, %v1158
      %v1160 = vpop.f32.mrf.mxu0
      %1161 = vmatprep.mubr.f32.mxu0 0.0
      %1162 = vmatmul.mubr.f32.gmra.mxu0 %v552
      %v1163 = vpop.f32.mrf.mxu0
      %v1164 = vadd.f32 %v311, %v1163
      %v1165 = vpop.f32.mrf.mxu0
      %1166 = vmatprep.mubr.f32.mxu0 0.0
      %1167 = vmatmul.mubr.f32.gmra.mxu0 %v555
      %v1168 = vpop.f32.mrf.mxu0
      %v1169 = vadd.f32 %v311, %v1168
      %v1170 = vpop.f32.mrf.mxu0
      %1171 = vmatprep.mubr.f32.mxu0 0.0
      %1172 = vmatmul.mubr.f32.gmra.mxu0 %v558
      %v1173 = vpop.f32.mrf.mxu0
      %v1174 = vadd.f32 %v311, %v1173
      %v1175 = vpop.f32.mrf.mxu0
      %1176 = vmatprep.mubr.f32.mxu0 0.0
      %1177 = vmatmul.mubr.f32.gmra.mxu0 %v561
      %v1178 = vpop.f32.mrf.mxu0
      %v1179 = vadd.f32 %v311, %v1178
      %v1180 = vpop.f32.mrf.mxu0
      %1181 = vmatprep.mubr.f32.mxu0 0.0
      %1182 = vmatmul.mubr.f32.gmra.mxu0 %v564
      %v1183 = vpop.f32.mrf.mxu0
      %v1184 = vadd.f32 %v311, %v1183
      %v1185 = vpop.f32.mrf.mxu0
      %1186 = vmatprep.mubr.f32.mxu0 0.0
      %1187 = vmatmul.mubr.f32.gmra.mxu0 %v567
      %v1188 = vpop.f32.mrf.mxu0
      %v1189 = vadd.f32 %v311, %v1188
      %v1190 = vpop.f32.mrf.mxu0
      %1191 = vmatprep.mubr.f32.mxu0 0.0
      %1192 = vmatmul.mubr.f32.gmra.mxu0 %v570
      %v1193 = vpop.f32.mrf.mxu0
      %v1194 = vadd.f32 %v311, %v1193
      %v1195 = vpop.f32.mrf.mxu0
      %1196 = vmatprep.mubr.f32.mxu0 0.0
      %1197 = vmatmul.mubr.f32.gmra.mxu0 %v573
      %v1198 = vpop.f32.mrf.mxu0
      %v1199 = vadd.f32 %v311, %v1198
      %v1200 = vpop.f32.mrf.mxu0
      %1201 = vmatprep.mubr.f32.mxu0 0.0
      %1202 = vmatmul.mubr.f32.gmra.mxu0 %v576
      %v1203 = vpop.f32.mrf.mxu0
      %v1204 = vadd.f32 %v311, %v1203
      %v1205 = vpop.f32.mrf.mxu0
      %1206 = vmatprep.mubr.f32.mxu0 0.0
      %1207 = vmatmul.mubr.f32.gmra.mxu0 %v579
      %v1208 = vpop.f32.mrf.mxu0
      %v1209 = vadd.f32 %v311, %v1208
      %v1210 = vpop.f32.mrf.mxu0
      %1211 = vmatprep.mubr.f32.mxu0 0.0
      %1212 = vmatmul.mubr.f32.gmra.mxu0 %v582
      %v1213 = vpop.f32.mrf.mxu0
      %v1214 = vadd.f32 %v311, %v1213
      %v1215 = vpop.f32.mrf.mxu0
      %1216 = vmatprep.mubr.f32.mxu0 0.0
      %1217 = vmatmul.mubr.f32.gmra.mxu0 %v585
      %v1218 = vpop.f32.mrf.mxu0
      %v1219 = vadd.f32 %v311, %v1218
      %v1220 = vpop.f32.mrf.mxu0
      %1221 = vmatprep.mubr.f32.mxu0 0.0
      %1222 = vmatmul.mubr.f32.gmra.mxu0 %v588
      %v1223 = vpop.f32.mrf.mxu0
      %v1224 = vadd.f32 %v311, %v1223
      %v1225 = vpop.f32.mrf.mxu0
      %1226 = vmatprep.mubr.f32.mxu0 0.0
      %1227 = vmatmul.mubr.f32.gmra.mxu0 %v591
      %v1228 = vpop.f32.mrf.mxu0
      %v1229 = vadd.f32 %v311, %v1228
      %v1230 = vpop.f32.mrf.mxu0
      %1231 = vmatprep.mubr.f32.mxu0 0.0
      %1232 = vmatmul.mubr.f32.gmra.mxu0 %v594
      %v1233 = vpop.f32.mrf.mxu0
      %v1234 = vadd.f32 %v311, %v1233
      %v1235 = vpop.f32.mrf.mxu0
      %1236 = vmatprep.mubr.f32.mxu0 0.0
      %1237 = vmatmul.mubr.f32.gmra.mxu0 %v597
      %v1238 = vpop.f32.mrf.mxu0
      %v1239 = vadd.f32 %v311, %v1238
      %v1240 = vpop.f32.mrf.mxu0
      %1241 = vmatprep.mubr.f32.mxu0 0.0
      %1242 = vmatmul.mubr.f32.gmra.mxu0 %v600
      %v1243 = vpop.f32.mrf.mxu0
      %v1244 = vadd.f32 %v311, %v1243
      %v1245 = vpop.f32.mrf.mxu0
      %1246 = vmatprep.mubr.f32.mxu0 0.0
      %1247 = vmatmul.mubr.f32.gmra.mxu0 %v603
      %v1248 = vpop.f32.mrf.mxu0
      %v1249 = vadd.f32 %v311, %v1248
      %v1250 = vpop.f32.mrf.mxu0
      %1251 = vmatprep.mubr.f32.mxu0 0.0
      %1252 = vmatmul.mubr.f32.gmra.mxu0 %v606
      %v1253 = vpop.f32.mrf.mxu0
      %v1254 = vadd.f32 %v311, %v1253
      %v1255 = vpop.f32.mrf.mxu0
      %1256 = vmatprep.mubr.f32.mxu0 0.0
      %1257 = vmatmul.mubr.f32.gmra.mxu0 %v609
      %v1258 = vpop.f32.mrf.mxu0
      %v1259 = vadd.f32 %v311, %v1258
      %v1260 = vpop.f32.mrf.mxu0
      %1261 = vmatprep.mubr.f32.mxu0 0.0
      %1262 = vmatmul.mubr.f32.gmra.mxu0 %v612
      %v1263 = vpop.f32.mrf.mxu0
      %v1264 = vadd.f32 %v311, %v1263
      %v1265 = vpop.f32.mrf.mxu0
      %1266 = vmatprep.mubr.f32.mxu0 0.0
      %1267 = vmatmul.mubr.f32.gmra.mxu0 %v615
      %v1268 = vpop.f32.mrf.mxu0
      %v1269 = vadd.f32 %v311, %v1268
      %v1270 = vpop.f32.mrf.mxu0
      %1271 = vmatprep.mubr.f32.mxu0 0.0
      %1272 = vmatmul.mubr.f32.gmra.mxu0 %v618
      %v1273 = vpop.f32.mrf.mxu0
      %v1274 = vadd.f32 %v311, %v1273
      %v1275 = vpop.f32.mrf.mxu0
      %1276 = vmatprep.mubr.f32.mxu0 0.0
      %1277 = vmatmul.mubr.f32.gmra.mxu0 %v621
      %v1278 = vpop.f32.mrf.mxu0
      %v1279 = vadd.f32 %v311, %v1278
      %v1280 = vpop.f32.mrf.mxu0
      %1281 = vmatprep.mubr.f32.mxu0 0.0
      %1282 = vmatmul.mubr.f32.gmra.mxu0 %v624
      %v1283 = vpop.f32.mrf.mxu0
      %v1284 = vadd.f32 %v311, %v1283
      %v1285 = vpop.f32.mrf.mxu0
      %1286 = vmatprep.mubr.f32.mxu0 0.0
      %1287 = vmatmul.mubr.f32.gmra.mxu0 %v627
      %v1288 = vpop.f32.mrf.mxu0
      %v1289 = vadd.f32 %v311, %v1288
      %v1290 = vpop.f32.mrf.mxu0
      %1291 = vmatprep.mubr.f32.mxu0 0.0
      %1292 = vmatmul.mubr.f32.gmra.mxu0 %v630
      %v1293 = vpop.f32.mrf.mxu0
      %v1294 = vadd.f32 %v311, %v1293
      %v1295 = vpop.f32.mrf.mxu0
      %1296 = vmatprep.mubr.f32.mxu0 0.0
      %1297 = vmatmul.mubr.f32.gmra.mxu0 %v633
      %v1298 = vpop.f32.mrf.mxu0
      %v1299 = vadd.f32 %v311, %v1298
      %v1300 = vpop.f32.mrf.mxu0
      %1301 = vmatprep.mubr.f32.mxu0 0.0
      %1302 = vmatmul.mubr.f32.gmra.mxu0 %v636
      %v1303 = vpop.f32.mrf.mxu0
      %v1304 = vadd.f32 %v311, %v1303
      %v1305 = vpop.f32.mrf.mxu0
      %1306 = vmatprep.mubr.f32.mxu0 0.0
      %1307 = vmatmul.mubr.f32.gmra.mxu0 %v639
      %v1308 = vpop.f32.mrf.mxu0
      %v1309 = vadd.f32 %v311, %v1308
      %v1310 = vpop.f32.mrf.mxu0
      %1311 = vmatprep.mubr.f32.mxu0 0.0
      %1312 = vmatmul.mubr.f32.gmra.mxu0 %v642
      %v1313 = vpop.f32.mrf.mxu0
      %v1314 = vadd.f32 %v311, %v1313
      %v1315 = vpop.f32.mrf.mxu0
      %1316 = vmatprep.mubr.f32.mxu0 0.0
      %1317 = vmatmul.mubr.f32.gmra.mxu0 %v645
      %v1318 = vpop.f32.mrf.mxu0
      %v1319 = vadd.f32 %v311, %v1318
      %v1320 = vpop.f32.mrf.mxu0
      %1321 = vmatprep.mubr.f32.mxu0 0.0
      %1322 = vmatmul.mubr.f32.gmra.mxu0 %v648
      %v1323 = vpop.f32.mrf.mxu0
      %v1324 = vadd.f32 %v311, %v1323
      %v1325 = vpop.f32.mrf.mxu0
      %1326 = vmatprep.mubr.f32.mxu0 0.0
      %1327 = vmatmul.mubr.f32.gmra.mxu0 %v651
      %v1328 = vpop.f32.mrf.mxu0
      %v1329 = vadd.f32 %v311, %v1328
      %v1330 = vpop.f32.mrf.mxu0
      %1331 = vmatprep.mubr.f32.mxu0 0.0
      %1332 = vmatmul.mubr.f32.gmra.mxu0 %v654
      %v1333 = vpop.f32.mrf.mxu0
      %v1334 = vadd.f32 %v311, %v1333
      %v1335 = vpop.f32.mrf.mxu0
      %1336 = vmatprep.mubr.f32.mxu0 0.0
      %1337 = vmatmul.mubr.f32.gmra.mxu0 %v657
      %v1338 = vpop.f32.mrf.mxu0
      %v1339 = vadd.f32 %v311, %v1338
      %v1340 = vpop.f32.mrf.mxu0
      %1341 = vmatprep.mubr.f32.mxu0 0.0
      %1342 = vmatmul.mubr.f32.gmra.mxu0 %v660
      %v1343 = vpop.f32.mrf.mxu0
      %v1344 = vadd.f32 %v311, %v1343
      %v1345 = vpop.f32.mrf.mxu0
      %1346 = vmatprep.mubr.f32.mxu0 0.0
      %1347 = vmatmul.mubr.f32.gmra.mxu0 %v663
      %v1348 = vpop.f32.mrf.mxu0
      %v1349 = vadd.f32 %v311, %v1348
      %v1350 = vpop.f32.mrf.mxu0
      %1351 = vmatprep.mubr.f32.mxu0 0.0
      %1352 = vmatmul.mubr.f32.gmra.mxu0 %v666
      %v1353 = vpop.f32.mrf.mxu0
      %v1354 = vadd.f32 %v311, %v1353
      %v1355 = vpop.f32.mrf.mxu0
      %1356 = vmatprep.mubr.f32.mxu0 0.0
      %1357 = vmatmul.mubr.f32.gmra.mxu0 %v669
      %v1358 = vpop.f32.mrf.mxu0
      %v1359 = vadd.f32 %v311, %v1358
      %v1360 = vpop.f32.mrf.mxu0
      %1361 = vmatprep.mubr.f32.mxu0 0.0
      %1362 = vmatmul.mubr.f32.gmra.mxu0 %v672
      %v1363 = vpop.f32.mrf.mxu0
      %v1364 = vadd.f32 %v311, %v1363
      %v1365 = vpop.f32.mrf.mxu0
      %1366 = vmatprep.mubr.f32.mxu0 0.0
      %1367 = vmatmul.mubr.f32.gmra.mxu0 %v675
      %v1368 = vpop.f32.mrf.mxu0
      %v1369 = vadd.f32 %v311, %v1368
      %v1370 = vpop.f32.mrf.mxu0
      %1371 = vmatprep.mubr.f32.mxu0 0.0
      %1372 = vmatmul.mubr.f32.gmra.mxu0 %v678
      %v1373 = vpop.f32.mrf.mxu0
      %v1374 = vadd.f32 %v311, %v1373
      %v1375 = vpop.f32.mrf.mxu0
      %1376 = vmatprep.mubr.f32.mxu0 0.0
      %1377 = vmatmul.mubr.f32.gmra.mxu0 %v681
      %v1378 = vpop.f32.mrf.mxu0
      %v1379 = vadd.f32 %v311, %v1378
      %v1380 = vpop.f32.mrf.mxu0
      %1381 = vmatprep.mubr.f32.mxu0 0.0
      %1382 = vmatmul.mubr.f32.gmra.mxu0 %v684
      %v1383 = vpop.f32.mrf.mxu0
      %v1384 = vadd.f32 %v311, %v1383
      %v1385 = vpop.f32.mrf.mxu0
      %1386 = vmatprep.mubr.f32.mxu0 0.0
      %1387 = vmatmul.mubr.f32.gmra.mxu0 %v687
      %v1388 = vpop.f32.mrf.mxu0
      %v1389 = vadd.f32 %v311, %v1388
      %v1390 = vpop.f32.mrf.mxu0
      %1391 = vmatprep.mubr.f32.mxu0 0.0
      %1392 = vmatmul.mubr.f32.gmra.mxu0 %v690
      %v1393 = vpop.f32.mrf.mxu0
      %v1394 = vadd.f32 %v311, %v1393
      %v1395 = vpop.f32.mrf.mxu0
      %1396 = vmatprep.mubr.f32.mxu0 0.0
      %1397 = vmatmul.mubr.f32.gmra.mxu0 %v693
      %v1398 = vpop.f32.mrf.mxu0
      %v1399 = vadd.f32 %v311, %v1398
      %v1400 = vpop.f32.mrf.mxu0
      %1401 = vmatprep.mubr.f32.mxu0 0.0
      %1402 = vmatmul.mubr.f32.gmra.mxu0 %v696
      %v1403 = vpop.f32.mrf.mxu0
      %v1404 = vadd.f32 %v311, %v1403
      %v1405 = vpop.f32.mrf.mxu0
      %1406 = vdwg.mxu0
      %v1407 = vmin.f32 %v769, 0.0
      %v1408 = vmin.f32 %v774, 0.0
      %v1409 = vmin.f32 %v779, 0.0
      %v1410 = vmin.f32 %v784, 0.0
      %v1411 = vmin.f32 %v789, 0.0
      %v1412 = vmin.f32 %v794, 0.0
      %v1413 = vmin.f32 %v799, 0.0
      %v1414 = vmin.f32 %v804, 0.0
      %v1415 = vmin.f32 %v809, 0.0
      %v1416 = vmin.f32 %v814, 0.0
      %v1417 = vmin.f32 %v819, 0.0
      %v1418 = vmin.f32 %v824, 0.0
      %v1419 = vmin.f32 %v829, 0.0
      %v1420 = vmin.f32 %v834, 0.0
      %v1421 = vmin.f32 %v839, 0.0
      %v1422 = vmin.f32 %v844, 0.0
      %v1423 = vmin.f32 %v849, 0.0
      %v1424 = vmin.f32 %v854, 0.0
      %v1425 = vmin.f32 %v859, 0.0
      %v1426 = vmin.f32 %v864, 0.0
      %v1427 = vmin.f32 %v869, 0.0
      %v1428 = vmin.f32 %v874, 0.0
      %v1429 = vmin.f32 %v879, 0.0
      %v1430 = vmin.f32 %v884, 0.0
      %v1431 = vmin.f32 %v889, 0.0
      %v1432 = vmin.f32 %v894, 0.0
      %v1433 = vmin.f32 %v899, 0.0
      %v1434 = vmin.f32 %v904, 0.0
      %v1435 = vmin.f32 %v909, 0.0
      %v1436 = vmin.f32 %v914, 0.0
      %v1437 = vmin.f32 %v919, 0.0
      %v1438 = vmin.f32 %v924, 0.0
      %v1439 = vmin.f32 %v929, 0.0
      %v1440 = vmin.f32 %v934, 0.0
      %v1441 = vmin.f32 %v939, 0.0
      %v1442 = vmin.f32 %v944, 0.0
      %v1443 = vmin.f32 %v949, 0.0
      %v1444 = vmin.f32 %v954, 0.0
      %v1445 = vmin.f32 %v959, 0.0
      %v1446 = vmin.f32 %v964, 0.0
      %v1447 = vmin.f32 %v969, 0.0
      %v1448 = vmin.f32 %v974, 0.0
      %v1449 = vmin.f32 %v979, 0.0
      %v1450 = vmin.f32 %v984, 0.0
      %v1451 = vmin.f32 %v989, 0.0
      %v1452 = vmin.f32 %v994, 0.0
      %v1453 = vmin.f32 %v999, 0.0
      %v1454 = vmin.f32 %v1004, 0.0
      %v1455 = vmin.f32 %v1009, 0.0
      %v1456 = vmin.f32 %v1014, 0.0
      %v1457 = vmin.f32 %v1019, 0.0
      %v1458 = vmin.f32 %v1024, 0.0
      %v1459 = vmin.f32 %v1029, 0.0
      %v1460 = vmin.f32 %v1034, 0.0
      %v1461 = vmin.f32 %v1039, 0.0
      %v1462 = vmin.f32 %v1044, 0.0
      %v1463 = vmin.f32 %v1049, 0.0
      %v1464 = vmin.f32 %v1054, 0.0
      %v1465 = vmin.f32 %v1059, 0.0
      %v1466 = vmin.f32 %v1064, 0.0
      %v1467 = vmin.f32 %v1069, 0.0
      %v1468 = vmin.f32 %v1074, 0.0
      %v1469 = vmin.f32 %v1079, 0.0
      %v1470 = vmin.f32 %v1084, 0.0
      %v1471 = vmin.f32 %v1089, 0.0
      %v1472 = vmin.f32 %v1094, 0.0
      %v1473 = vmin.f32 %v1099, 0.0
      %v1474 = vmin.f32 %v1104, 0.0
      %v1475 = vmin.f32 %v1109, 0.0
      %v1476 = vmin.f32 %v1114, 0.0
      %v1477 = vmin.f32 %v1119, 0.0
      %v1478 = vmin.f32 %v1124, 0.0
      %v1479 = vmin.f32 %v1129, 0.0
      %v1480 = vmin.f32 %v1134, 0.0
      %v1481 = vmin.f32 %v1139, 0.0
      %v1482 = vmin.f32 %v1144, 0.0
      %v1483 = vmin.f32 %v1149, 0.0
      %v1484 = vmin.f32 %v1154, 0.0
      %v1485 = vmin.f32 %v1159, 0.0
      %v1486 = vmin.f32 %v1164, 0.0
      %v1487 = vmin.f32 %v1169, 0.0
      %v1488 = vmin.f32 %v1174, 0.0
      %v1489 = vmin.f32 %v1179, 0.0
      %v1490 = vmin.f32 %v1184, 0.0
      %v1491 = vmin.f32 %v1189, 0.0
      %v1492 = vmin.f32 %v1194, 0.0
      %v1493 = vmin.f32 %v1199, 0.0
      %v1494 = vmin.f32 %v1204, 0.0
      %v1495 = vmin.f32 %v1209, 0.0
      %v1496 = vmin.f32 %v1214, 0.0
      %v1497 = vmin.f32 %v1219, 0.0
      %v1498 = vmin.f32 %v1224, 0.0
      %v1499 = vmin.f32 %v1229, 0.0
      %v1500 = vmin.f32 %v1234, 0.0
      %v1501 = vmin.f32 %v1239, 0.0
      %v1502 = vmin.f32 %v1244, 0.0
      %v1503 = vmin.f32 %v1249, 0.0
      %v1504 = vmin.f32 %v1254, 0.0
      %v1505 = vmin.f32 %v1259, 0.0
      %v1506 = vmin.f32 %v1264, 0.0
      %v1507 = vmin.f32 %v1269, 0.0
      %v1508 = vmin.f32 %v1274, 0.0
      %v1509 = vmin.f32 %v1279, 0.0
      %v1510 = vmin.f32 %v1284, 0.0
      %v1511 = vmin.f32 %v1289, 0.0
      %v1512 = vmin.f32 %v1294, 0.0
      %v1513 = vmin.f32 %v1299, 0.0
      %v1514 = vmin.f32 %v1304, 0.0
      %v1515 = vmin.f32 %v1309, 0.0
      %v1516 = vmin.f32 %v1314, 0.0
      %v1517 = vmin.f32 %v1319, 0.0
      %v1518 = vmin.f32 %v1324, 0.0
      %v1519 = vmin.f32 %v1329, 0.0
      %v1520 = vmin.f32 %v1334, 0.0
      %v1521 = vmin.f32 %v1339, 0.0
      %v1522 = vmin.f32 %v1344, 0.0
      %v1523 = vmin.f32 %v1349, 0.0
      %v1524 = vmin.f32 %v1354, 0.0
      %v1525 = vmin.f32 %v1359, 0.0
      %v1526 = vmin.f32 %v1364, 0.0
      %v1527 = vmin.f32 %v1369, 0.0
      %v1528 = vmin.f32 %v1374, 0.0
      %v1529 = vmin.f32 %v1379, 0.0
      %v1530 = vmin.f32 %v1384, 0.0
      %v1531 = vmin.f32 %v1389, 0.0
      %v1532 = vmin.f32 %v1394, 0.0
      %v1533 = vmin.f32 %v1399, 0.0
      %v1534 = vmin.f32 %v1404, 0.0
      %v1535 = vmul.f32 %v1407, 1.442695
      %v1536 = vpow.pop %v1535
      %v1537 = vmul.f32 %v1408, 1.442695
      %v1538 = vpow.pop %v1537
      %v1539 = vmul.f32 %v1409, 1.442695
      %v1540 = vpow.pop %v1539
      %v1541 = vmul.f32 %v1410, 1.442695
      %v1542 = vpow.pop %v1541
      %v1543 = vmul.f32 %v1411, 1.442695
      %v1544 = vpow.pop %v1543
      %v1545 = vmul.f32 %v1412, 1.442695
      %v1546 = vpow.pop %v1545
      %v1547 = vmul.f32 %v1413, 1.442695
      %v1548 = vpow.pop %v1547
      %v1549 = vmul.f32 %v1414, 1.442695
      %v1550 = vpow.pop %v1549
      %v1551 = vmul.f32 %v1415, 1.442695
      %v1552 = vpow.pop %v1551
      %v1553 = vmul.f32 %v1416, 1.442695
      %v1554 = vpow.pop %v1553
      %v1555 = vmul.f32 %v1417, 1.442695
      %v1556 = vpow.pop %v1555
      %v1557 = vmul.f32 %v1418, 1.442695
      %v1558 = vpow.pop %v1557
      %v1559 = vmul.f32 %v1419, 1.442695
      %v1560 = vpow.pop %v1559
      %v1561 = vmul.f32 %v1420, 1.442695
      %v1562 = vpow.pop %v1561
      %v1563 = vmul.f32 %v1421, 1.442695
      %v1564 = vpow.pop %v1563
      %v1565 = vmul.f32 %v1422, 1.442695
      %v1566 = vpow.pop %v1565
      %v1567 = vmul.f32 %v1423, 1.442695
      %v1568 = vpow.pop %v1567
      %v1569 = vmul.f32 %v1424, 1.442695
      %v1570 = vpow.pop %v1569
      %v1571 = vmul.f32 %v1425, 1.442695
      %v1572 = vpow.pop %v1571
      %v1573 = vmul.f32 %v1426, 1.442695
      %v1574 = vpow.pop %v1573
      %v1575 = vmul.f32 %v1427, 1.442695
      %v1576 = vpow.pop %v1575
      %v1577 = vmul.f32 %v1428, 1.442695
      %v1578 = vpow.pop %v1577
      %v1579 = vmul.f32 %v1429, 1.442695
      %v1580 = vpow.pop %v1579
      %v1581 = vmul.f32 %v1430, 1.442695
      %v1582 = vpow.pop %v1581
      %v1583 = vmul.f32 %v1431, 1.442695
      %v1584 = vpow.pop %v1583
      %v1585 = vmul.f32 %v1432, 1.442695
      %v1586 = vpow.pop %v1585
      %v1587 = vmul.f32 %v1433, 1.442695
      %v1588 = vpow.pop %v1587
      %v1589 = vmul.f32 %v1434, 1.442695
      %v1590 = vpow.pop %v1589
      %v1591 = vmul.f32 %v1435, 1.442695
      %v1592 = vpow.pop %v1591
      %v1593 = vmul.f32 %v1436, 1.442695
      %v1594 = vpow.pop %v1593
      %v1595 = vmul.f32 %v1437, 1.442695
      %v1596 = vpow.pop %v1595
      %v1597 = vmul.f32 %v1438, 1.442695
      %v1598 = vpow.pop %v1597
      %v1599 = vmul.f32 %v1439, 1.442695
      %v1600 = vpow.pop %v1599
      %v1601 = vmul.f32 %v1440, 1.442695
      %v1602 = vpow.pop %v1601
      %v1603 = vmul.f32 %v1441, 1.442695
      %v1604 = vpow.pop %v1603
      %v1605 = vmul.f32 %v1442, 1.442695
      %v1606 = vpow.pop %v1605
      %v1607 = vmul.f32 %v1443, 1.442695
      %v1608 = vpow.pop %v1607
      %v1609 = vmul.f32 %v1444, 1.442695
      %v1610 = vpow.pop %v1609
      %v1611 = vmul.f32 %v1445, 1.442695
      %v1612 = vpow.pop %v1611
      %v1613 = vmul.f32 %v1446, 1.442695
      %v1614 = vpow.pop %v1613
      %v1615 = vmul.f32 %v1447, 1.442695
      %v1616 = vpow.pop %v1615
      %v1617 = vmul.f32 %v1448, 1.442695
      %v1618 = vpow.pop %v1617
      %v1619 = vmul.f32 %v1449, 1.442695
      %v1620 = vpow.pop %v1619
      %v1621 = vmul.f32 %v1450, 1.442695
      %v1622 = vpow.pop %v1621
      %v1623 = vmul.f32 %v1451, 1.442695
      %v1624 = vpow.pop %v1623
      %v1625 = vmul.f32 %v1452, 1.442695
      %v1626 = vpow.pop %v1625
      %v1627 = vmul.f32 %v1453, 1.442695
      %v1628 = vpow.pop %v1627
      %v1629 = vmul.f32 %v1454, 1.442695
      %v1630 = vpow.pop %v1629
      %v1631 = vmul.f32 %v1455, 1.442695
      %v1632 = vpow.pop %v1631
      %v1633 = vmul.f32 %v1456, 1.442695
      %v1634 = vpow.pop %v1633
      %v1635 = vmul.f32 %v1457, 1.442695
      %v1636 = vpow.pop %v1635
      %v1637 = vmul.f32 %v1458, 1.442695
      %v1638 = vpow.pop %v1637
      %v1639 = vmul.f32 %v1459, 1.442695
      %v1640 = vpow.pop %v1639
      %v1641 = vmul.f32 %v1460, 1.442695
      %v1642 = vpow.pop %v1641
      %v1643 = vmul.f32 %v1461, 1.442695
      %v1644 = vpow.pop %v1643
      %v1645 = vmul.f32 %v1462, 1.442695
      %v1646 = vpow.pop %v1645
      %v1647 = vmul.f32 %v1463, 1.442695
      %v1648 = vpow.pop %v1647
      %v1649 = vmul.f32 %v1464, 1.442695
      %v1650 = vpow.pop %v1649
      %v1651 = vmul.f32 %v1465, 1.442695
      %v1652 = vpow.pop %v1651
      %v1653 = vmul.f32 %v1466, 1.442695
      %v1654 = vpow.pop %v1653
      %v1655 = vmul.f32 %v1467, 1.442695
      %v1656 = vpow.pop %v1655
      %v1657 = vmul.f32 %v1468, 1.442695
      %v1658 = vpow.pop %v1657
      %v1659 = vmul.f32 %v1469, 1.442695
      %v1660 = vpow.pop %v1659
      %v1661 = vmul.f32 %v1470, 1.442695
      %v1662 = vpow.pop %v1661
      %v1663 = vmul.f32 %v1471, 1.442695
      %v1664 = vpow.pop %v1663
      %v1665 = vmul.f32 %v1472, 1.442695
      %v1666 = vpow.pop %v1665
      %v1667 = vmul.f32 %v1473, 1.442695
      %v1668 = vpow.pop %v1667
      %v1669 = vmul.f32 %v1474, 1.442695
      %v1670 = vpow.pop %v1669
      %v1671 = vmul.f32 %v1475, 1.442695
      %v1672 = vpow.pop %v1671
      %v1673 = vmul.f32 %v1476, 1.442695
      %v1674 = vpow.pop %v1673
      %v1675 = vmul.f32 %v1477, 1.442695
      %v1676 = vpow.pop %v1675
      %v1677 = vmul.f32 %v1478, 1.442695
      %v1678 = vpow.pop %v1677
      %v1679 = vmul.f32 %v1479, 1.442695
      %v1680 = vpow.pop %v1679
      %v1681 = vmul.f32 %v1480, 1.442695
      %v1682 = vpow.pop %v1681
      %v1683 = vmul.f32 %v1481, 1.442695
      %v1684 = vpow.pop %v1683
      %v1685 = vmul.f32 %v1482, 1.442695
      %v1686 = vpow.pop %v1685
      %v1687 = vmul.f32 %v1483, 1.442695
      %v1688 = vpow.pop %v1687
      %v1689 = vmul.f32 %v1484, 1.442695
      %v1690 = vpow.pop %v1689
      %v1691 = vmul.f32 %v1485, 1.442695
      %v1692 = vpow.pop %v1691
      %v1693 = vmul.f32 %v1486, 1.442695
      %v1694 = vpow.pop %v1693
      %v1695 = vmul.f32 %v1487, 1.442695
      %v1696 = vpow.pop %v1695
      %v1697 = vmul.f32 %v1488, 1.442695
      %v1698 = vpow.pop %v1697
      %v1699 = vmul.f32 %v1489, 1.442695
      %v1700 = vpow.pop %v1699
      %v1701 = vmul.f32 %v1490, 1.442695
      %v1702 = vpow.pop %v1701
      %v1703 = vmul.f32 %v1491, 1.442695
      %v1704 = vpow.pop %v1703
      %v1705 = vmul.f32 %v1492, 1.442695
      %v1706 = vpow.pop %v1705
      %v1707 = vmul.f32 %v1493, 1.442695
      %v1708 = vpow.pop %v1707
      %v1709 = vmul.f32 %v1494, 1.442695
      %v1710 = vpow.pop %v1709
      %v1711 = vmul.f32 %v1495, 1.442695
      %v1712 = vpow.pop %v1711
      %v1713 = vmul.f32 %v1496, 1.442695
      %v1714 = vpow.pop %v1713
      %v1715 = vmul.f32 %v1497, 1.442695
      %v1716 = vpow.pop %v1715
      %v1717 = vmul.f32 %v1498, 1.442695
      %v1718 = vpow.pop %v1717
      %v1719 = vmul.f32 %v1499, 1.442695
      %v1720 = vpow.pop %v1719
      %v1721 = vmul.f32 %v1500, 1.442695
      %v1722 = vpow.pop %v1721
      %v1723 = vmul.f32 %v1501, 1.442695
      %v1724 = vpow.pop %v1723
      %v1725 = vmul.f32 %v1502, 1.442695
      %v1726 = vpow.pop %v1725
      %v1727 = vmul.f32 %v1503, 1.442695
      %v1728 = vpow.pop %v1727
      %v1729 = vmul.f32 %v1504, 1.442695
      %v1730 = vpow.pop %v1729
      %v1731 = vmul.f32 %v1505, 1.442695
      %v1732 = vpow.pop %v1731
      %v1733 = vmul.f32 %v1506, 1.442695
      %v1734 = vpow.pop %v1733
      %v1735 = vmul.f32 %v1507, 1.442695
      %v1736 = vpow.pop %v1735
      %v1737 = vmul.f32 %v1508, 1.442695
      %v1738 = vpow.pop %v1737
      %v1739 = vmul.f32 %v1509, 1.442695
      %v1740 = vpow.pop %v1739
      %v1741 = vmul.f32 %v1510, 1.442695
      %v1742 = vpow.pop %v1741
      %v1743 = vmul.f32 %v1511, 1.442695
      %v1744 = vpow.pop %v1743
      %v1745 = vmul.f32 %v1512, 1.442695
      %v1746 = vpow.pop %v1745
      %v1747 = vmul.f32 %v1513, 1.442695
      %v1748 = vpow.pop %v1747
      %v1749 = vmul.f32 %v1514, 1.442695
      %v1750 = vpow.pop %v1749
      %v1751 = vmul.f32 %v1515, 1.442695
      %v1752 = vpow.pop %v1751
      %v1753 = vmul.f32 %v1516, 1.442695
      %v1754 = vpow.pop %v1753
      %v1755 = vmul.f32 %v1517, 1.442695
      %v1756 = vpow.pop %v1755
      %v1757 = vmul.f32 %v1518, 1.442695
      %v1758 = vpow.pop %v1757
      %v1759 = vmul.f32 %v1519, 1.442695
      %v1760 = vpow.pop %v1759
      %v1761 = vmul.f32 %v1520, 1.442695
      %v1762 = vpow.pop %v1761
      %v1763 = vmul.f32 %v1521, 1.442695
      %v1764 = vpow.pop %v1763
      %v1765 = vmul.f32 %v1522, 1.442695
      %v1766 = vpow.pop %v1765
      %v1767 = vmul.f32 %v1523, 1.442695
      %v1768 = vpow.pop %v1767
      %v1769 = vmul.f32 %v1524, 1.442695
      %v1770 = vpow.pop %v1769
      %v1771 = vmul.f32 %v1525, 1.442695
      %v1772 = vpow.pop %v1771
      %v1773 = vmul.f32 %v1526, 1.442695
      %v1774 = vpow.pop %v1773
      %v1775 = vmul.f32 %v1527, 1.442695
      %v1776 = vpow.pop %v1775
      %v1777 = vmul.f32 %v1528, 1.442695
      %v1778 = vpow.pop %v1777
      %v1779 = vmul.f32 %v1529, 1.442695
      %v1780 = vpow.pop %v1779
      %v1781 = vmul.f32 %v1530, 1.442695
      %v1782 = vpow.pop %v1781
      %v1783 = vmul.f32 %v1531, 1.442695
      %v1784 = vpow.pop %v1783
      %v1785 = vmul.f32 %v1532, 1.442695
      %v1786 = vpow.pop %v1785
      %v1787 = vmul.f32 %v1533, 1.442695
      %v1788 = vpow.pop %v1787
      %v1789 = vmul.f32 %v1534, 1.442695
      %v1790 = vpow.pop %v1789
      %v1791 = vsub.f32 %v1536, 1.0
      %v1792 = vsub.f32 %v1538, 1.0
      %v1793 = vsub.f32 %v1540, 1.0
      %v1794 = vsub.f32 %v1542, 1.0
      %v1795 = vsub.f32 %v1544, 1.0
      %v1796 = vsub.f32 %v1546, 1.0
      %v1797 = vsub.f32 %v1548, 1.0
      %v1798 = vsub.f32 %v1550, 1.0
      %v1799 = vsub.f32 %v1552, 1.0
      %v1800 = vsub.f32 %v1554, 1.0
      %v1801 = vsub.f32 %v1556, 1.0
      %v1802 = vsub.f32 %v1558, 1.0
      %v1803 = vsub.f32 %v1560, 1.0
      %v1804 = vsub.f32 %v1562, 1.0
      %v1805 = vsub.f32 %v1564, 1.0
      %v1806 = vsub.f32 %v1566, 1.0
      %v1807 = vsub.f32 %v1568, 1.0
      %v1808 = vsub.f32 %v1570, 1.0
      %v1809 = vsub.f32 %v1572, 1.0
      %v1810 = vsub.f32 %v1574, 1.0
      %v1811 = vsub.f32 %v1576, 1.0
      %v1812 = vsub.f32 %v1578, 1.0
      %v1813 = vsub.f32 %v1580, 1.0
      %v1814 = vsub.f32 %v1582, 1.0
      %v1815 = vsub.f32 %v1584, 1.0
      %v1816 = vsub.f32 %v1586, 1.0
      %v1817 = vsub.f32 %v1588, 1.0
      %v1818 = vsub.f32 %v1590, 1.0
      %v1819 = vsub.f32 %v1592, 1.0
      %v1820 = vsub.f32 %v1594, 1.0
      %v1821 = vsub.f32 %v1596, 1.0
      %v1822 = vsub.f32 %v1598, 1.0
      %v1823 = vsub.f32 %v1600, 1.0
      %v1824 = vsub.f32 %v1602, 1.0
      %v1825 = vsub.f32 %v1604, 1.0
      %v1826 = vsub.f32 %v1606, 1.0
      %v1827 = vsub.f32 %v1608, 1.0
      %v1828 = vsub.f32 %v1610, 1.0
      %v1829 = vsub.f32 %v1612, 1.0
      %v1830 = vsub.f32 %v1614, 1.0
      %v1831 = vsub.f32 %v1616, 1.0
      %v1832 = vsub.f32 %v1618, 1.0
      %v1833 = vsub.f32 %v1620, 1.0
      %v1834 = vsub.f32 %v1622, 1.0
      %v1835 = vsub.f32 %v1624, 1.0
      %v1836 = vsub.f32 %v1626, 1.0
      %v1837 = vsub.f32 %v1628, 1.0
      %v1838 = vsub.f32 %v1630, 1.0
      %v1839 = vsub.f32 %v1632, 1.0
      %v1840 = vsub.f32 %v1634, 1.0
      %v1841 = vsub.f32 %v1636, 1.0
      %v1842 = vsub.f32 %v1638, 1.0
      %v1843 = vsub.f32 %v1640, 1.0
      %v1844 = vsub.f32 %v1642, 1.0
      %v1845 = vsub.f32 %v1644, 1.0
      %v1846 = vsub.f32 %v1646, 1.0
      %v1847 = vsub.f32 %v1648, 1.0
      %v1848 = vsub.f32 %v1650, 1.0
      %v1849 = vsub.f32 %v1652, 1.0
      %v1850 = vsub.f32 %v1654, 1.0
      %v1851 = vsub.f32 %v1656, 1.0
      %v1852 = vsub.f32 %v1658, 1.0
      %v1853 = vsub.f32 %v1660, 1.0
      %v1854 = vsub.f32 %v1662, 1.0
      %v1855 = vsub.f32 %v1664, 1.0
      %v1856 = vsub.f32 %v1666, 1.0
      %v1857 = vsub.f32 %v1668, 1.0
      %v1858 = vsub.f32 %v1670, 1.0
      %v1859 = vsub.f32 %v1672, 1.0
      %v1860 = vsub.f32 %v1674, 1.0
      %v1861 = vsub.f32 %v1676, 1.0
      %v1862 = vsub.f32 %v1678, 1.0
      %v1863 = vsub.f32 %v1680, 1.0
      %v1864 = vsub.f32 %v1682, 1.0
      %v1865 = vsub.f32 %v1684, 1.0
      %v1866 = vsub.f32 %v1686, 1.0
      %v1867 = vsub.f32 %v1688, 1.0
      %v1868 = vsub.f32 %v1690, 1.0
      %v1869 = vsub.f32 %v1692, 1.0
      %v1870 = vsub.f32 %v1694, 1.0
      %v1871 = vsub.f32 %v1696, 1.0
      %v1872 = vsub.f32 %v1698, 1.0
      %v1873 = vsub.f32 %v1700, 1.0
      %v1874 = vsub.f32 %v1702, 1.0
      %v1875 = vsub.f32 %v1704, 1.0
      %v1876 = vsub.f32 %v1706, 1.0
      %v1877 = vsub.f32 %v1708, 1.0
      %v1878 = vsub.f32 %v1710, 1.0
      %v1879 = vsub.f32 %v1712, 1.0
      %v1880 = vsub.f32 %v1714, 1.0
      %v1881 = vsub.f32 %v1716, 1.0
      %v1882 = vsub.f32 %v1718, 1.0
      %v1883 = vsub.f32 %v1720, 1.0
      %v1884 = vsub.f32 %v1722, 1.0
      %v1885 = vsub.f32 %v1724, 1.0
      %v1886 = vsub.f32 %v1726, 1.0
      %v1887 = vsub.f32 %v1728, 1.0
      %v1888 = vsub.f32 %v1730, 1.0
      %v1889 = vsub.f32 %v1732, 1.0
      %v1890 = vsub.f32 %v1734, 1.0
      %v1891 = vsub.f32 %v1736, 1.0
      %v1892 = vsub.f32 %v1738, 1.0
      %v1893 = vsub.f32 %v1740, 1.0
      %v1894 = vsub.f32 %v1742, 1.0
      %v1895 = vsub.f32 %v1744, 1.0
      %v1896 = vsub.f32 %v1746, 1.0
      %v1897 = vsub.f32 %v1748, 1.0
      %v1898 = vsub.f32 %v1750, 1.0
      %v1899 = vsub.f32 %v1752, 1.0
      %v1900 = vsub.f32 %v1754, 1.0
      %v1901 = vsub.f32 %v1756, 1.0
      %v1902 = vsub.f32 %v1758, 1.0
      %v1903 = vsub.f32 %v1760, 1.0
      %v1904 = vsub.f32 %v1762, 1.0
      %v1905 = vsub.f32 %v1764, 1.0
      %v1906 = vsub.f32 %v1766, 1.0
      %v1907 = vsub.f32 %v1768, 1.0
      %v1908 = vsub.f32 %v1770, 1.0
      %v1909 = vsub.f32 %v1772, 1.0
      %v1910 = vsub.f32 %v1774, 1.0
      %v1911 = vsub.f32 %v1776, 1.0
      %v1912 = vsub.f32 %v1778, 1.0
      %v1913 = vsub.f32 %v1780, 1.0
      %v1914 = vsub.f32 %v1782, 1.0
      %v1915 = vsub.f32 %v1784, 1.0
      %v1916 = vsub.f32 %v1786, 1.0
      %v1917 = vsub.f32 %v1788, 1.0
      %v1918 = vsub.f32 %v1790, 1.0
      %v1919 = vmul.f32 %v1791, 1.6732632
      %v1920 = vmul.f32 %v1792, 1.6732632
      %v1921 = vmul.f32 %v1793, 1.6732632
      %v1922 = vmul.f32 %v1794, 1.6732632
      %v1923 = vmul.f32 %v1795, 1.6732632
      %v1924 = vmul.f32 %v1796, 1.6732632
      %v1925 = vmul.f32 %v1797, 1.6732632
      %v1926 = vmul.f32 %v1798, 1.6732632
      %v1927 = vmul.f32 %v1799, 1.6732632
      %v1928 = vmul.f32 %v1800, 1.6732632
      %v1929 = vmul.f32 %v1801, 1.6732632
      %v1930 = vmul.f32 %v1802, 1.6732632
      %v1931 = vmul.f32 %v1803, 1.6732632
      %v1932 = vmul.f32 %v1804, 1.6732632
      %v1933 = vmul.f32 %v1805, 1.6732632
      %v1934 = vmul.f32 %v1806, 1.6732632
      %v1935 = vmul.f32 %v1807, 1.6732632
      %v1936 = vmul.f32 %v1808, 1.6732632
      %v1937 = vmul.f32 %v1809, 1.6732632
      %v1938 = vmul.f32 %v1810, 1.6732632
      %v1939 = vmul.f32 %v1811, 1.6732632
      %v1940 = vmul.f32 %v1812, 1.6732632
      %v1941 = vmul.f32 %v1813, 1.6732632
      %v1942 = vmul.f32 %v1814, 1.6732632
      %v1943 = vmul.f32 %v1815, 1.6732632
      %v1944 = vmul.f32 %v1816, 1.6732632
      %v1945 = vmul.f32 %v1817, 1.6732632
      %v1946 = vmul.f32 %v1818, 1.6732632
      %v1947 = vmul.f32 %v1819, 1.6732632
      %v1948 = vmul.f32 %v1820, 1.6732632
      %v1949 = vmul.f32 %v1821, 1.6732632
      %v1950 = vmul.f32 %v1822, 1.6732632
      %v1951 = vmul.f32 %v1823, 1.6732632
      %v1952 = vmul.f32 %v1824, 1.6732632
      %v1953 = vmul.f32 %v1825, 1.6732632
      %v1954 = vmul.f32 %v1826, 1.6732632
      %v1955 = vmul.f32 %v1827, 1.6732632
      %v1956 = vmul.f32 %v1828, 1.6732632
      %v1957 = vmul.f32 %v1829, 1.6732632
      %v1958 = vmul.f32 %v1830, 1.6732632
      %v1959 = vmul.f32 %v1831, 1.6732632
      %v1960 = vmul.f32 %v1832, 1.6732632
      %v1961 = vmul.f32 %v1833, 1.6732632
      %v1962 = vmul.f32 %v1834, 1.6732632
      %v1963 = vmul.f32 %v1835, 1.6732632
      %v1964 = vmul.f32 %v1836, 1.6732632
      %v1965 = vmul.f32 %v1837, 1.6732632
      %v1966 = vmul.f32 %v1838, 1.6732632
      %v1967 = vmul.f32 %v1839, 1.6732632
      %v1968 = vmul.f32 %v1840, 1.6732632
      %v1969 = vmul.f32 %v1841, 1.6732632
      %v1970 = vmul.f32 %v1842, 1.6732632
      %v1971 = vmul.f32 %v1843, 1.6732632
      %v1972 = vmul.f32 %v1844, 1.6732632
      %v1973 = vmul.f32 %v1845, 1.6732632
      %v1974 = vmul.f32 %v1846, 1.6732632
      %v1975 = vmul.f32 %v1847, 1.6732632
      %v1976 = vmul.f32 %v1848, 1.6732632
      %v1977 = vmul.f32 %v1849, 1.6732632
      %v1978 = vmul.f32 %v1850, 1.6732632
      %v1979 = vmul.f32 %v1851, 1.6732632
      %v1980 = vmul.f32 %v1852, 1.6732632
      %v1981 = vmul.f32 %v1853, 1.6732632
      %v1982 = vmul.f32 %v1854, 1.6732632
      %v1983 = vmul.f32 %v1855, 1.6732632
      %v1984 = vmul.f32 %v1856, 1.6732632
      %v1985 = vmul.f32 %v1857, 1.6732632
      %v1986 = vmul.f32 %v1858, 1.6732632
      %v1987 = vmul.f32 %v1859, 1.6732632
      %v1988 = vmul.f32 %v1860, 1.6732632
      %v1989 = vmul.f32 %v1861, 1.6732632
      %v1990 = vmul.f32 %v1862, 1.6732632
      %v1991 = vmul.f32 %v1863, 1.6732632
      %v1992 = vmul.f32 %v1864, 1.6732632
      %v1993 = vmul.f32 %v1865, 1.6732632
      %v1994 = vmul.f32 %v1866, 1.6732632
      %v1995 = vmul.f32 %v1867, 1.6732632
      %v1996 = vmul.f32 %v1868, 1.6732632
      %v1997 = vmul.f32 %v1869, 1.6732632
      %v1998 = vmul.f32 %v1870, 1.6732632
      %v1999 = vmul.f32 %v1871, 1.6732632
      %v2000 = vmul.f32 %v1872, 1.6732632
      %v2001 = vmul.f32 %v1873, 1.6732632
      %v2002 = vmul.f32 %v1874, 1.6732632
      %v2003 = vmul.f32 %v1875, 1.6732632
      %v2004 = vmul.f32 %v1876, 1.6732632
      %v2005 = vmul.f32 %v1877, 1.6732632
      %v2006 = vmul.f32 %v1878, 1.6732632
      %v2007 = vmul.f32 %v1879, 1.6732632
      %v2008 = vmul.f32 %v1880, 1.6732632
      %v2009 = vmul.f32 %v1881, 1.6732632
      %v2010 = vmul.f32 %v1882, 1.6732632
      %v2011 = vmul.f32 %v1883, 1.6732632
      %v2012 = vmul.f32 %v1884, 1.6732632
      %v2013 = vmul.f32 %v1885, 1.6732632
      %v2014 = vmul.f32 %v1886, 1.6732632
      %v2015 = vmul.f32 %v1887, 1.6732632
      %v2016 = vmul.f32 %v1888, 1.6732632
      %v2017 = vmul.f32 %v1889, 1.6732632
      %v2018 = vmul.f32 %v1890, 1.6732632
      %v2019 = vmul.f32 %v1891, 1.6732632
      %v2020 = vmul.f32 %v1892, 1.6732632
      %v2021 = vmul.f32 %v1893, 1.6732632
      %v2022 = vmul.f32 %v1894, 1.6732632
      %v2023 = vmul.f32 %v1895, 1.6732632
      %v2024 = vmul.f32 %v1896, 1.6732632
      %v2025 = vmul.f32 %v1897, 1.6732632
      %v2026 = vmul.f32 %v1898, 1.6732632
      %v2027 = vmul.f32 %v1899, 1.6732632
      %v2028 = vmul.f32 %v1900, 1.6732632
      %v2029 = vmul.f32 %v1901, 1.6732632
      %v2030 = vmul.f32 %v1902, 1.6732632
      %v2031 = vmul.f32 %v1903, 1.6732632
      %v2032 = vmul.f32 %v1904, 1.6732632
      %v2033 = vmul.f32 %v1905, 1.6732632
      %v2034 = vmul.f32 %v1906, 1.6732632
      %v2035 = vmul.f32 %v1907, 1.6732632
      %v2036 = vmul.f32 %v1908, 1.6732632
      %v2037 = vmul.f32 %v1909, 1.6732632
      %v2038 = vmul.f32 %v1910, 1.6732632
      %v2039 = vmul.f32 %v1911, 1.6732632
      %v2040 = vmul.f32 %v1912, 1.6732632
      %v2041 = vmul.f32 %v1913, 1.6732632
      %v2042 = vmul.f32 %v1914, 1.6732632
      %v2043 = vmul.f32 %v1915, 1.6732632
      %v2044 = vmul.f32 %v1916, 1.6732632
      %v2045 = vmul.f32 %v1917, 1.6732632
      %v2046 = vmul.f32 %v1918, 1.6732632
      %vm2047 = vcmp.gt.f32.partialorder %v769, 0.0
      %vm2048 = vcmp.gt.f32.partialorder %v774, 0.0
      %vm2049 = vcmp.gt.f32.partialorder %v779, 0.0
      %vm2050 = vcmp.gt.f32.partialorder %v784, 0.0
      %vm2051 = vcmp.gt.f32.partialorder %v789, 0.0
      %vm2052 = vcmp.gt.f32.partialorder %v794, 0.0
      %vm2053 = vcmp.gt.f32.partialorder %v799, 0.0
      %vm2054 = vcmp.gt.f32.partialorder %v804, 0.0
      %vm2055 = vcmp.gt.f32.partialorder %v809, 0.0
      %vm2056 = vcmp.gt.f32.partialorder %v814, 0.0
      %vm2057 = vcmp.gt.f32.partialorder %v819, 0.0
      %vm2058 = vcmp.gt.f32.partialorder %v824, 0.0
      %vm2059 = vcmp.gt.f32.partialorder %v829, 0.0
      %vm2060 = vcmp.gt.f32.partialorder %v834, 0.0
      %vm2061 = vcmp.gt.f32.partialorder %v839, 0.0
      %vm2062 = vcmp.gt.f32.partialorder %v844, 0.0
      %vm2063 = vcmp.gt.f32.partialorder %v849, 0.0
      %vm2064 = vcmp.gt.f32.partialorder %v854, 0.0
      %vm2065 = vcmp.gt.f32.partialorder %v859, 0.0
      %vm2066 = vcmp.gt.f32.partialorder %v864, 0.0
      %vm2067 = vcmp.gt.f32.partialorder %v869, 0.0
      %vm2068 = vcmp.gt.f32.partialorder %v874, 0.0
      %vm2069 = vcmp.gt.f32.partialorder %v879, 0.0
      %vm2070 = vcmp.gt.f32.partialorder %v884, 0.0
      %vm2071 = vcmp.gt.f32.partialorder %v889, 0.0
      %vm2072 = vcmp.gt.f32.partialorder %v894, 0.0
      %vm2073 = vcmp.gt.f32.partialorder %v899, 0.0
      %vm2074 = vcmp.gt.f32.partialorder %v904, 0.0
      %vm2075 = vcmp.gt.f32.partialorder %v909, 0.0
      %vm2076 = vcmp.gt.f32.partialorder %v914, 0.0
      %vm2077 = vcmp.gt.f32.partialorder %v919, 0.0
      %vm2078 = vcmp.gt.f32.partialorder %v924, 0.0
      %vm2079 = vcmp.gt.f32.partialorder %v929, 0.0
      %vm2080 = vcmp.gt.f32.partialorder %v934, 0.0
      %vm2081 = vcmp.gt.f32.partialorder %v939, 0.0
      %vm2082 = vcmp.gt.f32.partialorder %v944, 0.0
      %vm2083 = vcmp.gt.f32.partialorder %v949, 0.0
      %vm2084 = vcmp.gt.f32.partialorder %v954, 0.0
      %vm2085 = vcmp.gt.f32.partialorder %v959, 0.0
      %vm2086 = vcmp.gt.f32.partialorder %v964, 0.0
      %vm2087 = vcmp.gt.f32.partialorder %v969, 0.0
      %vm2088 = vcmp.gt.f32.partialorder %v974, 0.0
      %vm2089 = vcmp.gt.f32.partialorder %v979, 0.0
      %vm2090 = vcmp.gt.f32.partialorder %v984, 0.0
      %vm2091 = vcmp.gt.f32.partialorder %v989, 0.0
      %vm2092 = vcmp.gt.f32.partialorder %v994, 0.0
      %vm2093 = vcmp.gt.f32.partialorder %v999, 0.0
      %vm2094 = vcmp.gt.f32.partialorder %v1004, 0.0
      %vm2095 = vcmp.gt.f32.partialorder %v1009, 0.0
      %vm2096 = vcmp.gt.f32.partialorder %v1014, 0.0
      %vm2097 = vcmp.gt.f32.partialorder %v1019, 0.0
      %vm2098 = vcmp.gt.f32.partialorder %v1024, 0.0
      %vm2099 = vcmp.gt.f32.partialorder %v1029, 0.0
      %vm2100 = vcmp.gt.f32.partialorder %v1034, 0.0
      %vm2101 = vcmp.gt.f32.partialorder %v1039, 0.0
      %vm2102 = vcmp.gt.f32.partialorder %v1044, 0.0
      %vm2103 = vcmp.gt.f32.partialorder %v1049, 0.0
      %vm2104 = vcmp.gt.f32.partialorder %v1054, 0.0
      %vm2105 = vcmp.gt.f32.partialorder %v1059, 0.0
      %vm2106 = vcmp.gt.f32.partialorder %v1064, 0.0
      %vm2107 = vcmp.gt.f32.partialorder %v1069, 0.0
      %vm2108 = vcmp.gt.f32.partialorder %v1074, 0.0
      %vm2109 = vcmp.gt.f32.partialorder %v1079, 0.0
      %vm2110 = vcmp.gt.f32.partialorder %v1084, 0.0
      %vm2111 = vcmp.gt.f32.partialorder %v1089, 0.0
      %vm2112 = vcmp.gt.f32.partialorder %v1094, 0.0
      %vm2113 = vcmp.gt.f32.partialorder %v1099, 0.0
      %vm2114 = vcmp.gt.f32.partialorder %v1104, 0.0
      %vm2115 = vcmp.gt.f32.partialorder %v1109, 0.0
      %vm2116 = vcmp.gt.f32.partialorder %v1114, 0.0
      %vm2117 = vcmp.gt.f32.partialorder %v1119, 0.0
      %vm2118 = vcmp.gt.f32.partialorder %v1124, 0.0
      %vm2119 = vcmp.gt.f32.partialorder %v1129, 0.0
      %vm2120 = vcmp.gt.f32.partialorder %v1134, 0.0
      %vm2121 = vcmp.gt.f32.partialorder %v1139, 0.0
      %vm2122 = vcmp.gt.f32.partialorder %v1144, 0.0
      %vm2123 = vcmp.gt.f32.partialorder %v1149, 0.0
      %vm2124 = vcmp.gt.f32.partialorder %v1154, 0.0
      %vm2125 = vcmp.gt.f32.partialorder %v1159, 0.0
      %vm2126 = vcmp.gt.f32.partialorder %v1164, 0.0
      %vm2127 = vcmp.gt.f32.partialorder %v1169, 0.0
      %vm2128 = vcmp.gt.f32.partialorder %v1174, 0.0
      %vm2129 = vcmp.gt.f32.partialorder %v1179, 0.0
      %vm2130 = vcmp.gt.f32.partialorder %v1184, 0.0
      %vm2131 = vcmp.gt.f32.partialorder %v1189, 0.0
      %vm2132 = vcmp.gt.f32.partialorder %v1194, 0.0
      %vm2133 = vcmp.gt.f32.partialorder %v1199, 0.0
      %vm2134 = vcmp.gt.f32.partialorder %v1204, 0.0
      %vm2135 = vcmp.gt.f32.partialorder %v1209, 0.0
      %vm2136 = vcmp.gt.f32.partialorder %v1214, 0.0
      %vm2137 = vcmp.gt.f32.partialorder %v1219, 0.0
      %vm2138 = vcmp.gt.f32.partialorder %v1224, 0.0
      %vm2139 = vcmp.gt.f32.partialorder %v1229, 0.0
      %vm2140 = vcmp.gt.f32.partialorder %v1234, 0.0
      %vm2141 = vcmp.gt.f32.partialorder %v1239, 0.0
      %vm2142 = vcmp.gt.f32.partialorder %v1244, 0.0
      %vm2143 = vcmp.gt.f32.partialorder %v1249, 0.0
      %vm2144 = vcmp.gt.f32.partialorder %v1254, 0.0
      %vm2145 = vcmp.gt.f32.partialorder %v1259, 0.0
      %vm2146 = vcmp.gt.f32.partialorder %v1264, 0.0
      %vm2147 = vcmp.gt.f32.partialorder %v1269, 0.0
      %vm2148 = vcmp.gt.f32.partialorder %v1274, 0.0
      %vm2149 = vcmp.gt.f32.partialorder %v1279, 0.0
      %vm2150 = vcmp.gt.f32.partialorder %v1284, 0.0
      %vm2151 = vcmp.gt.f32.partialorder %v1289, 0.0
      %vm2152 = vcmp.gt.f32.partialorder %v1294, 0.0
      %vm2153 = vcmp.gt.f32.partialorder %v1299, 0.0
      %vm2154 = vcmp.gt.f32.partialorder %v1304, 0.0
      %vm2155 = vcmp.gt.f32.partialorder %v1309, 0.0
      %vm2156 = vcmp.gt.f32.partialorder %v1314, 0.0
      %vm2157 = vcmp.gt.f32.partialorder %v1319, 0.0
      %vm2158 = vcmp.gt.f32.partialorder %v1324, 0.0
      %vm2159 = vcmp.gt.f32.partialorder %v1329, 0.0
      %vm2160 = vcmp.gt.f32.partialorder %v1334, 0.0
      %vm2161 = vcmp.gt.f32.partialorder %v1339, 0.0
      %vm2162 = vcmp.gt.f32.partialorder %v1344, 0.0
      %vm2163 = vcmp.gt.f32.partialorder %v1349, 0.0
      %vm2164 = vcmp.gt.f32.partialorder %v1354, 0.0
      %vm2165 = vcmp.gt.f32.partialorder %v1359, 0.0
      %vm2166 = vcmp.gt.f32.partialorder %v1364, 0.0
      %vm2167 = vcmp.gt.f32.partialorder %v1369, 0.0
      %vm2168 = vcmp.gt.f32.partialorder %v1374, 0.0
      %vm2169 = vcmp.gt.f32.partialorder %v1379, 0.0
      %vm2170 = vcmp.gt.f32.partialorder %v1384, 0.0
      %vm2171 = vcmp.gt.f32.partialorder %v1389, 0.0
      %vm2172 = vcmp.gt.f32.partialorder %v1394, 0.0
      %vm2173 = vcmp.gt.f32.partialorder %v1399, 0.0
      %vm2174 = vcmp.gt.f32.partialorder %v1404, 0.0
      %v2175 = vsel %vm2047, %v769, %v1919
      %v2176 = vsel %vm2048, %v774, %v1920
      %v2177 = vsel %vm2049, %v779, %v1921
      %v2178 = vsel %vm2050, %v784, %v1922
      %v2179 = vsel %vm2051, %v789, %v1923
      %v2180 = vsel %vm2052, %v794, %v1924
      %v2181 = vsel %vm2053, %v799, %v1925
      %v2182 = vsel %vm2054, %v804, %v1926
      %v2183 = vsel %vm2055, %v809, %v1927
      %v2184 = vsel %vm2056, %v814, %v1928
      %v2185 = vsel %vm2057, %v819, %v1929
      %v2186 = vsel %vm2058, %v824, %v1930
      %v2187 = vsel %vm2059, %v829, %v1931
      %v2188 = vsel %vm2060, %v834, %v1932
      %v2189 = vsel %vm2061, %v839, %v1933
      %v2190 = vsel %vm2062, %v844, %v1934
      %v2191 = vsel %vm2063, %v849, %v1935
      %v2192 = vsel %vm2064, %v854, %v1936
      %v2193 = vsel %vm2065, %v859, %v1937
      %v2194 = vsel %vm2066, %v864, %v1938
      %v2195 = vsel %vm2067, %v869, %v1939
      %v2196 = vsel %vm2068, %v874, %v1940
      %v2197 = vsel %vm2069, %v879, %v1941
      %v2198 = vsel %vm2070, %v884, %v1942
      %v2199 = vsel %vm2071, %v889, %v1943
      %v2200 = vsel %vm2072, %v894, %v1944
      %v2201 = vsel %vm2073, %v899, %v1945
      %v2202 = vsel %vm2074, %v904, %v1946
      %v2203 = vsel %vm2075, %v909, %v1947
      %v2204 = vsel %vm2076, %v914, %v1948
      %v2205 = vsel %vm2077, %v919, %v1949
      %v2206 = vsel %vm2078, %v924, %v1950
      %v2207 = vsel %vm2079, %v929, %v1951
      %v2208 = vsel %vm2080, %v934, %v1952
      %v2209 = vsel %vm2081, %v939, %v1953
      %v2210 = vsel %vm2082, %v944, %v1954
      %v2211 = vsel %vm2083, %v949, %v1955
      %v2212 = vsel %vm2084, %v954, %v1956
      %v2213 = vsel %vm2085, %v959, %v1957
      %v2214 = vsel %vm2086, %v964, %v1958
      %v2215 = vsel %vm2087, %v969, %v1959
      %v2216 = vsel %vm2088, %v974, %v1960
      %v2217 = vsel %vm2089, %v979, %v1961
      %v2218 = vsel %vm2090, %v984, %v1962
      %v2219 = vsel %vm2091, %v989, %v1963
      %v2220 = vsel %vm2092, %v994, %v1964
      %v2221 = vsel %vm2093, %v999, %v1965
      %v2222 = vsel %vm2094, %v1004, %v1966
      %v2223 = vsel %vm2095, %v1009, %v1967
      %v2224 = vsel %vm2096, %v1014, %v1968
      %v2225 = vsel %vm2097, %v1019, %v1969
      %v2226 = vsel %vm2098, %v1024, %v1970
      %v2227 = vsel %vm2099, %v1029, %v1971
      %v2228 = vsel %vm2100, %v1034, %v1972
      %v2229 = vsel %vm2101, %v1039, %v1973
      %v2230 = vsel %vm2102, %v1044, %v1974
      %v2231 = vsel %vm2103, %v1049, %v1975
      %v2232 = vsel %vm2104, %v1054, %v1976
      %v2233 = vsel %vm2105, %v1059, %v1977
      %v2234 = vsel %vm2106, %v1064, %v1978
      %v2235 = vsel %vm2107, %v1069, %v1979
      %v2236 = vsel %vm2108, %v1074, %v1980
      %v2237 = vsel %vm2109, %v1079, %v1981
      %v2238 = vsel %vm2110, %v1084, %v1982
      %v2239 = vsel %vm2111, %v1089, %v1983
      %v2240 = vsel %vm2112, %v1094, %v1984
      %v2241 = vsel %vm2113, %v1099, %v1985
      %v2242 = vsel %vm2114, %v1104, %v1986
      %v2243 = vsel %vm2115, %v1109, %v1987
      %v2244 = vsel %vm2116, %v1114, %v1988
      %v2245 = vsel %vm2117, %v1119, %v1989
      %v2246 = vsel %vm2118, %v1124, %v1990
      %v2247 = vsel %vm2119, %v1129, %v1991
      %v2248 = vsel %vm2120, %v1134, %v1992
      %v2249 = vsel %vm2121, %v1139, %v1993
      %v2250 = vsel %vm2122, %v1144, %v1994
      %v2251 = vsel %vm2123, %v1149, %v1995
      %v2252 = vsel %vm2124, %v1154, %v1996
      %v2253 = vsel %vm2125, %v1159, %v1997
      %v2254 = vsel %vm2126, %v1164, %v1998
      %v2255 = vsel %vm2127, %v1169, %v1999
      %v2256 = vsel %vm2128, %v1174, %v2000
      %v2257 = vsel %vm2129, %v1179, %v2001
      %v2258 = vsel %vm2130, %v1184, %v2002
      %v2259 = vsel %vm2131, %v1189, %v2003
      %v2260 = vsel %vm2132, %v1194, %v2004
      %v2261 = vsel %vm2133, %v1199, %v2005
      %v2262 = vsel %vm2134, %v1204, %v2006
      %v2263 = vsel %vm2135, %v1209, %v2007
      %v2264 = vsel %vm2136, %v1214, %v2008
      %v2265 = vsel %vm2137, %v1219, %v2009
      %v2266 = vsel %vm2138, %v1224, %v2010
      %v2267 = vsel %vm2139, %v1229, %v2011
      %v2268 = vsel %vm2140, %v1234, %v2012
      %v2269 = vsel %vm2141, %v1239, %v2013
      %v2270 = vsel %vm2142, %v1244, %v2014
      %v2271 = vsel %vm2143, %v1249, %v2015
      %v2272 = vsel %vm2144, %v1254, %v2016
      %v2273 = vsel %vm2145, %v1259, %v2017
      %v2274 = vsel %vm2146, %v1264, %v2018
      %v2275 = vsel %vm2147, %v1269, %v2019
      %v2276 = vsel %vm2148, %v1274, %v2020
      %v2277 = vsel %vm2149, %v1279, %v2021
      %v2278 = vsel %vm2150, %v1284, %v2022
      %v2279 = vsel %vm2151, %v1289, %v2023
      %v2280 = vsel %vm2152, %v1294, %v2024
      %v2281 = vsel %vm2153, %v1299, %v2025
      %v2282 = vsel %vm2154, %v1304, %v2026
      %v2283 = vsel %vm2155, %v1309, %v2027
      %v2284 = vsel %vm2156, %v1314, %v2028
      %v2285 = vsel %vm2157, %v1319, %v2029
      %v2286 = vsel %vm2158, %v1324, %v2030
      %v2287 = vsel %vm2159, %v1329, %v2031
      %v2288 = vsel %vm2160, %v1334, %v2032
      %v2289 = vsel %vm2161, %v1339, %v2033
      %v2290 = vsel %vm2162, %v1344, %v2034
      %v2291 = vsel %vm2163, %v1349, %v2035
      %v2292 = vsel %vm2164, %v1354, %v2036
      %v2293 = vsel %vm2165, %v1359, %v2037
      %v2294 = vsel %vm2166, %v1364, %v2038
      %v2295 = vsel %vm2167, %v1369, %v2039
      %v2296 = vsel %vm2168, %v1374, %v2040
      %v2297 = vsel %vm2169, %v1379, %v2041
      %v2298 = vsel %vm2170, %v1384, %v2042
      %v2299 = vsel %vm2171, %v1389, %v2043
      %v2300 = vsel %vm2172, %v1394, %v2044
      %v2301 = vsel %vm2173, %v1399, %v2045
      %v2302 = vsel %vm2174, %v1404, %v2046
      %v2303 = vmul.f32 %v2175, 1.050701
      %v2304 = vmul.f32 %v2176, 1.050701
      %v2305 = vmul.f32 %v2177, 1.050701
      %v2306 = vmul.f32 %v2178, 1.050701
      %v2307 = vmul.f32 %v2179, 1.050701
      %v2308 = vmul.f32 %v2180, 1.050701
      %v2309 = vmul.f32 %v2181, 1.050701
      %v2310 = vmul.f32 %v2182, 1.050701
      %v2311 = vmul.f32 %v2183, 1.050701
      %v2312 = vmul.f32 %v2184, 1.050701
      %v2313 = vmul.f32 %v2185, 1.050701
      %v2314 = vmul.f32 %v2186, 1.050701
      %v2315 = vmul.f32 %v2187, 1.050701
      %v2316 = vmul.f32 %v2188, 1.050701
      %v2317 = vmul.f32 %v2189, 1.050701
      %v2318 = vmul.f32 %v2190, 1.050701
      %v2319 = vmul.f32 %v2191, 1.050701
      %v2320 = vmul.f32 %v2192, 1.050701
      %v2321 = vmul.f32 %v2193, 1.050701
      %v2322 = vmul.f32 %v2194, 1.050701
      %v2323 = vmul.f32 %v2195, 1.050701
      %v2324 = vmul.f32 %v2196, 1.050701
      %v2325 = vmul.f32 %v2197, 1.050701
      %v2326 = vmul.f32 %v2198, 1.050701
      %v2327 = vmul.f32 %v2199, 1.050701
      %v2328 = vmul.f32 %v2200, 1.050701
      %v2329 = vmul.f32 %v2201, 1.050701
      %v2330 = vmul.f32 %v2202, 1.050701
      %v2331 = vmul.f32 %v2203, 1.050701
      %v2332 = vmul.f32 %v2204, 1.050701
      %v2333 = vmul.f32 %v2205, 1.050701
      %v2334 = vmul.f32 %v2206, 1.050701
      %v2335 = vmul.f32 %v2207, 1.050701
      %v2336 = vmul.f32 %v2208, 1.050701
      %v2337 = vmul.f32 %v2209, 1.050701
      %v2338 = vmul.f32 %v2210, 1.050701
      %v2339 = vmul.f32 %v2211, 1.050701
      %v2340 = vmul.f32 %v2212, 1.050701
      %v2341 = vmul.f32 %v2213, 1.050701
      %v2342 = vmul.f32 %v2214, 1.050701
      %v2343 = vmul.f32 %v2215, 1.050701
      %v2344 = vmul.f32 %v2216, 1.050701
      %v2345 = vmul.f32 %v2217, 1.050701
      %v2346 = vmul.f32 %v2218, 1.050701
      %v2347 = vmul.f32 %v2219, 1.050701
      %v2348 = vmul.f32 %v2220, 1.050701
      %v2349 = vmul.f32 %v2221, 1.050701
      %v2350 = vmul.f32 %v2222, 1.050701
      %v2351 = vmul.f32 %v2223, 1.050701
      %v2352 = vmul.f32 %v2224, 1.050701
      %v2353 = vmul.f32 %v2225, 1.050701
      %v2354 = vmul.f32 %v2226, 1.050701
      %v2355 = vmul.f32 %v2227, 1.050701
      %v2356 = vmul.f32 %v2228, 1.050701
      %v2357 = vmul.f32 %v2229, 1.050701
      %v2358 = vmul.f32 %v2230, 1.050701
      %v2359 = vmul.f32 %v2231, 1.050701
      %v2360 = vmul.f32 %v2232, 1.050701
      %v2361 = vmul.f32 %v2233, 1.050701
      %v2362 = vmul.f32 %v2234, 1.050701
      %v2363 = vmul.f32 %v2235, 1.050701
      %v2364 = vmul.f32 %v2236, 1.050701
      %v2365 = vmul.f32 %v2237, 1.050701
      %v2366 = vmul.f32 %v2238, 1.050701
      %v2367 = vmul.f32 %v2239, 1.050701
      %v2368 = vmul.f32 %v2240, 1.050701
      %v2369 = vmul.f32 %v2241, 1.050701
      %v2370 = vmul.f32 %v2242, 1.050701
      %v2371 = vmul.f32 %v2243, 1.050701
      %v2372 = vmul.f32 %v2244, 1.050701
      %v2373 = vmul.f32 %v2245, 1.050701
      %v2374 = vmul.f32 %v2246, 1.050701
      %v2375 = vmul.f32 %v2247, 1.050701
      %v2376 = vmul.f32 %v2248, 1.050701
      %v2377 = vmul.f32 %v2249, 1.050701
      %v2378 = vmul.f32 %v2250, 1.050701
      %v2379 = vmul.f32 %v2251, 1.050701
      %v2380 = vmul.f32 %v2252, 1.050701
      %v2381 = vmul.f32 %v2253, 1.050701
      %v2382 = vmul.f32 %v2254, 1.050701
      %v2383 = vmul.f32 %v2255, 1.050701
      %v2384 = vmul.f32 %v2256, 1.050701
      %v2385 = vmul.f32 %v2257, 1.050701
      %v2386 = vmul.f32 %v2258, 1.050701
      %v2387 = vmul.f32 %v2259, 1.050701
      %v2388 = vmul.f32 %v2260, 1.050701
      %v2389 = vmul.f32 %v2261, 1.050701
      %v2390 = vmul.f32 %v2262, 1.050701
      %v2391 = vmul.f32 %v2263, 1.050701
      %v2392 = vmul.f32 %v2264, 1.050701
      %v2393 = vmul.f32 %v2265, 1.050701
      %v2394 = vmul.f32 %v2266, 1.050701
      %v2395 = vmul.f32 %v2267, 1.050701
      %v2396 = vmul.f32 %v2268, 1.050701
      %v2397 = vmul.f32 %v2269, 1.050701
      %v2398 = vmul.f32 %v2270, 1.050701
      %v2399 = vmul.f32 %v2271, 1.050701
      %v2400 = vmul.f32 %v2272, 1.050701
      %v2401 = vmul.f32 %v2273, 1.050701
      %v2402 = vmul.f32 %v2274, 1.050701
      %v2403 = vmul.f32 %v2275, 1.050701
      %v2404 = vmul.f32 %v2276, 1.050701
      %v2405 = vmul.f32 %v2277, 1.050701
      %v2406 = vmul.f32 %v2278, 1.050701
      %v2407 = vmul.f32 %v2279, 1.050701
      %v2408 = vmul.f32 %v2280, 1.050701
      %v2409 = vmul.f32 %v2281, 1.050701
      %v2410 = vmul.f32 %v2282, 1.050701
      %v2411 = vmul.f32 %v2283, 1.050701
      %v2412 = vmul.f32 %v2284, 1.050701
      %v2413 = vmul.f32 %v2285, 1.050701
      %v2414 = vmul.f32 %v2286, 1.050701
      %v2415 = vmul.f32 %v2287, 1.050701
      %v2416 = vmul.f32 %v2288, 1.050701
      %v2417 = vmul.f32 %v2289, 1.050701
      %v2418 = vmul.f32 %v2290, 1.050701
      %v2419 = vmul.f32 %v2291, 1.050701
      %v2420 = vmul.f32 %v2292, 1.050701
      %v2421 = vmul.f32 %v2293, 1.050701
      %v2422 = vmul.f32 %v2294, 1.050701
      %v2423 = vmul.f32 %v2295, 1.050701
      %v2424 = vmul.f32 %v2296, 1.050701
      %v2425 = vmul.f32 %v2297, 1.050701
      %v2426 = vmul.f32 %v2298, 1.050701
      %v2427 = vmul.f32 %v2299, 1.050701
      %v2428 = vmul.f32 %v2300, 1.050701
      %v2429 = vmul.f32 %v2301, 1.050701
      %v2430 = vmul.f32 %v2302, 1.050701
      %v2431 = vmax.f32 %v2303, %v2335
      %v2432 = vmax.f32 %v2304, %v2336
      %v2433 = vmax.f32 %v2305, %v2337
      %v2434 = vmax.f32 %v2306, %v2338
      %v2435 = vmax.f32 %v2307, %v2339
      %v2436 = vmax.f32 %v2308, %v2340
      %v2437 = vmax.f32 %v2309, %v2341
      %v2438 = vmax.f32 %v2310, %v2342
      %v2439 = vmax.f32 %v2311, %v2343
      %v2440 = vmax.f32 %v2312, %v2344
      %v2441 = vmax.f32 %v2313, %v2345
      %v2442 = vmax.f32 %v2314, %v2346
      %v2443 = vmax.f32 %v2315, %v2347
      %v2444 = vmax.f32 %v2316, %v2348
      %v2445 = vmax.f32 %v2317, %v2349
      %v2446 = vmax.f32 %v2318, %v2350
      %v2447 = vmax.f32 %v2319, %v2351
      %v2448 = vmax.f32 %v2320, %v2352
      %v2449 = vmax.f32 %v2321, %v2353
      %v2450 = vmax.f32 %v2322, %v2354
      %v2451 = vmax.f32 %v2323, %v2355
      %v2452 = vmax.f32 %v2324, %v2356
      %v2453 = vmax.f32 %v2325, %v2357
      %v2454 = vmax.f32 %v2326, %v2358
      %v2455 = vmax.f32 %v2327, %v2359
      %v2456 = vmax.f32 %v2328, %v2360
      %v2457 = vmax.f32 %v2329, %v2361
      %v2458 = vmax.f32 %v2330, %v2362
      %v2459 = vmax.f32 %v2331, %v2363
      %v2460 = vmax.f32 %v2332, %v2364
      %v2461 = vmax.f32 %v2333, %v2365
      %v2462 = vmax.f32 %v2334, %v2366
      %v2463 = vmax.f32 %v2367, %v2399
      %v2464 = vmax.f32 %v2368, %v2400
      %v2465 = vmax.f32 %v2369, %v2401
      %v2466 = vmax.f32 %v2370, %v2402
      %v2467 = vmax.f32 %v2371, %v2403
      %v2468 = vmax.f32 %v2372, %v2404
      %v2469 = vmax.f32 %v2373, %v2405
      %v2470 = vmax.f32 %v2374, %v2406
      %v2471 = vmax.f32 %v2375, %v2407
      %v2472 = vmax.f32 %v2376, %v2408
      %v2473 = vmax.f32 %v2377, %v2409
      %v2474 = vmax.f32 %v2378, %v2410
      %v2475 = vmax.f32 %v2379, %v2411
      %v2476 = vmax.f32 %v2380, %v2412
      %v2477 = vmax.f32 %v2381, %v2413
      %v2478 = vmax.f32 %v2382, %v2414
      %v2479 = vmax.f32 %v2383, %v2415
      %v2480 = vmax.f32 %v2384, %v2416
      %v2481 = vmax.f32 %v2385, %v2417
      %v2482 = vmax.f32 %v2386, %v2418
      %v2483 = vmax.f32 %v2387, %v2419
      %v2484 = vmax.f32 %v2388, %v2420
      %v2485 = vmax.f32 %v2389, %v2421
      %v2486 = vmax.f32 %v2390, %v2422
      %v2487 = vmax.f32 %v2391, %v2423
      %v2488 = vmax.f32 %v2392, %v2424
      %v2489 = vmax.f32 %v2393, %v2425
      %v2490 = vmax.f32 %v2394, %v2426
      %v2491 = vmax.f32 %v2395, %v2427
      %v2492 = vmax.f32 %v2396, %v2428
      %v2493 = vmax.f32 %v2397, %v2429
      %v2494 = vmax.f32 %v2398, %v2430
      %v2495 = vmax.f32 %v2431, %v2463
      %v2496 = vmax.f32 %v2432, %v2464
      %v2497 = vmax.f32 %v2433, %v2465
      %v2498 = vmax.f32 %v2434, %v2466
      %v2499 = vmax.f32 %v2435, %v2467
      %v2500 = vmax.f32 %v2436, %v2468
      %v2501 = vmax.f32 %v2437, %v2469
      %v2502 = vmax.f32 %v2438, %v2470
      %v2503 = vmax.f32 %v2439, %v2471
      %v2504 = vmax.f32 %v2440, %v2472
      %v2505 = vmax.f32 %v2441, %v2473
      %v2506 = vmax.f32 %v2442, %v2474
      %v2507 = vmax.f32 %v2443, %v2475
      %v2508 = vmax.f32 %v2444, %v2476
      %v2509 = vmax.f32 %v2445, %v2477
      %v2510 = vmax.f32 %v2446, %v2478
      %v2511 = vmax.f32 %v2447, %v2479
      %v2512 = vmax.f32 %v2448, %v2480
      %v2513 = vmax.f32 %v2449, %v2481
      %v2514 = vmax.f32 %v2450, %v2482
      %v2515 = vmax.f32 %v2451, %v2483
      %v2516 = vmax.f32 %v2452, %v2484
      %v2517 = vmax.f32 %v2453, %v2485
      %v2518 = vmax.f32 %v2454, %v2486
      %v2519 = vmax.f32 %v2455, %v2487
      %v2520 = vmax.f32 %v2456, %v2488
      %v2521 = vmax.f32 %v2457, %v2489
      %v2522 = vmax.f32 %v2458, %v2490
      %v2523 = vmax.f32 %v2459, %v2491
      %v2524 = vmax.f32 %v2460, %v2492
      %v2525 = vmax.f32 %v2461, %v2493
      %v2526 = vmax.f32 %v2462, %v2494
      %vm2527 = vcmask 261120
      %2528 = vst.msk [vmem:[%s172] sm:$0xff] %vm2527, %v2495
      %2529 = vst.msk [vmem:[%s172 + $0x8] sm:$0xff] %vm2527, %v2496
      %2530 = vst.msk [vmem:[%s172 + $0x10] sm:$0xff] %vm2527, %v2497
      %2531 = vst.msk [vmem:[%s172 + $0x18] sm:$0xff] %vm2527, %v2498
      %2532 = vst.msk [vmem:[%s172 + $0x20] sm:$0xff] %vm2527, %v2499
      %2533 = vst.msk [vmem:[%s172 + $0x28] sm:$0xff] %vm2527, %v2500
      %2534 = vst.msk [vmem:[%s172 + $0x30] sm:$0xff] %vm2527, %v2501
      %2535 = vst.msk [vmem:[%s172 + $0x38] sm:$0xff] %vm2527, %v2502
      %2536 = vst.msk [vmem:[%s172 + $0x40] sm:$0xff] %vm2527, %v2503
      %2537 = vst.msk [vmem:[%s172 + $0x48] sm:$0xff] %vm2527, %v2504
      %2538 = vst.msk [vmem:[%s172 + $0x50] sm:$0xff] %vm2527, %v2505
      %2539 = vst.msk [vmem:[%s172 + $0x58] sm:$0xff] %vm2527, %v2506
      %2540 = vst.msk [vmem:[%s172 + $0x60] sm:$0xff] %vm2527, %v2507
      %2541 = vst.msk [vmem:[%s172 + $0x68] sm:$0xff] %vm2527, %v2508
      %2542 = vst.msk [vmem:[%s172 + $0x70] sm:$0xff] %vm2527, %v2509
      %2543 = vst.msk [vmem:[%s172 + $0x78] sm:$0xff] %vm2527, %v2510
      %2544 = vst.msk [vmem:[%s172 + $0x80] sm:$0xff] %vm2527, %v2511
      %2545 = vst.msk [vmem:[%s172 + $0x88] sm:$0xff] %vm2527, %v2512
      %2546 = vst.msk [vmem:[%s172 + $0x90] sm:$0xff] %vm2527, %v2513
      %2547 = vst.msk [vmem:[%s172 + $0x98] sm:$0xff] %vm2527, %v2514
      %2548 = vst.msk [vmem:[%s172 + $0xa0] sm:$0xff] %vm2527, %v2515
      %2549 = vst.msk [vmem:[%s172 + $0xa8] sm:$0xff] %vm2527, %v2516
      %2550 = vst.msk [vmem:[%s172 + $0xb0] sm:$0xff] %vm2527, %v2517
      %2551 = vst.msk [vmem:[%s172 + $0xb8] sm:$0xff] %vm2527, %v2518
      %2552 = vst.msk [vmem:[%s172 + $0xc0] sm:$0xff] %vm2527, %v2519
      %2553 = vst.msk [vmem:[%s172 + $0xc8] sm:$0xff] %vm2527, %v2520
      %2554 = vst.msk [vmem:[%s172 + $0xd0] sm:$0xff] %vm2527, %v2521
      %2555 = vst.msk [vmem:[%s172 + $0xd8] sm:$0xff] %vm2527, %v2522
      %2556 = vst.msk [vmem:[%s172 + $0xe0] sm:$0xff] %vm2527, %v2523
      %2557 = vst.msk [vmem:[%s172 + $0xe8] sm:$0xff] %vm2527, %v2524
      %2558 = vst.msk [vmem:[%s172 + $0xf0] sm:$0xff] %vm2527, %v2525
      %2559 = vst.msk [vmem:[%s172 + $0xf8] sm:$0xff] %vm2527, %v2526
      %s2560 = smul.u32 32, %s14
      %p2561 = scmp.lt.s32.totalorder %s2560, 63
      %s2562 = scalar_select %p2561, %s2560, 63
      %s2563 = smul.addr %s2562, 8
      %s2564 = scalar_lea.vmem %s3, %s2563
      // Predicated region
      $region33: #{cnn_forward.3} parent=31 // pred_check
        %p2565 = pneg %p100
      $region34: #{cnn_forward.3} parent=31 // pred_check_branch
        %2567 = sbr.rel (%p2565) target = $region36
      $region35: #{cnn_forward.3} parent=31 // pred_region
        %s2568 = smul.u32 32, %s14
      $region36: #{cnn_forward.3} parent=31 // pred_fallthru
        _
    $region32: #{cnn_forward.3} parent=5 // pred_fallthru
      _
    %p2569 = scmp.le.s32.totalorder 2, %s9
    // Predicated region
    $region37: #{cnn_forward.3} parent=5 // pred_check
      %p2570 = pneg %p2569
    $region38: #{cnn_forward.3} parent=5 // pred_check_branch
      %2572 = sbr.rel (%p2570) target = $region40
    $region39: #{cnn_forward.3} parent=5 // pred_region
      %s2573 = ssub.s32 %s9, 2
      // Predicated region
      $region41: #{cnn_forward.3} parent=39 // pred_check
        %p2574 = pneg %p106
      $region42: #{cnn_forward.3} parent=39 // pred_check_branch
        %2576 = sbr.rel (%p2574) target = $region44
      $region43: #{cnn_forward.3} parent=39 // pred_region
        %s2577 = smul.u32 32, %s15
        %p2578 = scmp.lt.s32.totalorder %s2577, 63
        %s2579 = scalar_select %p2578, %s2577, 63
        %s2580 = smul.addr %s2579, 8
        %s2581 = scalar_lea.vmem %s3, %s2580
      $region44: #{cnn_forward.3} parent=39 // pred_fallthru
        _
    $region40: #{cnn_forward.3} parent=5 // pred_fallthru
      _
  $region6: #{cnn_forward.3} parent=0 // loop_footer
    %s13 = sadd.s32 1, %s9
  $region7: #{cnn_forward.3} parent=0 // loop_footer_branch
    %8 = sbr.rel target = $region3
  $region8: #{cnn_forward.3} parent=0 // loop_exit
    _

// kernel: cnn_forward.4
$region0: #{cnn_forward.4}
  #allocation0 [shape = 'u32[]', space=smem, size = 0x4, offset = 0x4, fixed_abs, tag = 'smem constant byte address 0x4 - core index']
  #allocation1 [shape = 'u32[144,128]{1,0:T(1,128)}', space=vmem, size = 0x12000, scoped, tag = 'internal scratch']
  %s0 = inlined_call_operand.vmem [shape: f32[512,288], index: 0, kind: input, shape index: {}]
  %s1 = inlined_call_operand.vmem [shape: f32[288,64], index: 1, kind: input, shape index: {}]
  %s2 = inlined_call_operand.vmem [shape: f32[1,64], index: 2, kind: input, shape index: {}]
  %s3 = inlined_call_operand.vmem [shape: f32[128,64], index: 3, kind: output, shape index: {}]
  %s4 = sld [smem:[#allocation0]]
  $region45: #{cnn_forward.4} parent=0
    _
  %s6 = ssub.s32 1, %s4
  %s7 = scalar_select 0, %s6, %s4
  loop: start=0, step=1, limit=4
  $region2: #{cnn_forward.4} parent=0 // loop_pre_header
    _
  $region3: #{cnn_forward.4} parent=0 // loop_header
    %s9 = sphi 0, %s13
    %p10 = scmp.ge.s32.totalorder %s9, 4
    %s19 = sphi 0, %s21
    %s22 = sphi 0, %s19
    %s23 = sphi 0, %s22
    %s39 = sphi 0, %s23
    %s43 = sphi 0, %s43
    %s45 = sphi 0, %s43
    %s46 = sphi 0, %s45
    %s60 = sphi 0, %s46
    %s64 = sphi 0, %s64
    %s66 = sphi 0, %s64
    %s67 = sphi 0, %s66
    %s81 = sphi 0, %s67
    %s87 = sphi 0, %s89
    %s90 = sphi 0, %s87
    %s91 = sphi 0, %s90
    %s107 = sphi 0, %s91
  $region4: #{cnn_forward.4} parent=0 // loop_header_branch
    %12 = sbr.rel (%p10) target = $region8
  $region5: #{cnn_forward.4} parent=0 // loop_body
    %s14 = ssub.s32 %s9, 1
    %s15 = ssub.s32 %s9, 2
    %s16 = sadd.s32 %s9, 1
    %s17 = ssub.s32 %s9, %s16
    %p18 = scmp.eq.s32.totalorder %s17, 0
    %s20 = sadd.s32 %s19, 1
    %s21 = scalar_select %p18, %s19, %s20
    %p24 = pneg %p18
    %p25 = scmp.eq.s32.totalorder %s9, 1
    %p26 = por %p24, %p25
    %p27 = scmp.ne.s32.totalorder %s19, %s22
    %p28 = scmp.eq.s32.totalorder %s9, 0
    %p29 = por %p27, %p28
    %p30 = scmp.ne.s32.totalorder %s19, %s22
    %p31 = scmp.eq.s32.totalorder %s14, 1
    %p32 = por %p30, %p31
    %p33 = scmp.ne.s32.totalorder %s22, %s23
    %p34 = scmp.eq.s32.totalorder %s14, 0
    %p35 = por %p33, %p34
    %p36 = scmp.ne.s32.totalorder %s22, %s23
    %p37 = scmp.eq.s32.totalorder %s15, 1
    %p38 = por %p36, %p37
    %p40 = scmp.ne.s32.totalorder %s23, %s39
    %p41 = scmp.eq.s32.totalorder %s15, 0
    %p42 = por %p40, %p41
    %s44 = sadd.s32 %s43, 1
    %p47 = scmp.eq.s32.totalorder %s9, 1
    %p48 = scmp.ne.s32.totalorder %s43, %s45
    %p49 = scmp.eq.s32.totalorder %s9, 0
    %p50 = por %p48, %p49
    %p51 = scmp.ne.s32.totalorder %s43, %s45
    %p52 = scmp.eq.s32.totalorder %s14, 1
    %p53 = por %p51, %p52
    %p54 = scmp.ne.s32.totalorder %s45, %s46
    %p55 = scmp.eq.s32.totalorder %s14, 0
    %p56 = por %p54, %p55
    %p57 = scmp.ne.s32.totalorder %s45, %s46
    %p58 = scmp.eq.s32.totalorder %s15, 1
    %p59 = por %p57, %p58
    %p61 = scmp.ne.s32.totalorder %s46, %s60
    %p62 = scmp.eq.s32.totalorder %s15, 0
    %p63 = por %p61, %p62
    %s65 = sadd.s32 %s64, 1
    %p68 = scmp.eq.s32.totalorder %s9, 1
    %p69 = scmp.ne.s32.totalorder %s64, %s66
    %p70 = scmp.eq.s32.totalorder %s9, 0
    %p71 = por %p69, %p70
    %p72 = scmp.ne.s32.totalorder %s64, %s66
    %p73 = scmp.eq.s32.totalorder %s14, 1
    %p74 = por %p72, %p73
    %p75 = scmp.ne.s32.totalorder %s66, %s67
    %p76 = scmp.eq.s32.totalorder %s14, 0
    %p77 = por %p75, %p76
    %p78 = scmp.ne.s32.totalorder %s66, %s67
    %p79 = scmp.eq.s32.totalorder %s15, 1
    %p80 = por %p78, %p79
    %p82 = scmp.ne.s32.totalorder %s67, %s81
    %p83 = scmp.eq.s32.totalorder %s15, 0
    %p84 = por %p82, %p83
    %s85 = ssub.s32 %s9, %s16
    %p86 = scmp.eq.s32.totalorder %s85, 0
    %s88 = sadd.s32 %s87, 1
    %s89 = scalar_select %p86, %s87, %s88
    %p92 = pneg %p86
    %p93 = scmp.eq.s32.totalorder %s9, 1
    %p94 = por %p92, %p93
    %p95 = scmp.ne.s32.totalorder %s87, %s90
    %p96 = scmp.eq.s32.totalorder %s9, 0
    %p97 = por %p95, %p96
    %p98 = scmp.ne.s32.totalorder %s87, %s90
    %p99 = scmp.eq.s32.totalorder %s14, 1
    %p100 = por %p98, %p99
    %p101 = scmp.ne.s32.totalorder %s90, %s91
    %p102 = scmp.eq.s32.totalorder %s14, 0
    %p103 = por %p101, %p102
    %p104 = scmp.ne.s32.totalorder %s90, %s91
    %p105 = scmp.eq.s32.totalorder %s15, 1
    %p106 = por %p104, %p105
    %p108 = scmp.ne.s32.totalorder %s91, %s107
    %p109 = scmp.eq.s32.totalorder %s15, 0
    %p110 = por %p108, %p109
    %p111 = scmp.le.s32.totalorder 1, %s9
    %p112 = scmp.lt.s32.totalorder %s9, 3
    %p113 = pnand %p111, %p112
    %p114 = pneg %p113
    // Predicated region
    $region9: #{cnn_forward.4} parent=5 // pred_check
      _
    $region10: #{cnn_forward.4} parent=5 // pred_check_branch
      %116 = sbr.rel (%p113) target = $region12
    $region11: #{cnn_forward.4} parent=5 // pred_region
      %s117 = ssub.s32 %s9, 1
      // Predicated region
      $region13: #{cnn_forward.4} parent=11 // pred_check
        %p118 = pneg %p56
      $region14: #{cnn_forward.4} parent=11 // pred_check_branch
        %120 = sbr.rel (%p118) target = $region16
      $region15: #{cnn_forward.4} parent=11 // pred_region
        _
      $region16: #{cnn_forward.4} parent=11 // pred_fallthru
        _
      // Predicated region
      $region17: #{cnn_forward.4} parent=11 // pred_check
        %p121 = pneg %p77
      $region18: #{cnn_forward.4} parent=11 // pred_check_branch
        %123 = sbr.rel (%p121) target = $region20
      $region19: #{cnn_forward.4} parent=11 // pred_region
        _
      $region20: #{cnn_forward.4} parent=11 // pred_fallthru
        _
    $region12: #{cnn_forward.4} parent=5 // pred_fallthru
      _
    %p124 = scmp.lt.s32.totalorder %s9, 2
    // Predicated region
    $region21: #{cnn_forward.4} parent=5 // pred_check
      %p125 = pneg %p124
    $region22: #{cnn_forward.4} parent=5 // pred_check_branch
      %127 = sbr.rel (%p125) target = $region24
    $region23: #{cnn_forward.4} parent=5 // pred_region
      // Predicated region
      $region25: #{cnn_forward.4} parent=23 // pred_check
        %p128 = pneg %p29
      $region26: #{cnn_forward.4} parent=23 // pred_check_branch
        %130 = sbr.rel (%p128) target = $region28
      $region27: #{cnn_forward.4} parent=23 // pred_region
        %s131 = smul.u32 32, %s9
        %p132 = scmp.lt.s32.totalorder %s131, 63
        %s133 = scalar_select %p132, %s131, 63
        %s134 = smul.addr %s133, 3
        %s135 = smul.addr %s134, 8
        %s136 = scalar_lea.vmem %s0, %s135
        %s137 = smul.u32 32, %s9
      $region28: #{cnn_forward.4} parent=23 // pred_fallthru
        _
    $region24: #{cnn_forward.4} parent=5 // pred_fallthru
      _
    %p138 = scmp.le.s32.totalorder 1, %s9
    %p139 = scmp.lt.s32.totalorder %s9, 3
    %p140 = pnand %p138, %p139
    %p141 = pneg %p140
    // Predicated region
    $region29: #{cnn_forward.4} parent=5 // pred_check
      _
    $region30: #{cnn_forward.4} parent=5 // pred_check_branch
      %143 = sbr.rel (%p140) target = $region32
    $region31: #{cnn_forward.4} parent=5 // pred_region
      %s144 = ssub.s32 %s9, 1
      %s145 = smul.u32 32, %s14
      %p146 = scmp.lt.s32.totalorder %s145, 63
      %s147 = scalar_select %p146, %s145, 63
      %s148 = smul.addr %s147, 3
      %s149 = smul.addr %s148, 8
      %s150 = scalar_lea.vmem %s0, %s149
      %p151 = pneg %p35
      %p152 = pneg %p32
      %p153 = pneg %p56
      %p154 = pneg %p53
      %p155 = pneg %p77
      %p156 = pneg %p74
      %p157 = pneg %p103
      %p158 = pneg %p100
      %s159 = smul.u32 8, %s14
      %p160 = scmp.lt.s32.totalorder %s159, 15
      %s161 = scalar_select %p160, %s159, 15
      %s162 = smul.addr %s161, 8
      %s163 = scalar_lea.vmem %s3, %s162
      %s164 = smul.u32 32, %s14
      %p165 = scmp.lt.s32.totalorder %s164, 63
      %s166 = scalar_select %p165, %s164, 63
      %s167 = smul.addr %s166, 3
      %s168 = smul.addr %s167, 8
      %s169 = scalar_lea.vmem %s0, %s168
      %s170 = smul.u32 32, %s14
      %s171 = smul.u32 8, %s14
      %p172 = scmp.lt.s32.totalorder %s171, 15
      %s173 = scalar_select %p172, %s171, 15
      %s174 = smul.addr %s173, 8
      %s175 = scalar_lea.vmem %s3, %s174
      %s176 = smul.u32 8, %s14
      %v177 = vld [vmem:[%s169] sm:$0xff]
      %v178 = vld [vmem:[%s169 + $0x8] sm:$0xff]
      %v179 = vld [vmem:[%s169 + $0x10] sm:$0xff]
      %v180 = vld [vmem:[%s169 + $0x18] sm:$0xff]
      %v181 = vld [vmem:[%s169 + $0x20] sm:$0xff]
      %v182 = vld [vmem:[%s169 + $0x28] sm:$0xff]
      %v183 = vld [vmem:[%s169 + $0x30] sm:$0xff]
      %v184 = vld [vmem:[%s169 + $0x38] sm:$0xff]
      %v185 = vld [vmem:[%s169 + $0x40] sm:$0xff]
      %v186 = vld [vmem:[%s169 + $0x48] sm:$0xff]
      %v187 = vld [vmem:[%s169 + $0x50] sm:$0xff]
      %v188 = vld [vmem:[%s169 + $0x58] sm:$0xff]
      %v189 = vld [vmem:[%s169 + $0x60] sm:$0xff]
      %v190 = vld [vmem:[%s169 + $0x68] sm:$0xff]
      %v191 = vld [vmem:[%s169 + $0x70] sm:$0xff]
      %v192 = vld [vmem:[%s169 + $0x78] sm:$0xff]
      %v193 = vld [vmem:[%s169 + $0x80] sm:$0xff]
      %v194 = vld [vmem:[%s169 + $0x88] sm:$0xff]
      %v195 = vld [vmem:[%s169 + $0x90] sm:$0xff]
      %v196 = vld [vmem:[%s169 + $0x98] sm:$0xff]
      %v197 = vld [vmem:[%s169 + $0xa0] sm:$0xff]
      %v198 = vld [vmem:[%s169 + $0xa8] sm:$0xff]
      %v199 = vld [vmem:[%s169 + $0xb0] sm:$0xff]
      %v200 = vld [vmem:[%s169 + $0xb8] sm:$0xff]
      %v201 = vld [vmem:[%s169 + $0xc0] sm:$0xff]
      %v202 = vld [vmem:[%s169 + $0xc8] sm:$0xff]
      %v203 = vld [vmem:[%s169 + $0xd0] sm:$0xff]
      %v204 = vld [vmem:[%s169 + $0xd8] sm:$0xff]
      %v205 = vld [vmem:[%s169 + $0xe0] sm:$0xff]
      %v206 = vld [vmem:[%s169 + $0xe8] sm:$0xff]
      %v207 = vld [vmem:[%s169 + $0xf0] sm:$0xff]
      %v208 = vld [vmem:[%s169 + $0xf8] sm:$0xff]
      %v209 = vld [vmem:[%s169 + $0x100] sm:$0xff]
      %v210 = vld [vmem:[%s169 + $0x108] sm:$0xff]
      %v211 = vld [vmem:[%s169 + $0x110] sm:$0xff]
      %v212 = vld [vmem:[%s169 + $0x118] sm:$0xff]
      %v213 = vld [vmem:[%s169 + $0x120] sm:$0xff]
      %v214 = vld [vmem:[%s169 + $0x128] sm:$0xff]
      %v215 = vld [vmem:[%s169 + $0x130] sm:$0xff]
      %v216 = vld [vmem:[%s169 + $0x138] sm:$0xff]
      %v217 = vld [vmem:[%s169 + $0x140] sm:$0xff]
      %v218 = vld [vmem:[%s169 + $0x148] sm:$0xff]
      %v219 = vld [vmem:[%s169 + $0x150] sm:$0xff]
      %v220 = vld [vmem:[%s169 + $0x158] sm:$0xff]
      %v221 = vld [vmem:[%s169 + $0x160] sm:$0xff]
      %v222 = vld [vmem:[%s169 + $0x168] sm:$0xff]
      %v223 = vld [vmem:[%s169 + $0x170] sm:$0xff]
      %v224 = vld [vmem:[%s169 + $0x178] sm:$0xff]
      %v225 = vld [vmem:[%s169 + $0x180] sm:$0xff]
      %v226 = vld [vmem:[%s169 + $0x188] sm:$0xff]
      %v227 = vld [vmem:[%s169 + $0x190] sm:$0xff]
      %v228 = vld [vmem:[%s169 + $0x198] sm:$0xff]
      %v229 = vld [vmem:[%s169 + $0x1a0] sm:$0xff]
      %v230 = vld [vmem:[%s169 + $0x1a8] sm:$0xff]
      %v231 = vld [vmem:[%s169 + $0x1b0] sm:$0xff]
      %v232 = vld [vmem:[%s169 + $0x1b8] sm:$0xff]
      %v233 = vld [vmem:[%s169 + $0x1c0] sm:$0xff]
      %v234 = vld [vmem:[%s169 + $0x1c8] sm:$0xff]
      %v235 = vld [vmem:[%s169 + $0x1d0] sm:$0xff]
      %v236 = vld [vmem:[%s169 + $0x1d8] sm:$0xff]
      %v237 = vld [vmem:[%s169 + $0x1e0] sm:$0xff]
      %v238 = vld [vmem:[%s169 + $0x1e8] sm:$0xff]
      %v239 = vld [vmem:[%s169 + $0x1f0] sm:$0xff]
      %v240 = vld [vmem:[%s169 + $0x1f8] sm:$0xff]
      %v241 = vld [vmem:[%s169 + $0x200] sm:$0xff]
      %v242 = vld [vmem:[%s169 + $0x208] sm:$0xff]
      %v243 = vld [vmem:[%s169 + $0x210] sm:$0xff]
      %v244 = vld [vmem:[%s169 + $0x218] sm:$0xff]
      %v245 = vld [vmem:[%s169 + $0x220] sm:$0xff]
      %v246 = vld [vmem:[%s169 + $0x228] sm:$0xff]
      %v247 = vld [vmem:[%s169 + $0x230] sm:$0xff]
      %v248 = vld [vmem:[%s169 + $0x238] sm:$0xff]
      %v249 = vld [vmem:[%s169 + $0x240] sm:$0xff]
      %v250 = vld [vmem:[%s169 + $0x248] sm:$0xff]
      %v251 = vld [vmem:[%s169 + $0x250] sm:$0xff]
      %v252 = vld [vmem:[%s169 + $0x258] sm:$0xff]
      %v253 = vld [vmem:[%s169 + $0x260] sm:$0xff]
      %v254 = vld [vmem:[%s169 + $0x268] sm:$0xff]
      %v255 = vld [vmem:[%s169 + $0x270] sm:$0xff]
      %v256 = vld [vmem:[%s169 + $0x278] sm:$0xff]
      %v257 = vld [vmem:[%s169 + $0x280] sm:$0xff]
      %v258 = vld [vmem:[%s169 + $0x288] sm:$0xff]
      %v259 = vld [vmem:[%s169 + $0x290] sm:$0xff]
      %v260 = vld [vmem:[%s169 + $0x298] sm:$0xff]
      %v261 = vld [vmem:[%s169 + $0x2a0] sm:$0xff]
      %v262 = vld [vmem:[%s169 + $0x2a8] sm:$0xff]
      %v263 = vld [vmem:[%s169 + $0x2b0] sm:$0xff]
      %v264 = vld [vmem:[%s169 + $0x2b8] sm:$0xff]
      %v265 = vld [vmem:[%s169 + $0x2c0] sm:$0xff]
      %v266 = vld [vmem:[%s169 + $0x2c8] sm:$0xff]
      %v267 = vld [vmem:[%s169 + $0x2d0] sm:$0xff]
      %v268 = vld [vmem:[%s169 + $0x2d8] sm:$0xff]
      %v269 = vld [vmem:[%s169 + $0x2e0] sm:$0xff]
      %v270 = vld [vmem:[%s169 + $0x2e8] sm:$0xff]
      %v271 = vld [vmem:[%s169 + $0x2f0] sm:$0xff]
      %v272 = vld [vmem:[%s169 + $0x2f8] sm:$0xff]
      %v273 = vld [vmem:[%s1] sm:$0xff]
      %v274 = vld [vmem:[%s1 + $0x8] sm:$0xff]
      %v275 = vld [vmem:[%s1 + $0x10] sm:$0xff]
      %v276 = vld [vmem:[%s1 + $0x18] sm:$0xff]
      %v277 = vld [vmem:[%s1 + $0x20] sm:$0xff]
      %v278 = vld [vmem:[%s1 + $0x28] sm:$0xff]
      %v279 = vld [vmem:[%s1 + $0x30] sm:$0xff]
      %v280 = vld [vmem:[%s1 + $0x38] sm:$0xff]
      %v281 = vld [vmem:[%s1 + $0x40] sm:$0xff]
      %v282 = vld [vmem:[%s1 + $0x48] sm:$0xff]
      %v283 = vld [vmem:[%s1 + $0x50] sm:$0xff]
      %v284 = vld [vmem:[%s1 + $0x58] sm:$0xff]
      %v285 = vld [vmem:[%s1 + $0x60] sm:$0xff]
      %v286 = vld [vmem:[%s1 + $0x68] sm:$0xff]
      %v287 = vld [vmem:[%s1 + $0x70] sm:$0xff]
      %v288 = vld [vmem:[%s1 + $0x78] sm:$0xff]
      %v289 = vld [vmem:[%s1 + $0x80] sm:$0xff]
      %v290 = vld [vmem:[%s1 + $0x88] sm:$0xff]
      %v291 = vld [vmem:[%s1 + $0x90] sm:$0xff]
      %v292 = vld [vmem:[%s1 + $0x98] sm:$0xff]
      %v293 = vld [vmem:[%s1 + $0xa0] sm:$0xff]
      %v294 = vld [vmem:[%s1 + $0xa8] sm:$0xff]
      %v295 = vld [vmem:[%s1 + $0xb0] sm:$0xff]
      %v296 = vld [vmem:[%s1 + $0xb8] sm:$0xff]
      %v297 = vld [vmem:[%s1 + $0xc0] sm:$0xff]
      %v298 = vld [vmem:[%s1 + $0xc8] sm:$0xff]
      %v299 = vld [vmem:[%s1 + $0xd0] sm:$0xff]
      %v300 = vld [vmem:[%s1 + $0xd8] sm:$0xff]
      %v301 = vld [vmem:[%s1 + $0xe0] sm:$0xff]
      %v302 = vld [vmem:[%s1 + $0xe8] sm:$0xff]
      %v303 = vld [vmem:[%s1 + $0xf0] sm:$0xff]
      %v304 = vld [vmem:[%s1 + $0xf8] sm:$0xff]
      %v305 = vld [vmem:[%s1 + $0x100] sm:$0xff]
      %v306 = vld [vmem:[%s1 + $0x108] sm:$0xff]
      %v307 = vld [vmem:[%s1 + $0x110] sm:$0xff]
      %v308 = vld [vmem:[%s1 + $0x118] sm:$0xff]
      %v309 = vld [vmem:[%s2] sm:$0x1]
      %v311 = vlaneseq
      %v312 = vshrl.u32 %v311, 7
      %v313 = vsub.s32 0, %v312
      %v314 = vrot.slane %v309, %v313
      %vm316 = vcmask 261120
      %v318 = vsel %vm316, %v179, 0
      %v321 = vsel %vm316, %v182, 0
      %v324 = vsel %vm316, %v185, 0
      %v327 = vsel %vm316, %v188, 0
      %v330 = vsel %vm316, %v191, 0
      %v333 = vsel %vm316, %v194, 0
      %v336 = vsel %vm316, %v197, 0
      %v339 = vsel %vm316, %v200, 0
      %v342 = vsel %vm316, %v203, 0
      %v345 = vsel %vm316, %v206, 0
      %v348 = vsel %vm316, %v209, 0
      %v351 = vsel %vm316, %v212, 0
      %v354 = vsel %vm316, %v215, 0
      %v357 = vsel %vm316, %v218, 0
      %v360 = vsel %vm316, %v221, 0
      %v363 = vsel %vm316, %v224, 0
      %v366 = vsel %vm316, %v227, 0
      %v369 = vsel %vm316, %v230, 0
      %v372 = vsel %vm316, %v233, 0
      %v375 = vsel %vm316, %v236, 0
      %v378 = vsel %vm316, %v239, 0
      %v381 = vsel %vm316, %v242, 0
      %v384 = vsel %vm316, %v245, 0
      %v387 = vsel %vm316, %v248, 0
      %v390 = vsel %vm316, %v251, 0
      %v393 = vsel %vm316, %v254, 0
      %v396 = vsel %vm316, %v257, 0
      %v399 = vsel %vm316, %v260, 0
      %v402 = vsel %vm316, %v263, 0
      %v405 = vsel %vm316, %v266, 0
      %v408 = vsel %vm316, %v269, 0
      %v411 = vsel %vm316, %v272, 0
      %413 = vmatprep.subr.mxu0 0.0
      %414 = vmatpush1.msra.mxu0 %v288
      %415 = vmatprep.subr.mxu0 0.0
      %416 = vmatpush1.msra.mxu0 %v287
      %417 = vmatprep.subr.mxu0 0.0
      %418 = vmatpush1.msra.mxu0 %v286
      %419 = vmatprep.subr.mxu0 0.0
      %420 = vmatpush1.msra.mxu0 %v285
      %421 = vmatprep.subr.mxu0 0.0
      %422 = vmatpush1.msra.mxu0 %v284
      %423 = vmatprep.subr.mxu0 0.0
      %424 = vmatpush1.msra.mxu0 %v283
      %425 = vmatprep.subr.mxu0 0.0
      %426 = vmatpush1.msra.mxu0 %v282
      %427 = vmatprep.subr.mxu0 0.0
      %428 = vmatpush1.msra.mxu0 %v281
      %429 = vmatprep.subr.mxu0 0.0
      %430 = vmatpush1.msra.mxu0 %v280
      %431 = vmatprep.subr.mxu0 0.0
      %432 = vmatpush1.msra.mxu0 %v279
      %433 = vmatprep.subr.mxu0 0.0
      %434 = vmatpush1.msra.mxu0 %v278
      %435 = vmatprep.subr.mxu0 0.0
      %436 = vmatpush1.msra.mxu0 %v277
      %437 = vmatprep.subr.mxu0 0.0
      %438 = vmatpush1.msra.mxu0 %v276
      %439 = vmatprep.subr.mxu0 0.0
      %440 = vmatpush1.msra.mxu0 %v275
      %441 = vmatprep.subr.mxu0 0.0
      %442 = vmatpush1.msra.mxu0 %v274
      %443 = vmatprep.subr.mxu0 0.0
      %444 = vmatpush1.msra.mxu0 %v273
      %445 = vmatprep.subr.mxu0 0.0
      %446 = vmatpush2.msra.mxu0 %v304
      %447 = vmatprep.subr.mxu0 0.0
      %448 = vmatpush2.msra.mxu0 %v303
      %449 = vmatprep.subr.mxu0 0.0
      %450 = vmatpush2.msra.mxu0 %v302
      %451 = vmatprep.subr.mxu0 0.0
      %452 = vmatpush2.msra.mxu0 %v301
      %453 = vmatprep.subr.mxu0 0.0
      %454 = vmatpush2.msra.mxu0 %v300
      %455 = vmatprep.subr.mxu0 0.0
      %456 = vmatpush2.msra.mxu0 %v299
      %457 = vmatprep.subr.mxu0 0.0
      %458 = vmatpush2.msra.mxu0 %v298
      %459 = vmatprep.subr.mxu0 0.0
      %460 = vmatpush2.msra.mxu0 %v297
      %461 = vmatprep.subr.mxu0 0.0
      %462 = vmatpush2.msra.mxu0 %v296
      %463 = vmatprep.subr.mxu0 0.0
      %464 = vmatpush2.msra.mxu0 %v295
      %465 = vmatprep.subr.mxu0 0.0
      %466 = vmatpush2.msra.mxu0 %v294
      %467 = vmatprep.subr.mxu0 0.0
      %468 = vmatpush2.msra.mxu0 %v293
      %469 = vmatprep.subr.mxu0 0.0
      %470 = vmatpush2.msra.mxu0 %v292
      %471 = vmatprep.subr.mxu0 0.0
      %472 = vmatpush2.msra.mxu0 %v291
      %473 = vmatprep.subr.mxu0 0.0
      %474 = vmatpush2.msra.mxu0 %v290
      %475 = vmatprep.subr.mxu0 0.0
      %476 = vmatpush2.msra.mxu0 %v289
      %477 = vmatprep.mubr.f32.mxu0 %v178
      %478 = vmatmul.mubr.f32.gmra.mxu0 %v177
      %v479 = vpop.f32.mrf.mxu0
      %v480 = vadd.f32 %v314, %v479
      %v481 = vpop.f32.mrf.mxu0
      %482 = vmatprep.mubr.f32.mxu0 %v181
      %483 = vmatmul.mubr.f32.gmra.mxu0 %v180
      %v484 = vpop.f32.mrf.mxu0
      %v485 = vadd.f32 %v314, %v484
      %v486 = vpop.f32.mrf.mxu0
      %487 = vmatprep.mubr.f32.mxu0 %v184
      %488 = vmatmul.mubr.f32.gmra.mxu0 %v183
      %v489 = vpop.f32.mrf.mxu0
      %v490 = vadd.f32 %v314, %v489
      %v491 = vpop.f32.mrf.mxu0
      %492 = vmatprep.mubr.f32.mxu0 %v187
      %493 = vmatmul.mubr.f32.gmra.mxu0 %v186
      %v494 = vpop.f32.mrf.mxu0
      %v495 = vadd.f32 %v314, %v494
      %v496 = vpop.f32.mrf.mxu0
      %497 = vmatprep.mubr.f32.mxu0 %v190
      %498 = vmatmul.mubr.f32.gmra.mxu0 %v189
      %v499 = vpop.f32.mrf.mxu0
      %v500 = vadd.f32 %v314, %v499
      %v501 = vpop.f32.mrf.mxu0
      %502 = vmatprep.mubr.f32.mxu0 %v193
      %503 = vmatmul.mubr.f32.gmra.mxu0 %v192
      %v504 = vpop.f32.mrf.mxu0
      %v505 = vadd.f32 %v314, %v504
      %v506 = vpop.f32.mrf.mxu0
      %507 = vmatprep.mubr.f32.mxu0 %v196
      %508 = vmatmul.mubr.f32.gmra.mxu0 %v195
      %v509 = vpop.f32.mrf.mxu0
      %v510 = vadd.f32 %v314, %v509
      %v511 = vpop.f32.mrf.mxu0
      %512 = vmatprep.mubr.f32.mxu0 %v199
      %513 = vmatmul.mubr.f32.gmra.mxu0 %v198
      %v514 = vpop.f32.mrf.mxu0
      %v515 = vadd.f32 %v314, %v514
      %v516 = vpop.f32.mrf.mxu0
      %517 = vmatprep.mubr.f32.mxu0 %v202
      %518 = vmatmul.mubr.f32.gmra.mxu0 %v201
      %v519 = vpop.f32.mrf.mxu0
      %v520 = vadd.f32 %v314, %v519
      %v521 = vpop.f32.mrf.mxu0
      %522 = vmatprep.mubr.f32.mxu0 %v205
      %523 = vmatmul.mubr.f32.gmra.mxu0 %v204
      %v524 = vpop.f32.mrf.mxu0
      %v525 = vadd.f32 %v314, %v524
      %v526 = vpop.f32.mrf.mxu0
      %527 = vmatprep.mubr.f32.mxu0 %v208
      %528 = vmatmul.mubr.f32.gmra.mxu0 %v207
      %v529 = vpop.f32.mrf.mxu0
      %v530 = vadd.f32 %v314, %v529
      %v531 = vpop.f32.mrf.mxu0
      %532 = vmatprep.mubr.f32.mxu0 %v211
      %533 = vmatmul.mubr.f32.gmra.mxu0 %v210
      %v534 = vpop.f32.mrf.mxu0
      %v535 = vadd.f32 %v314, %v534
      %v536 = vpop.f32.mrf.mxu0
      %537 = vmatprep.mubr.f32.mxu0 %v214
      %538 = vmatmul.mubr.f32.gmra.mxu0 %v213
      %v539 = vpop.f32.mrf.mxu0
      %v540 = vadd.f32 %v314, %v539
      %v541 = vpop.f32.mrf.mxu0
      %542 = vmatprep.mubr.f32.mxu0 %v217
      %543 = vmatmul.mubr.f32.gmra.mxu0 %v216
      %v544 = vpop.f32.mrf.mxu0
      %v545 = vadd.f32 %v314, %v544
      %v546 = vpop.f32.mrf.mxu0
      %547 = vmatprep.mubr.f32.mxu0 %v220
      %548 = vmatmul.mubr.f32.gmra.mxu0 %v219
      %v549 = vpop.f32.mrf.mxu0
      %v550 = vadd.f32 %v314, %v549
      %v551 = vpop.f32.mrf.mxu0
      %552 = vmatprep.mubr.f32.mxu0 %v223
      %553 = vmatmul.mubr.f32.gmra.mxu0 %v222
      %v554 = vpop.f32.mrf.mxu0
      %v555 = vadd.f32 %v314, %v554
      %v556 = vpop.f32.mrf.mxu0
      %557 = vmatprep.mubr.f32.mxu0 %v226
      %558 = vmatmul.mubr.f32.gmra.mxu0 %v225
      %v559 = vpop.f32.mrf.mxu0
      %v560 = vadd.f32 %v314, %v559
      %v561 = vpop.f32.mrf.mxu0
      %562 = vmatprep.mubr.f32.mxu0 %v229
      %563 = vmatmul.mubr.f32.gmra.mxu0 %v228
      %v564 = vpop.f32.mrf.mxu0
      %v565 = vadd.f32 %v314, %v564
      %v566 = vpop.f32.mrf.mxu0
      %567 = vmatprep.mubr.f32.mxu0 %v232
      %568 = vmatmul.mubr.f32.gmra.mxu0 %v231
      %v569 = vpop.f32.mrf.mxu0
      %v570 = vadd.f32 %v314, %v569
      %v571 = vpop.f32.mrf.mxu0
      %572 = vmatprep.mubr.f32.mxu0 %v235
      %573 = vmatmul.mubr.f32.gmra.mxu0 %v234
      %v574 = vpop.f32.mrf.mxu0
      %v575 = vadd.f32 %v314, %v574
      %v576 = vpop.f32.mrf.mxu0
      %577 = vmatprep.mubr.f32.mxu0 %v238
      %578 = vmatmul.mubr.f32.gmra.mxu0 %v237
      %v579 = vpop.f32.mrf.mxu0
      %v580 = vadd.f32 %v314, %v579
      %v581 = vpop.f32.mrf.mxu0
      %582 = vmatprep.mubr.f32.mxu0 %v241
      %583 = vmatmul.mubr.f32.gmra.mxu0 %v240
      %v584 = vpop.f32.mrf.mxu0
      %v585 = vadd.f32 %v314, %v584
      %v586 = vpop.f32.mrf.mxu0
      %587 = vmatprep.mubr.f32.mxu0 %v244
      %588 = vmatmul.mubr.f32.gmra.mxu0 %v243
      %v589 = vpop.f32.mrf.mxu0
      %v590 = vadd.f32 %v314, %v589
      %v591 = vpop.f32.mrf.mxu0
      %592 = vmatprep.mubr.f32.mxu0 %v247
      %593 = vmatmul.mubr.f32.gmra.mxu0 %v246
      %v594 = vpop.f32.mrf.mxu0
      %v595 = vadd.f32 %v314, %v594
      %v596 = vpop.f32.mrf.mxu0
      %597 = vmatprep.mubr.f32.mxu0 %v250
      %598 = vmatmul.mubr.f32.gmra.mxu0 %v249
      %v599 = vpop.f32.mrf.mxu0
      %v600 = vadd.f32 %v314, %v599
      %v601 = vpop.f32.mrf.mxu0
      %602 = vmatprep.mubr.f32.mxu0 %v253
      %603 = vmatmul.mubr.f32.gmra.mxu0 %v252
      %v604 = vpop.f32.mrf.mxu0
      %v605 = vadd.f32 %v314, %v604
      %v606 = vpop.f32.mrf.mxu0
      %607 = vmatprep.mubr.f32.mxu0 %v256
      %608 = vmatmul.mubr.f32.gmra.mxu0 %v255
      %v609 = vpop.f32.mrf.mxu0
      %v610 = vadd.f32 %v314, %v609
      %v611 = vpop.f32.mrf.mxu0
      %612 = vmatprep.mubr.f32.mxu0 %v259
      %613 = vmatmul.mubr.f32.gmra.mxu0 %v258
      %v614 = vpop.f32.mrf.mxu0
      %v615 = vadd.f32 %v314, %v614
      %v616 = vpop.f32.mrf.mxu0
      %617 = vmatprep.mubr.f32.mxu0 %v262
      %618 = vmatmul.mubr.f32.gmra.mxu0 %v261
      %v619 = vpop.f32.mrf.mxu0
      %v620 = vadd.f32 %v314, %v619
      %v621 = vpop.f32.mrf.mxu0
      %622 = vmatprep.mubr.f32.mxu0 %v265
      %623 = vmatmul.mubr.f32.gmra.mxu0 %v264
      %v624 = vpop.f32.mrf.mxu0
      %v625 = vadd.f32 %v314, %v624
      %v626 = vpop.f32.mrf.mxu0
      %627 = vmatprep.mubr.f32.mxu0 %v268
      %628 = vmatmul.mubr.f32.gmra.mxu0 %v267
      %v629 = vpop.f32.mrf.mxu0
      %v630 = vadd.f32 %v314, %v629
      %v631 = vpop.f32.mrf.mxu0
      %632 = vmatprep.mubr.f32.mxu0 %v271
      %633 = vmatmul.mubr.f32.gmra.mxu0 %v270
      %v634 = vpop.f32.mrf.mxu0
      %v635 = vadd.f32 %v314, %v634
      %v636 = vpop.f32.mrf.mxu0
      %637 = vdwg.mxu0
      %638 = vmatprep.subr.mxu0 0.0
      %639 = vmatpush1.msra.mxu0 0.0
      %640 = vmatprep.subr.mxu0 0.0
      %641 = vmatpush1.msra.mxu0 0.0
      %642 = vmatprep.subr.mxu0 0.0
      %643 = vmatpush1.msra.mxu0 0.0
      %644 = vmatprep.subr.mxu0 0.0
      %645 = vmatpush1.msra.mxu0 0.0
      %646 = vmatprep.subr.mxu0 0.0
      %647 = vmatpush1.msra.mxu0 0.0
      %648 = vmatprep.subr.mxu0 0.0
      %649 = vmatpush1.msra.mxu0 0.0
      %650 = vmatprep.subr.mxu0 0.0
      %651 = vmatpush1.msra.mxu0 0.0
      %652 = vmatprep.subr.mxu0 0.0
      %653 = vmatpush1.msra.mxu0 0.0
      %654 = vmatprep.subr.mxu0 0.0
      %655 = vmatpush1.msra.mxu0 0.0
      %656 = vmatprep.subr.mxu0 0.0
      %657 = vmatpush1.msra.mxu0 0.0
      %658 = vmatprep.subr.mxu0 0.0
      %659 = vmatpush1.msra.mxu0 0.0
      %660 = vmatprep.subr.mxu0 0.0
      %661 = vmatpush1.msra.mxu0 0.0
      %662 = vmatprep.subr.mxu0 0.0
      %663 = vmatpush1.msra.mxu0 %v308
      %664 = vmatprep.subr.mxu0 0.0
      %665 = vmatpush1.msra.mxu0 %v307
      %666 = vmatprep.subr.mxu0 0.0
      %667 = vmatpush1.msra.mxu0 %v306
      %668 = vmatprep.subr.mxu0 0.0
      %669 = vmatpush1.msra.mxu0 %v305
      %670 = vmatprep.subr.mxu0 0.0
      %671 = vmatpush2.msra.mxu0 0.0
      %672 = vmatprep.subr.mxu0 0.0
      %673 = vmatpush2.msra.mxu0 0.0
      %674 = vmatprep.subr.mxu0 0.0
      %675 = vmatpush2.msra.mxu0 0.0
      %676 = vmatprep.subr.mxu0 0.0
      %677 = vmatpush2.msra.mxu0 0.0
      %678 = vmatprep.subr.mxu0 0.0
      %679 = vmatpush2.msra.mxu0 0.0
      %680 = vmatprep.subr.mxu0 0.0
      %681 = vmatpush2.msra.mxu0 0.0
      %682 = vmatprep.subr.mxu0 0.0
      %683 = vmatpush2.msra.mxu0 0.0
      %684 = vmatprep.subr.mxu0 0.0
      %685 = vmatpush2.msra.mxu0 0.0
      %686 = vmatprep.subr.mxu0 0.0
      %687 = vmatpush2.msra.mxu0 0.0
      %688 = vmatprep.subr.mxu0 0.0
      %689 = vmatpush2.msra.mxu0 0.0
      %690 = vmatprep.subr.mxu0 0.0
      %691 = vmatpush2.msra.mxu0 0.0
      %692 = vmatprep.subr.mxu0 0.0
      %693 = vmatpush2.msra.mxu0 0.0
      %694 = vmatprep.subr.mxu0 0.0
      %695 = vmatpush2.msra.mxu0 0.0
      %696 = vmatprep.subr.mxu0 0.0
      %697 = vmatpush2.msra.mxu0 0.0
      %698 = vmatprep.subr.mxu0 0.0
      %699 = vmatpush2.msra.mxu0 0.0
      %700 = vmatprep.subr.mxu0 0.0
      %701 = vmatpush2.msra.mxu0 0.0
      %702 = vmatprep.mubr.f32.mxu0 0.0
      %703 = vmatmul.mubr.f32.gmra.mxu0 %v318
      %v704 = vpop.f32.mrf.mxu0
      %v705 = vadd.f32 %v480, %v704
      %v706 = vpop.f32.mrf.mxu0
      %707 = vmatprep.mubr.f32.mxu0 0.0
      %708 = vmatmul.mubr.f32.gmra.mxu0 %v321
      %v709 = vpop.f32.mrf.mxu0
      %v710 = vadd.f32 %v485, %v709
      %v711 = vpop.f32.mrf.mxu0
      %712 = vmatprep.mubr.f32.mxu0 0.0
      %713 = vmatmul.mubr.f32.gmra.mxu0 %v324
      %v714 = vpop.f32.mrf.mxu0
      %v715 = vadd.f32 %v490, %v714
      %v716 = vpop.f32.mrf.mxu0
      %717 = vmatprep.mubr.f32.mxu0 0.0
      %718 = vmatmul.mubr.f32.gmra.mxu0 %v327
      %v719 = vpop.f32.mrf.mxu0
      %v720 = vadd.f32 %v495, %v719
      %v721 = vpop.f32.mrf.mxu0
      %722 = vmatprep.mubr.f32.mxu0 0.0
      %723 = vmatmul.mubr.f32.gmra.mxu0 %v330
      %v724 = vpop.f32.mrf.mxu0
      %v725 = vadd.f32 %v500, %v724
      %v726 = vpop.f32.mrf.mxu0
      %727 = vmatprep.mubr.f32.mxu0 0.0
      %728 = vmatmul.mubr.f32.gmra.mxu0 %v333
      %v729 = vpop.f32.mrf.mxu0
      %v730 = vadd.f32 %v505, %v729
      %v731 = vpop.f32.mrf.mxu0
      %732 = vmatprep.mubr.f32.mxu0 0.0
      %733 = vmatmul.mubr.f32.gmra.mxu0 %v336
      %v734 = vpop.f32.mrf.mxu0
      %v735 = vadd.f32 %v510, %v734
      %v736 = vpop.f32.mrf.mxu0
      %737 = vmatprep.mubr.f32.mxu0 0.0
      %738 = vmatmul.mubr.f32.gmra.mxu0 %v339
      %v739 = vpop.f32.mrf.mxu0
      %v740 = vadd.f32 %v515, %v739
      %v741 = vpop.f32.mrf.mxu0
      %742 = vmatprep.mubr.f32.mxu0 0.0
      %743 = vmatmul.mubr.f32.gmra.mxu0 %v342
      %v744 = vpop.f32.mrf.mxu0
      %v745 = vadd.f32 %v520, %v744
      %v746 = vpop.f32.mrf.mxu0
      %747 = vmatprep.mubr.f32.mxu0 0.0
      %748 = vmatmul.mubr.f32.gmra.mxu0 %v345
      %v749 = vpop.f32.mrf.mxu0
      %v750 = vadd.f32 %v525, %v749
      %v751 = vpop.f32.mrf.mxu0
      %752 = vmatprep.mubr.f32.mxu0 0.0
      %753 = vmatmul.mubr.f32.gmra.mxu0 %v348
      %v754 = vpop.f32.mrf.mxu0
      %v755 = vadd.f32 %v530, %v754
      %v756 = vpop.f32.mrf.mxu0
      %757 = vmatprep.mubr.f32.mxu0 0.0
      %758 = vmatmul.mubr.f32.gmra.mxu0 %v351
      %v759 = vpop.f32.mrf.mxu0
      %v760 = vadd.f32 %v535, %v759
      %v761 = vpop.f32.mrf.mxu0
      %762 = vmatprep.mubr.f32.mxu0 0.0
      %763 = vmatmul.mubr.f32.gmra.mxu0 %v354
      %v764 = vpop.f32.mrf.mxu0
      %v765 = vadd.f32 %v540, %v764
      %v766 = vpop.f32.mrf.mxu0
      %767 = vmatprep.mubr.f32.mxu0 0.0
      %768 = vmatmul.mubr.f32.gmra.mxu0 %v357
      %v769 = vpop.f32.mrf.mxu0
      %v770 = vadd.f32 %v545, %v769
      %v771 = vpop.f32.mrf.mxu0
      %772 = vmatprep.mubr.f32.mxu0 0.0
      %773 = vmatmul.mubr.f32.gmra.mxu0 %v360
      %v774 = vpop.f32.mrf.mxu0
      %v775 = vadd.f32 %v550, %v774
      %v776 = vpop.f32.mrf.mxu0
      %777 = vmatprep.mubr.f32.mxu0 0.0
      %778 = vmatmul.mubr.f32.gmra.mxu0 %v363
      %v779 = vpop.f32.mrf.mxu0
      %v780 = vadd.f32 %v555, %v779
      %v781 = vpop.f32.mrf.mxu0
      %782 = vmatprep.mubr.f32.mxu0 0.0
      %783 = vmatmul.mubr.f32.gmra.mxu0 %v366
      %v784 = vpop.f32.mrf.mxu0
      %v785 = vadd.f32 %v560, %v784
      %v786 = vpop.f32.mrf.mxu0
      %787 = vmatprep.mubr.f32.mxu0 0.0
      %788 = vmatmul.mubr.f32.gmra.mxu0 %v369
      %v789 = vpop.f32.mrf.mxu0
      %v790 = vadd.f32 %v565, %v789
      %v791 = vpop.f32.mrf.mxu0
      %792 = vmatprep.mubr.f32.mxu0 0.0
      %793 = vmatmul.mubr.f32.gmra.mxu0 %v372
      %v794 = vpop.f32.mrf.mxu0
      %v795 = vadd.f32 %v570, %v794
      %v796 = vpop.f32.mrf.mxu0
      %797 = vmatprep.mubr.f32.mxu0 0.0
      %798 = vmatmul.mubr.f32.gmra.mxu0 %v375
      %v799 = vpop.f32.mrf.mxu0
      %v800 = vadd.f32 %v575, %v799
      %v801 = vpop.f32.mrf.mxu0
      %802 = vmatprep.mubr.f32.mxu0 0.0
      %803 = vmatmul.mubr.f32.gmra.mxu0 %v378
      %v804 = vpop.f32.mrf.mxu0
      %v805 = vadd.f32 %v580, %v804
      %v806 = vpop.f32.mrf.mxu0
      %807 = vmatprep.mubr.f32.mxu0 0.0
      %808 = vmatmul.mubr.f32.gmra.mxu0 %v381
      %v809 = vpop.f32.mrf.mxu0
      %v810 = vadd.f32 %v585, %v809
      %v811 = vpop.f32.mrf.mxu0
      %812 = vmatprep.mubr.f32.mxu0 0.0
      %813 = vmatmul.mubr.f32.gmra.mxu0 %v384
      %v814 = vpop.f32.mrf.mxu0
      %v815 = vadd.f32 %v590, %v814
      %v816 = vpop.f32.mrf.mxu0
      %817 = vmatprep.mubr.f32.mxu0 0.0
      %818 = vmatmul.mubr.f32.gmra.mxu0 %v387
      %v819 = vpop.f32.mrf.mxu0
      %v820 = vadd.f32 %v595, %v819
      %v821 = vpop.f32.mrf.mxu0
      %822 = vmatprep.mubr.f32.mxu0 0.0
      %823 = vmatmul.mubr.f32.gmra.mxu0 %v390
      %v824 = vpop.f32.mrf.mxu0
      %v825 = vadd.f32 %v600, %v824
      %v826 = vpop.f32.mrf.mxu0
      %827 = vmatprep.mubr.f32.mxu0 0.0
      %828 = vmatmul.mubr.f32.gmra.mxu0 %v393
      %v829 = vpop.f32.mrf.mxu0
      %v830 = vadd.f32 %v605, %v829
      %v831 = vpop.f32.mrf.mxu0
      %832 = vmatprep.mubr.f32.mxu0 0.0
      %833 = vmatmul.mubr.f32.gmra.mxu0 %v396
      %v834 = vpop.f32.mrf.mxu0
      %v835 = vadd.f32 %v610, %v834
      %v836 = vpop.f32.mrf.mxu0
      %837 = vmatprep.mubr.f32.mxu0 0.0
      %838 = vmatmul.mubr.f32.gmra.mxu0 %v399
      %v839 = vpop.f32.mrf.mxu0
      %v840 = vadd.f32 %v615, %v839
      %v841 = vpop.f32.mrf.mxu0
      %842 = vmatprep.mubr.f32.mxu0 0.0
      %843 = vmatmul.mubr.f32.gmra.mxu0 %v402
      %v844 = vpop.f32.mrf.mxu0
      %v845 = vadd.f32 %v620, %v844
      %v846 = vpop.f32.mrf.mxu0
      %847 = vmatprep.mubr.f32.mxu0 0.0
      %848 = vmatmul.mubr.f32.gmra.mxu0 %v405
      %v849 = vpop.f32.mrf.mxu0
      %v850 = vadd.f32 %v625, %v849
      %v851 = vpop.f32.mrf.mxu0
      %852 = vmatprep.mubr.f32.mxu0 0.0
      %853 = vmatmul.mubr.f32.gmra.mxu0 %v408
      %v854 = vpop.f32.mrf.mxu0
      %v855 = vadd.f32 %v630, %v854
      %v856 = vpop.f32.mrf.mxu0
      %857 = vmatprep.mubr.f32.mxu0 0.0
      %858 = vmatmul.mubr.f32.gmra.mxu0 %v411
      %v859 = vpop.f32.mrf.mxu0
      %v860 = vadd.f32 %v635, %v859
      %v861 = vpop.f32.mrf.mxu0
      %862 = vdwg.mxu0
      %v863 = vmin.f32 %v705, 0.0
      %v864 = vmin.f32 %v710, 0.0
      %v865 = vmin.f32 %v715, 0.0
      %v866 = vmin.f32 %v720, 0.0
      %v867 = vmin.f32 %v725, 0.0
      %v868 = vmin.f32 %v730, 0.0
      %v869 = vmin.f32 %v735, 0.0
      %v870 = vmin.f32 %v740, 0.0
      %v871 = vmin.f32 %v745, 0.0
      %v872 = vmin.f32 %v750, 0.0
      %v873 = vmin.f32 %v755, 0.0
      %v874 = vmin.f32 %v760, 0.0
      %v875 = vmin.f32 %v765, 0.0
      %v876 = vmin.f32 %v770, 0.0
      %v877 = vmin.f32 %v775, 0.0
      %v878 = vmin.f32 %v780, 0.0
      %v879 = vmin.f32 %v785, 0.0
      %v880 = vmin.f32 %v790, 0.0
      %v881 = vmin.f32 %v795, 0.0
      %v882 = vmin.f32 %v800, 0.0
      %v883 = vmin.f32 %v805, 0.0
      %v884 = vmin.f32 %v810, 0.0
      %v885 = vmin.f32 %v815, 0.0
      %v886 = vmin.f32 %v820, 0.0
      %v887 = vmin.f32 %v825, 0.0
      %v888 = vmin.f32 %v830, 0.0
      %v889 = vmin.f32 %v835, 0.0
      %v890 = vmin.f32 %v840, 0.0
      %v891 = vmin.f32 %v845, 0.0
      %v892 = vmin.f32 %v850, 0.0
      %v893 = vmin.f32 %v855, 0.0
      %v894 = vmin.f32 %v860, 0.0
      %v895 = vmul.f32 %v863, 1.442695
      %v896 = vpow.pop %v895
      %v897 = vmul.f32 %v864, 1.442695
      %v898 = vpow.pop %v897
      %v899 = vmul.f32 %v865, 1.442695
      %v900 = vpow.pop %v899
      %v901 = vmul.f32 %v866, 1.442695
      %v902 = vpow.pop %v901
      %v903 = vmul.f32 %v867, 1.442695
      %v904 = vpow.pop %v903
      %v905 = vmul.f32 %v868, 1.442695
      %v906 = vpow.pop %v905
      %v907 = vmul.f32 %v869, 1.442695
      %v908 = vpow.pop %v907
      %v909 = vmul.f32 %v870, 1.442695
      %v910 = vpow.pop %v909
      %v911 = vmul.f32 %v871, 1.442695
      %v912 = vpow.pop %v911
      %v913 = vmul.f32 %v872, 1.442695
      %v914 = vpow.pop %v913
      %v915 = vmul.f32 %v873, 1.442695
      %v916 = vpow.pop %v915
      %v917 = vmul.f32 %v874, 1.442695
      %v918 = vpow.pop %v917
      %v919 = vmul.f32 %v875, 1.442695
      %v920 = vpow.pop %v919
      %v921 = vmul.f32 %v876, 1.442695
      %v922 = vpow.pop %v921
      %v923 = vmul.f32 %v877, 1.442695
      %v924 = vpow.pop %v923
      %v925 = vmul.f32 %v878, 1.442695
      %v926 = vpow.pop %v925
      %v927 = vmul.f32 %v879, 1.442695
      %v928 = vpow.pop %v927
      %v929 = vmul.f32 %v880, 1.442695
      %v930 = vpow.pop %v929
      %v931 = vmul.f32 %v881, 1.442695
      %v932 = vpow.pop %v931
      %v933 = vmul.f32 %v882, 1.442695
      %v934 = vpow.pop %v933
      %v935 = vmul.f32 %v883, 1.442695
      %v936 = vpow.pop %v935
      %v937 = vmul.f32 %v884, 1.442695
      %v938 = vpow.pop %v937
      %v939 = vmul.f32 %v885, 1.442695
      %v940 = vpow.pop %v939
      %v941 = vmul.f32 %v886, 1.442695
      %v942 = vpow.pop %v941
      %v943 = vmul.f32 %v887, 1.442695
      %v944 = vpow.pop %v943
      %v945 = vmul.f32 %v888, 1.442695
      %v946 = vpow.pop %v945
      %v947 = vmul.f32 %v889, 1.442695
      %v948 = vpow.pop %v947
      %v949 = vmul.f32 %v890, 1.442695
      %v950 = vpow.pop %v949
      %v951 = vmul.f32 %v891, 1.442695
      %v952 = vpow.pop %v951
      %v953 = vmul.f32 %v892, 1.442695
      %v954 = vpow.pop %v953
      %v955 = vmul.f32 %v893, 1.442695
      %v956 = vpow.pop %v955
      %v957 = vmul.f32 %v894, 1.442695
      %v958 = vpow.pop %v957
      %v959 = vsub.f32 %v896, 1.0
      %v960 = vsub.f32 %v898, 1.0
      %v961 = vsub.f32 %v900, 1.0
      %v962 = vsub.f32 %v902, 1.0
      %v963 = vsub.f32 %v904, 1.0
      %v964 = vsub.f32 %v906, 1.0
      %v965 = vsub.f32 %v908, 1.0
      %v966 = vsub.f32 %v910, 1.0
      %v967 = vsub.f32 %v912, 1.0
      %v968 = vsub.f32 %v914, 1.0
      %v969 = vsub.f32 %v916, 1.0
      %v970 = vsub.f32 %v918, 1.0
      %v971 = vsub.f32 %v920, 1.0
      %v972 = vsub.f32 %v922, 1.0
      %v973 = vsub.f32 %v924, 1.0
      %v974 = vsub.f32 %v926, 1.0
      %v975 = vsub.f32 %v928, 1.0
      %v976 = vsub.f32 %v930, 1.0
      %v977 = vsub.f32 %v932, 1.0
      %v978 = vsub.f32 %v934, 1.0
      %v979 = vsub.f32 %v936, 1.0
      %v980 = vsub.f32 %v938, 1.0
      %v981 = vsub.f32 %v940, 1.0
      %v982 = vsub.f32 %v942, 1.0
      %v983 = vsub.f32 %v944, 1.0
      %v984 = vsub.f32 %v946, 1.0
      %v985 = vsub.f32 %v948, 1.0
      %v986 = vsub.f32 %v950, 1.0
      %v987 = vsub.f32 %v952, 1.0
      %v988 = vsub.f32 %v954, 1.0
      %v989 = vsub.f32 %v956, 1.0
      %v990 = vsub.f32 %v958, 1.0
      %v991 = vmul.f32 %v959, 1.6732632
      %v992 = vmul.f32 %v960, 1.6732632
      %v993 = vmul.f32 %v961, 1.6732632
      %v994 = vmul.f32 %v962, 1.6732632
      %v995 = vmul.f32 %v963, 1.6732632
      %v996 = vmul.f32 %v964, 1.6732632
      %v997 = vmul.f32 %v965, 1.6732632
      %v998 = vmul.f32 %v966, 1.6732632
      %v999 = vmul.f32 %v967, 1.6732632
      %v1000 = vmul.f32 %v968, 1.6732632
      %v1001 = vmul.f32 %v969, 1.6732632
      %v1002 = vmul.f32 %v970, 1.6732632
      %v1003 = vmul.f32 %v971, 1.6732632
      %v1004 = vmul.f32 %v972, 1.6732632
      %v1005 = vmul.f32 %v973, 1.6732632
      %v1006 = vmul.f32 %v974, 1.6732632
      %v1007 = vmul.f32 %v975, 1.6732632
      %v1008 = vmul.f32 %v976, 1.6732632
      %v1009 = vmul.f32 %v977, 1.6732632
      %v1010 = vmul.f32 %v978, 1.6732632
      %v1011 = vmul.f32 %v979, 1.6732632
      %v1012 = vmul.f32 %v980, 1.6732632
      %v1013 = vmul.f32 %v981, 1.6732632
      %v1014 = vmul.f32 %v982, 1.6732632
      %v1015 = vmul.f32 %v983, 1.6732632
      %v1016 = vmul.f32 %v984, 1.6732632
      %v1017 = vmul.f32 %v985, 1.6732632
      %v1018 = vmul.f32 %v986, 1.6732632
      %v1019 = vmul.f32 %v987, 1.6732632
      %v1020 = vmul.f32 %v988, 1.6732632
      %v1021 = vmul.f32 %v989, 1.6732632
      %v1022 = vmul.f32 %v990, 1.6732632
      %vm1023 = vcmp.gt.f32.partialorder %v705, 0.0
      %vm1024 = vcmp.gt.f32.partialorder %v710, 0.0
      %vm1025 = vcmp.gt.f32.partialorder %v715, 0.0
      %vm1026 = vcmp.gt.f32.partialorder %v720, 0.0
      %vm1027 = vcmp.gt.f32.partialorder %v725, 0.0
      %vm1028 = vcmp.gt.f32.partialorder %v730, 0.0
      %vm1029 = vcmp.gt.f32.partialorder %v735, 0.0
      %vm1030 = vcmp.gt.f32.partialorder %v740, 0.0
      %vm1031 = vcmp.gt.f32.partialorder %v745, 0.0
      %vm1032 = vcmp.gt.f32.partialorder %v750, 0.0
      %vm1033 = vcmp.gt.f32.partialorder %v755, 0.0
      %vm1034 = vcmp.gt.f32.partialorder %v760, 0.0
      %vm1035 = vcmp.gt.f32.partialorder %v765, 0.0
      %vm1036 = vcmp.gt.f32.partialorder %v770, 0.0
      %vm1037 = vcmp.gt.f32.partialorder %v775, 0.0
      %vm1038 = vcmp.gt.f32.partialorder %v780, 0.0
      %vm1039 = vcmp.gt.f32.partialorder %v785, 0.0
      %vm1040 = vcmp.gt.f32.partialorder %v790, 0.0
      %vm1041 = vcmp.gt.f32.partialorder %v795, 0.0
      %vm1042 = vcmp.gt.f32.partialorder %v800, 0.0
      %vm1043 = vcmp.gt.f32.partialorder %v805, 0.0
      %vm1044 = vcmp.gt.f32.partialorder %v810, 0.0
      %vm1045 = vcmp.gt.f32.partialorder %v815, 0.0
      %vm1046 = vcmp.gt.f32.partialorder %v820, 0.0
      %vm1047 = vcmp.gt.f32.partialorder %v825, 0.0
      %vm1048 = vcmp.gt.f32.partialorder %v830, 0.0
      %vm1049 = vcmp.gt.f32.partialorder %v835, 0.0
      %vm1050 = vcmp.gt.f32.partialorder %v840, 0.0
      %vm1051 = vcmp.gt.f32.partialorder %v845, 0.0
      %vm1052 = vcmp.gt.f32.partialorder %v850, 0.0
      %vm1053 = vcmp.gt.f32.partialorder %v855, 0.0
      %vm1054 = vcmp.gt.f32.partialorder %v860, 0.0
      %v1055 = vsel %vm1023, %v705, %v991
      %v1056 = vsel %vm1024, %v710, %v992
      %v1057 = vsel %vm1025, %v715, %v993
      %v1058 = vsel %vm1026, %v720, %v994
      %v1059 = vsel %vm1027, %v725, %v995
      %v1060 = vsel %vm1028, %v730, %v996
      %v1061 = vsel %vm1029, %v735, %v997
      %v1062 = vsel %vm1030, %v740, %v998
      %v1063 = vsel %vm1031, %v745, %v999
      %v1064 = vsel %vm1032, %v750, %v1000
      %v1065 = vsel %vm1033, %v755, %v1001
      %v1066 = vsel %vm1034, %v760, %v1002
      %v1067 = vsel %vm1035, %v765, %v1003
      %v1068 = vsel %vm1036, %v770, %v1004
      %v1069 = vsel %vm1037, %v775, %v1005
      %v1070 = vsel %vm1038, %v780, %v1006
      %v1071 = vsel %vm1039, %v785, %v1007
      %v1072 = vsel %vm1040, %v790, %v1008
      %v1073 = vsel %vm1041, %v795, %v1009
      %v1074 = vsel %vm1042, %v800, %v1010
      %v1075 = vsel %vm1043, %v805, %v1011
      %v1076 = vsel %vm1044, %v810, %v1012
      %v1077 = vsel %vm1045, %v815, %v1013
      %v1078 = vsel %vm1046, %v820, %v1014
      %v1079 = vsel %vm1047, %v825, %v1015
      %v1080 = vsel %vm1048, %v830, %v1016
      %v1081 = vsel %vm1049, %v835, %v1017
      %v1082 = vsel %vm1050, %v840, %v1018
      %v1083 = vsel %vm1051, %v845, %v1019
      %v1084 = vsel %vm1052, %v850, %v1020
      %v1085 = vsel %vm1053, %v855, %v1021
      %v1086 = vsel %vm1054, %v860, %v1022
      %v1087 = vmul.f32 %v1055, 1.050701
      %v1088 = vmul.f32 %v1056, 1.050701
      %v1089 = vmul.f32 %v1057, 1.050701
      %v1090 = vmul.f32 %v1058, 1.050701
      %v1091 = vmul.f32 %v1059, 1.050701
      %v1092 = vmul.f32 %v1060, 1.050701
      %v1093 = vmul.f32 %v1061, 1.050701
      %v1094 = vmul.f32 %v1062, 1.050701
      %v1095 = vmul.f32 %v1063, 1.050701
      %v1096 = vmul.f32 %v1064, 1.050701
      %v1097 = vmul.f32 %v1065, 1.050701
      %v1098 = vmul.f32 %v1066, 1.050701
      %v1099 = vmul.f32 %v1067, 1.050701
      %v1100 = vmul.f32 %v1068, 1.050701
      %v1101 = vmul.f32 %v1069, 1.050701
      %v1102 = vmul.f32 %v1070, 1.050701
      %v1103 = vmul.f32 %v1071, 1.050701
      %v1104 = vmul.f32 %v1072, 1.050701
      %v1105 = vmul.f32 %v1073, 1.050701
      %v1106 = vmul.f32 %v1074, 1.050701
      %v1107 = vmul.f32 %v1075, 1.050701
      %v1108 = vmul.f32 %v1076, 1.050701
      %v1109 = vmul.f32 %v1077, 1.050701
      %v1110 = vmul.f32 %v1078, 1.050701
      %v1111 = vmul.f32 %v1079, 1.050701
      %v1112 = vmul.f32 %v1080, 1.050701
      %v1113 = vmul.f32 %v1081, 1.050701
      %v1114 = vmul.f32 %v1082, 1.050701
      %v1115 = vmul.f32 %v1083, 1.050701
      %v1116 = vmul.f32 %v1084, 1.050701
      %v1117 = vmul.f32 %v1085, 1.050701
      %v1118 = vmul.f32 %v1086, 1.050701
      %v1119 = vmax.f32 %v1087, %v1095
      %v1120 = vmax.f32 %v1088, %v1096
      %v1121 = vmax.f32 %v1089, %v1097
      %v1122 = vmax.f32 %v1090, %v1098
      %v1123 = vmax.f32 %v1091, %v1099
      %v1124 = vmax.f32 %v1092, %v1100
      %v1125 = vmax.f32 %v1093, %v1101
      %v1126 = vmax.f32 %v1094, %v1102
      %v1127 = vmax.f32 %v1103, %v1111
      %v1128 = vmax.f32 %v1104, %v1112
      %v1129 = vmax.f32 %v1105, %v1113
      %v1130 = vmax.f32 %v1106, %v1114
      %v1131 = vmax.f32 %v1107, %v1115
      %v1132 = vmax.f32 %v1108, %v1116
      %v1133 = vmax.f32 %v1109, %v1117
      %v1134 = vmax.f32 %v1110, %v1118
      %v1135 = vmax.f32 %v1119, %v1127
      %v1136 = vmax.f32 %v1120, %v1128
      %v1137 = vmax.f32 %v1121, %v1129
      %v1138 = vmax.f32 %v1122, %v1130
      %v1139 = vmax.f32 %v1123, %v1131
      %v1140 = vmax.f32 %v1124, %v1132
      %v1141 = vmax.f32 %v1125, %v1133
      %v1142 = vmax.f32 %v1126, %v1134
      %vm1143 = vcmask 523264
      %1144 = vst.msk [vmem:[%s175] sm:$0xff] %vm1143, %v1135
      %1145 = vst.msk [vmem:[%s175 + $0x8] sm:$0xff] %vm1143, %v1136
      %1146 = vst.msk [vmem:[%s175 + $0x10] sm:$0xff] %vm1143, %v1137
      %1147 = vst.msk [vmem:[%s175 + $0x18] sm:$0xff] %vm1143, %v1138
      %1148 = vst.msk [vmem:[%s175 + $0x20] sm:$0xff] %vm1143, %v1139
      %1149 = vst.msk [vmem:[%s175 + $0x28] sm:$0xff] %vm1143, %v1140
      %1150 = vst.msk [vmem:[%s175 + $0x30] sm:$0xff] %vm1143, %v1141
      %1151 = vst.msk [vmem:[%s175 + $0x38] sm:$0xff] %vm1143, %v1142
      %s1152 = smul.u32 8, %s14
      %p1153 = scmp.lt.s32.totalorder %s1152, 15
      %s1154 = scalar_select %p1153, %s1152, 15
      %s1155 = smul.addr %s1154, 8
      %s1156 = scalar_lea.vmem %s3, %s1155
      // Predicated region
      $region33: #{cnn_forward.4} parent=31 // pred_check
        %p1157 = pneg %p100
      $region34: #{cnn_forward.4} parent=31 // pred_check_branch
        %1159 = sbr.rel (%p1157) target = $region36
      $region35: #{cnn_forward.4} parent=31 // pred_region
        %s1160 = smul.u32 8, %s14
      $region36: #{cnn_forward.4} parent=31 // pred_fallthru
        _
    $region32: #{cnn_forward.4} parent=5 // pred_fallthru
      _
    %p1161 = scmp.le.s32.totalorder 2, %s9
    // Predicated region
    $region37: #{cnn_forward.4} parent=5 // pred_check
      %p1162 = pneg %p1161
    $region38: #{cnn_forward.4} parent=5 // pred_check_branch
      %1164 = sbr.rel (%p1162) target = $region40
    $region39: #{cnn_forward.4} parent=5 // pred_region
      %s1165 = ssub.s32 %s9, 2
      // Predicated region
      $region41: #{cnn_forward.4} parent=39 // pred_check
        %p1166 = pneg %p106
      $region42: #{cnn_forward.4} parent=39 // pred_check_branch
        %1168 = sbr.rel (%p1166) target = $region44
      $region43: #{cnn_forward.4} parent=39 // pred_region
        %s1169 = smul.u32 8, %s15
        %p1170 = scmp.lt.s32.totalorder %s1169, 15
        %s1171 = scalar_select %p1170, %s1169, 15
        %s1172 = smul.addr %s1171, 8
        %s1173 = scalar_lea.vmem %s3, %s1172
      $region44: #{cnn_forward.4} parent=39 // pred_fallthru
        _
    $region40: #{cnn_forward.4} parent=5 // pred_fallthru
      _
  $region6: #{cnn_forward.4} parent=0 // loop_footer
    %s13 = sadd.s32 1, %s9
  $region7: #{cnn_forward.4} parent=0 // loop_footer_branch
    %8 = sbr.rel target = $region3
  $region8: #{cnn_forward.4} parent=0 // loop_exit
    _

// kernel: cnn_forward.5
$region0: #{cnn_forward.5}
  #allocation0 [shape = 'u32[]', space=smem, size = 0x4, offset = 0x4, fixed_abs, tag = 'smem constant byte address 0x4 - core index']
  #allocation1 [shape = 'u32[144,128]{1,0:T(1,128)}', space=vmem, size = 0x12000, scoped, tag = 'internal scratch']
  %s0 = inlined_call_operand.vmem [shape: f32[2,4096], index: 0, kind: input, shape index: {}]
  %s1 = inlined_call_operand.vmem [shape: bf16[4096,256], index: 1, kind: input, shape index: {}]
  %s2 = inlined_call_operand.vmem [shape: f32[1,256], index: 2, kind: input, shape index: {}]
  %s3 = inlined_call_operand.vmem [shape: bf16[256,10], index: 3, kind: input, shape index: {}]
  %s4 = inlined_call_operand.vmem [shape: f32[1,10], index: 4, kind: input, shape index: {}]
  %s5 = inlined_call_operand.hbm [shape: f32[2,10], index: 5, kind: output, shape index: {}]
  %s6 = sld [smem:[#allocation0]]
  $region30: #{cnn_forward.5} parent=0
    _
  %s8 = ssub.s32 1, %s6
  %s9 = scalar_select 0, %s8, %s6
  $region1: #{cnn_forward.5} parent=0
    #allocation2 [shape = 'u8[1024]{0}', space=vmem, size = 0x400, scoped, tag = 'output window, operand 0, single buffered']
    #allocation3 [shape = 's32[1]{0}', space=sflag, size = 0x4, scoped, tag = 'scoped memory for cnn_forward.5']
    %10 = vsyncpa [#allocation3], 0
    // Predicated region
    $region2: #{cnn_forward.5} parent=1 // pred_check
      _
    $region3: #{cnn_forward.5} parent=1 // pred_check_branch
      %12 = sbr.rel (0) target = $region5
    $region4: #{cnn_forward.5} parent=1 // pred_region
      _
    $region5: #{cnn_forward.5} parent=1 // pred_fallthru
      _
    // Predicated region
    $region6: #{cnn_forward.5} parent=1 // pred_check
      _
    $region7: #{cnn_forward.5} parent=1 // pred_check_branch
      %14 = sbr.rel (0) target = $region9
    $region8: #{cnn_forward.5} parent=1 // pred_region
      _
    $region9: #{cnn_forward.5} parent=1 // pred_fallthru
      _
    // Predicated region
    $region10: #{cnn_forward.5} parent=1 // pred_check
      _
    $region11: #{cnn_forward.5} parent=1 // pred_check_branch
      %16 = sbr.rel (0) target = $region13
    $region12: #{cnn_forward.5} parent=1 // pred_region
      _
    $region13: #{cnn_forward.5} parent=1 // pred_fallthru
      _
    // Predicated region
    $region14: #{cnn_forward.5} parent=1 // pred_check
      _
    $region15: #{cnn_forward.5} parent=1 // pred_check_branch
      %18 = sbr.rel (0) target = $region17
    $region16: #{cnn_forward.5} parent=1 // pred_region
      _
    $region17: #{cnn_forward.5} parent=1 // pred_fallthru
      _
    // Predicated region
    $region18: #{cnn_forward.5} parent=1 // pred_check
      _
    $region19: #{cnn_forward.5} parent=1 // pred_check_branch
      %20 = sbr.rel (0) target = $region21
    $region20: #{cnn_forward.5} parent=1 // pred_region
      _
    $region21: #{cnn_forward.5} parent=1 // pred_fallthru
      _
    %v22 = vld [vmem:[%s0] sm:$0xff]
    %v23 = vld [vmem:[%s0 + $0x8] sm:$0xff]
    %v24 = vld [vmem:[%s0 + $0x10] sm:$0xff]
    %v25 = vld [vmem:[%s0 + $0x18] sm:$0xff]
    %v26 = vld [vmem:[%s0 + $0x20] sm:$0xff]
    %v27 = vld [vmem:[%s0 + $0x28] sm:$0xff]
    %v28 = vld [vmem:[%s0 + $0x30] sm:$0xff]
    %v29 = vld [vmem:[%s0 + $0x38] sm:$0xff]
    %v38 = vcombine.high %v22, %v22
    %v40 = vunpack.c.l.s4 1983009808
    %v41 = vunpack.c.0.s8 %v40
    %v42 = vlaneseq
    %v43 = vshrl.u32 %v42, 7
    %v44 = vsub.s32 %v41, %v43
    %v45 = vrot.slane %v22, %v44
    %v47 = vunpack.c.l.s4 1983009808
    %v48 = vunpack.c.0.s8 %v47
    %v49 = vlaneseq
    %v50 = vshrl.u32 %v49, 7
    %v51 = vsub.s32 %v48, %v50
    %v52 = vrot.slane %v38, %v51
    %v53 = vcombine.high %v45, %v45
    %v54 = vcombine.high %v52, %v52
    %v55 = vcombine.high %v23, %v23
    %v57 = vunpack.c.l.s4 1983009808
    %v58 = vunpack.c.0.s8 %v57
    %v59 = vlaneseq
    %v60 = vshrl.u32 %v59, 7
    %v61 = vsub.s32 %v58, %v60
    %v62 = vrot.slane %v23, %v61
    %v64 = vunpack.c.l.s4 1983009808
    %v65 = vunpack.c.0.s8 %v64
    %v66 = vlaneseq
    %v67 = vshrl.u32 %v66, 7
    %v68 = vsub.s32 %v65, %v67
    %v69 = vrot.slane %v55, %v68
    %v70 = vcombine.high %v62, %v62
    %v71 = vcombine.high %v69, %v69
    %v72 = vcombine.high %v24, %v24
    %v74 = vunpack.c.l.s4 1983009808
    %v75 = vunpack.c.0.s8 %v74
    %v76 = vlaneseq
    %v77 = vshrl.u32 %v76, 7
    %v78 = vsub.s32 %v75, %v77
    %v79 = vrot.slane %v24, %v78
    %v81 = vunpack.c.l.s4 1983009808
    %v82 = vunpack.c.0.s8 %v81
    %v83 = vlaneseq
    %v84 = vshrl.u32 %v83, 7
    %v85 = vsub.s32 %v82, %v84
    %v86 = vrot.slane %v72, %v85
    %v87 = vcombine.high %v79, %v79
    %v88 = vcombine.high %v86, %v86
    %v89 = vcombine.high %v25, %v25
    %v91 = vunpack.c.l.s4 1983009808
    %v92 = vunpack.c.0.s8 %v91
    %v93 = vlaneseq
    %v94 = vshrl.u32 %v93, 7
    %v95 = vsub.s32 %v92, %v94
    %v96 = vrot.slane %v25, %v95
    %v98 = vunpack.c.l.s4 1983009808
    %v99 = vunpack.c.0.s8 %v98
    %v100 = vlaneseq
    %v101 = vshrl.u32 %v100, 7
    %v102 = vsub.s32 %v99, %v101
    %v103 = vrot.slane %v89, %v102
    %v104 = vcombine.high %v96, %v96
    %v105 = vcombine.high %v103, %v103
    %v106 = vcombine.high %v26, %v26
    %v108 = vunpack.c.l.s4 1983009808
    %v109 = vunpack.c.0.s8 %v108
    %v110 = vlaneseq
    %v111 = vshrl.u32 %v110, 7
    %v112 = vsub.s32 %v109, %v111
    %v113 = vrot.slane %v26, %v112
    %v115 = vunpack.c.l.s4 1983009808
    %v116 = vunpack.c.0.s8 %v115
    %v117 = vlaneseq
    %v118 = vshrl.u32 %v117, 7
    %v119 = vsub.s32 %v116, %v118
    %v120 = vrot.slane %v106, %v119
    %v121 = vcombine.high %v113, %v113
    %v122 = vcombine.high %v120, %v120
    %v123 = vcombine.high %v27, %v27
    %v125 = vunpack.c.l.s4 1983009808
    %v126 = vunpack.c.0.s8 %v125
    %v127 = vlaneseq
    %v128 = vshrl.u32 %v127, 7
    %v129 = vsub.s32 %v126, %v128
    %v130 = vrot.slane %v27, %v129
    %v132 = vunpack.c.l.s4 1983009808
    %v133 = vunpack.c.0.s8 %v132
    %v134 = vlaneseq
    %v135 = vshrl.u32 %v134, 7
    %v136 = vsub.s32 %v133, %v135
    %v137 = vrot.slane %v123, %v136
    %v138 = vcombine.high %v130, %v130
    %v139 = vcombine.high %v137, %v137
    %v140 = vcombine.high %v28, %v28
    %v142 = vunpack.c.l.s4 1983009808
    %v143 = vunpack.c.0.s8 %v142
    %v144 = vlaneseq
    %v145 = vshrl.u32 %v144, 7
    %v146 = vsub.s32 %v143, %v145
    %v147 = vrot.slane %v28, %v146
    %v149 = vunpack.c.l.s4 1983009808
    %v150 = vunpack.c.0.s8 %v149
    %v151 = vlaneseq
    %v152 = vshrl.u32 %v151, 7
    %v153 = vsub.s32 %v150, %v152
    %v154 = vrot.slane %v140, %v153
    %v155 = vcombine.high %v147, %v147
    %v156 = vcombine.high %v154, %v154
    %v157 = vcombine.high %v29, %v29
    %v159 = vunpack.c.l.s4 1983009808
    %v160 = vunpack.c.0.s8 %v159
    %v161 = vlaneseq
    %v162 = vshrl.u32 %v161, 7
    %v163 = vsub.s32 %v160, %v162
    %v164 = vrot.slane %v29, %v163
    %v166 = vunpack.c.l.s4 1983009808
    %v167 = vunpack.c.0.s8 %v166
    %v168 = vlaneseq
    %v169 = vshrl.u32 %v168, 7
    %v170 = vsub.s32 %v167, %v169
    %v171 = vrot.slane %v157, %v170
    %v172 = vcombine.high %v164, %v164
    %v173 = vcombine.high %v171, %v171
    %v206 = vpack.c.bf16 %v45, %v45
    %v207 = vpack.c.bf16 %v53, %v53
    %v208 = vpack.c.bf16 %v52, %v52
    %v209 = vpack.c.bf16 %v54, %v54
    %v210 = vpack.c.bf16 %v62, %v62
    %v211 = vpack.c.bf16 %v70, %v70
    %v212 = vpack.c.bf16 %v69, %v69
    %v213 = vpack.c.bf16 %v71, %v71
    %v214 = vpack.c.bf16 %v79, %v79
    %v215 = vpack.c.bf16 %v87, %v87
    %v216 = vpack.c.bf16 %v86, %v86
    %v217 = vpack.c.bf16 %v88, %v88
    %v218 = vpack.c.bf16 %v96, %v96
    %v219 = vpack.c.bf16 %v104, %v104
    %v220 = vpack.c.bf16 %v103, %v103
    %v221 = vpack.c.bf16 %v105, %v105
    %v222 = vpack.c.bf16 %v113, %v113
    %v223 = vpack.c.bf16 %v121, %v121
    %v224 = vpack.c.bf16 %v120, %v120
    %v225 = vpack.c.bf16 %v122, %v122
    %v226 = vpack.c.bf16 %v130, %v130
    %v227 = vpack.c.bf16 %v138, %v138
    %v228 = vpack.c.bf16 %v137, %v137
    %v229 = vpack.c.bf16 %v139, %v139
    %v230 = vpack.c.bf16 %v147, %v147
    %v231 = vpack.c.bf16 %v155, %v155
    %v232 = vpack.c.bf16 %v154, %v154
    %v233 = vpack.c.bf16 %v156, %v156
    %v234 = vpack.c.bf16 %v164, %v164
    %v235 = vpack.c.bf16 %v172, %v172
    %v236 = vpack.c.bf16 %v171, %v171
    %v237 = vpack.c.bf16 %v173, %v173
    %v238 = vld [vmem:[%s1] sm:$0xff]
    %v239 = vld [vmem:[%s1 + $0x8] sm:$0xff]
    %v240 = vld [vmem:[%s1 + $0x10] sm:$0xff]
    %v241 = vld [vmem:[%s1 + $0x18] sm:$0xff]
    %v242 = vld [vmem:[%s1 + $0x20] sm:$0xff]
    %v243 = vld [vmem:[%s1 + $0x28] sm:$0xff]
    %v244 = vld [vmem:[%s1 + $0x30] sm:$0xff]
    %v245 = vld [vmem:[%s1 + $0x38] sm:$0xff]
    %v246 = vld [vmem:[%s1 + $0x40] sm:$0xff]
    %v247 = vld [vmem:[%s1 + $0x48] sm:$0xff]
    %v248 = vld [vmem:[%s1 + $0x50] sm:$0xff]
    %v249 = vld [vmem:[%s1 + $0x58] sm:$0xff]
    %v250 = vld [vmem:[%s1 + $0x60] sm:$0xff]
    %v251 = vld [vmem:[%s1 + $0x68] sm:$0xff]
    %v252 = vld [vmem:[%s1 + $0x70] sm:$0xff]
    %v253 = vld [vmem:[%s1 + $0x78] sm:$0xff]
    %v254 = vld [vmem:[%s1 + $0x80] sm:$0xff]
    %v255 = vld [vmem:[%s1 + $0x88] sm:$0xff]
    %v256 = vld [vmem:[%s1 + $0x90] sm:$0xff]
    %v257 = vld [vmem:[%s1 + $0x98] sm:$0xff]
    %v258 = vld [vmem:[%s1 + $0xa0] sm:$0xff]
    %v259 = vld [vmem:[%s1 + $0xa8] sm:$0xff]
    %v260 = vld [vmem:[%s1 + $0xb0] sm:$0xff]
    %v261 = vld [vmem:[%s1 + $0xb8] sm:$0xff]
    %v262 = vld [vmem:[%s1 + $0xc0] sm:$0xff]
    %v263 = vld [vmem:[%s1 + $0xc8] sm:$0xff]
    %v264 = vld [vmem:[%s1 + $0xd0] sm:$0xff]
    %v265 = vld [vmem:[%s1 + $0xd8] sm:$0xff]
    %v266 = vld [vmem:[%s1 + $0xe0] sm:$0xff]
    %v267 = vld [vmem:[%s1 + $0xe8] sm:$0xff]
    %v268 = vld [vmem:[%s1 + $0xf0] sm:$0xff]
    %v269 = vld [vmem:[%s1 + $0xf8] sm:$0xff]
    %v270 = vld [vmem:[%s1 + $0x100] sm:$0xff]
    %v271 = vld [vmem:[%s1 + $0x108] sm:$0xff]
    %v272 = vld [vmem:[%s1 + $0x110] sm:$0xff]
    %v273 = vld [vmem:[%s1 + $0x118] sm:$0xff]
    %v274 = vld [vmem:[%s1 + $0x120] sm:$0xff]
    %v275 = vld [vmem:[%s1 + $0x128] sm:$0xff]
    %v276 = vld [vmem:[%s1 + $0x130] sm:$0xff]
    %v277 = vld [vmem:[%s1 + $0x138] sm:$0xff]
    %v278 = vld [vmem:[%s1 + $0x140] sm:$0xff]
    %v279 = vld [vmem:[%s1 + $0x148] sm:$0xff]
    %v280 = vld [vmem:[%s1 + $0x150] sm:$0xff]
    %v281 = vld [vmem:[%s1 + $0x158] sm:$0xff]
    %v282 = vld [vmem:[%s1 + $0x160] sm:$0xff]
    %v283 = vld [vmem:[%s1 + $0x168] sm:$0xff]
    %v284 = vld [vmem:[%s1 + $0x170] sm:$0xff]
    %v285 = vld [vmem:[%s1 + $0x178] sm:$0xff]
    %v286 = vld [vmem:[%s1 + $0x180] sm:$0xff]
    %v287 = vld [vmem:[%s1 + $0x188] sm:$0xff]
    %v288 = vld [vmem:[%s1 + $0x190] sm:$0xff]
    %v289 = vld [vmem:[%s1 + $0x198] sm:$0xff]
    %v290 = vld [vmem:[%s1 + $0x1a0] sm:$0xff]
    %v291 = vld [vmem:[%s1 + $0x1a8] sm:$0xff]
    %v292 = vld [vmem:[%s1 + $0x1b0] sm:$0xff]
    %v293 = vld [vmem:[%s1 + $0x1b8] sm:$0xff]
    %v294 = vld [vmem:[%s1 + $0x1c0] sm:$0xff]
    %v295 = vld [vmem:[%s1 + $0x1c8] sm:$0xff]
    %v296 = vld [vmem:[%s1 + $0x1d0] sm:$0xff]
    %v297 = vld [vmem:[%s1 + $0x1d8] sm:$0xff]
    %v298 = vld [vmem:[%s1 + $0x1e0] sm:$0xff]
    %v299 = vld [vmem:[%s1 + $0x1e8] sm:$0xff]
    %v300 = vld [vmem:[%s1 + $0x1f0] sm:$0xff]
    %v301 = vld [vmem:[%s1 + $0x1f8] sm:$0xff]
    %v302 = vld [vmem:[%s1 + $0x200] sm:$0xff]
    %v303 = vld [vmem:[%s1 + $0x208] sm:$0xff]
    %v304 = vld [vmem:[%s1 + $0x210] sm:$0xff]
    %v305 = vld [vmem:[%s1 + $0x218] sm:$0xff]
    %v306 = vld [vmem:[%s1 + $0x220] sm:$0xff]
    %v307 = vld [vmem:[%s1 + $0x228] sm:$0xff]
    %v308 = vld [vmem:[%s1 + $0x230] sm:$0xff]
    %v309 = vld [vmem:[%s1 + $0x238] sm:$0xff]
    %v310 = vld [vmem:[%s1 + $0x240] sm:$0xff]
    %v311 = vld [vmem:[%s1 + $0x248] sm:$0xff]
    %v312 = vld [vmem:[%s1 + $0x250] sm:$0xff]
    %v313 = vld [vmem:[%s1 + $0x258] sm:$0xff]
    %v314 = vld [vmem:[%s1 + $0x260] sm:$0xff]
    %v315 = vld [vmem:[%s1 + $0x268] sm:$0xff]
    %v316 = vld [vmem:[%s1 + $0x270] sm:$0xff]
    %v317 = vld [vmem:[%s1 + $0x278] sm:$0xff]
    %v318 = vld [vmem:[%s1 + $0x280] sm:$0xff]
    %v319 = vld [vmem:[%s1 + $0x288] sm:$0xff]
    %v320 = vld [vmem:[%s1 + $0x290] sm:$0xff]
    %v321 = vld [vmem:[%s1 + $0x298] sm:$0xff]
    %v322 = vld [vmem:[%s1 + $0x2a0] sm:$0xff]
    %v323 = vld [vmem:[%s1 + $0x2a8] sm:$0xff]
    %v324 = vld [vmem:[%s1 + $0x2b0] sm:$0xff]
    %v325 = vld [vmem:[%s1 + $0x2b8] sm:$0xff]
    %v326 = vld [vmem:[%s1 + $0x2c0] sm:$0xff]
    %v327 = vld [vmem:[%s1 + $0x2c8] sm:$0xff]
    %v328 = vld [vmem:[%s1 + $0x2d0] sm:$0xff]
    %v329 = vld [vmem:[%s1 + $0x2d8] sm:$0xff]
    %v330 = vld [vmem:[%s1 + $0x2e0] sm:$0xff]
    %v331 = vld [vmem:[%s1 + $0x2e8] sm:$0xff]
    %v332 = vld [vmem:[%s1 + $0x2f0] sm:$0xff]
    %v333 = vld [vmem:[%s1 + $0x2f8] sm:$0xff]
    %v334 = vld [vmem:[%s1 + $0x300] sm:$0xff]
    %v335 = vld [vmem:[%s1 + $0x308] sm:$0xff]
    %v336 = vld [vmem:[%s1 + $0x310] sm:$0xff]
    %v337 = vld [vmem:[%s1 + $0x318] sm:$0xff]
    %v338 = vld [vmem:[%s1 + $0x320] sm:$0xff]
    %v339 = vld [vmem:[%s1 + $0x328] sm:$0xff]
    %v340 = vld [vmem:[%s1 + $0x330] sm:$0xff]
    %v341 = vld [vmem:[%s1 + $0x338] sm:$0xff]
    %v342 = vld [vmem:[%s1 + $0x340] sm:$0xff]
    %v343 = vld [vmem:[%s1 + $0x348] sm:$0xff]
    %v344 = vld [vmem:[%s1 + $0x350] sm:$0xff]
    %v345 = vld [vmem:[%s1 + $0x358] sm:$0xff]
    %v346 = vld [vmem:[%s1 + $0x360] sm:$0xff]
    %v347 = vld [vmem:[%s1 + $0x368] sm:$0xff]
    %v348 = vld [vmem:[%s1 + $0x370] sm:$0xff]
    %v349 = vld [vmem:[%s1 + $0x378] sm:$0xff]
    %v350 = vld [vmem:[%s1 + $0x380] sm:$0xff]
    %v351 = vld [vmem:[%s1 + $0x388] sm:$0xff]
    %v352 = vld [vmem:[%s1 + $0x390] sm:$0xff]
    %v353 = vld [vmem:[%s1 + $0x398] sm:$0xff]
    %v354 = vld [vmem:[%s1 + $0x3a0] sm:$0xff]
    %v355 = vld [vmem:[%s1 + $0x3a8] sm:$0xff]
    %v356 = vld [vmem:[%s1 + $0x3b0] sm:$0xff]
    %v357 = vld [vmem:[%s1 + $0x3b8] sm:$0xff]
    %v358 = vld [vmem:[%s1 + $0x3c0] sm:$0xff]
    %v359 = vld [vmem:[%s1 + $0x3c8] sm:$0xff]
    %v360 = vld [vmem:[%s1 + $0x3d0] sm:$0xff]
    %v361 = vld [vmem:[%s1 + $0x3d8] sm:$0xff]
    %v362 = vld [vmem:[%s1 + $0x3e0] sm:$0xff]
    %v363 = vld [vmem:[%s1 + $0x3e8] sm:$0xff]
    %v364 = vld [vmem:[%s1 + $0x3f0] sm:$0xff]
    %v365 = vld [vmem:[%s1 + $0x3f8] sm:$0xff]
    %v366 = vld [vmem:[%s1 + $0x400] sm:$0xff]
    %v367 = vld [vmem:[%s1 + $0x408] sm:$0xff]
    %v368 = vld [vmem:[%s1 + $0x410] sm:$0xff]
    %v369 = vld [vmem:[%s1 + $0x418] sm:$0xff]
    %v370 = vld [vmem:[%s1 + $0x420] sm:$0xff]
    %v371 = vld [vmem:[%s1 + $0x428] sm:$0xff]
    %v372 = vld [vmem:[%s1 + $0x430] sm:$0xff]
    %v373 = vld [vmem:[%s1 + $0x438] sm:$0xff]
    %v374 = vld [vmem:[%s1 + $0x440] sm:$0xff]
    %v375 = vld [vmem:[%s1 + $0x448] sm:$0xff]
    %v376 = vld [vmem:[%s1 + $0x450] sm:$0xff]
    %v377 = vld [vmem:[%s1 + $0x458] sm:$0xff]
    %v378 = vld [vmem:[%s1 + $0x460] sm:$0xff]
    %v379 = vld [vmem:[%s1 + $0x468] sm:$0xff]
    %v380 = vld [vmem:[%s1 + $0x470] sm:$0xff]
    %v381 = vld [vmem:[%s1 + $0x478] sm:$0xff]
    %v382 = vld [vmem:[%s1 + $0x480] sm:$0xff]
    %v383 = vld [vmem:[%s1 + $0x488] sm:$0xff]
    %v384 = vld [vmem:[%s1 + $0x490] sm:$0xff]
    %v385 = vld [vmem:[%s1 + $0x498] sm:$0xff]
    %v386 = vld [vmem:[%s1 + $0x4a0] sm:$0xff]
    %v387 = vld [vmem:[%s1 + $0x4a8] sm:$0xff]
    %v388 = vld [vmem:[%s1 + $0x4b0] sm:$0xff]
    %v389 = vld [vmem:[%s1 + $0x4b8] sm:$0xff]
    %v390 = vld [vmem:[%s1 + $0x4c0] sm:$0xff]
    %v391 = vld [vmem:[%s1 + $0x4c8] sm:$0xff]
    %v392 = vld [vmem:[%s1 + $0x4d0] sm:$0xff]
    %v393 = vld [vmem:[%s1 + $0x4d8] sm:$0xff]
    %v394 = vld [vmem:[%s1 + $0x4e0] sm:$0xff]
    %v395 = vld [vmem:[%s1 + $0x4e8] sm:$0xff]
    %v396 = vld [vmem:[%s1 + $0x4f0] sm:$0xff]
    %v397 = vld [vmem:[%s1 + $0x4f8] sm:$0xff]
    %v398 = vld [vmem:[%s1 + $0x500] sm:$0xff]
    %v399 = vld [vmem:[%s1 + $0x508] sm:$0xff]
    %v400 = vld [vmem:[%s1 + $0x510] sm:$0xff]
    %v401 = vld [vmem:[%s1 + $0x518] sm:$0xff]
    %v402 = vld [vmem:[%s1 + $0x520] sm:$0xff]
    %v403 = vld [vmem:[%s1 + $0x528] sm:$0xff]
    %v404 = vld [vmem:[%s1 + $0x530] sm:$0xff]
    %v405 = vld [vmem:[%s1 + $0x538] sm:$0xff]
    %v406 = vld [vmem:[%s1 + $0x540] sm:$0xff]
    %v407 = vld [vmem:[%s1 + $0x548] sm:$0xff]
    %v408 = vld [vmem:[%s1 + $0x550] sm:$0xff]
    %v409 = vld [vmem:[%s1 + $0x558] sm:$0xff]
    %v410 = vld [vmem:[%s1 + $0x560] sm:$0xff]
    %v411 = vld [vmem:[%s1 + $0x568] sm:$0xff]
    %v412 = vld [vmem:[%s1 + $0x570] sm:$0xff]
    %v413 = vld [vmem:[%s1 + $0x578] sm:$0xff]
    %v414 = vld [vmem:[%s1 + $0x580] sm:$0xff]
    %v415 = vld [vmem:[%s1 + $0x588] sm:$0xff]
    %v416 = vld [vmem:[%s1 + $0x590] sm:$0xff]
    %v417 = vld [vmem:[%s1 + $0x598] sm:$0xff]
    %v418 = vld [vmem:[%s1 + $0x5a0] sm:$0xff]
    %v419 = vld [vmem:[%s1 + $0x5a8] sm:$0xff]
    %v420 = vld [vmem:[%s1 + $0x5b0] sm:$0xff]
    %v421 = vld [vmem:[%s1 + $0x5b8] sm:$0xff]
    %v422 = vld [vmem:[%s1 + $0x5c0] sm:$0xff]
    %v423 = vld [vmem:[%s1 + $0x5c8] sm:$0xff]
    %v424 = vld [vmem:[%s1 + $0x5d0] sm:$0xff]
    %v425 = vld [vmem:[%s1 + $0x5d8] sm:$0xff]
    %v426 = vld [vmem:[%s1 + $0x5e0] sm:$0xff]
    %v427 = vld [vmem:[%s1 + $0x5e8] sm:$0xff]
    %v428 = vld [vmem:[%s1 + $0x5f0] sm:$0xff]
    %v429 = vld [vmem:[%s1 + $0x5f8] sm:$0xff]
    %v430 = vld [vmem:[%s1 + $0x600] sm:$0xff]
    %v431 = vld [vmem:[%s1 + $0x608] sm:$0xff]
    %v432 = vld [vmem:[%s1 + $0x610] sm:$0xff]
    %v433 = vld [vmem:[%s1 + $0x618] sm:$0xff]
    %v434 = vld [vmem:[%s1 + $0x620] sm:$0xff]
    %v435 = vld [vmem:[%s1 + $0x628] sm:$0xff]
    %v436 = vld [vmem:[%s1 + $0x630] sm:$0xff]
    %v437 = vld [vmem:[%s1 + $0x638] sm:$0xff]
    %v438 = vld [vmem:[%s1 + $0x640] sm:$0xff]
    %v439 = vld [vmem:[%s1 + $0x648] sm:$0xff]
    %v440 = vld [vmem:[%s1 + $0x650] sm:$0xff]
    %v441 = vld [vmem:[%s1 + $0x658] sm:$0xff]
    %v442 = vld [vmem:[%s1 + $0x660] sm:$0xff]
    %v443 = vld [vmem:[%s1 + $0x668] sm:$0xff]
    %v444 = vld [vmem:[%s1 + $0x670] sm:$0xff]
    %v445 = vld [vmem:[%s1 + $0x678] sm:$0xff]
    %v446 = vld [vmem:[%s1 + $0x680] sm:$0xff]
    %v447 = vld [vmem:[%s1 + $0x688] sm:$0xff]
    %v448 = vld [vmem:[%s1 + $0x690] sm:$0xff]
    %v449 = vld [vmem:[%s1 + $0x698] sm:$0xff]
    %v450 = vld [vmem:[%s1 + $0x6a0] sm:$0xff]
    %v451 = vld [vmem:[%s1 + $0x6a8] sm:$0xff]
    %v452 = vld [vmem:[%s1 + $0x6b0] sm:$0xff]
    %v453 = vld [vmem:[%s1 + $0x6b8] sm:$0xff]
    %v454 = vld [vmem:[%s1 + $0x6c0] sm:$0xff]
    %v455 = vld [vmem:[%s1 + $0x6c8] sm:$0xff]
    %v456 = vld [vmem:[%s1 + $0x6d0] sm:$0xff]
    %v457 = vld [vmem:[%s1 + $0x6d8] sm:$0xff]
    %v458 = vld [vmem:[%s1 + $0x6e0] sm:$0xff]
    %v459 = vld [vmem:[%s1 + $0x6e8] sm:$0xff]
    %v460 = vld [vmem:[%s1 + $0x6f0] sm:$0xff]
    %v461 = vld [vmem:[%s1 + $0x6f8] sm:$0xff]
    %v462 = vld [vmem:[%s1 + $0x700] sm:$0xff]
    %v463 = vld [vmem:[%s1 + $0x708] sm:$0xff]
    %v464 = vld [vmem:[%s1 + $0x710] sm:$0xff]
    %v465 = vld [vmem:[%s1 + $0x718] sm:$0xff]
    %v466 = vld [vmem:[%s1 + $0x720] sm:$0xff]
    %v467 = vld [vmem:[%s1 + $0x728] sm:$0xff]
    %v468 = vld [vmem:[%s1 + $0x730] sm:$0xff]
    %v469 = vld [vmem:[%s1 + $0x738] sm:$0xff]
    %v470 = vld [vmem:[%s1 + $0x740] sm:$0xff]
    %v471 = vld [vmem:[%s1 + $0x748] sm:$0xff]
    %v472 = vld [vmem:[%s1 + $0x750] sm:$0xff]
    %v473 = vld [vmem:[%s1 + $0x758] sm:$0xff]
    %v474 = vld [vmem:[%s1 + $0x760] sm:$0xff]
    %v475 = vld [vmem:[%s1 + $0x768] sm:$0xff]
    %v476 = vld [vmem:[%s1 + $0x770] sm:$0xff]
    %v477 = vld [vmem:[%s1 + $0x778] sm:$0xff]
    %v478 = vld [vmem:[%s1 + $0x780] sm:$0xff]
    %v479 = vld [vmem:[%s1 + $0x788] sm:$0xff]
    %v480 = vld [vmem:[%s1 + $0x790] sm:$0xff]
    %v481 = vld [vmem:[%s1 + $0x798] sm:$0xff]
    %v482 = vld [vmem:[%s1 + $0x7a0] sm:$0xff]
    %v483 = vld [vmem:[%s1 + $0x7a8] sm:$0xff]
    %v484 = vld [vmem:[%s1 + $0x7b0] sm:$0xff]
    %v485 = vld [vmem:[%s1 + $0x7b8] sm:$0xff]
    %v486 = vld [vmem:[%s1 + $0x7c0] sm:$0xff]
    %v487 = vld [vmem:[%s1 + $0x7c8] sm:$0xff]
    %v488 = vld [vmem:[%s1 + $0x7d0] sm:$0xff]
    %v489 = vld [vmem:[%s1 + $0x7d8] sm:$0xff]
    %v490 = vld [vmem:[%s1 + $0x7e0] sm:$0xff]
    %v491 = vld [vmem:[%s1 + $0x7e8] sm:$0xff]
    %v492 = vld [vmem:[%s1 + $0x7f0] sm:$0xff]
    %v493 = vld [vmem:[%s1 + $0x7f8] sm:$0xff]
    %v494 = vld [vmem:[%s1 + $0x800] sm:$0xff]
    %v495 = vld [vmem:[%s1 + $0x808] sm:$0xff]
    %v496 = vld [vmem:[%s1 + $0x810] sm:$0xff]
    %v497 = vld [vmem:[%s1 + $0x818] sm:$0xff]
    %v498 = vld [vmem:[%s1 + $0x820] sm:$0xff]
    %v499 = vld [vmem:[%s1 + $0x828] sm:$0xff]
    %v500 = vld [vmem:[%s1 + $0x830] sm:$0xff]
    %v501 = vld [vmem:[%s1 + $0x838] sm:$0xff]
    %v502 = vld [vmem:[%s1 + $0x840] sm:$0xff]
    %v503 = vld [vmem:[%s1 + $0x848] sm:$0xff]
    %v504 = vld [vmem:[%s1 + $0x850] sm:$0xff]
    %v505 = vld [vmem:[%s1 + $0x858] sm:$0xff]
    %v506 = vld [vmem:[%s1 + $0x860] sm:$0xff]
    %v507 = vld [vmem:[%s1 + $0x868] sm:$0xff]
    %v508 = vld [vmem:[%s1 + $0x870] sm:$0xff]
    %v509 = vld [vmem:[%s1 + $0x878] sm:$0xff]
    %v510 = vld [vmem:[%s1 + $0x880] sm:$0xff]
    %v511 = vld [vmem:[%s1 + $0x888] sm:$0xff]
    %v512 = vld [vmem:[%s1 + $0x890] sm:$0xff]
    %v513 = vld [vmem:[%s1 + $0x898] sm:$0xff]
    %v514 = vld [vmem:[%s1 + $0x8a0] sm:$0xff]
    %v515 = vld [vmem:[%s1 + $0x8a8] sm:$0xff]
    %v516 = vld [vmem:[%s1 + $0x8b0] sm:$0xff]
    %v517 = vld [vmem:[%s1 + $0x8b8] sm:$0xff]
    %v518 = vld [vmem:[%s1 + $0x8c0] sm:$0xff]
    %v519 = vld [vmem:[%s1 + $0x8c8] sm:$0xff]
    %v520 = vld [vmem:[%s1 + $0x8d0] sm:$0xff]
    %v521 = vld [vmem:[%s1 + $0x8d8] sm:$0xff]
    %v522 = vld [vmem:[%s1 + $0x8e0] sm:$0xff]
    %v523 = vld [vmem:[%s1 + $0x8e8] sm:$0xff]
    %v524 = vld [vmem:[%s1 + $0x8f0] sm:$0xff]
    %v525 = vld [vmem:[%s1 + $0x8f8] sm:$0xff]
    %v526 = vld [vmem:[%s1 + $0x900] sm:$0xff]
    %v527 = vld [vmem:[%s1 + $0x908] sm:$0xff]
    %v528 = vld [vmem:[%s1 + $0x910] sm:$0xff]
    %v529 = vld [vmem:[%s1 + $0x918] sm:$0xff]
    %v530 = vld [vmem:[%s1 + $0x920] sm:$0xff]
    %v531 = vld [vmem:[%s1 + $0x928] sm:$0xff]
    %v532 = vld [vmem:[%s1 + $0x930] sm:$0xff]
    %v533 = vld [vmem:[%s1 + $0x938] sm:$0xff]
    %v534 = vld [vmem:[%s1 + $0x940] sm:$0xff]
    %v535 = vld [vmem:[%s1 + $0x948] sm:$0xff]
    %v536 = vld [vmem:[%s1 + $0x950] sm:$0xff]
    %v537 = vld [vmem:[%s1 + $0x958] sm:$0xff]
    %v538 = vld [vmem:[%s1 + $0x960] sm:$0xff]
    %v539 = vld [vmem:[%s1 + $0x968] sm:$0xff]
    %v540 = vld [vmem:[%s1 + $0x970] sm:$0xff]
    %v541 = vld [vmem:[%s1 + $0x978] sm:$0xff]
    %v542 = vld [vmem:[%s1 + $0x980] sm:$0xff]
    %v543 = vld [vmem:[%s1 + $0x988] sm:$0xff]
    %v544 = vld [vmem:[%s1 + $0x990] sm:$0xff]
    %v545 = vld [vmem:[%s1 + $0x998] sm:$0xff]
    %v546 = vld [vmem:[%s1 + $0x9a0] sm:$0xff]
    %v547 = vld [vmem:[%s1 + $0x9a8] sm:$0xff]
    %v548 = vld [vmem:[%s1 + $0x9b0] sm:$0xff]
    %v549 = vld [vmem:[%s1 + $0x9b8] sm:$0xff]
    %v550 = vld [vmem:[%s1 + $0x9c0] sm:$0xff]
    %v551 = vld [vmem:[%s1 + $0x9c8] sm:$0xff]
    %v552 = vld [vmem:[%s1 + $0x9d0] sm:$0xff]
    %v553 = vld [vmem:[%s1 + $0x9d8] sm:$0xff]
    %v554 = vld [vmem:[%s1 + $0x9e0] sm:$0xff]
    %v555 = vld [vmem:[%s1 + $0x9e8] sm:$0xff]
    %v556 = vld [vmem:[%s1 + $0x9f0] sm:$0xff]
    %v557 = vld [vmem:[%s1 + $0x9f8] sm:$0xff]
    %v558 = vld [vmem:[%s1 + $0xa00] sm:$0xff]
    %v559 = vld [vmem:[%s1 + $0xa08] sm:$0xff]
    %v560 = vld [vmem:[%s1 + $0xa10] sm:$0xff]
    %v561 = vld [vmem:[%s1 + $0xa18] sm:$0xff]
    %v562 = vld [vmem:[%s1 + $0xa20] sm:$0xff]
    %v563 = vld [vmem:[%s1 + $0xa28] sm:$0xff]
    %v564 = vld [vmem:[%s1 + $0xa30] sm:$0xff]
    %v565 = vld [vmem:[%s1 + $0xa38] sm:$0xff]
    %v566 = vld [vmem:[%s1 + $0xa40] sm:$0xff]
    %v567 = vld [vmem:[%s1 + $0xa48] sm:$0xff]
    %v568 = vld [vmem:[%s1 + $0xa50] sm:$0xff]
    %v569 = vld [vmem:[%s1 + $0xa58] sm:$0xff]
    %v570 = vld [vmem:[%s1 + $0xa60] sm:$0xff]
    %v571 = vld [vmem:[%s1 + $0xa68] sm:$0xff]
    %v572 = vld [vmem:[%s1 + $0xa70] sm:$0xff]
    %v573 = vld [vmem:[%s1 + $0xa78] sm:$0xff]
    %v574 = vld [vmem:[%s1 + $0xa80] sm:$0xff]
    %v575 = vld [vmem:[%s1 + $0xa88] sm:$0xff]
    %v576 = vld [vmem:[%s1 + $0xa90] sm:$0xff]
    %v577 = vld [vmem:[%s1 + $0xa98] sm:$0xff]
    %v578 = vld [vmem:[%s1 + $0xaa0] sm:$0xff]
    %v579 = vld [vmem:[%s1 + $0xaa8] sm:$0xff]
    %v580 = vld [vmem:[%s1 + $0xab0] sm:$0xff]
    %v581 = vld [vmem:[%s1 + $0xab8] sm:$0xff]
    %v582 = vld [vmem:[%s1 + $0xac0] sm:$0xff]
    %v583 = vld [vmem:[%s1 + $0xac8] sm:$0xff]
    %v584 = vld [vmem:[%s1 + $0xad0] sm:$0xff]
    %v585 = vld [vmem:[%s1 + $0xad8] sm:$0xff]
    %v586 = vld [vmem:[%s1 + $0xae0] sm:$0xff]
    %v587 = vld [vmem:[%s1 + $0xae8] sm:$0xff]
    %v588 = vld [vmem:[%s1 + $0xaf0] sm:$0xff]
    %v589 = vld [vmem:[%s1 + $0xaf8] sm:$0xff]
    %v590 = vld [vmem:[%s1 + $0xb00] sm:$0xff]
    %v591 = vld [vmem:[%s1 + $0xb08] sm:$0xff]
    %v592 = vld [vmem:[%s1 + $0xb10] sm:$0xff]
    %v593 = vld [vmem:[%s1 + $0xb18] sm:$0xff]
    %v594 = vld [vmem:[%s1 + $0xb20] sm:$0xff]
    %v595 = vld [vmem:[%s1 + $0xb28] sm:$0xff]
    %v596 = vld [vmem:[%s1 + $0xb30] sm:$0xff]
    %v597 = vld [vmem:[%s1 + $0xb38] sm:$0xff]
    %v598 = vld [vmem:[%s1 + $0xb40] sm:$0xff]
    %v599 = vld [vmem:[%s1 + $0xb48] sm:$0xff]
    %v600 = vld [vmem:[%s1 + $0xb50] sm:$0xff]
    %v601 = vld [vmem:[%s1 + $0xb58] sm:$0xff]
    %v602 = vld [vmem:[%s1 + $0xb60] sm:$0xff]
    %v603 = vld [vmem:[%s1 + $0xb68] sm:$0xff]
    %v604 = vld [vmem:[%s1 + $0xb70] sm:$0xff]
    %v605 = vld [vmem:[%s1 + $0xb78] sm:$0xff]
    %v606 = vld [vmem:[%s1 + $0xb80] sm:$0xff]
    %v607 = vld [vmem:[%s1 + $0xb88] sm:$0xff]
    %v608 = vld [vmem:[%s1 + $0xb90] sm:$0xff]
    %v609 = vld [vmem:[%s1 + $0xb98] sm:$0xff]
    %v610 = vld [vmem:[%s1 + $0xba0] sm:$0xff]
    %v611 = vld [vmem:[%s1 + $0xba8] sm:$0xff]
    %v612 = vld [vmem:[%s1 + $0xbb0] sm:$0xff]
    %v613 = vld [vmem:[%s1 + $0xbb8] sm:$0xff]
    %v614 = vld [vmem:[%s1 + $0xbc0] sm:$0xff]
    %v615 = vld [vmem:[%s1 + $0xbc8] sm:$0xff]
    %v616 = vld [vmem:[%s1 + $0xbd0] sm:$0xff]
    %v617 = vld [vmem:[%s1 + $0xbd8] sm:$0xff]
    %v618 = vld [vmem:[%s1 + $0xbe0] sm:$0xff]
    %v619 = vld [vmem:[%s1 + $0xbe8] sm:$0xff]
    %v620 = vld [vmem:[%s1 + $0xbf0] sm:$0xff]
    %v621 = vld [vmem:[%s1 + $0xbf8] sm:$0xff]
    %v622 = vld [vmem:[%s1 + $0xc00] sm:$0xff]
    %v623 = vld [vmem:[%s1 + $0xc08] sm:$0xff]
    %v624 = vld [vmem:[%s1 + $0xc10] sm:$0xff]
    %v625 = vld [vmem:[%s1 + $0xc18] sm:$0xff]
    %v626 = vld [vmem:[%s1 + $0xc20] sm:$0xff]
    %v627 = vld [vmem:[%s1 + $0xc28] sm:$0xff]
    %v628 = vld [vmem:[%s1 + $0xc30] sm:$0xff]
    %v629 = vld [vmem:[%s1 + $0xc38] sm:$0xff]
    %v630 = vld [vmem:[%s1 + $0xc40] sm:$0xff]
    %v631 = vld [vmem:[%s1 + $0xc48] sm:$0xff]
    %v632 = vld [vmem:[%s1 + $0xc50] sm:$0xff]
    %v633 = vld [vmem:[%s1 + $0xc58] sm:$0xff]
    %v634 = vld [vmem:[%s1 + $0xc60] sm:$0xff]
    %v635 = vld [vmem:[%s1 + $0xc68] sm:$0xff]
    %v636 = vld [vmem:[%s1 + $0xc70] sm:$0xff]
    %v637 = vld [vmem:[%s1 + $0xc78] sm:$0xff]
    %v638 = vld [vmem:[%s1 + $0xc80] sm:$0xff]
    %v639 = vld [vmem:[%s1 + $0xc88] sm:$0xff]
    %v640 = vld [vmem:[%s1 + $0xc90] sm:$0xff]
    %v641 = vld [vmem:[%s1 + $0xc98] sm:$0xff]
    %v642 = vld [vmem:[%s1 + $0xca0] sm:$0xff]
    %v643 = vld [vmem:[%s1 + $0xca8] sm:$0xff]
    %v644 = vld [vmem:[%s1 + $0xcb0] sm:$0xff]
    %v645 = vld [vmem:[%s1 + $0xcb8] sm:$0xff]
    %v646 = vld [vmem:[%s1 + $0xcc0] sm:$0xff]
    %v647 = vld [vmem:[%s1 + $0xcc8] sm:$0xff]
    %v648 = vld [vmem:[%s1 + $0xcd0] sm:$0xff]
    %v649 = vld [vmem:[%s1 + $0xcd8] sm:$0xff]
    %v650 = vld [vmem:[%s1 + $0xce0] sm:$0xff]
    %v651 = vld [vmem:[%s1 + $0xce8] sm:$0xff]
    %v652 = vld [vmem:[%s1 + $0xcf0] sm:$0xff]
    %v653 = vld [vmem:[%s1 + $0xcf8] sm:$0xff]
    %v654 = vld [vmem:[%s1 + $0xd00] sm:$0xff]
    %v655 = vld [vmem:[%s1 + $0xd08] sm:$0xff]
    %v656 = vld [vmem:[%s1 + $0xd10] sm:$0xff]
    %v657 = vld [vmem:[%s1 + $0xd18] sm:$0xff]
    %v658 = vld [vmem:[%s1 + $0xd20] sm:$0xff]
    %v659 = vld [vmem:[%s1 + $0xd28] sm:$0xff]
    %v660 = vld [vmem:[%s1 + $0xd30] sm:$0xff]
    %v661 = vld [vmem:[%s1 + $0xd38] sm:$0xff]
    %v662 = vld [vmem:[%s1 + $0xd40] sm:$0xff]
    %v663 = vld [vmem:[%s1 + $0xd48] sm:$0xff]
    %v664 = vld [vmem:[%s1 + $0xd50] sm:$0xff]
    %v665 = vld [vmem:[%s1 + $0xd58] sm:$0xff]
    %v666 = vld [vmem:[%s1 + $0xd60] sm:$0xff]
    %v667 = vld [vmem:[%s1 + $0xd68] sm:$0xff]
    %v668 = vld [vmem:[%s1 + $0xd70] sm:$0xff]
    %v669 = vld [vmem:[%s1 + $0xd78] sm:$0xff]
    %v670 = vld [vmem:[%s1 + $0xd80] sm:$0xff]
    %v671 = vld [vmem:[%s1 + $0xd88] sm:$0xff]
    %v672 = vld [vmem:[%s1 + $0xd90] sm:$0xff]
    %v673 = vld [vmem:[%s1 + $0xd98] sm:$0xff]
    %v674 = vld [vmem:[%s1 + $0xda0] sm:$0xff]
    %v675 = vld [vmem:[%s1 + $0xda8] sm:$0xff]
    %v676 = vld [vmem:[%s1 + $0xdb0] sm:$0xff]
    %v677 = vld [vmem:[%s1 + $0xdb8] sm:$0xff]
    %v678 = vld [vmem:[%s1 + $0xdc0] sm:$0xff]
    %v679 = vld [vmem:[%s1 + $0xdc8] sm:$0xff]
    %v680 = vld [vmem:[%s1 + $0xdd0] sm:$0xff]
    %v681 = vld [vmem:[%s1 + $0xdd8] sm:$0xff]
    %v682 = vld [vmem:[%s1 + $0xde0] sm:$0xff]
    %v683 = vld [vmem:[%s1 + $0xde8] sm:$0xff]
    %v684 = vld [vmem:[%s1 + $0xdf0] sm:$0xff]
    %v685 = vld [vmem:[%s1 + $0xdf8] sm:$0xff]
    %v686 = vld [vmem:[%s1 + $0xe00] sm:$0xff]
    %v687 = vld [vmem:[%s1 + $0xe08] sm:$0xff]
    %v688 = vld [vmem:[%s1 + $0xe10] sm:$0xff]
    %v689 = vld [vmem:[%s1 + $0xe18] sm:$0xff]
    %v690 = vld [vmem:[%s1 + $0xe20] sm:$0xff]
    %v691 = vld [vmem:[%s1 + $0xe28] sm:$0xff]
    %v692 = vld [vmem:[%s1 + $0xe30] sm:$0xff]
    %v693 = vld [vmem:[%s1 + $0xe38] sm:$0xff]
    %v694 = vld [vmem:[%s1 + $0xe40] sm:$0xff]
    %v695 = vld [vmem:[%s1 + $0xe48] sm:$0xff]
    %v696 = vld [vmem:[%s1 + $0xe50] sm:$0xff]
    %v697 = vld [vmem:[%s1 + $0xe58] sm:$0xff]
    %v698 = vld [vmem:[%s1 + $0xe60] sm:$0xff]
    %v699 = vld [vmem:[%s1 + $0xe68] sm:$0xff]
    %v700 = vld [vmem:[%s1 + $0xe70] sm:$0xff]
    %v701 = vld [vmem:[%s1 + $0xe78] sm:$0xff]
    %v702 = vld [vmem:[%s1 + $0xe80] sm:$0xff]
    %v703 = vld [vmem:[%s1 + $0xe88] sm:$0xff]
    %v704 = vld [vmem:[%s1 + $0xe90] sm:$0xff]
    %v705 = vld [vmem:[%s1 + $0xe98] sm:$0xff]
    %v706 = vld [vmem:[%s1 + $0xea0] sm:$0xff]
    %v707 = vld [vmem:[%s1 + $0xea8] sm:$0xff]
    %v708 = vld [vmem:[%s1 + $0xeb0] sm:$0xff]
    %v709 = vld [vmem:[%s1 + $0xeb8] sm:$0xff]
    %v710 = vld [vmem:[%s1 + $0xec0] sm:$0xff]
    %v711 = vld [vmem:[%s1 + $0xec8] sm:$0xff]
    %v712 = vld [vmem:[%s1 + $0xed0] sm:$0xff]
    %v713 = vld [vmem:[%s1 + $0xed8] sm:$0xff]
    %v714 = vld [vmem:[%s1 + $0xee0] sm:$0xff]
    %v715 = vld [vmem:[%s1 + $0xee8] sm:$0xff]
    %v716 = vld [vmem:[%s1 + $0xef0] sm:$0xff]
    %v717 = vld [vmem:[%s1 + $0xef8] sm:$0xff]
    %v718 = vld [vmem:[%s1 + $0xf00] sm:$0xff]
    %v719 = vld [vmem:[%s1 + $0xf08] sm:$0xff]
    %v720 = vld [vmem:[%s1 + $0xf10] sm:$0xff]
    %v721 = vld [vmem:[%s1 + $0xf18] sm:$0xff]
    %v722 = vld [vmem:[%s1 + $0xf20] sm:$0xff]
    %v723 = vld [vmem:[%s1 + $0xf28] sm:$0xff]
    %v724 = vld [vmem:[%s1 + $0xf30] sm:$0xff]
    %v725 = vld [vmem:[%s1 + $0xf38] sm:$0xff]
    %v726 = vld [vmem:[%s1 + $0xf40] sm:$0xff]
    %v727 = vld [vmem:[%s1 + $0xf48] sm:$0xff]
    %v728 = vld [vmem:[%s1 + $0xf50] sm:$0xff]
    %v729 = vld [vmem:[%s1 + $0xf58] sm:$0xff]
    %v730 = vld [vmem:[%s1 + $0xf60] sm:$0xff]
    %v731 = vld [vmem:[%s1 + $0xf68] sm:$0xff]
    %v732 = vld [vmem:[%s1 + $0xf70] sm:$0xff]
    %v733 = vld [vmem:[%s1 + $0xf78] sm:$0xff]
    %v734 = vld [vmem:[%s1 + $0xf80] sm:$0xff]
    %v735 = vld [vmem:[%s1 + $0xf88] sm:$0xff]
    %v736 = vld [vmem:[%s1 + $0xf90] sm:$0xff]
    %v737 = vld [vmem:[%s1 + $0xf98] sm:$0xff]
    %v738 = vld [vmem:[%s1 + $0xfa0] sm:$0xff]
    %v739 = vld [vmem:[%s1 + $0xfa8] sm:$0xff]
    %v740 = vld [vmem:[%s1 + $0xfb0] sm:$0xff]
    %v741 = vld [vmem:[%s1 + $0xfb8] sm:$0xff]
    %v742 = vld [vmem:[%s1 + $0xfc0] sm:$0xff]
    %v743 = vld [vmem:[%s1 + $0xfc8] sm:$0xff]
    %v744 = vld [vmem:[%s1 + $0xfd0] sm:$0xff]
    %v745 = vld [vmem:[%s1 + $0xfd8] sm:$0xff]
    %v746 = vld [vmem:[%s1 + $0xfe0] sm:$0xff]
    %v747 = vld [vmem:[%s1 + $0xfe8] sm:$0xff]
    %v748 = vld [vmem:[%s1 + $0xff0] sm:$0xff]
    %v749 = vld [vmem:[%s1 + $0xff8] sm:$0xff]
    %v750 = vld [vmem:[%s2] sm:$0x3]
    %v752 = vlaneseq
    %v753 = vshrl.u32 %v752, 7
    %v754 = vsub.s32 0, %v753
    %v755 = vrot.slane %v750, %v754
    %v756 = vlaneseq
    %v757 = vshrl.u32 %v756, 7
    %v758 = vsub.s32 1, %v757
    %v759 = vrot.slane %v750, %v758
    %v1274 = vunpack.c.l.b16 %v238
    %v1275 = vunpack.c.h.b16 %v238
    %v1276 = vunpack.c.l.b16 %v239
    %v1277 = vunpack.c.h.b16 %v239
    %v1278 = vunpack.c.l.b16 %v240
    %v1279 = vunpack.c.h.b16 %v240
    %v1280 = vunpack.c.l.b16 %v241
    %v1281 = vunpack.c.h.b16 %v241
    %v1282 = vunpack.c.l.b16 %v242
    %v1283 = vunpack.c.h.b16 %v242
    %v1284 = vunpack.c.l.b16 %v243
    %v1285 = vunpack.c.h.b16 %v243
    %v1286 = vunpack.c.l.b16 %v244
    %v1287 = vunpack.c.h.b16 %v244
    %v1288 = vunpack.c.l.b16 %v245
    %v1289 = vunpack.c.h.b16 %v245
    %v1290 = vunpack.c.l.b16 %v246
    %v1291 = vunpack.c.h.b16 %v246
    %v1292 = vunpack.c.l.b16 %v247
    %v1293 = vunpack.c.h.b16 %v247
    %v1294 = vunpack.c.l.b16 %v248
    %v1295 = vunpack.c.h.b16 %v248
    %v1296 = vunpack.c.l.b16 %v249
    %v1297 = vunpack.c.h.b16 %v249
    %v1298 = vunpack.c.l.b16 %v250
    %v1299 = vunpack.c.h.b16 %v250
    %v1300 = vunpack.c.l.b16 %v251
    %v1301 = vunpack.c.h.b16 %v251
    %v1302 = vunpack.c.l.b16 %v252
    %v1303 = vunpack.c.h.b16 %v252
    %v1304 = vunpack.c.l.b16 %v253
    %v1305 = vunpack.c.h.b16 %v253
    %v1306 = vunpack.c.l.b16 %v254
    %v1307 = vunpack.c.h.b16 %v254
    %v1308 = vunpack.c.l.b16 %v255
    %v1309 = vunpack.c.h.b16 %v255
    %v1310 = vunpack.c.l.b16 %v256
    %v1311 = vunpack.c.h.b16 %v256
    %v1312 = vunpack.c.l.b16 %v257
    %v1313 = vunpack.c.h.b16 %v257
    %v1314 = vunpack.c.l.b16 %v258
    %v1315 = vunpack.c.h.b16 %v258
    %v1316 = vunpack.c.l.b16 %v259
    %v1317 = vunpack.c.h.b16 %v259
    %v1318 = vunpack.c.l.b16 %v260
    %v1319 = vunpack.c.h.b16 %v260
    %v1320 = vunpack.c.l.b16 %v261
    %v1321 = vunpack.c.h.b16 %v261
    %v1322 = vunpack.c.l.b16 %v262
    %v1323 = vunpack.c.h.b16 %v262
    %v1324 = vunpack.c.l.b16 %v263
    %v1325 = vunpack.c.h.b16 %v263
    %v1326 = vunpack.c.l.b16 %v264
    %v1327 = vunpack.c.h.b16 %v264
    %v1328 = vunpack.c.l.b16 %v265
    %v1329 = vunpack.c.h.b16 %v265
    %v1330 = vunpack.c.l.b16 %v266
    %v1331 = vunpack.c.h.b16 %v266
    %v1332 = vunpack.c.l.b16 %v267
    %v1333 = vunpack.c.h.b16 %v267
    %v1334 = vunpack.c.l.b16 %v268
    %v1335 = vunpack.c.h.b16 %v268
    %v1336 = vunpack.c.l.b16 %v269
    %v1337 = vunpack.c.h.b16 %v269
    %v1338 = vunpack.c.l.b16 %v270
    %v1339 = vunpack.c.h.b16 %v270
    %v1340 = vunpack.c.l.b16 %v271
    %v1341 = vunpack.c.h.b16 %v271
    %v1342 = vunpack.c.l.b16 %v272
    %v1343 = vunpack.c.h.b16 %v272
    %v1344 = vunpack.c.l.b16 %v273
    %v1345 = vunpack.c.h.b16 %v273
    %v1346 = vunpack.c.l.b16 %v274
    %v1347 = vunpack.c.h.b16 %v274
    %v1348 = vunpack.c.l.b16 %v275
    %v1349 = vunpack.c.h.b16 %v275
    %v1350 = vunpack.c.l.b16 %v276
    %v1351 = vunpack.c.h.b16 %v276
    %v1352 = vunpack.c.l.b16 %v277
    %v1353 = vunpack.c.h.b16 %v277
    %v1354 = vunpack.c.l.b16 %v278
    %v1355 = vunpack.c.h.b16 %v278
    %v1356 = vunpack.c.l.b16 %v279
    %v1357 = vunpack.c.h.b16 %v279
    %v1358 = vunpack.c.l.b16 %v280
    %v1359 = vunpack.c.h.b16 %v280
    %v1360 = vunpack.c.l.b16 %v281
    %v1361 = vunpack.c.h.b16 %v281
    %v1362 = vunpack.c.l.b16 %v282
    %v1363 = vunpack.c.h.b16 %v282
    %v1364 = vunpack.c.l.b16 %v283
    %v1365 = vunpack.c.h.b16 %v283
    %v1366 = vunpack.c.l.b16 %v284
    %v1367 = vunpack.c.h.b16 %v284
    %v1368 = vunpack.c.l.b16 %v285
    %v1369 = vunpack.c.h.b16 %v285
    %v1370 = vunpack.c.l.b16 %v286
    %v1371 = vunpack.c.h.b16 %v286
    %v1372 = vunpack.c.l.b16 %v287
    %v1373 = vunpack.c.h.b16 %v287
    %v1374 = vunpack.c.l.b16 %v288
    %v1375 = vunpack.c.h.b16 %v288
    %v1376 = vunpack.c.l.b16 %v289
    %v1377 = vunpack.c.h.b16 %v289
    %v1378 = vunpack.c.l.b16 %v290
    %v1379 = vunpack.c.h.b16 %v290
    %v1380 = vunpack.c.l.b16 %v291
    %v1381 = vunpack.c.h.b16 %v291
    %v1382 = vunpack.c.l.b16 %v292
    %v1383 = vunpack.c.h.b16 %v292
    %v1384 = vunpack.c.l.b16 %v293
    %v1385 = vunpack.c.h.b16 %v293
    %v1386 = vunpack.c.l.b16 %v294
    %v1387 = vunpack.c.h.b16 %v294
    %v1388 = vunpack.c.l.b16 %v295
    %v1389 = vunpack.c.h.b16 %v295
    %v1390 = vunpack.c.l.b16 %v296
    %v1391 = vunpack.c.h.b16 %v296
    %v1392 = vunpack.c.l.b16 %v297
    %v1393 = vunpack.c.h.b16 %v297
    %v1394 = vunpack.c.l.b16 %v298
    %v1395 = vunpack.c.h.b16 %v298
    %v1396 = vunpack.c.l.b16 %v299
    %v1397 = vunpack.c.h.b16 %v299
    %v1398 = vunpack.c.l.b16 %v300
    %v1399 = vunpack.c.h.b16 %v300
    %v1400 = vunpack.c.l.b16 %v301
    %v1401 = vunpack.c.h.b16 %v301
    %v1402 = vunpack.c.l.b16 %v302
    %v1403 = vunpack.c.h.b16 %v302
    %v1404 = vunpack.c.l.b16 %v303
    %v1405 = vunpack.c.h.b16 %v303
    %v1406 = vunpack.c.l.b16 %v304
    %v1407 = vunpack.c.h.b16 %v304
    %v1408 = vunpack.c.l.b16 %v305
    %v1409 = vunpack.c.h.b16 %v305
    %v1410 = vunpack.c.l.b16 %v306
    %v1411 = vunpack.c.h.b16 %v306
    %v1412 = vunpack.c.l.b16 %v307
    %v1413 = vunpack.c.h.b16 %v307
    %v1414 = vunpack.c.l.b16 %v308
    %v1415 = vunpack.c.h.b16 %v308
    %v1416 = vunpack.c.l.b16 %v309
    %v1417 = vunpack.c.h.b16 %v309
    %v1418 = vunpack.c.l.b16 %v310
    %v1419 = vunpack.c.h.b16 %v310
    %v1420 = vunpack.c.l.b16 %v311
    %v1421 = vunpack.c.h.b16 %v311
    %v1422 = vunpack.c.l.b16 %v312
    %v1423 = vunpack.c.h.b16 %v312
    %v1424 = vunpack.c.l.b16 %v313
    %v1425 = vunpack.c.h.b16 %v313
    %v1426 = vunpack.c.l.b16 %v314
    %v1427 = vunpack.c.h.b16 %v314
    %v1428 = vunpack.c.l.b16 %v315
    %v1429 = vunpack.c.h.b16 %v315
    %v1430 = vunpack.c.l.b16 %v316
    %v1431 = vunpack.c.h.b16 %v316
    %v1432 = vunpack.c.l.b16 %v317
    %v1433 = vunpack.c.h.b16 %v317
    %v1434 = vunpack.c.l.b16 %v318
    %v1435 = vunpack.c.h.b16 %v318
    %v1436 = vunpack.c.l.b16 %v319
    %v1437 = vunpack.c.h.b16 %v319
    %v1438 = vunpack.c.l.b16 %v320
    %v1439 = vunpack.c.h.b16 %v320
    %v1440 = vunpack.c.l.b16 %v321
    %v1441 = vunpack.c.h.b16 %v321
    %v1442 = vunpack.c.l.b16 %v322
    %v1443 = vunpack.c.h.b16 %v322
    %v1444 = vunpack.c.l.b16 %v323
    %v1445 = vunpack.c.h.b16 %v323
    %v1446 = vunpack.c.l.b16 %v324
    %v1447 = vunpack.c.h.b16 %v324
    %v1448 = vunpack.c.l.b16 %v325
    %v1449 = vunpack.c.h.b16 %v325
    %v1450 = vunpack.c.l.b16 %v326
    %v1451 = vunpack.c.h.b16 %v326
    %v1452 = vunpack.c.l.b16 %v327
    %v1453 = vunpack.c.h.b16 %v327
    %v1454 = vunpack.c.l.b16 %v328
    %v1455 = vunpack.c.h.b16 %v328
    %v1456 = vunpack.c.l.b16 %v329
    %v1457 = vunpack.c.h.b16 %v329
    %v1458 = vunpack.c.l.b16 %v330
    %v1459 = vunpack.c.h.b16 %v330
    %v1460 = vunpack.c.l.b16 %v331
    %v1461 = vunpack.c.h.b16 %v331
    %v1462 = vunpack.c.l.b16 %v332
    %v1463 = vunpack.c.h.b16 %v332
    %v1464 = vunpack.c.l.b16 %v333
    %v1465 = vunpack.c.h.b16 %v333
    %v1466 = vunpack.c.l.b16 %v334
    %v1467 = vunpack.c.h.b16 %v334
    %v1468 = vunpack.c.l.b16 %v335
    %v1469 = vunpack.c.h.b16 %v335
    %v1470 = vunpack.c.l.b16 %v336
    %v1471 = vunpack.c.h.b16 %v336
    %v1472 = vunpack.c.l.b16 %v337
    %v1473 = vunpack.c.h.b16 %v337
    %v1474 = vunpack.c.l.b16 %v338
    %v1475 = vunpack.c.h.b16 %v338
    %v1476 = vunpack.c.l.b16 %v339
    %v1477 = vunpack.c.h.b16 %v339
    %v1478 = vunpack.c.l.b16 %v340
    %v1479 = vunpack.c.h.b16 %v340
    %v1480 = vunpack.c.l.b16 %v341
    %v1481 = vunpack.c.h.b16 %v341
    %v1482 = vunpack.c.l.b16 %v342
    %v1483 = vunpack.c.h.b16 %v342
    %v1484 = vunpack.c.l.b16 %v343
    %v1485 = vunpack.c.h.b16 %v343
    %v1486 = vunpack.c.l.b16 %v344
    %v1487 = vunpack.c.h.b16 %v344
    %v1488 = vunpack.c.l.b16 %v345
    %v1489 = vunpack.c.h.b16 %v345
    %v1490 = vunpack.c.l.b16 %v346
    %v1491 = vunpack.c.h.b16 %v346
    %v1492 = vunpack.c.l.b16 %v347
    %v1493 = vunpack.c.h.b16 %v347
    %v1494 = vunpack.c.l.b16 %v348
    %v1495 = vunpack.c.h.b16 %v348
    %v1496 = vunpack.c.l.b16 %v349
    %v1497 = vunpack.c.h.b16 %v349
    %v1498 = vunpack.c.l.b16 %v350
    %v1499 = vunpack.c.h.b16 %v350
    %v1500 = vunpack.c.l.b16 %v351
    %v1501 = vunpack.c.h.b16 %v351
    %v1502 = vunpack.c.l.b16 %v352
    %v1503 = vunpack.c.h.b16 %v352
    %v1504 = vunpack.c.l.b16 %v353
    %v1505 = vunpack.c.h.b16 %v353
    %v1506 = vunpack.c.l.b16 %v354
    %v1507 = vunpack.c.h.b16 %v354
    %v1508 = vunpack.c.l.b16 %v355
    %v1509 = vunpack.c.h.b16 %v355
    %v1510 = vunpack.c.l.b16 %v356
    %v1511 = vunpack.c.h.b16 %v356
    %v1512 = vunpack.c.l.b16 %v357
    %v1513 = vunpack.c.h.b16 %v357
    %v1514 = vunpack.c.l.b16 %v358
    %v1515 = vunpack.c.h.b16 %v358
    %v1516 = vunpack.c.l.b16 %v359
    %v1517 = vunpack.c.h.b16 %v359
    %v1518 = vunpack.c.l.b16 %v360
    %v1519 = vunpack.c.h.b16 %v360
    %v1520 = vunpack.c.l.b16 %v361
    %v1521 = vunpack.c.h.b16 %v361
    %v1522 = vunpack.c.l.b16 %v362
    %v1523 = vunpack.c.h.b16 %v362
    %v1524 = vunpack.c.l.b16 %v363
    %v1525 = vunpack.c.h.b16 %v363
    %v1526 = vunpack.c.l.b16 %v364
    %v1527 = vunpack.c.h.b16 %v364
    %v1528 = vunpack.c.l.b16 %v365
    %v1529 = vunpack.c.h.b16 %v365
    %v1530 = vunpack.c.l.b16 %v366
    %v1531 = vunpack.c.h.b16 %v366
    %v1532 = vunpack.c.l.b16 %v367
    %v1533 = vunpack.c.h.b16 %v367
    %v1534 = vunpack.c.l.b16 %v368
    %v1535 = vunpack.c.h.b16 %v368
    %v1536 = vunpack.c.l.b16 %v369
    %v1537 = vunpack.c.h.b16 %v369
    %v1538 = vunpack.c.l.b16 %v370
    %v1539 = vunpack.c.h.b16 %v370
    %v1540 = vunpack.c.l.b16 %v371
    %v1541 = vunpack.c.h.b16 %v371
    %v1542 = vunpack.c.l.b16 %v372
    %v1543 = vunpack.c.h.b16 %v372
    %v1544 = vunpack.c.l.b16 %v373
    %v1545 = vunpack.c.h.b16 %v373
    %v1546 = vunpack.c.l.b16 %v374
    %v1547 = vunpack.c.h.b16 %v374
    %v1548 = vunpack.c.l.b16 %v375
    %v1549 = vunpack.c.h.b16 %v375
    %v1550 = vunpack.c.l.b16 %v376
    %v1551 = vunpack.c.h.b16 %v376
    %v1552 = vunpack.c.l.b16 %v377
    %v1553 = vunpack.c.h.b16 %v377
    %v1554 = vunpack.c.l.b16 %v378
    %v1555 = vunpack.c.h.b16 %v378
    %v1556 = vunpack.c.l.b16 %v379
    %v1557 = vunpack.c.h.b16 %v379
    %v1558 = vunpack.c.l.b16 %v380
    %v1559 = vunpack.c.h.b16 %v380
    %v1560 = vunpack.c.l.b16 %v381
    %v1561 = vunpack.c.h.b16 %v381
    %v1562 = vunpack.c.l.b16 %v382
    %v1563 = vunpack.c.h.b16 %v382
    %v1564 = vunpack.c.l.b16 %v383
    %v1565 = vunpack.c.h.b16 %v383
    %v1566 = vunpack.c.l.b16 %v384
    %v1567 = vunpack.c.h.b16 %v384
    %v1568 = vunpack.c.l.b16 %v385
    %v1569 = vunpack.c.h.b16 %v385
    %v1570 = vunpack.c.l.b16 %v386
    %v1571 = vunpack.c.h.b16 %v386
    %v1572 = vunpack.c.l.b16 %v387
    %v1573 = vunpack.c.h.b16 %v387
    %v1574 = vunpack.c.l.b16 %v388
    %v1575 = vunpack.c.h.b16 %v388
    %v1576 = vunpack.c.l.b16 %v389
    %v1577 = vunpack.c.h.b16 %v389
    %v1578 = vunpack.c.l.b16 %v390
    %v1579 = vunpack.c.h.b16 %v390
    %v1580 = vunpack.c.l.b16 %v391
    %v1581 = vunpack.c.h.b16 %v391
    %v1582 = vunpack.c.l.b16 %v392
    %v1583 = vunpack.c.h.b16 %v392
    %v1584 = vunpack.c.l.b16 %v393
    %v1585 = vunpack.c.h.b16 %v393
    %v1586 = vunpack.c.l.b16 %v394
    %v1587 = vunpack.c.h.b16 %v394
    %v1588 = vunpack.c.l.b16 %v395
    %v1589 = vunpack.c.h.b16 %v395
    %v1590 = vunpack.c.l.b16 %v396
    %v1591 = vunpack.c.h.b16 %v396
    %v1592 = vunpack.c.l.b16 %v397
    %v1593 = vunpack.c.h.b16 %v397
    %v1594 = vunpack.c.l.b16 %v398
    %v1595 = vunpack.c.h.b16 %v398
    %v1596 = vunpack.c.l.b16 %v399
    %v1597 = vunpack.c.h.b16 %v399
    %v1598 = vunpack.c.l.b16 %v400
    %v1599 = vunpack.c.h.b16 %v400
    %v1600 = vunpack.c.l.b16 %v401
    %v1601 = vunpack.c.h.b16 %v401
    %v1602 = vunpack.c.l.b16 %v402
    %v1603 = vunpack.c.h.b16 %v402
    %v1604 = vunpack.c.l.b16 %v403
    %v1605 = vunpack.c.h.b16 %v403
    %v1606 = vunpack.c.l.b16 %v404
    %v1607 = vunpack.c.h.b16 %v404
    %v1608 = vunpack.c.l.b16 %v405
    %v1609 = vunpack.c.h.b16 %v405
    %v1610 = vunpack.c.l.b16 %v406
    %v1611 = vunpack.c.h.b16 %v406
    %v1612 = vunpack.c.l.b16 %v407
    %v1613 = vunpack.c.h.b16 %v407
    %v1614 = vunpack.c.l.b16 %v408
    %v1615 = vunpack.c.h.b16 %v408
    %v1616 = vunpack.c.l.b16 %v409
    %v1617 = vunpack.c.h.b16 %v409
    %v1618 = vunpack.c.l.b16 %v410
    %v1619 = vunpack.c.h.b16 %v410
    %v1620 = vunpack.c.l.b16 %v411
    %v1621 = vunpack.c.h.b16 %v411
    %v1622 = vunpack.c.l.b16 %v412
    %v1623 = vunpack.c.h.b16 %v412
    %v1624 = vunpack.c.l.b16 %v413
    %v1625 = vunpack.c.h.b16 %v413
    %v1626 = vunpack.c.l.b16 %v414
    %v1627 = vunpack.c.h.b16 %v414
    %v1628 = vunpack.c.l.b16 %v415
    %v1629 = vunpack.c.h.b16 %v415
    %v1630 = vunpack.c.l.b16 %v416
    %v1631 = vunpack.c.h.b16 %v416
    %v1632 = vunpack.c.l.b16 %v417
    %v1633 = vunpack.c.h.b16 %v417
    %v1634 = vunpack.c.l.b16 %v418
    %v1635 = vunpack.c.h.b16 %v418
    %v1636 = vunpack.c.l.b16 %v419
    %v1637 = vunpack.c.h.b16 %v419
    %v1638 = vunpack.c.l.b16 %v420
    %v1639 = vunpack.c.h.b16 %v420
    %v1640 = vunpack.c.l.b16 %v421
    %v1641 = vunpack.c.h.b16 %v421
    %v1642 = vunpack.c.l.b16 %v422
    %v1643 = vunpack.c.h.b16 %v422
    %v1644 = vunpack.c.l.b16 %v423
    %v1645 = vunpack.c.h.b16 %v423
    %v1646 = vunpack.c.l.b16 %v424
    %v1647 = vunpack.c.h.b16 %v424
    %v1648 = vunpack.c.l.b16 %v425
    %v1649 = vunpack.c.h.b16 %v425
    %v1650 = vunpack.c.l.b16 %v426
    %v1651 = vunpack.c.h.b16 %v426
    %v1652 = vunpack.c.l.b16 %v427
    %v1653 = vunpack.c.h.b16 %v427
    %v1654 = vunpack.c.l.b16 %v428
    %v1655 = vunpack.c.h.b16 %v428
    %v1656 = vunpack.c.l.b16 %v429
    %v1657 = vunpack.c.h.b16 %v429
    %v1658 = vunpack.c.l.b16 %v430
    %v1659 = vunpack.c.h.b16 %v430
    %v1660 = vunpack.c.l.b16 %v431
    %v1661 = vunpack.c.h.b16 %v431
    %v1662 = vunpack.c.l.b16 %v432
    %v1663 = vunpack.c.h.b16 %v432
    %v1664 = vunpack.c.l.b16 %v433
    %v1665 = vunpack.c.h.b16 %v433
    %v1666 = vunpack.c.l.b16 %v434
    %v1667 = vunpack.c.h.b16 %v434
    %v1668 = vunpack.c.l.b16 %v435
    %v1669 = vunpack.c.h.b16 %v435
    %v1670 = vunpack.c.l.b16 %v436
    %v1671 = vunpack.c.h.b16 %v436
    %v1672 = vunpack.c.l.b16 %v437
    %v1673 = vunpack.c.h.b16 %v437
    %v1674 = vunpack.c.l.b16 %v438
    %v1675 = vunpack.c.h.b16 %v438
    %v1676 = vunpack.c.l.b16 %v439
    %v1677 = vunpack.c.h.b16 %v439
    %v1678 = vunpack.c.l.b16 %v440
    %v1679 = vunpack.c.h.b16 %v440
    %v1680 = vunpack.c.l.b16 %v441
    %v1681 = vunpack.c.h.b16 %v441
    %v1682 = vunpack.c.l.b16 %v442
    %v1683 = vunpack.c.h.b16 %v442
    %v1684 = vunpack.c.l.b16 %v443
    %v1685 = vunpack.c.h.b16 %v443
    %v1686 = vunpack.c.l.b16 %v444
    %v1687 = vunpack.c.h.b16 %v444
    %v1688 = vunpack.c.l.b16 %v445
    %v1689 = vunpack.c.h.b16 %v445
    %v1690 = vunpack.c.l.b16 %v446
    %v1691 = vunpack.c.h.b16 %v446
    %v1692 = vunpack.c.l.b16 %v447
    %v1693 = vunpack.c.h.b16 %v447
    %v1694 = vunpack.c.l.b16 %v448
    %v1695 = vunpack.c.h.b16 %v448
    %v1696 = vunpack.c.l.b16 %v449
    %v1697 = vunpack.c.h.b16 %v449
    %v1698 = vunpack.c.l.b16 %v450
    %v1699 = vunpack.c.h.b16 %v450
    %v1700 = vunpack.c.l.b16 %v451
    %v1701 = vunpack.c.h.b16 %v451
    %v1702 = vunpack.c.l.b16 %v452
    %v1703 = vunpack.c.h.b16 %v452
    %v1704 = vunpack.c.l.b16 %v453
    %v1705 = vunpack.c.h.b16 %v453
    %v1706 = vunpack.c.l.b16 %v454
    %v1707 = vunpack.c.h.b16 %v454
    %v1708 = vunpack.c.l.b16 %v455
    %v1709 = vunpack.c.h.b16 %v455
    %v1710 = vunpack.c.l.b16 %v456
    %v1711 = vunpack.c.h.b16 %v456
    %v1712 = vunpack.c.l.b16 %v457
    %v1713 = vunpack.c.h.b16 %v457
    %v1714 = vunpack.c.l.b16 %v458
    %v1715 = vunpack.c.h.b16 %v458
    %v1716 = vunpack.c.l.b16 %v459
    %v1717 = vunpack.c.h.b16 %v459
    %v1718 = vunpack.c.l.b16 %v460
    %v1719 = vunpack.c.h.b16 %v460
    %v1720 = vunpack.c.l.b16 %v461
    %v1721 = vunpack.c.h.b16 %v461
    %v1722 = vunpack.c.l.b16 %v462
    %v1723 = vunpack.c.h.b16 %v462
    %v1724 = vunpack.c.l.b16 %v463
    %v1725 = vunpack.c.h.b16 %v463
    %v1726 = vunpack.c.l.b16 %v464
    %v1727 = vunpack.c.h.b16 %v464
    %v1728 = vunpack.c.l.b16 %v465
    %v1729 = vunpack.c.h.b16 %v465
    %v1730 = vunpack.c.l.b16 %v466
    %v1731 = vunpack.c.h.b16 %v466
    %v1732 = vunpack.c.l.b16 %v467
    %v1733 = vunpack.c.h.b16 %v467
    %v1734 = vunpack.c.l.b16 %v468
    %v1735 = vunpack.c.h.b16 %v468
    %v1736 = vunpack.c.l.b16 %v469
    %v1737 = vunpack.c.h.b16 %v469
    %v1738 = vunpack.c.l.b16 %v470
    %v1739 = vunpack.c.h.b16 %v470
    %v1740 = vunpack.c.l.b16 %v471
    %v1741 = vunpack.c.h.b16 %v471
    %v1742 = vunpack.c.l.b16 %v472
    %v1743 = vunpack.c.h.b16 %v472
    %v1744 = vunpack.c.l.b16 %v473
    %v1745 = vunpack.c.h.b16 %v473
    %v1746 = vunpack.c.l.b16 %v474
    %v1747 = vunpack.c.h.b16 %v474
    %v1748 = vunpack.c.l.b16 %v475
    %v1749 = vunpack.c.h.b16 %v475
    %v1750 = vunpack.c.l.b16 %v476
    %v1751 = vunpack.c.h.b16 %v476
    %v1752 = vunpack.c.l.b16 %v477
    %v1753 = vunpack.c.h.b16 %v477
    %v1754 = vunpack.c.l.b16 %v478
    %v1755 = vunpack.c.h.b16 %v478
    %v1756 = vunpack.c.l.b16 %v479
    %v1757 = vunpack.c.h.b16 %v479
    %v1758 = vunpack.c.l.b16 %v480
    %v1759 = vunpack.c.h.b16 %v480
    %v1760 = vunpack.c.l.b16 %v481
    %v1761 = vunpack.c.h.b16 %v481
    %v1762 = vunpack.c.l.b16 %v482
    %v1763 = vunpack.c.h.b16 %v482
    %v1764 = vunpack.c.l.b16 %v483
    %v1765 = vunpack.c.h.b16 %v483
    %v1766 = vunpack.c.l.b16 %v484
    %v1767 = vunpack.c.h.b16 %v484
    %v1768 = vunpack.c.l.b16 %v485
    %v1769 = vunpack.c.h.b16 %v485
    %v1770 = vunpack.c.l.b16 %v486
    %v1771 = vunpack.c.h.b16 %v486
    %v1772 = vunpack.c.l.b16 %v487
    %v1773 = vunpack.c.h.b16 %v487
    %v1774 = vunpack.c.l.b16 %v488
    %v1775 = vunpack.c.h.b16 %v488
    %v1776 = vunpack.c.l.b16 %v489
    %v1777 = vunpack.c.h.b16 %v489
    %v1778 = vunpack.c.l.b16 %v490
    %v1779 = vunpack.c.h.b16 %v490
    %v1780 = vunpack.c.l.b16 %v491
    %v1781 = vunpack.c.h.b16 %v491
    %v1782 = vunpack.c.l.b16 %v492
    %v1783 = vunpack.c.h.b16 %v492
    %v1784 = vunpack.c.l.b16 %v493
    %v1785 = vunpack.c.h.b16 %v493
    %v1786 = vunpack.c.l.b16 %v494
    %v1787 = vunpack.c.h.b16 %v494
    %v1788 = vunpack.c.l.b16 %v495
    %v1789 = vunpack.c.h.b16 %v495
    %v1790 = vunpack.c.l.b16 %v496
    %v1791 = vunpack.c.h.b16 %v496
    %v1792 = vunpack.c.l.b16 %v497
    %v1793 = vunpack.c.h.b16 %v497
    %v1794 = vunpack.c.l.b16 %v498
    %v1795 = vunpack.c.h.b16 %v498
    %v1796 = vunpack.c.l.b16 %v499
    %v1797 = vunpack.c.h.b16 %v499
    %v1798 = vunpack.c.l.b16 %v500
    %v1799 = vunpack.c.h.b16 %v500
    %v1800 = vunpack.c.l.b16 %v501
    %v1801 = vunpack.c.h.b16 %v501
    %v1802 = vunpack.c.l.b16 %v502
    %v1803 = vunpack.c.h.b16 %v502
    %v1804 = vunpack.c.l.b16 %v503
    %v1805 = vunpack.c.h.b16 %v503
    %v1806 = vunpack.c.l.b16 %v504
    %v1807 = vunpack.c.h.b16 %v504
    %v1808 = vunpack.c.l.b16 %v505
    %v1809 = vunpack.c.h.b16 %v505
    %v1810 = vunpack.c.l.b16 %v506
    %v1811 = vunpack.c.h.b16 %v506
    %v1812 = vunpack.c.l.b16 %v507
    %v1813 = vunpack.c.h.b16 %v507
    %v1814 = vunpack.c.l.b16 %v508
    %v1815 = vunpack.c.h.b16 %v508
    %v1816 = vunpack.c.l.b16 %v509
    %v1817 = vunpack.c.h.b16 %v509
    %v1818 = vunpack.c.l.b16 %v510
    %v1819 = vunpack.c.h.b16 %v510
    %v1820 = vunpack.c.l.b16 %v511
    %v1821 = vunpack.c.h.b16 %v511
    %v1822 = vunpack.c.l.b16 %v512
    %v1823 = vunpack.c.h.b16 %v512
    %v1824 = vunpack.c.l.b16 %v513
    %v1825 = vunpack.c.h.b16 %v513
    %v1826 = vunpack.c.l.b16 %v514
    %v1827 = vunpack.c.h.b16 %v514
    %v1828 = vunpack.c.l.b16 %v515
    %v1829 = vunpack.c.h.b16 %v515
    %v1830 = vunpack.c.l.b16 %v516
    %v1831 = vunpack.c.h.b16 %v516
    %v1832 = vunpack.c.l.b16 %v517
    %v1833 = vunpack.c.h.b16 %v517
    %v1834 = vunpack.c.l.b16 %v518
    %v1835 = vunpack.c.h.b16 %v518
    %v1836 = vunpack.c.l.b16 %v519
    %v1837 = vunpack.c.h.b16 %v519
    %v1838 = vunpack.c.l.b16 %v520
    %v1839 = vunpack.c.h.b16 %v520
    %v1840 = vunpack.c.l.b16 %v521
    %v1841 = vunpack.c.h.b16 %v521
    %v1842 = vunpack.c.l.b16 %v522
    %v1843 = vunpack.c.h.b16 %v522
    %v1844 = vunpack.c.l.b16 %v523
    %v1845 = vunpack.c.h.b16 %v523
    %v1846 = vunpack.c.l.b16 %v524
    %v1847 = vunpack.c.h.b16 %v524
    %v1848 = vunpack.c.l.b16 %v525
    %v1849 = vunpack.c.h.b16 %v525
    %v1850 = vunpack.c.l.b16 %v526
    %v1851 = vunpack.c.h.b16 %v526
    %v1852 = vunpack.c.l.b16 %v527
    %v1853 = vunpack.c.h.b16 %v527
    %v1854 = vunpack.c.l.b16 %v528
    %v1855 = vunpack.c.h.b16 %v528
    %v1856 = vunpack.c.l.b16 %v529
    %v1857 = vunpack.c.h.b16 %v529
    %v1858 = vunpack.c.l.b16 %v530
    %v1859 = vunpack.c.h.b16 %v530
    %v1860 = vunpack.c.l.b16 %v531
    %v1861 = vunpack.c.h.b16 %v531
    %v1862 = vunpack.c.l.b16 %v532
    %v1863 = vunpack.c.h.b16 %v532
    %v1864 = vunpack.c.l.b16 %v533
    %v1865 = vunpack.c.h.b16 %v533
    %v1866 = vunpack.c.l.b16 %v534
    %v1867 = vunpack.c.h.b16 %v534
    %v1868 = vunpack.c.l.b16 %v535
    %v1869 = vunpack.c.h.b16 %v535
    %v1870 = vunpack.c.l.b16 %v536
    %v1871 = vunpack.c.h.b16 %v536
    %v1872 = vunpack.c.l.b16 %v537
    %v1873 = vunpack.c.h.b16 %v537
    %v1874 = vunpack.c.l.b16 %v538
    %v1875 = vunpack.c.h.b16 %v538
    %v1876 = vunpack.c.l.b16 %v539
    %v1877 = vunpack.c.h.b16 %v539
    %v1878 = vunpack.c.l.b16 %v540
    %v1879 = vunpack.c.h.b16 %v540
    %v1880 = vunpack.c.l.b16 %v541
    %v1881 = vunpack.c.h.b16 %v541
    %v1882 = vunpack.c.l.b16 %v542
    %v1883 = vunpack.c.h.b16 %v542
    %v1884 = vunpack.c.l.b16 %v543
    %v1885 = vunpack.c.h.b16 %v543
    %v1886 = vunpack.c.l.b16 %v544
    %v1887 = vunpack.c.h.b16 %v544
    %v1888 = vunpack.c.l.b16 %v545
    %v1889 = vunpack.c.h.b16 %v545
    %v1890 = vunpack.c.l.b16 %v546
    %v1891 = vunpack.c.h.b16 %v546
    %v1892 = vunpack.c.l.b16 %v547
    %v1893 = vunpack.c.h.b16 %v547
    %v1894 = vunpack.c.l.b16 %v548
    %v1895 = vunpack.c.h.b16 %v548
    %v1896 = vunpack.c.l.b16 %v549
    %v1897 = vunpack.c.h.b16 %v549
    %v1898 = vunpack.c.l.b16 %v550
    %v1899 = vunpack.c.h.b16 %v550
    %v1900 = vunpack.c.l.b16 %v551
    %v1901 = vunpack.c.h.b16 %v551
    %v1902 = vunpack.c.l.b16 %v552
    %v1903 = vunpack.c.h.b16 %v552
    %v1904 = vunpack.c.l.b16 %v553
    %v1905 = vunpack.c.h.b16 %v553
    %v1906 = vunpack.c.l.b16 %v554
    %v1907 = vunpack.c.h.b16 %v554
    %v1908 = vunpack.c.l.b16 %v555
    %v1909 = vunpack.c.h.b16 %v555
    %v1910 = vunpack.c.l.b16 %v556
    %v1911 = vunpack.c.h.b16 %v556
    %v1912 = vunpack.c.l.b16 %v557
    %v1913 = vunpack.c.h.b16 %v557
    %v1914 = vunpack.c.l.b16 %v558
    %v1915 = vunpack.c.h.b16 %v558
    %v1916 = vunpack.c.l.b16 %v559
    %v1917 = vunpack.c.h.b16 %v559
    %v1918 = vunpack.c.l.b16 %v560
    %v1919 = vunpack.c.h.b16 %v560
    %v1920 = vunpack.c.l.b16 %v561
    %v1921 = vunpack.c.h.b16 %v561
    %v1922 = vunpack.c.l.b16 %v562
    %v1923 = vunpack.c.h.b16 %v562
    %v1924 = vunpack.c.l.b16 %v563
    %v1925 = vunpack.c.h.b16 %v563
    %v1926 = vunpack.c.l.b16 %v564
    %v1927 = vunpack.c.h.b16 %v564
    %v1928 = vunpack.c.l.b16 %v565
    %v1929 = vunpack.c.h.b16 %v565
    %v1930 = vunpack.c.l.b16 %v566
    %v1931 = vunpack.c.h.b16 %v566
    %v1932 = vunpack.c.l.b16 %v567
    %v1933 = vunpack.c.h.b16 %v567
    %v1934 = vunpack.c.l.b16 %v568
    %v1935 = vunpack.c.h.b16 %v568
    %v1936 = vunpack.c.l.b16 %v569
    %v1937 = vunpack.c.h.b16 %v569
    %v1938 = vunpack.c.l.b16 %v570
    %v1939 = vunpack.c.h.b16 %v570
    %v1940 = vunpack.c.l.b16 %v571
    %v1941 = vunpack.c.h.b16 %v571
    %v1942 = vunpack.c.l.b16 %v572
    %v1943 = vunpack.c.h.b16 %v572
    %v1944 = vunpack.c.l.b16 %v573
    %v1945 = vunpack.c.h.b16 %v573
    %v1946 = vunpack.c.l.b16 %v574
    %v1947 = vunpack.c.h.b16 %v574
    %v1948 = vunpack.c.l.b16 %v575
    %v1949 = vunpack.c.h.b16 %v575
    %v1950 = vunpack.c.l.b16 %v576
    %v1951 = vunpack.c.h.b16 %v576
    %v1952 = vunpack.c.l.b16 %v577
    %v1953 = vunpack.c.h.b16 %v577
    %v1954 = vunpack.c.l.b16 %v578
    %v1955 = vunpack.c.h.b16 %v578
    %v1956 = vunpack.c.l.b16 %v579
    %v1957 = vunpack.c.h.b16 %v579
    %v1958 = vunpack.c.l.b16 %v580
    %v1959 = vunpack.c.h.b16 %v580
    %v1960 = vunpack.c.l.b16 %v581
    %v1961 = vunpack.c.h.b16 %v581
    %v1962 = vunpack.c.l.b16 %v582
    %v1963 = vunpack.c.h.b16 %v582
    %v1964 = vunpack.c.l.b16 %v583
    %v1965 = vunpack.c.h.b16 %v583
    %v1966 = vunpack.c.l.b16 %v584
    %v1967 = vunpack.c.h.b16 %v584
    %v1968 = vunpack.c.l.b16 %v585
    %v1969 = vunpack.c.h.b16 %v585
    %v1970 = vunpack.c.l.b16 %v586
    %v1971 = vunpack.c.h.b16 %v586
    %v1972 = vunpack.c.l.b16 %v587
    %v1973 = vunpack.c.h.b16 %v587
    %v1974 = vunpack.c.l.b16 %v588
    %v1975 = vunpack.c.h.b16 %v588
    %v1976 = vunpack.c.l.b16 %v589
    %v1977 = vunpack.c.h.b16 %v589
    %v1978 = vunpack.c.l.b16 %v590
    %v1979 = vunpack.c.h.b16 %v590
    %v1980 = vunpack.c.l.b16 %v591
    %v1981 = vunpack.c.h.b16 %v591
    %v1982 = vunpack.c.l.b16 %v592
    %v1983 = vunpack.c.h.b16 %v592
    %v1984 = vunpack.c.l.b16 %v593
    %v1985 = vunpack.c.h.b16 %v593
    %v1986 = vunpack.c.l.b16 %v594
    %v1987 = vunpack.c.h.b16 %v594
    %v1988 = vunpack.c.l.b16 %v595
    %v1989 = vunpack.c.h.b16 %v595
    %v1990 = vunpack.c.l.b16 %v596
    %v1991 = vunpack.c.h.b16 %v596
    %v1992 = vunpack.c.l.b16 %v597
    %v1993 = vunpack.c.h.b16 %v597
    %v1994 = vunpack.c.l.b16 %v598
    %v1995 = vunpack.c.h.b16 %v598
    %v1996 = vunpack.c.l.b16 %v599
    %v1997 = vunpack.c.h.b16 %v599
    %v1998 = vunpack.c.l.b16 %v600
    %v1999 = vunpack.c.h.b16 %v600
    %v2000 = vunpack.c.l.b16 %v601
    %v2001 = vunpack.c.h.b16 %v601
    %v2002 = vunpack.c.l.b16 %v602
    %v2003 = vunpack.c.h.b16 %v602
    %v2004 = vunpack.c.l.b16 %v603
    %v2005 = vunpack.c.h.b16 %v603
    %v2006 = vunpack.c.l.b16 %v604
    %v2007 = vunpack.c.h.b16 %v604
    %v2008 = vunpack.c.l.b16 %v605
    %v2009 = vunpack.c.h.b16 %v605
    %v2010 = vunpack.c.l.b16 %v606
    %v2011 = vunpack.c.h.b16 %v606
    %v2012 = vunpack.c.l.b16 %v607
    %v2013 = vunpack.c.h.b16 %v607
    %v2014 = vunpack.c.l.b16 %v608
    %v2015 = vunpack.c.h.b16 %v608
    %v2016 = vunpack.c.l.b16 %v609
    %v2017 = vunpack.c.h.b16 %v609
    %v2018 = vunpack.c.l.b16 %v610
    %v2019 = vunpack.c.h.b16 %v610
    %v2020 = vunpack.c.l.b16 %v611
    %v2021 = vunpack.c.h.b16 %v611
    %v2022 = vunpack.c.l.b16 %v612
    %v2023 = vunpack.c.h.b16 %v612
    %v2024 = vunpack.c.l.b16 %v613
    %v2025 = vunpack.c.h.b16 %v613
    %v2026 = vunpack.c.l.b16 %v614
    %v2027 = vunpack.c.h.b16 %v614
    %v2028 = vunpack.c.l.b16 %v615
    %v2029 = vunpack.c.h.b16 %v615
    %v2030 = vunpack.c.l.b16 %v616
    %v2031 = vunpack.c.h.b16 %v616
    %v2032 = vunpack.c.l.b16 %v617
    %v2033 = vunpack.c.h.b16 %v617
    %v2034 = vunpack.c.l.b16 %v618
    %v2035 = vunpack.c.h.b16 %v618
    %v2036 = vunpack.c.l.b16 %v619
    %v2037 = vunpack.c.h.b16 %v619
    %v2038 = vunpack.c.l.b16 %v620
    %v2039 = vunpack.c.h.b16 %v620
    %v2040 = vunpack.c.l.b16 %v621
    %v2041 = vunpack.c.h.b16 %v621
    %v2042 = vunpack.c.l.b16 %v622
    %v2043 = vunpack.c.h.b16 %v622
    %v2044 = vunpack.c.l.b16 %v623
    %v2045 = vunpack.c.h.b16 %v623
    %v2046 = vunpack.c.l.b16 %v624
    %v2047 = vunpack.c.h.b16 %v624
    %v2048 = vunpack.c.l.b16 %v625
    %v2049 = vunpack.c.h.b16 %v625
    %v2050 = vunpack.c.l.b16 %v626
    %v2051 = vunpack.c.h.b16 %v626
    %v2052 = vunpack.c.l.b16 %v627
    %v2053 = vunpack.c.h.b16 %v627
    %v2054 = vunpack.c.l.b16 %v628
    %v2055 = vunpack.c.h.b16 %v628
    %v2056 = vunpack.c.l.b16 %v629
    %v2057 = vunpack.c.h.b16 %v629
    %v2058 = vunpack.c.l.b16 %v630
    %v2059 = vunpack.c.h.b16 %v630
    %v2060 = vunpack.c.l.b16 %v631
    %v2061 = vunpack.c.h.b16 %v631
    %v2062 = vunpack.c.l.b16 %v632
    %v2063 = vunpack.c.h.b16 %v632
    %v2064 = vunpack.c.l.b16 %v633
    %v2065 = vunpack.c.h.b16 %v633
    %v2066 = vunpack.c.l.b16 %v634
    %v2067 = vunpack.c.h.b16 %v634
    %v2068 = vunpack.c.l.b16 %v635
    %v2069 = vunpack.c.h.b16 %v635
    %v2070 = vunpack.c.l.b16 %v636
    %v2071 = vunpack.c.h.b16 %v636
    %v2072 = vunpack.c.l.b16 %v637
    %v2073 = vunpack.c.h.b16 %v637
    %v2074 = vunpack.c.l.b16 %v638
    %v2075 = vunpack.c.h.b16 %v638
    %v2076 = vunpack.c.l.b16 %v639
    %v2077 = vunpack.c.h.b16 %v639
    %v2078 = vunpack.c.l.b16 %v640
    %v2079 = vunpack.c.h.b16 %v640
    %v2080 = vunpack.c.l.b16 %v641
    %v2081 = vunpack.c.h.b16 %v641
    %v2082 = vunpack.c.l.b16 %v642
    %v2083 = vunpack.c.h.b16 %v642
    %v2084 = vunpack.c.l.b16 %v643
    %v2085 = vunpack.c.h.b16 %v643
    %v2086 = vunpack.c.l.b16 %v644
    %v2087 = vunpack.c.h.b16 %v644
    %v2088 = vunpack.c.l.b16 %v645
    %v2089 = vunpack.c.h.b16 %v645
    %v2090 = vunpack.c.l.b16 %v646
    %v2091 = vunpack.c.h.b16 %v646
    %v2092 = vunpack.c.l.b16 %v647
    %v2093 = vunpack.c.h.b16 %v647
    %v2094 = vunpack.c.l.b16 %v648
    %v2095 = vunpack.c.h.b16 %v648
    %v2096 = vunpack.c.l.b16 %v649
    %v2097 = vunpack.c.h.b16 %v649
    %v2098 = vunpack.c.l.b16 %v650
    %v2099 = vunpack.c.h.b16 %v650
    %v2100 = vunpack.c.l.b16 %v651
    %v2101 = vunpack.c.h.b16 %v651
    %v2102 = vunpack.c.l.b16 %v652
    %v2103 = vunpack.c.h.b16 %v652
    %v2104 = vunpack.c.l.b16 %v653
    %v2105 = vunpack.c.h.b16 %v653
    %v2106 = vunpack.c.l.b16 %v654
    %v2107 = vunpack.c.h.b16 %v654
    %v2108 = vunpack.c.l.b16 %v655
    %v2109 = vunpack.c.h.b16 %v655
    %v2110 = vunpack.c.l.b16 %v656
    %v2111 = vunpack.c.h.b16 %v656
    %v2112 = vunpack.c.l.b16 %v657
    %v2113 = vunpack.c.h.b16 %v657
    %v2114 = vunpack.c.l.b16 %v658
    %v2115 = vunpack.c.h.b16 %v658
    %v2116 = vunpack.c.l.b16 %v659
    %v2117 = vunpack.c.h.b16 %v659
    %v2118 = vunpack.c.l.b16 %v660
    %v2119 = vunpack.c.h.b16 %v660
    %v2120 = vunpack.c.l.b16 %v661
    %v2121 = vunpack.c.h.b16 %v661
    %v2122 = vunpack.c.l.b16 %v662
    %v2123 = vunpack.c.h.b16 %v662
    %v2124 = vunpack.c.l.b16 %v663
    %v2125 = vunpack.c.h.b16 %v663
    %v2126 = vunpack.c.l.b16 %v664
    %v2127 = vunpack.c.h.b16 %v664
    %v2128 = vunpack.c.l.b16 %v665
    %v2129 = vunpack.c.h.b16 %v665
    %v2130 = vunpack.c.l.b16 %v666
    %v2131 = vunpack.c.h.b16 %v666
    %v2132 = vunpack.c.l.b16 %v667
    %v2133 = vunpack.c.h.b16 %v667
    %v2134 = vunpack.c.l.b16 %v668
    %v2135 = vunpack.c.h.b16 %v668
    %v2136 = vunpack.c.l.b16 %v669
    %v2137 = vunpack.c.h.b16 %v669
    %v2138 = vunpack.c.l.b16 %v670
    %v2139 = vunpack.c.h.b16 %v670
    %v2140 = vunpack.c.l.b16 %v671
    %v2141 = vunpack.c.h.b16 %v671
    %v2142 = vunpack.c.l.b16 %v672
    %v2143 = vunpack.c.h.b16 %v672
    %v2144 = vunpack.c.l.b16 %v673
    %v2145 = vunpack.c.h.b16 %v673
    %v2146 = vunpack.c.l.b16 %v674
    %v2147 = vunpack.c.h.b16 %v674
    %v2148 = vunpack.c.l.b16 %v675
    %v2149 = vunpack.c.h.b16 %v675
    %v2150 = vunpack.c.l.b16 %v676
    %v2151 = vunpack.c.h.b16 %v676
    %v2152 = vunpack.c.l.b16 %v677
    %v2153 = vunpack.c.h.b16 %v677
    %v2154 = vunpack.c.l.b16 %v678
    %v2155 = vunpack.c.h.b16 %v678
    %v2156 = vunpack.c.l.b16 %v679
    %v2157 = vunpack.c.h.b16 %v679
    %v2158 = vunpack.c.l.b16 %v680
    %v2159 = vunpack.c.h.b16 %v680
    %v2160 = vunpack.c.l.b16 %v681
    %v2161 = vunpack.c.h.b16 %v681
    %v2162 = vunpack.c.l.b16 %v682
    %v2163 = vunpack.c.h.b16 %v682
    %v2164 = vunpack.c.l.b16 %v683
    %v2165 = vunpack.c.h.b16 %v683
    %v2166 = vunpack.c.l.b16 %v684
    %v2167 = vunpack.c.h.b16 %v684
    %v2168 = vunpack.c.l.b16 %v685
    %v2169 = vunpack.c.h.b16 %v685
    %v2170 = vunpack.c.l.b16 %v686
    %v2171 = vunpack.c.h.b16 %v686
    %v2172 = vunpack.c.l.b16 %v687
    %v2173 = vunpack.c.h.b16 %v687
    %v2174 = vunpack.c.l.b16 %v688
    %v2175 = vunpack.c.h.b16 %v688
    %v2176 = vunpack.c.l.b16 %v689
    %v2177 = vunpack.c.h.b16 %v689
    %v2178 = vunpack.c.l.b16 %v690
    %v2179 = vunpack.c.h.b16 %v690
    %v2180 = vunpack.c.l.b16 %v691
    %v2181 = vunpack.c.h.b16 %v691
    %v2182 = vunpack.c.l.b16 %v692
    %v2183 = vunpack.c.h.b16 %v692
    %v2184 = vunpack.c.l.b16 %v693
    %v2185 = vunpack.c.h.b16 %v693
    %v2186 = vunpack.c.l.b16 %v694
    %v2187 = vunpack.c.h.b16 %v694
    %v2188 = vunpack.c.l.b16 %v695
    %v2189 = vunpack.c.h.b16 %v695
    %v2190 = vunpack.c.l.b16 %v696
    %v2191 = vunpack.c.h.b16 %v696
    %v2192 = vunpack.c.l.b16 %v697
    %v2193 = vunpack.c.h.b16 %v697
    %v2194 = vunpack.c.l.b16 %v698
    %v2195 = vunpack.c.h.b16 %v698
    %v2196 = vunpack.c.l.b16 %v699
    %v2197 = vunpack.c.h.b16 %v699
    %v2198 = vunpack.c.l.b16 %v700
    %v2199 = vunpack.c.h.b16 %v700
    %v2200 = vunpack.c.l.b16 %v701
    %v2201 = vunpack.c.h.b16 %v701
    %v2202 = vunpack.c.l.b16 %v702
    %v2203 = vunpack.c.h.b16 %v702
    %v2204 = vunpack.c.l.b16 %v703
    %v2205 = vunpack.c.h.b16 %v703
    %v2206 = vunpack.c.l.b16 %v704
    %v2207 = vunpack.c.h.b16 %v704
    %v2208 = vunpack.c.l.b16 %v705
    %v2209 = vunpack.c.h.b16 %v705
    %v2210 = vunpack.c.l.b16 %v706
    %v2211 = vunpack.c.h.b16 %v706
    %v2212 = vunpack.c.l.b16 %v707
    %v2213 = vunpack.c.h.b16 %v707
    %v2214 = vunpack.c.l.b16 %v708
    %v2215 = vunpack.c.h.b16 %v708
    %v2216 = vunpack.c.l.b16 %v709
    %v2217 = vunpack.c.h.b16 %v709
    %v2218 = vunpack.c.l.b16 %v710
    %v2219 = vunpack.c.h.b16 %v710
    %v2220 = vunpack.c.l.b16 %v711
    %v2221 = vunpack.c.h.b16 %v711
    %v2222 = vunpack.c.l.b16 %v712
    %v2223 = vunpack.c.h.b16 %v712
    %v2224 = vunpack.c.l.b16 %v713
    %v2225 = vunpack.c.h.b16 %v713
    %v2226 = vunpack.c.l.b16 %v714
    %v2227 = vunpack.c.h.b16 %v714
    %v2228 = vunpack.c.l.b16 %v715
    %v2229 = vunpack.c.h.b16 %v715
    %v2230 = vunpack.c.l.b16 %v716
    %v2231 = vunpack.c.h.b16 %v716
    %v2232 = vunpack.c.l.b16 %v717
    %v2233 = vunpack.c.h.b16 %v717
    %v2234 = vunpack.c.l.b16 %v718
    %v2235 = vunpack.c.h.b16 %v718
    %v2236 = vunpack.c.l.b16 %v719
    %v2237 = vunpack.c.h.b16 %v719
    %v2238 = vunpack.c.l.b16 %v720
    %v2239 = vunpack.c.h.b16 %v720
    %v2240 = vunpack.c.l.b16 %v721
    %v2241 = vunpack.c.h.b16 %v721
    %v2242 = vunpack.c.l.b16 %v722
    %v2243 = vunpack.c.h.b16 %v722
    %v2244 = vunpack.c.l.b16 %v723
    %v2245 = vunpack.c.h.b16 %v723
    %v2246 = vunpack.c.l.b16 %v724
    %v2247 = vunpack.c.h.b16 %v724
    %v2248 = vunpack.c.l.b16 %v725
    %v2249 = vunpack.c.h.b16 %v725
    %v2250 = vunpack.c.l.b16 %v726
    %v2251 = vunpack.c.h.b16 %v726
    %v2252 = vunpack.c.l.b16 %v727
    %v2253 = vunpack.c.h.b16 %v727
    %v2254 = vunpack.c.l.b16 %v728
    %v2255 = vunpack.c.h.b16 %v728
    %v2256 = vunpack.c.l.b16 %v729
    %v2257 = vunpack.c.h.b16 %v729
    %v2258 = vunpack.c.l.b16 %v730
    %v2259 = vunpack.c.h.b16 %v730
    %v2260 = vunpack.c.l.b16 %v731
    %v2261 = vunpack.c.h.b16 %v731
    %v2262 = vunpack.c.l.b16 %v732
    %v2263 = vunpack.c.h.b16 %v732
    %v2264 = vunpack.c.l.b16 %v733
    %v2265 = vunpack.c.h.b16 %v733
    %v2266 = vunpack.c.l.b16 %v734
    %v2267 = vunpack.c.h.b16 %v734
    %v2268 = vunpack.c.l.b16 %v735
    %v2269 = vunpack.c.h.b16 %v735
    %v2270 = vunpack.c.l.b16 %v736
    %v2271 = vunpack.c.h.b16 %v736
    %v2272 = vunpack.c.l.b16 %v737
    %v2273 = vunpack.c.h.b16 %v737
    %v2274 = vunpack.c.l.b16 %v738
    %v2275 = vunpack.c.h.b16 %v738
    %v2276 = vunpack.c.l.b16 %v739
    %v2277 = vunpack.c.h.b16 %v739
    %v2278 = vunpack.c.l.b16 %v740
    %v2279 = vunpack.c.h.b16 %v740
    %v2280 = vunpack.c.l.b16 %v741
    %v2281 = vunpack.c.h.b16 %v741
    %v2282 = vunpack.c.l.b16 %v742
    %v2283 = vunpack.c.h.b16 %v742
    %v2284 = vunpack.c.l.b16 %v743
    %v2285 = vunpack.c.h.b16 %v743
    %v2286 = vunpack.c.l.b16 %v744
    %v2287 = vunpack.c.h.b16 %v744
    %v2288 = vunpack.c.l.b16 %v745
    %v2289 = vunpack.c.h.b16 %v745
    %v2290 = vunpack.c.l.b16 %v746
    %v2291 = vunpack.c.h.b16 %v746
    %v2292 = vunpack.c.l.b16 %v747
    %v2293 = vunpack.c.h.b16 %v747
    %v2294 = vunpack.c.l.b16 %v748
    %v2295 = vunpack.c.h.b16 %v748
    %v2296 = vunpack.c.l.b16 %v749
    %v2297 = vunpack.c.h.b16 %v749
    %v2298 = vpack.c.b16 %v1276, %v1274
    %v2299 = vpack.c.b16 %v1277, %v1275
    %v2300 = vpack.c.b16 %v1280, %v1278
    %v2301 = vpack.c.b16 %v1281, %v1279
    %v2302 = vpack.c.b16 %v1284, %v1282
    %v2303 = vpack.c.b16 %v1285, %v1283
    %v2304 = vpack.c.b16 %v1288, %v1286
    %v2305 = vpack.c.b16 %v1289, %v1287
    %v2306 = vpack.c.b16 %v1292, %v1290
    %v2307 = vpack.c.b16 %v1293, %v1291
    %v2308 = vpack.c.b16 %v1296, %v1294
    %v2309 = vpack.c.b16 %v1297, %v1295
    %v2310 = vpack.c.b16 %v1300, %v1298
    %v2311 = vpack.c.b16 %v1301, %v1299
    %v2312 = vpack.c.b16 %v1304, %v1302
    %v2313 = vpack.c.b16 %v1305, %v1303
    %v2314 = vpack.c.b16 %v1308, %v1306
    %v2315 = vpack.c.b16 %v1309, %v1307
    %v2316 = vpack.c.b16 %v1312, %v1310
    %v2317 = vpack.c.b16 %v1313, %v1311
    %v2318 = vpack.c.b16 %v1316, %v1314
    %v2319 = vpack.c.b16 %v1317, %v1315
    %v2320 = vpack.c.b16 %v1320, %v1318
    %v2321 = vpack.c.b16 %v1321, %v1319
    %v2322 = vpack.c.b16 %v1324, %v1322
    %v2323 = vpack.c.b16 %v1325, %v1323
    %v2324 = vpack.c.b16 %v1328, %v1326
    %v2325 = vpack.c.b16 %v1329, %v1327
    %v2326 = vpack.c.b16 %v1332, %v1330
    %v2327 = vpack.c.b16 %v1333, %v1331
    %v2328 = vpack.c.b16 %v1336, %v1334
    %v2329 = vpack.c.b16 %v1337, %v1335
    %v2330 = vpack.c.b16 %v1340, %v1338
    %v2331 = vpack.c.b16 %v1341, %v1339
    %v2332 = vpack.c.b16 %v1344, %v1342
    %v2333 = vpack.c.b16 %v1345, %v1343
    %v2334 = vpack.c.b16 %v1348, %v1346
    %v2335 = vpack.c.b16 %v1349, %v1347
    %v2336 = vpack.c.b16 %v1352, %v1350
    %v2337 = vpack.c.b16 %v1353, %v1351
    %v2338 = vpack.c.b16 %v1356, %v1354
    %v2339 = vpack.c.b16 %v1357, %v1355
    %v2340 = vpack.c.b16 %v1360, %v1358
    %v2341 = vpack.c.b16 %v1361, %v1359
    %v2342 = vpack.c.b16 %v1364, %v1362
    %v2343 = vpack.c.b16 %v1365, %v1363
    %v2344 = vpack.c.b16 %v1368, %v1366
    %v2345 = vpack.c.b16 %v1369, %v1367
    %v2346 = vpack.c.b16 %v1372, %v1370
    %v2347 = vpack.c.b16 %v1373, %v1371
    %v2348 = vpack.c.b16 %v1376, %v1374
    %v2349 = vpack.c.b16 %v1377, %v1375
    %v2350 = vpack.c.b16 %v1380, %v1378
    %v2351 = vpack.c.b16 %v1381, %v1379
    %v2352 = vpack.c.b16 %v1384, %v1382
    %v2353 = vpack.c.b16 %v1385, %v1383
    %v2354 = vpack.c.b16 %v1388, %v1386
    %v2355 = vpack.c.b16 %v1389, %v1387
    %v2356 = vpack.c.b16 %v1392, %v1390
    %v2357 = vpack.c.b16 %v1393, %v1391
    %v2358 = vpack.c.b16 %v1396, %v1394
    %v2359 = vpack.c.b16 %v1397, %v1395
    %v2360 = vpack.c.b16 %v1400, %v1398
    %v2361 = vpack.c.b16 %v1401, %v1399
    %v2362 = vpack.c.b16 %v1404, %v1402
    %v2363 = vpack.c.b16 %v1405, %v1403
    %v2364 = vpack.c.b16 %v1408, %v1406
    %v2365 = vpack.c.b16 %v1409, %v1407
    %v2366 = vpack.c.b16 %v1412, %v1410
    %v2367 = vpack.c.b16 %v1413, %v1411
    %v2368 = vpack.c.b16 %v1416, %v1414
    %v2369 = vpack.c.b16 %v1417, %v1415
    %v2370 = vpack.c.b16 %v1420, %v1418
    %v2371 = vpack.c.b16 %v1421, %v1419
    %v2372 = vpack.c.b16 %v1424, %v1422
    %v2373 = vpack.c.b16 %v1425, %v1423
    %v2374 = vpack.c.b16 %v1428, %v1426
    %v2375 = vpack.c.b16 %v1429, %v1427
    %v2376 = vpack.c.b16 %v1432, %v1430
    %v2377 = vpack.c.b16 %v1433, %v1431
    %v2378 = vpack.c.b16 %v1436, %v1434
    %v2379 = vpack.c.b16 %v1437, %v1435
    %v2380 = vpack.c.b16 %v1440, %v1438
    %v2381 = vpack.c.b16 %v1441, %v1439
    %v2382 = vpack.c.b16 %v1444, %v1442
    %v2383 = vpack.c.b16 %v1445, %v1443
    %v2384 = vpack.c.b16 %v1448, %v1446
    %v2385 = vpack.c.b16 %v1449, %v1447
    %v2386 = vpack.c.b16 %v1452, %v1450
    %v2387 = vpack.c.b16 %v1453, %v1451
    %v2388 = vpack.c.b16 %v1456, %v1454
    %v2389 = vpack.c.b16 %v1457, %v1455
    %v2390 = vpack.c.b16 %v1460, %v1458
    %v2391 = vpack.c.b16 %v1461, %v1459
    %v2392 = vpack.c.b16 %v1464, %v1462
    %v2393 = vpack.c.b16 %v1465, %v1463
    %v2394 = vpack.c.b16 %v1468, %v1466
    %v2395 = vpack.c.b16 %v1469, %v1467
    %v2396 = vpack.c.b16 %v1472, %v1470
    %v2397 = vpack.c.b16 %v1473, %v1471
    %v2398 = vpack.c.b16 %v1476, %v1474
    %v2399 = vpack.c.b16 %v1477, %v1475
    %v2400 = vpack.c.b16 %v1480, %v1478
    %v2401 = vpack.c.b16 %v1481, %v1479
    %v2402 = vpack.c.b16 %v1484, %v1482
    %v2403 = vpack.c.b16 %v1485, %v1483
    %v2404 = vpack.c.b16 %v1488, %v1486
    %v2405 = vpack.c.b16 %v1489, %v1487
    %v2406 = vpack.c.b16 %v1492, %v1490
    %v2407 = vpack.c.b16 %v1493, %v1491
    %v2408 = vpack.c.b16 %v1496, %v1494
    %v2409 = vpack.c.b16 %v1497, %v1495
    %v2410 = vpack.c.b16 %v1500, %v1498
    %v2411 = vpack.c.b16 %v1501, %v1499
    %v2412 = vpack.c.b16 %v1504, %v1502
    %v2413 = vpack.c.b16 %v1505, %v1503
    %v2414 = vpack.c.b16 %v1508, %v1506
    %v2415 = vpack.c.b16 %v1509, %v1507
    %v2416 = vpack.c.b16 %v1512, %v1510
    %v2417 = vpack.c.b16 %v1513, %v1511
    %v2418 = vpack.c.b16 %v1516, %v1514
    %v2419 = vpack.c.b16 %v1517, %v1515
    %v2420 = vpack.c.b16 %v1520, %v1518
    %v2421 = vpack.c.b16 %v1521, %v1519
    %v2422 = vpack.c.b16 %v1524, %v1522
    %v2423 = vpack.c.b16 %v1525, %v1523
    %v2424 = vpack.c.b16 %v1528, %v1526
    %v2425 = vpack.c.b16 %v1529, %v1527
    %v2426 = vpack.c.b16 %v1532, %v1530
    %v2427 = vpack.c.b16 %v1533, %v1531
    %v2428 = vpack.c.b16 %v1536, %v1534
    %v2429 = vpack.c.b16 %v1537, %v1535
    %v2430 = vpack.c.b16 %v1540, %v1538
    %v2431 = vpack.c.b16 %v1541, %v1539
    %v2432 = vpack.c.b16 %v1544, %v1542
    %v2433 = vpack.c.b16 %v1545, %v1543
    %v2434 = vpack.c.b16 %v1548, %v1546
    %v2435 = vpack.c.b16 %v1549, %v1547
    %v2436 = vpack.c.b16 %v1552, %v1550
    %v2437 = vpack.c.b16 %v1553, %v1551
    %v2438 = vpack.c.b16 %v1556, %v1554
    %v2439 = vpack.c.b16 %v1557, %v1555
    %v2440 = vpack.c.b16 %v1560, %v1558
    %v2441 = vpack.c.b16 %v1561, %v1559
    %v2442 = vpack.c.b16 %v1564, %v1562
    %v2443 = vpack.c.b16 %v1565, %v1563
    %v2444 = vpack.c.b16 %v1568, %v1566
    %v2445 = vpack.c.b16 %v1569, %v1567
    %v2446 = vpack.c.b16 %v1572, %v1570
    %v2447 = vpack.c.b16 %v1573, %v1571
    %v2448 = vpack.c.b16 %v1576, %v1574
    %v2449 = vpack.c.b16 %v1577, %v1575
    %v2450 = vpack.c.b16 %v1580, %v1578
    %v2451 = vpack.c.b16 %v1581, %v1579
    %v2452 = vpack.c.b16 %v1584, %v1582
    %v2453 = vpack.c.b16 %v1585, %v1583
    %v2454 = vpack.c.b16 %v1588, %v1586
    %v2455 = vpack.c.b16 %v1589, %v1587
    %v2456 = vpack.c.b16 %v1592, %v1590
    %v2457 = vpack.c.b16 %v1593, %v1591
    %v2458 = vpack.c.b16 %v1596, %v1594
    %v2459 = vpack.c.b16 %v1597, %v1595
    %v2460 = vpack.c.b16 %v1600, %v1598
    %v2461 = vpack.c.b16 %v1601, %v1599
    %v2462 = vpack.c.b16 %v1604, %v1602
    %v2463 = vpack.c.b16 %v1605, %v1603
    %v2464 = vpack.c.b16 %v1608, %v1606
    %v2465 = vpack.c.b16 %v1609, %v1607
    %v2466 = vpack.c.b16 %v1612, %v1610
    %v2467 = vpack.c.b16 %v1613, %v1611
    %v2468 = vpack.c.b16 %v1616, %v1614
    %v2469 = vpack.c.b16 %v1617, %v1615
    %v2470 = vpack.c.b16 %v1620, %v1618
    %v2471 = vpack.c.b16 %v1621, %v1619
    %v2472 = vpack.c.b16 %v1624, %v1622
    %v2473 = vpack.c.b16 %v1625, %v1623
    %v2474 = vpack.c.b16 %v1628, %v1626
    %v2475 = vpack.c.b16 %v1629, %v1627
    %v2476 = vpack.c.b16 %v1632, %v1630
    %v2477 = vpack.c.b16 %v1633, %v1631
    %v2478 = vpack.c.b16 %v1636, %v1634
    %v2479 = vpack.c.b16 %v1637, %v1635
    %v2480 = vpack.c.b16 %v1640, %v1638
    %v2481 = vpack.c.b16 %v1641, %v1639
    %v2482 = vpack.c.b16 %v1644, %v1642
    %v2483 = vpack.c.b16 %v1645, %v1643
    %v2484 = vpack.c.b16 %v1648, %v1646
    %v2485 = vpack.c.b16 %v1649, %v1647
    %v2486 = vpack.c.b16 %v1652, %v1650
    %v2487 = vpack.c.b16 %v1653, %v1651
    %v2488 = vpack.c.b16 %v1656, %v1654
    %v2489 = vpack.c.b16 %v1657, %v1655
    %v2490 = vpack.c.b16 %v1660, %v1658
    %v2491 = vpack.c.b16 %v1661, %v1659
    %v2492 = vpack.c.b16 %v1664, %v1662
    %v2493 = vpack.c.b16 %v1665, %v1663
    %v2494 = vpack.c.b16 %v1668, %v1666
    %v2495 = vpack.c.b16 %v1669, %v1667
    %v2496 = vpack.c.b16 %v1672, %v1670
    %v2497 = vpack.c.b16 %v1673, %v1671
    %v2498 = vpack.c.b16 %v1676, %v1674
    %v2499 = vpack.c.b16 %v1677, %v1675
    %v2500 = vpack.c.b16 %v1680, %v1678
    %v2501 = vpack.c.b16 %v1681, %v1679
    %v2502 = vpack.c.b16 %v1684, %v1682
    %v2503 = vpack.c.b16 %v1685, %v1683
    %v2504 = vpack.c.b16 %v1688, %v1686
    %v2505 = vpack.c.b16 %v1689, %v1687
    %v2506 = vpack.c.b16 %v1692, %v1690
    %v2507 = vpack.c.b16 %v1693, %v1691
    %v2508 = vpack.c.b16 %v1696, %v1694
    %v2509 = vpack.c.b16 %v1697, %v1695
    %v2510 = vpack.c.b16 %v1700, %v1698
    %v2511 = vpack.c.b16 %v1701, %v1699
    %v2512 = vpack.c.b16 %v1704, %v1702
    %v2513 = vpack.c.b16 %v1705, %v1703
    %v2514 = vpack.c.b16 %v1708, %v1706
    %v2515 = vpack.c.b16 %v1709, %v1707
    %v2516 = vpack.c.b16 %v1712, %v1710
    %v2517 = vpack.c.b16 %v1713, %v1711
    %v2518 = vpack.c.b16 %v1716, %v1714
    %v2519 = vpack.c.b16 %v1717, %v1715
    %v2520 = vpack.c.b16 %v1720, %v1718
    %v2521 = vpack.c.b16 %v1721, %v1719
    %v2522 = vpack.c.b16 %v1724, %v1722
    %v2523 = vpack.c.b16 %v1725, %v1723
    %v2524 = vpack.c.b16 %v1728, %v1726
    %v2525 = vpack.c.b16 %v1729, %v1727
    %v2526 = vpack.c.b16 %v1732, %v1730
    %v2527 = vpack.c.b16 %v1733, %v1731
    %v2528 = vpack.c.b16 %v1736, %v1734
    %v2529 = vpack.c.b16 %v1737, %v1735
    %v2530 = vpack.c.b16 %v1740, %v1738
    %v2531 = vpack.c.b16 %v1741, %v1739
    %v2532 = vpack.c.b16 %v1744, %v1742
    %v2533 = vpack.c.b16 %v1745, %v1743
    %v2534 = vpack.c.b16 %v1748, %v1746
    %v2535 = vpack.c.b16 %v1749, %v1747
    %v2536 = vpack.c.b16 %v1752, %v1750
    %v2537 = vpack.c.b16 %v1753, %v1751
    %v2538 = vpack.c.b16 %v1756, %v1754
    %v2539 = vpack.c.b16 %v1757, %v1755
    %v2540 = vpack.c.b16 %v1760, %v1758
    %v2541 = vpack.c.b16 %v1761, %v1759
    %v2542 = vpack.c.b16 %v1764, %v1762
    %v2543 = vpack.c.b16 %v1765, %v1763
    %v2544 = vpack.c.b16 %v1768, %v1766
    %v2545 = vpack.c.b16 %v1769, %v1767
    %v2546 = vpack.c.b16 %v1772, %v1770
    %v2547 = vpack.c.b16 %v1773, %v1771
    %v2548 = vpack.c.b16 %v1776, %v1774
    %v2549 = vpack.c.b16 %v1777, %v1775
    %v2550 = vpack.c.b16 %v1780, %v1778
    %v2551 = vpack.c.b16 %v1781, %v1779
    %v2552 = vpack.c.b16 %v1784, %v1782
    %v2553 = vpack.c.b16 %v1785, %v1783
    %v2554 = vpack.c.b16 %v1788, %v1786
    %v2555 = vpack.c.b16 %v1789, %v1787
    %v2556 = vpack.c.b16 %v1792, %v1790
    %v2557 = vpack.c.b16 %v1793, %v1791
    %v2558 = vpack.c.b16 %v1796, %v1794
    %v2559 = vpack.c.b16 %v1797, %v1795
    %v2560 = vpack.c.b16 %v1800, %v1798
    %v2561 = vpack.c.b16 %v1801, %v1799
    %v2562 = vpack.c.b16 %v1804, %v1802
    %v2563 = vpack.c.b16 %v1805, %v1803
    %v2564 = vpack.c.b16 %v1808, %v1806
    %v2565 = vpack.c.b16 %v1809, %v1807
    %v2566 = vpack.c.b16 %v1812, %v1810
    %v2567 = vpack.c.b16 %v1813, %v1811
    %v2568 = vpack.c.b16 %v1816, %v1814
    %v2569 = vpack.c.b16 %v1817, %v1815
    %v2570 = vpack.c.b16 %v1820, %v1818
    %v2571 = vpack.c.b16 %v1821, %v1819
    %v2572 = vpack.c.b16 %v1824, %v1822
    %v2573 = vpack.c.b16 %v1825, %v1823
    %v2574 = vpack.c.b16 %v1828, %v1826
    %v2575 = vpack.c.b16 %v1829, %v1827
    %v2576 = vpack.c.b16 %v1832, %v1830
    %v2577 = vpack.c.b16 %v1833, %v1831
    %v2578 = vpack.c.b16 %v1836, %v1834
    %v2579 = vpack.c.b16 %v1837, %v1835
    %v2580 = vpack.c.b16 %v1840, %v1838
    %v2581 = vpack.c.b16 %v1841, %v1839
    %v2582 = vpack.c.b16 %v1844, %v1842
    %v2583 = vpack.c.b16 %v1845, %v1843
    %v2584 = vpack.c.b16 %v1848, %v1846
    %v2585 = vpack.c.b16 %v1849, %v1847
    %v2586 = vpack.c.b16 %v1852, %v1850
    %v2587 = vpack.c.b16 %v1853, %v1851
    %v2588 = vpack.c.b16 %v1856, %v1854
    %v2589 = vpack.c.b16 %v1857, %v1855
    %v2590 = vpack.c.b16 %v1860, %v1858
    %v2591 = vpack.c.b16 %v1861, %v1859
    %v2592 = vpack.c.b16 %v1864, %v1862
    %v2593 = vpack.c.b16 %v1865, %v1863
    %v2594 = vpack.c.b16 %v1868, %v1866
    %v2595 = vpack.c.b16 %v1869, %v1867
    %v2596 = vpack.c.b16 %v1872, %v1870
    %v2597 = vpack.c.b16 %v1873, %v1871
    %v2598 = vpack.c.b16 %v1876, %v1874
    %v2599 = vpack.c.b16 %v1877, %v1875
    %v2600 = vpack.c.b16 %v1880, %v1878
    %v2601 = vpack.c.b16 %v1881, %v1879
    %v2602 = vpack.c.b16 %v1884, %v1882
    %v2603 = vpack.c.b16 %v1885, %v1883
    %v2604 = vpack.c.b16 %v1888, %v1886
    %v2605 = vpack.c.b16 %v1889, %v1887
    %v2606 = vpack.c.b16 %v1892, %v1890
    %v2607 = vpack.c.b16 %v1893, %v1891
    %v2608 = vpack.c.b16 %v1896, %v1894
    %v2609 = vpack.c.b16 %v1897, %v1895
    %v2610 = vpack.c.b16 %v1900, %v1898
    %v2611 = vpack.c.b16 %v1901, %v1899
    %v2612 = vpack.c.b16 %v1904, %v1902
    %v2613 = vpack.c.b16 %v1905, %v1903
    %v2614 = vpack.c.b16 %v1908, %v1906
    %v2615 = vpack.c.b16 %v1909, %v1907
    %v2616 = vpack.c.b16 %v1912, %v1910
    %v2617 = vpack.c.b16 %v1913, %v1911
    %v2618 = vpack.c.b16 %v1916, %v1914
    %v2619 = vpack.c.b16 %v1917, %v1915
    %v2620 = vpack.c.b16 %v1920, %v1918
    %v2621 = vpack.c.b16 %v1921, %v1919
    %v2622 = vpack.c.b16 %v1924, %v1922
    %v2623 = vpack.c.b16 %v1925, %v1923
    %v2624 = vpack.c.b16 %v1928, %v1926
    %v2625 = vpack.c.b16 %v1929, %v1927
    %v2626 = vpack.c.b16 %v1932, %v1930
    %v2627 = vpack.c.b16 %v1933, %v1931
    %v2628 = vpack.c.b16 %v1936, %v1934
    %v2629 = vpack.c.b16 %v1937, %v1935
    %v2630 = vpack.c.b16 %v1940, %v1938
    %v2631 = vpack.c.b16 %v1941, %v1939
    %v2632 = vpack.c.b16 %v1944, %v1942
    %v2633 = vpack.c.b16 %v1945, %v1943
    %v2634 = vpack.c.b16 %v1948, %v1946
    %v2635 = vpack.c.b16 %v1949, %v1947
    %v2636 = vpack.c.b16 %v1952, %v1950
    %v2637 = vpack.c.b16 %v1953, %v1951
    %v2638 = vpack.c.b16 %v1956, %v1954
    %v2639 = vpack.c.b16 %v1957, %v1955
    %v2640 = vpack.c.b16 %v1960, %v1958
    %v2641 = vpack.c.b16 %v1961, %v1959
    %v2642 = vpack.c.b16 %v1964, %v1962
    %v2643 = vpack.c.b16 %v1965, %v1963
    %v2644 = vpack.c.b16 %v1968, %v1966
    %v2645 = vpack.c.b16 %v1969, %v1967
    %v2646 = vpack.c.b16 %v1972, %v1970
    %v2647 = vpack.c.b16 %v1973, %v1971
    %v2648 = vpack.c.b16 %v1976, %v1974
    %v2649 = vpack.c.b16 %v1977, %v1975
    %v2650 = vpack.c.b16 %v1980, %v1978
    %v2651 = vpack.c.b16 %v1981, %v1979
    %v2652 = vpack.c.b16 %v1984, %v1982
    %v2653 = vpack.c.b16 %v1985, %v1983
    %v2654 = vpack.c.b16 %v1988, %v1986
    %v2655 = vpack.c.b16 %v1989, %v1987
    %v2656 = vpack.c.b16 %v1992, %v1990
    %v2657 = vpack.c.b16 %v1993, %v1991
    %v2658 = vpack.c.b16 %v1996, %v1994
    %v2659 = vpack.c.b16 %v1997, %v1995
    %v2660 = vpack.c.b16 %v2000, %v1998
    %v2661 = vpack.c.b16 %v2001, %v1999
    %v2662 = vpack.c.b16 %v2004, %v2002
    %v2663 = vpack.c.b16 %v2005, %v2003
    %v2664 = vpack.c.b16 %v2008, %v2006
    %v2665 = vpack.c.b16 %v2009, %v2007
    %v2666 = vpack.c.b16 %v2012, %v2010
    %v2667 = vpack.c.b16 %v2013, %v2011
    %v2668 = vpack.c.b16 %v2016, %v2014
    %v2669 = vpack.c.b16 %v2017, %v2015
    %v2670 = vpack.c.b16 %v2020, %v2018
    %v2671 = vpack.c.b16 %v2021, %v2019
    %v2672 = vpack.c.b16 %v2024, %v2022
    %v2673 = vpack.c.b16 %v2025, %v2023
    %v2674 = vpack.c.b16 %v2028, %v2026
    %v2675 = vpack.c.b16 %v2029, %v2027
    %v2676 = vpack.c.b16 %v2032, %v2030
    %v2677 = vpack.c.b16 %v2033, %v2031
    %v2678 = vpack.c.b16 %v2036, %v2034
    %v2679 = vpack.c.b16 %v2037, %v2035
    %v2680 = vpack.c.b16 %v2040, %v2038
    %v2681 = vpack.c.b16 %v2041, %v2039
    %v2682 = vpack.c.b16 %v2044, %v2042
    %v2683 = vpack.c.b16 %v2045, %v2043
    %v2684 = vpack.c.b16 %v2048, %v2046
    %v2685 = vpack.c.b16 %v2049, %v2047
    %v2686 = vpack.c.b16 %v2052, %v2050
    %v2687 = vpack.c.b16 %v2053, %v2051
    %v2688 = vpack.c.b16 %v2056, %v2054
    %v2689 = vpack.c.b16 %v2057, %v2055
    %v2690 = vpack.c.b16 %v2060, %v2058
    %v2691 = vpack.c.b16 %v2061, %v2059
    %v2692 = vpack.c.b16 %v2064, %v2062
    %v2693 = vpack.c.b16 %v2065, %v2063
    %v2694 = vpack.c.b16 %v2068, %v2066
    %v2695 = vpack.c.b16 %v2069, %v2067
    %v2696 = vpack.c.b16 %v2072, %v2070
    %v2697 = vpack.c.b16 %v2073, %v2071
    %v2698 = vpack.c.b16 %v2076, %v2074
    %v2699 = vpack.c.b16 %v2077, %v2075
    %v2700 = vpack.c.b16 %v2080, %v2078
    %v2701 = vpack.c.b16 %v2081, %v2079
    %v2702 = vpack.c.b16 %v2084, %v2082
    %v2703 = vpack.c.b16 %v2085, %v2083
    %v2704 = vpack.c.b16 %v2088, %v2086
    %v2705 = vpack.c.b16 %v2089, %v2087
    %v2706 = vpack.c.b16 %v2092, %v2090
    %v2707 = vpack.c.b16 %v2093, %v2091
    %v2708 = vpack.c.b16 %v2096, %v2094
    %v2709 = vpack.c.b16 %v2097, %v2095
    %v2710 = vpack.c.b16 %v2100, %v2098
    %v2711 = vpack.c.b16 %v2101, %v2099
    %v2712 = vpack.c.b16 %v2104, %v2102
    %v2713 = vpack.c.b16 %v2105, %v2103
    %v2714 = vpack.c.b16 %v2108, %v2106
    %v2715 = vpack.c.b16 %v2109, %v2107
    %v2716 = vpack.c.b16 %v2112, %v2110
    %v2717 = vpack.c.b16 %v2113, %v2111
    %v2718 = vpack.c.b16 %v2116, %v2114
    %v2719 = vpack.c.b16 %v2117, %v2115
    %v2720 = vpack.c.b16 %v2120, %v2118
    %v2721 = vpack.c.b16 %v2121, %v2119
    %v2722 = vpack.c.b16 %v2124, %v2122
    %v2723 = vpack.c.b16 %v2125, %v2123
    %v2724 = vpack.c.b16 %v2128, %v2126
    %v2725 = vpack.c.b16 %v2129, %v2127
    %v2726 = vpack.c.b16 %v2132, %v2130
    %v2727 = vpack.c.b16 %v2133, %v2131
    %v2728 = vpack.c.b16 %v2136, %v2134
    %v2729 = vpack.c.b16 %v2137, %v2135
    %v2730 = vpack.c.b16 %v2140, %v2138
    %v2731 = vpack.c.b16 %v2141, %v2139
    %v2732 = vpack.c.b16 %v2144, %v2142
    %v2733 = vpack.c.b16 %v2145, %v2143
    %v2734 = vpack.c.b16 %v2148, %v2146
    %v2735 = vpack.c.b16 %v2149, %v2147
    %v2736 = vpack.c.b16 %v2152, %v2150
    %v2737 = vpack.c.b16 %v2153, %v2151
    %v2738 = vpack.c.b16 %v2156, %v2154
    %v2739 = vpack.c.b16 %v2157, %v2155
    %v2740 = vpack.c.b16 %v2160, %v2158
    %v2741 = vpack.c.b16 %v2161, %v2159
    %v2742 = vpack.c.b16 %v2164, %v2162
    %v2743 = vpack.c.b16 %v2165, %v2163
    %v2744 = vpack.c.b16 %v2168, %v2166
    %v2745 = vpack.c.b16 %v2169, %v2167
    %v2746 = vpack.c.b16 %v2172, %v2170
    %v2747 = vpack.c.b16 %v2173, %v2171
    %v2748 = vpack.c.b16 %v2176, %v2174
    %v2749 = vpack.c.b16 %v2177, %v2175
    %v2750 = vpack.c.b16 %v2180, %v2178
    %v2751 = vpack.c.b16 %v2181, %v2179
    %v2752 = vpack.c.b16 %v2184, %v2182
    %v2753 = vpack.c.b16 %v2185, %v2183
    %v2754 = vpack.c.b16 %v2188, %v2186
    %v2755 = vpack.c.b16 %v2189, %v2187
    %v2756 = vpack.c.b16 %v2192, %v2190
    %v2757 = vpack.c.b16 %v2193, %v2191
    %v2758 = vpack.c.b16 %v2196, %v2194
    %v2759 = vpack.c.b16 %v2197, %v2195
    %v2760 = vpack.c.b16 %v2200, %v2198
    %v2761 = vpack.c.b16 %v2201, %v2199
    %v2762 = vpack.c.b16 %v2204, %v2202
    %v2763 = vpack.c.b16 %v2205, %v2203
    %v2764 = vpack.c.b16 %v2208, %v2206
    %v2765 = vpack.c.b16 %v2209, %v2207
    %v2766 = vpack.c.b16 %v2212, %v2210
    %v2767 = vpack.c.b16 %v2213, %v2211
    %v2768 = vpack.c.b16 %v2216, %v2214
    %v2769 = vpack.c.b16 %v2217, %v2215
    %v2770 = vpack.c.b16 %v2220, %v2218
    %v2771 = vpack.c.b16 %v2221, %v2219
    %v2772 = vpack.c.b16 %v2224, %v2222
    %v2773 = vpack.c.b16 %v2225, %v2223
    %v2774 = vpack.c.b16 %v2228, %v2226
    %v2775 = vpack.c.b16 %v2229, %v2227
    %v2776 = vpack.c.b16 %v2232, %v2230
    %v2777 = vpack.c.b16 %v2233, %v2231
    %v2778 = vpack.c.b16 %v2236, %v2234
    %v2779 = vpack.c.b16 %v2237, %v2235
    %v2780 = vpack.c.b16 %v2240, %v2238
    %v2781 = vpack.c.b16 %v2241, %v2239
    %v2782 = vpack.c.b16 %v2244, %v2242
    %v2783 = vpack.c.b16 %v2245, %v2243
    %v2784 = vpack.c.b16 %v2248, %v2246
    %v2785 = vpack.c.b16 %v2249, %v2247
    %v2786 = vpack.c.b16 %v2252, %v2250
    %v2787 = vpack.c.b16 %v2253, %v2251
    %v2788 = vpack.c.b16 %v2256, %v2254
    %v2789 = vpack.c.b16 %v2257, %v2255
    %v2790 = vpack.c.b16 %v2260, %v2258
    %v2791 = vpack.c.b16 %v2261, %v2259
    %v2792 = vpack.c.b16 %v2264, %v2262
    %v2793 = vpack.c.b16 %v2265, %v2263
    %v2794 = vpack.c.b16 %v2268, %v2266
    %v2795 = vpack.c.b16 %v2269, %v2267
    %v2796 = vpack.c.b16 %v2272, %v2270
    %v2797 = vpack.c.b16 %v2273, %v2271
    %v2798 = vpack.c.b16 %v2276, %v2274
    %v2799 = vpack.c.b16 %v2277, %v2275
    %v2800 = vpack.c.b16 %v2280, %v2278
    %v2801 = vpack.c.b16 %v2281, %v2279
    %v2802 = vpack.c.b16 %v2284, %v2282
    %v2803 = vpack.c.b16 %v2285, %v2283
    %v2804 = vpack.c.b16 %v2288, %v2286
    %v2805 = vpack.c.b16 %v2289, %v2287
    %v2806 = vpack.c.b16 %v2292, %v2290
    %v2807 = vpack.c.b16 %v2293, %v2291
    %v2808 = vpack.c.b16 %v2296, %v2294
    %v2809 = vpack.c.b16 %v2297, %v2295
    %3322 = vmatprep.subr.bf16.mxu0 %v2313
    %3323 = vmatpush1.bf16.msra.mxu0 %v2312
    %3324 = vmatprep.subr.bf16.mxu0 %v2311
    %3325 = vmatpush1.bf16.msra.mxu0 %v2310
    %3326 = vmatprep.subr.bf16.mxu0 %v2309
    %3327 = vmatpush1.bf16.msra.mxu0 %v2308
    %3328 = vmatprep.subr.bf16.mxu0 %v2307
    %3329 = vmatpush1.bf16.msra.mxu0 %v2306
    %3330 = vmatprep.subr.bf16.mxu0 %v2305
    %3331 = vmatpush1.bf16.msra.mxu0 %v2304
    %3332 = vmatprep.subr.bf16.mxu0 %v2303
    %3333 = vmatpush1.bf16.msra.mxu0 %v2302
    %3334 = vmatprep.subr.bf16.mxu0 %v2301
    %3335 = vmatpush1.bf16.msra.mxu0 %v2300
    %3336 = vmatprep.subr.bf16.mxu0 %v2299
    %3337 = vmatpush1.bf16.msra.mxu0 %v2298
    %3338 = vmatprep.subr.bf16.mxu0 %v2329
    %3339 = vmatpush2.bf16.msra.mxu0 %v2328
    %3340 = vmatprep.subr.bf16.mxu0 %v2327
    %3341 = vmatpush2.bf16.msra.mxu0 %v2326
    %3342 = vmatprep.subr.bf16.mxu0 %v2325
    %3343 = vmatpush2.bf16.msra.mxu0 %v2324
    %3344 = vmatprep.subr.bf16.mxu0 %v2323
    %3345 = vmatpush2.bf16.msra.mxu0 %v2322
    %3346 = vmatprep.subr.bf16.mxu0 %v2321
    %3347 = vmatpush2.bf16.msra.mxu0 %v2320
    %3348 = vmatprep.subr.bf16.mxu0 %v2319
    %3349 = vmatpush2.bf16.msra.mxu0 %v2318
    %3350 = vmatprep.subr.bf16.mxu0 %v2317
    %3351 = vmatpush2.bf16.msra.mxu0 %v2316
    %3352 = vmatprep.subr.bf16.mxu0 %v2315
    %3353 = vmatpush2.bf16.msra.mxu0 %v2314
    %3354 = vmatprep.mubr.bf16.mxu0 %v207
    %3355 = vmatmul.mubr.bf16.gmra.mxu0 %v206
    %v3356 = vpop.f32.mrf.mxu0
    %v3357 = vadd.f32 %v755, %v3356
    %v3358 = vpop.f32.mrf.mxu0
    %v3359 = vadd.f32 %v759, %v3358
    %v3360 = vpop.f32.mrf.mxu0
    %v3361 = vpop.f32.mrf.mxu0
    %3362 = vdwg.mxu0
    %3363 = vmatprep.subr.bf16.mxu0 %v2345
    %3364 = vmatpush1.bf16.msra.mxu0 %v2344
    %3365 = vmatprep.subr.bf16.mxu0 %v2343
    %3366 = vmatpush1.bf16.msra.mxu0 %v2342
    %3367 = vmatprep.subr.bf16.mxu0 %v2341
    %3368 = vmatpush1.bf16.msra.mxu0 %v2340
    %3369 = vmatprep.subr.bf16.mxu0 %v2339
    %3370 = vmatpush1.bf16.msra.mxu0 %v2338
    %3371 = vmatprep.subr.bf16.mxu0 %v2337
    %3372 = vmatpush1.bf16.msra.mxu0 %v2336
    %3373 = vmatprep.subr.bf16.mxu0 %v2335
    %3374 = vmatpush1.bf16.msra.mxu0 %v2334
    %3375 = vmatprep.subr.bf16.mxu0 %v2333
    %3376 = vmatpush1.bf16.msra.mxu0 %v2332
    %3377 = vmatprep.subr.bf16.mxu0 %v2331
    %3378 = vmatpush1.bf16.msra.mxu0 %v2330
    %3379 = vmatprep.subr.bf16.mxu0 %v2361
    %3380 = vmatpush2.bf16.msra.mxu0 %v2360
    %3381 = vmatprep.subr.bf16.mxu0 %v2359
    %3382 = vmatpush2.bf16.msra.mxu0 %v2358
    %3383 = vmatprep.subr.bf16.mxu0 %v2357
    %3384 = vmatpush2.bf16.msra.mxu0 %v2356
    %3385 = vmatprep.subr.bf16.mxu0 %v2355
    %3386 = vmatpush2.bf16.msra.mxu0 %v2354
    %3387 = vmatprep.subr.bf16.mxu0 %v2353
    %3388 = vmatpush2.bf16.msra.mxu0 %v2352
    %3389 = vmatprep.subr.bf16.mxu0 %v2351
    %3390 = vmatpush2.bf16.msra.mxu0 %v2350
    %3391 = vmatprep.subr.bf16.mxu0 %v2349
    %3392 = vmatpush2.bf16.msra.mxu0 %v2348
    %3393 = vmatprep.subr.bf16.mxu0 %v2347
    %3394 = vmatpush2.bf16.msra.mxu0 %v2346
    %3395 = vmatprep.mubr.bf16.mxu0 %v209
    %3396 = vmatmul.mubr.bf16.gmra.mxu0 %v208
    %v3397 = vpop.f32.mrf.mxu0
    %v3398 = vadd.f32 %v3357, %v3397
    %v3399 = vpop.f32.mrf.mxu0
    %v3400 = vadd.f32 %v3359, %v3399
    %v3401 = vpop.f32.mrf.mxu0
    %v3402 = vpop.f32.mrf.mxu0
    %3403 = vdwg.mxu0
    %3404 = vmatprep.subr.bf16.mxu0 %v2377
    %3405 = vmatpush1.bf16.msra.mxu0 %v2376
    %3406 = vmatprep.subr.bf16.mxu0 %v2375
    %3407 = vmatpush1.bf16.msra.mxu0 %v2374
    %3408 = vmatprep.subr.bf16.mxu0 %v2373
    %3409 = vmatpush1.bf16.msra.mxu0 %v2372
    %3410 = vmatprep.subr.bf16.mxu0 %v2371
    %3411 = vmatpush1.bf16.msra.mxu0 %v2370
    %3412 = vmatprep.subr.bf16.mxu0 %v2369
    %3413 = vmatpush1.bf16.msra.mxu0 %v2368
    %3414 = vmatprep.subr.bf16.mxu0 %v2367
    %3415 = vmatpush1.bf16.msra.mxu0 %v2366
    %3416 = vmatprep.subr.bf16.mxu0 %v2365
    %3417 = vmatpush1.bf16.msra.mxu0 %v2364
    %3418 = vmatprep.subr.bf16.mxu0 %v2363
    %3419 = vmatpush1.bf16.msra.mxu0 %v2362
    %3420 = vmatprep.subr.bf16.mxu0 %v2393
    %3421 = vmatpush2.bf16.msra.mxu0 %v2392
    %3422 = vmatprep.subr.bf16.mxu0 %v2391
    %3423 = vmatpush2.bf16.msra.mxu0 %v2390
    %3424 = vmatprep.subr.bf16.mxu0 %v2389
    %3425 = vmatpush2.bf16.msra.mxu0 %v2388
    %3426 = vmatprep.subr.bf16.mxu0 %v2387
    %3427 = vmatpush2.bf16.msra.mxu0 %v2386
    %3428 = vmatprep.subr.bf16.mxu0 %v2385
    %3429 = vmatpush2.bf16.msra.mxu0 %v2384
    %3430 = vmatprep.subr.bf16.mxu0 %v2383
    %3431 = vmatpush2.bf16.msra.mxu0 %v2382
    %3432 = vmatprep.subr.bf16.mxu0 %v2381
    %3433 = vmatpush2.bf16.msra.mxu0 %v2380
    %3434 = vmatprep.subr.bf16.mxu0 %v2379
    %3435 = vmatpush2.bf16.msra.mxu0 %v2378
    %3436 = vmatprep.mubr.bf16.mxu0 %v211
    %3437 = vmatmul.mubr.bf16.gmra.mxu0 %v210
    %v3438 = vpop.f32.mrf.mxu0
    %v3439 = vadd.f32 %v3398, %v3438
    %v3440 = vpop.f32.mrf.mxu0
    %v3441 = vadd.f32 %v3400, %v3440
    %v3442 = vpop.f32.mrf.mxu0
    %v3443 = vpop.f32.mrf.mxu0
    %3444 = vdwg.mxu0
    %3445 = vmatprep.subr.bf16.mxu0 %v2409
    %3446 = vmatpush1.bf16.msra.mxu0 %v2408
    %3447 = vmatprep.subr.bf16.mxu0 %v2407
    %3448 = vmatpush1.bf16.msra.mxu0 %v2406
    %3449 = vmatprep.subr.bf16.mxu0 %v2405
    %3450 = vmatpush1.bf16.msra.mxu0 %v2404
    %3451 = vmatprep.subr.bf16.mxu0 %v2403
    %3452 = vmatpush1.bf16.msra.mxu0 %v2402
    %3453 = vmatprep.subr.bf16.mxu0 %v2401
    %3454 = vmatpush1.bf16.msra.mxu0 %v2400
    %3455 = vmatprep.subr.bf16.mxu0 %v2399
    %3456 = vmatpush1.bf16.msra.mxu0 %v2398
    %3457 = vmatprep.subr.bf16.mxu0 %v2397
    %3458 = vmatpush1.bf16.msra.mxu0 %v2396
    %3459 = vmatprep.subr.bf16.mxu0 %v2395
    %3460 = vmatpush1.bf16.msra.mxu0 %v2394
    %3461 = vmatprep.subr.bf16.mxu0 %v2425
    %3462 = vmatpush2.bf16.msra.mxu0 %v2424
    %3463 = vmatprep.subr.bf16.mxu0 %v2423
    %3464 = vmatpush2.bf16.msra.mxu0 %v2422
    %3465 = vmatprep.subr.bf16.mxu0 %v2421
    %3466 = vmatpush2.bf16.msra.mxu0 %v2420
    %3467 = vmatprep.subr.bf16.mxu0 %v2419
    %3468 = vmatpush2.bf16.msra.mxu0 %v2418
    %3469 = vmatprep.subr.bf16.mxu0 %v2417
    %3470 = vmatpush2.bf16.msra.mxu0 %v2416
    %3471 = vmatprep.subr.bf16.mxu0 %v2415
    %3472 = vmatpush2.bf16.msra.mxu0 %v2414
    %3473 = vmatprep.subr.bf16.mxu0 %v2413
    %3474 = vmatpush2.bf16.msra.mxu0 %v2412
    %3475 = vmatprep.subr.bf16.mxu0 %v2411
    %3476 = vmatpush2.bf16.msra.mxu0 %v2410
    %3477 = vmatprep.mubr.bf16.mxu0 %v213
    %3478 = vmatmul.mubr.bf16.gmra.mxu0 %v212
    %v3479 = vpop.f32.mrf.mxu0
    %v3480 = vadd.f32 %v3439, %v3479
    %v3481 = vpop.f32.mrf.mxu0
    %v3482 = vadd.f32 %v3441, %v3481
    %v3483 = vpop.f32.mrf.mxu0
    %v3484 = vpop.f32.mrf.mxu0
    %3485 = vdwg.mxu0
    %3486 = vmatprep.subr.bf16.mxu0 %v2441
    %3487 = vmatpush1.bf16.msra.mxu0 %v2440
    %3488 = vmatprep.subr.bf16.mxu0 %v2439
    %3489 = vmatpush1.bf16.msra.mxu0 %v2438
    %3490 = vmatprep.subr.bf16.mxu0 %v2437
    %3491 = vmatpush1.bf16.msra.mxu0 %v2436
    %3492 = vmatprep.subr.bf16.mxu0 %v2435
    %3493 = vmatpush1.bf16.msra.mxu0 %v2434
    %3494 = vmatprep.subr.bf16.mxu0 %v2433
    %3495 = vmatpush1.bf16.msra.mxu0 %v2432
    %3496 = vmatprep.subr.bf16.mxu0 %v2431
    %3497 = vmatpush1.bf16.msra.mxu0 %v2430
    %3498 = vmatprep.subr.bf16.mxu0 %v2429
    %3499 = vmatpush1.bf16.msra.mxu0 %v2428
    %3500 = vmatprep.subr.bf16.mxu0 %v2427
    %3501 = vmatpush1.bf16.msra.mxu0 %v2426
    %3502 = vmatprep.subr.bf16.mxu0 %v2457
    %3503 = vmatpush2.bf16.msra.mxu0 %v2456
    %3504 = vmatprep.subr.bf16.mxu0 %v2455
    %3505 = vmatpush2.bf16.msra.mxu0 %v2454
    %3506 = vmatprep.subr.bf16.mxu0 %v2453
    %3507 = vmatpush2.bf16.msra.mxu0 %v2452
    %3508 = vmatprep.subr.bf16.mxu0 %v2451
    %3509 = vmatpush2.bf16.msra.mxu0 %v2450
    %3510 = vmatprep.subr.bf16.mxu0 %v2449
    %3511 = vmatpush2.bf16.msra.mxu0 %v2448
    %3512 = vmatprep.subr.bf16.mxu0 %v2447
    %3513 = vmatpush2.bf16.msra.mxu0 %v2446
    %3514 = vmatprep.subr.bf16.mxu0 %v2445
    %3515 = vmatpush2.bf16.msra.mxu0 %v2444
    %3516 = vmatprep.subr.bf16.mxu0 %v2443
    %3517 = vmatpush2.bf16.msra.mxu0 %v2442
    %3518 = vmatprep.mubr.bf16.mxu0 %v215
    %3519 = vmatmul.mubr.bf16.gmra.mxu0 %v214
    %v3520 = vpop.f32.mrf.mxu0
    %v3521 = vadd.f32 %v3480, %v3520
    %v3522 = vpop.f32.mrf.mxu0
    %v3523 = vadd.f32 %v3482, %v3522
    %v3524 = vpop.f32.mrf.mxu0
    %v3525 = vpop.f32.mrf.mxu0
    %3526 = vdwg.mxu0
    %3527 = vmatprep.subr.bf16.mxu0 %v2473
    %3528 = vmatpush1.bf16.msra.mxu0 %v2472
    %3529 = vmatprep.subr.bf16.mxu0 %v2471
    %3530 = vmatpush1.bf16.msra.mxu0 %v2470
    %3531 = vmatprep.subr.bf16.mxu0 %v2469
    %3532 = vmatpush1.bf16.msra.mxu0 %v2468
    %3533 = vmatprep.subr.bf16.mxu0 %v2467
    %3534 = vmatpush1.bf16.msra.mxu0 %v2466
    %3535 = vmatprep.subr.bf16.mxu0 %v2465
    %3536 = vmatpush1.bf16.msra.mxu0 %v2464
    %3537 = vmatprep.subr.bf16.mxu0 %v2463
    %3538 = vmatpush1.bf16.msra.mxu0 %v2462
    %3539 = vmatprep.subr.bf16.mxu0 %v2461
    %3540 = vmatpush1.bf16.msra.mxu0 %v2460
    %3541 = vmatprep.subr.bf16.mxu0 %v2459
    %3542 = vmatpush1.bf16.msra.mxu0 %v2458
    %3543 = vmatprep.subr.bf16.mxu0 %v2489
    %3544 = vmatpush2.bf16.msra.mxu0 %v2488
    %3545 = vmatprep.subr.bf16.mxu0 %v2487
    %3546 = vmatpush2.bf16.msra.mxu0 %v2486
    %3547 = vmatprep.subr.bf16.mxu0 %v2485
    %3548 = vmatpush2.bf16.msra.mxu0 %v2484
    %3549 = vmatprep.subr.bf16.mxu0 %v2483
    %3550 = vmatpush2.bf16.msra.mxu0 %v2482
    %3551 = vmatprep.subr.bf16.mxu0 %v2481
    %3552 = vmatpush2.bf16.msra.mxu0 %v2480
    %3553 = vmatprep.subr.bf16.mxu0 %v2479
    %3554 = vmatpush2.bf16.msra.mxu0 %v2478
    %3555 = vmatprep.subr.bf16.mxu0 %v2477
    %3556 = vmatpush2.bf16.msra.mxu0 %v2476
    %3557 = vmatprep.subr.bf16.mxu0 %v2475
    %3558 = vmatpush2.bf16.msra.mxu0 %v2474
    %3559 = vmatprep.mubr.bf16.mxu0 %v217
    %3560 = vmatmul.mubr.bf16.gmra.mxu0 %v216
    %v3561 = vpop.f32.mrf.mxu0
    %v3562 = vadd.f32 %v3521, %v3561
    %v3563 = vpop.f32.mrf.mxu0
    %v3564 = vadd.f32 %v3523, %v3563
    %v3565 = vpop.f32.mrf.mxu0
    %v3566 = vpop.f32.mrf.mxu0
    %3567 = vdwg.mxu0
    %3568 = vmatprep.subr.bf16.mxu0 %v2505
    %3569 = vmatpush1.bf16.msra.mxu0 %v2504
    %3570 = vmatprep.subr.bf16.mxu0 %v2503
    %3571 = vmatpush1.bf16.msra.mxu0 %v2502
    %3572 = vmatprep.subr.bf16.mxu0 %v2501
    %3573 = vmatpush1.bf16.msra.mxu0 %v2500
    %3574 = vmatprep.subr.bf16.mxu0 %v2499
    %3575 = vmatpush1.bf16.msra.mxu0 %v2498
    %3576 = vmatprep.subr.bf16.mxu0 %v2497
    %3577 = vmatpush1.bf16.msra.mxu0 %v2496
    %3578 = vmatprep.subr.bf16.mxu0 %v2495
    %3579 = vmatpush1.bf16.msra.mxu0 %v2494
    %3580 = vmatprep.subr.bf16.mxu0 %v2493
    %3581 = vmatpush1.bf16.msra.mxu0 %v2492
    %3582 = vmatprep.subr.bf16.mxu0 %v2491
    %3583 = vmatpush1.bf16.msra.mxu0 %v2490
    %3584 = vmatprep.subr.bf16.mxu0 %v2521
    %3585 = vmatpush2.bf16.msra.mxu0 %v2520
    %3586 = vmatprep.subr.bf16.mxu0 %v2519
    %3587 = vmatpush2.bf16.msra.mxu0 %v2518
    %3588 = vmatprep.subr.bf16.mxu0 %v2517
    %3589 = vmatpush2.bf16.msra.mxu0 %v2516
    %3590 = vmatprep.subr.bf16.mxu0 %v2515
    %3591 = vmatpush2.bf16.msra.mxu0 %v2514
    %3592 = vmatprep.subr.bf16.mxu0 %v2513
    %3593 = vmatpush2.bf16.msra.mxu0 %v2512
    %3594 = vmatprep.subr.bf16.mxu0 %v2511
    %3595 = vmatpush2.bf16.msra.mxu0 %v2510
    %3596 = vmatprep.subr.bf16.mxu0 %v2509
    %3597 = vmatpush2.bf16.msra.mxu0 %v2508
    %3598 = vmatprep.subr.bf16.mxu0 %v2507
    %3599 = vmatpush2.bf16.msra.mxu0 %v2506
    %3600 = vmatprep.mubr.bf16.mxu0 %v219
    %3601 = vmatmul.mubr.bf16.gmra.mxu0 %v218
    %v3602 = vpop.f32.mrf.mxu0
    %v3603 = vadd.f32 %v3562, %v3602
    %v3604 = vpop.f32.mrf.mxu0
    %v3605 = vadd.f32 %v3564, %v3604
    %v3606 = vpop.f32.mrf.mxu0
    %v3607 = vpop.f32.mrf.mxu0
    %3608 = vdwg.mxu0
    %3609 = vmatprep.subr.bf16.mxu0 %v2537
    %3610 = vmatpush1.bf16.msra.mxu0 %v2536
    %3611 = vmatprep.subr.bf16.mxu0 %v2535
    %3612 = vmatpush1.bf16.msra.mxu0 %v2534
    %3613 = vmatprep.subr.bf16.mxu0 %v2533
    %3614 = vmatpush1.bf16.msra.mxu0 %v2532
    %3615 = vmatprep.subr.bf16.mxu0 %v2531
    %3616 = vmatpush1.bf16.msra.mxu0 %v2530
    %3617 = vmatprep.subr.bf16.mxu0 %v2529
    %3618 = vmatpush1.bf16.msra.mxu0 %v2528
    %3619 = vmatprep.subr.bf16.mxu0 %v2527
    %3620 = vmatpush1.bf16.msra.mxu0 %v2526
    %3621 = vmatprep.subr.bf16.mxu0 %v2525
    %3622 = vmatpush1.bf16.msra.mxu0 %v2524
    %3623 = vmatprep.subr.bf16.mxu0 %v2523
    %3624 = vmatpush1.bf16.msra.mxu0 %v2522
    %3625 = vmatprep.subr.bf16.mxu0 %v2553
    %3626 = vmatpush2.bf16.msra.mxu0 %v2552
    %3627 = vmatprep.subr.bf16.mxu0 %v2551
    %3628 = vmatpush2.bf16.msra.mxu0 %v2550
    %3629 = vmatprep.subr.bf16.mxu0 %v2549
    %3630 = vmatpush2.bf16.msra.mxu0 %v2548
    %3631 = vmatprep.subr.bf16.mxu0 %v2547
    %3632 = vmatpush2.bf16.msra.mxu0 %v2546
    %3633 = vmatprep.subr.bf16.mxu0 %v2545
    %3634 = vmatpush2.bf16.msra.mxu0 %v2544
    %3635 = vmatprep.subr.bf16.mxu0 %v2543
    %3636 = vmatpush2.bf16.msra.mxu0 %v2542
    %3637 = vmatprep.subr.bf16.mxu0 %v2541
    %3638 = vmatpush2.bf16.msra.mxu0 %v2540
    %3639 = vmatprep.subr.bf16.mxu0 %v2539
    %3640 = vmatpush2.bf16.msra.mxu0 %v2538
    %3641 = vmatprep.mubr.bf16.mxu0 %v221
    %3642 = vmatmul.mubr.bf16.gmra.mxu0 %v220
    %v3643 = vpop.f32.mrf.mxu0
    %v3644 = vadd.f32 %v3603, %v3643
    %v3645 = vpop.f32.mrf.mxu0
    %v3646 = vadd.f32 %v3605, %v3645
    %v3647 = vpop.f32.mrf.mxu0
    %v3648 = vpop.f32.mrf.mxu0
    %3649 = vdwg.mxu0
    %3650 = vmatprep.subr.bf16.mxu0 %v2569
    %3651 = vmatpush1.bf16.msra.mxu0 %v2568
    %3652 = vmatprep.subr.bf16.mxu0 %v2567
    %3653 = vmatpush1.bf16.msra.mxu0 %v2566
    %3654 = vmatprep.subr.bf16.mxu0 %v2565
    %3655 = vmatpush1.bf16.msra.mxu0 %v2564
    %3656 = vmatprep.subr.bf16.mxu0 %v2563
    %3657 = vmatpush1.bf16.msra.mxu0 %v2562
    %3658 = vmatprep.subr.bf16.mxu0 %v2561
    %3659 = vmatpush1.bf16.msra.mxu0 %v2560
    %3660 = vmatprep.subr.bf16.mxu0 %v2559
    %3661 = vmatpush1.bf16.msra.mxu0 %v2558
    %3662 = vmatprep.subr.bf16.mxu0 %v2557
    %3663 = vmatpush1.bf16.msra.mxu0 %v2556
    %3664 = vmatprep.subr.bf16.mxu0 %v2555
    %3665 = vmatpush1.bf16.msra.mxu0 %v2554
    %3666 = vmatprep.subr.bf16.mxu0 %v2585
    %3667 = vmatpush2.bf16.msra.mxu0 %v2584
    %3668 = vmatprep.subr.bf16.mxu0 %v2583
    %3669 = vmatpush2.bf16.msra.mxu0 %v2582
    %3670 = vmatprep.subr.bf16.mxu0 %v2581
    %3671 = vmatpush2.bf16.msra.mxu0 %v2580
    %3672 = vmatprep.subr.bf16.mxu0 %v2579
    %3673 = vmatpush2.bf16.msra.mxu0 %v2578
    %3674 = vmatprep.subr.bf16.mxu0 %v2577
    %3675 = vmatpush2.bf16.msra.mxu0 %v2576
    %3676 = vmatprep.subr.bf16.mxu0 %v2575
    %3677 = vmatpush2.bf16.msra.mxu0 %v2574
    %3678 = vmatprep.subr.bf16.mxu0 %v2573
    %3679 = vmatpush2.bf16.msra.mxu0 %v2572
    %3680 = vmatprep.subr.bf16.mxu0 %v2571
    %3681 = vmatpush2.bf16.msra.mxu0 %v2570
    %3682 = vmatprep.mubr.bf16.mxu0 %v223
    %3683 = vmatmul.mubr.bf16.gmra.mxu0 %v222
    %v3684 = vpop.f32.mrf.mxu0
    %v3685 = vadd.f32 %v3644, %v3684
    %v3686 = vpop.f32.mrf.mxu0
    %v3687 = vadd.f32 %v3646, %v3686
    %v3688 = vpop.f32.mrf.mxu0
    %v3689 = vpop.f32.mrf.mxu0
    %3690 = vdwg.mxu0
    %3691 = vmatprep.subr.bf16.mxu0 %v2601
    %3692 = vmatpush1.bf16.msra.mxu0 %v2600
    %3693 = vmatprep.subr.bf16.mxu0 %v2599
    %3694 = vmatpush1.bf16.msra.mxu0 %v2598
    %3695 = vmatprep.subr.bf16.mxu0 %v2597
    %3696 = vmatpush1.bf16.msra.mxu0 %v2596
    %3697 = vmatprep.subr.bf16.mxu0 %v2595
    %3698 = vmatpush1.bf16.msra.mxu0 %v2594
    %3699 = vmatprep.subr.bf16.mxu0 %v2593
    %3700 = vmatpush1.bf16.msra.mxu0 %v2592
    %3701 = vmatprep.subr.bf16.mxu0 %v2591
    %3702 = vmatpush1.bf16.msra.mxu0 %v2590
    %3703 = vmatprep.subr.bf16.mxu0 %v2589
    %3704 = vmatpush1.bf16.msra.mxu0 %v2588
    %3705 = vmatprep.subr.bf16.mxu0 %v2587
    %3706 = vmatpush1.bf16.msra.mxu0 %v2586
    %3707 = vmatprep.subr.bf16.mxu0 %v2617
    %3708 = vmatpush2.bf16.msra.mxu0 %v2616
    %3709 = vmatprep.subr.bf16.mxu0 %v2615
    %3710 = vmatpush2.bf16.msra.mxu0 %v2614
    %3711 = vmatprep.subr.bf16.mxu0 %v2613
    %3712 = vmatpush2.bf16.msra.mxu0 %v2612
    %3713 = vmatprep.subr.bf16.mxu0 %v2611
    %3714 = vmatpush2.bf16.msra.mxu0 %v2610
    %3715 = vmatprep.subr.bf16.mxu0 %v2609
    %3716 = vmatpush2.bf16.msra.mxu0 %v2608
    %3717 = vmatprep.subr.bf16.mxu0 %v2607
    %3718 = vmatpush2.bf16.msra.mxu0 %v2606
    %3719 = vmatprep.subr.bf16.mxu0 %v2605
    %3720 = vmatpush2.bf16.msra.mxu0 %v2604
    %3721 = vmatprep.subr.bf16.mxu0 %v2603
    %3722 = vmatpush2.bf16.msra.mxu0 %v2602
    %3723 = vmatprep.mubr.bf16.mxu0 %v225
    %3724 = vmatmul.mubr.bf16.gmra.mxu0 %v224
    %v3725 = vpop.f32.mrf.mxu0
    %v3726 = vadd.f32 %v3685, %v3725
    %v3727 = vpop.f32.mrf.mxu0
    %v3728 = vadd.f32 %v3687, %v3727
    %v3729 = vpop.f32.mrf.mxu0
    %v3730 = vpop.f32.mrf.mxu0
    %3731 = vdwg.mxu0
    %3732 = vmatprep.subr.bf16.mxu0 %v2633
    %3733 = vmatpush1.bf16.msra.mxu0 %v2632
    %3734 = vmatprep.subr.bf16.mxu0 %v2631
    %3735 = vmatpush1.bf16.msra.mxu0 %v2630
    %3736 = vmatprep.subr.bf16.mxu0 %v2629
    %3737 = vmatpush1.bf16.msra.mxu0 %v2628
    %3738 = vmatprep.subr.bf16.mxu0 %v2627
    %3739 = vmatpush1.bf16.msra.mxu0 %v2626
    %3740 = vmatprep.subr.bf16.mxu0 %v2625
    %3741 = vmatpush1.bf16.msra.mxu0 %v2624
    %3742 = vmatprep.subr.bf16.mxu0 %v2623
    %3743 = vmatpush1.bf16.msra.mxu0 %v2622
    %3744 = vmatprep.subr.bf16.mxu0 %v2621
    %3745 = vmatpush1.bf16.msra.mxu0 %v2620
    %3746 = vmatprep.subr.bf16.mxu0 %v2619
    %3747 = vmatpush1.bf16.msra.mxu0 %v2618
    %3748 = vmatprep.subr.bf16.mxu0 %v2649
    %3749 = vmatpush2.bf16.msra.mxu0 %v2648
    %3750 = vmatprep.subr.bf16.mxu0 %v2647
    %3751 = vmatpush2.bf16.msra.mxu0 %v2646
    %3752 = vmatprep.subr.bf16.mxu0 %v2645
    %3753 = vmatpush2.bf16.msra.mxu0 %v2644
    %3754 = vmatprep.subr.bf16.mxu0 %v2643
    %3755 = vmatpush2.bf16.msra.mxu0 %v2642
    %3756 = vmatprep.subr.bf16.mxu0 %v2641
    %3757 = vmatpush2.bf16.msra.mxu0 %v2640
    %3758 = vmatprep.subr.bf16.mxu0 %v2639
    %3759 = vmatpush2.bf16.msra.mxu0 %v2638
    %3760 = vmatprep.subr.bf16.mxu0 %v2637
    %3761 = vmatpush2.bf16.msra.mxu0 %v2636
    %3762 = vmatprep.subr.bf16.mxu0 %v2635
    %3763 = vmatpush2.bf16.msra.mxu0 %v2634
    %3764 = vmatprep.mubr.bf16.mxu0 %v227
    %3765 = vmatmul.mubr.bf16.gmra.mxu0 %v226
    %v3766 = vpop.f32.mrf.mxu0
    %v3767 = vadd.f32 %v3726, %v3766
    %v3768 = vpop.f32.mrf.mxu0
    %v3769 = vadd.f32 %v3728, %v3768
    %v3770 = vpop.f32.mrf.mxu0
    %v3771 = vpop.f32.mrf.mxu0
    %3772 = vdwg.mxu0
    %3773 = vmatprep.subr.bf16.mxu0 %v2665
    %3774 = vmatpush1.bf16.msra.mxu0 %v2664
    %3775 = vmatprep.subr.bf16.mxu0 %v2663
    %3776 = vmatpush1.bf16.msra.mxu0 %v2662
    %3777 = vmatprep.subr.bf16.mxu0 %v2661
    %3778 = vmatpush1.bf16.msra.mxu0 %v2660
    %3779 = vmatprep.subr.bf16.mxu0 %v2659
    %3780 = vmatpush1.bf16.msra.mxu0 %v2658
    %3781 = vmatprep.subr.bf16.mxu0 %v2657
    %3782 = vmatpush1.bf16.msra.mxu0 %v2656
    %3783 = vmatprep.subr.bf16.mxu0 %v2655
    %3784 = vmatpush1.bf16.msra.mxu0 %v2654
    %3785 = vmatprep.subr.bf16.mxu0 %v2653
    %3786 = vmatpush1.bf16.msra.mxu0 %v2652
    %3787 = vmatprep.subr.bf16.mxu0 %v2651
    %3788 = vmatpush1.bf16.msra.mxu0 %v2650
    %3789 = vmatprep.subr.bf16.mxu0 %v2681
    %3790 = vmatpush2.bf16.msra.mxu0 %v2680
    %3791 = vmatprep.subr.bf16.mxu0 %v2679
    %3792 = vmatpush2.bf16.msra.mxu0 %v2678
    %3793 = vmatprep.subr.bf16.mxu0 %v2677
    %3794 = vmatpush2.bf16.msra.mxu0 %v2676
    %3795 = vmatprep.subr.bf16.mxu0 %v2675
    %3796 = vmatpush2.bf16.msra.mxu0 %v2674
    %3797 = vmatprep.subr.bf16.mxu0 %v2673
    %3798 = vmatpush2.bf16.msra.mxu0 %v2672
    %3799 = vmatprep.subr.bf16.mxu0 %v2671
    %3800 = vmatpush2.bf16.msra.mxu0 %v2670
    %3801 = vmatprep.subr.bf16.mxu0 %v2669
    %3802 = vmatpush2.bf16.msra.mxu0 %v2668
    %3803 = vmatprep.subr.bf16.mxu0 %v2667
    %3804 = vmatpush2.bf16.msra.mxu0 %v2666
    %3805 = vmatprep.mubr.bf16.mxu0 %v229
    %3806 = vmatmul.mubr.bf16.gmra.mxu0 %v228
    %v3807 = vpop.f32.mrf.mxu0
    %v3808 = vadd.f32 %v3767, %v3807
    %v3809 = vpop.f32.mrf.mxu0
    %v3810 = vadd.f32 %v3769, %v3809
    %v3811 = vpop.f32.mrf.mxu0
    %v3812 = vpop.f32.mrf.mxu0
    %3813 = vdwg.mxu0
    %3814 = vmatprep.subr.bf16.mxu0 %v2697
    %3815 = vmatpush1.bf16.msra.mxu0 %v2696
    %3816 = vmatprep.subr.bf16.mxu0 %v2695
    %3817 = vmatpush1.bf16.msra.mxu0 %v2694
    %3818 = vmatprep.subr.bf16.mxu0 %v2693
    %3819 = vmatpush1.bf16.msra.mxu0 %v2692
    %3820 = vmatprep.subr.bf16.mxu0 %v2691
    %3821 = vmatpush1.bf16.msra.mxu0 %v2690
    %3822 = vmatprep.subr.bf16.mxu0 %v2689
    %3823 = vmatpush1.bf16.msra.mxu0 %v2688
    %3824 = vmatprep.subr.bf16.mxu0 %v2687
    %3825 = vmatpush1.bf16.msra.mxu0 %v2686
    %3826 = vmatprep.subr.bf16.mxu0 %v2685
    %3827 = vmatpush1.bf16.msra.mxu0 %v2684
    %3828 = vmatprep.subr.bf16.mxu0 %v2683
    %3829 = vmatpush1.bf16.msra.mxu0 %v2682
    %3830 = vmatprep.subr.bf16.mxu0 %v2713
    %3831 = vmatpush2.bf16.msra.mxu0 %v2712
    %3832 = vmatprep.subr.bf16.mxu0 %v2711
    %3833 = vmatpush2.bf16.msra.mxu0 %v2710
    %3834 = vmatprep.subr.bf16.mxu0 %v2709
    %3835 = vmatpush2.bf16.msra.mxu0 %v2708
    %3836 = vmatprep.subr.bf16.mxu0 %v2707
    %3837 = vmatpush2.bf16.msra.mxu0 %v2706
    %3838 = vmatprep.subr.bf16.mxu0 %v2705
    %3839 = vmatpush2.bf16.msra.mxu0 %v2704
    %3840 = vmatprep.subr.bf16.mxu0 %v2703
    %3841 = vmatpush2.bf16.msra.mxu0 %v2702
    %3842 = vmatprep.subr.bf16.mxu0 %v2701
    %3843 = vmatpush2.bf16.msra.mxu0 %v2700
    %3844 = vmatprep.subr.bf16.mxu0 %v2699
    %3845 = vmatpush2.bf16.msra.mxu0 %v2698
    %3846 = vmatprep.mubr.bf16.mxu0 %v231
    %3847 = vmatmul.mubr.bf16.gmra.mxu0 %v230
    %v3848 = vpop.f32.mrf.mxu0
    %v3849 = vadd.f32 %v3808, %v3848
    %v3850 = vpop.f32.mrf.mxu0
    %v3851 = vadd.f32 %v3810, %v3850
    %v3852 = vpop.f32.mrf.mxu0
    %v3853 = vpop.f32.mrf.mxu0
    %3854 = vdwg.mxu0
    %3855 = vmatprep.subr.bf16.mxu0 %v2729
    %3856 = vmatpush1.bf16.msra.mxu0 %v2728
    %3857 = vmatprep.subr.bf16.mxu0 %v2727
    %3858 = vmatpush1.bf16.msra.mxu0 %v2726
    %3859 = vmatprep.subr.bf16.mxu0 %v2725
    %3860 = vmatpush1.bf16.msra.mxu0 %v2724
    %3861 = vmatprep.subr.bf16.mxu0 %v2723
    %3862 = vmatpush1.bf16.msra.mxu0 %v2722
    %3863 = vmatprep.subr.bf16.mxu0 %v2721
    %3864 = vmatpush1.bf16.msra.mxu0 %v2720
    %3865 = vmatprep.subr.bf16.mxu0 %v2719
    %3866 = vmatpush1.bf16.msra.mxu0 %v2718
    %3867 = vmatprep.subr.bf16.mxu0 %v2717
    %3868 = vmatpush1.bf16.msra.mxu0 %v2716
    %3869 = vmatprep.subr.bf16.mxu0 %v2715
    %3870 = vmatpush1.bf16.msra.mxu0 %v2714
    %3871 = vmatprep.subr.bf16.mxu0 %v2745
    %3872 = vmatpush2.bf16.msra.mxu0 %v2744
    %3873 = vmatprep.subr.bf16.mxu0 %v2743
    %3874 = vmatpush2.bf16.msra.mxu0 %v2742
    %3875 = vmatprep.subr.bf16.mxu0 %v2741
    %3876 = vmatpush2.bf16.msra.mxu0 %v2740
    %3877 = vmatprep.subr.bf16.mxu0 %v2739
    %3878 = vmatpush2.bf16.msra.mxu0 %v2738
    %3879 = vmatprep.subr.bf16.mxu0 %v2737
    %3880 = vmatpush2.bf16.msra.mxu0 %v2736
    %3881 = vmatprep.subr.bf16.mxu0 %v2735
    %3882 = vmatpush2.bf16.msra.mxu0 %v2734
    %3883 = vmatprep.subr.bf16.mxu0 %v2733
    %3884 = vmatpush2.bf16.msra.mxu0 %v2732
    %3885 = vmatprep.subr.bf16.mxu0 %v2731
    %3886 = vmatpush2.bf16.msra.mxu0 %v2730
    %3887 = vmatprep.mubr.bf16.mxu0 %v233
    %3888 = vmatmul.mubr.bf16.gmra.mxu0 %v232
    %v3889 = vpop.f32.mrf.mxu0
    %v3890 = vadd.f32 %v3849, %v3889
    %v3891 = vpop.f32.mrf.mxu0
    %v3892 = vadd.f32 %v3851, %v3891
    %v3893 = vpop.f32.mrf.mxu0
    %v3894 = vpop.f32.mrf.mxu0
    %3895 = vdwg.mxu0
    %3896 = vmatprep.subr.bf16.mxu0 %v2761
    %3897 = vmatpush1.bf16.msra.mxu0 %v2760
    %3898 = vmatprep.subr.bf16.mxu0 %v2759
    %3899 = vmatpush1.bf16.msra.mxu0 %v2758
    %3900 = vmatprep.subr.bf16.mxu0 %v2757
    %3901 = vmatpush1.bf16.msra.mxu0 %v2756
    %3902 = vmatprep.subr.bf16.mxu0 %v2755
    %3903 = vmatpush1.bf16.msra.mxu0 %v2754
    %3904 = vmatprep.subr.bf16.mxu0 %v2753
    %3905 = vmatpush1.bf16.msra.mxu0 %v2752
    %3906 = vmatprep.subr.bf16.mxu0 %v2751
    %3907 = vmatpush1.bf16.msra.mxu0 %v2750
    %3908 = vmatprep.subr.bf16.mxu0 %v2749
    %3909 = vmatpush1.bf16.msra.mxu0 %v2748
    %3910 = vmatprep.subr.bf16.mxu0 %v2747
    %3911 = vmatpush1.bf16.msra.mxu0 %v2746
    %3912 = vmatprep.subr.bf16.mxu0 %v2777
    %3913 = vmatpush2.bf16.msra.mxu0 %v2776
    %3914 = vmatprep.subr.bf16.mxu0 %v2775
    %3915 = vmatpush2.bf16.msra.mxu0 %v2774
    %3916 = vmatprep.subr.bf16.mxu0 %v2773
    %3917 = vmatpush2.bf16.msra.mxu0 %v2772
    %3918 = vmatprep.subr.bf16.mxu0 %v2771
    %3919 = vmatpush2.bf16.msra.mxu0 %v2770
    %3920 = vmatprep.subr.bf16.mxu0 %v2769
    %3921 = vmatpush2.bf16.msra.mxu0 %v2768
    %3922 = vmatprep.subr.bf16.mxu0 %v2767
    %3923 = vmatpush2.bf16.msra.mxu0 %v2766
    %3924 = vmatprep.subr.bf16.mxu0 %v2765
    %3925 = vmatpush2.bf16.msra.mxu0 %v2764
    %3926 = vmatprep.subr.bf16.mxu0 %v2763
    %3927 = vmatpush2.bf16.msra.mxu0 %v2762
    %3928 = vmatprep.mubr.bf16.mxu0 %v235
    %3929 = vmatmul.mubr.bf16.gmra.mxu0 %v234
    %v3930 = vpop.f32.mrf.mxu0
    %v3931 = vadd.f32 %v3890, %v3930
    %v3932 = vpop.f32.mrf.mxu0
    %v3933 = vadd.f32 %v3892, %v3932
    %v3934 = vpop.f32.mrf.mxu0
    %v3935 = vpop.f32.mrf.mxu0
    %3936 = vdwg.mxu0
    %3937 = vmatprep.subr.bf16.mxu0 %v2793
    %3938 = vmatpush1.bf16.msra.mxu0 %v2792
    %3939 = vmatprep.subr.bf16.mxu0 %v2791
    %3940 = vmatpush1.bf16.msra.mxu0 %v2790
    %3941 = vmatprep.subr.bf16.mxu0 %v2789
    %3942 = vmatpush1.bf16.msra.mxu0 %v2788
    %3943 = vmatprep.subr.bf16.mxu0 %v2787
    %3944 = vmatpush1.bf16.msra.mxu0 %v2786
    %3945 = vmatprep.subr.bf16.mxu0 %v2785
    %3946 = vmatpush1.bf16.msra.mxu0 %v2784
    %3947 = vmatprep.subr.bf16.mxu0 %v2783
    %3948 = vmatpush1.bf16.msra.mxu0 %v2782
    %3949 = vmatprep.subr.bf16.mxu0 %v2781
    %3950 = vmatpush1.bf16.msra.mxu0 %v2780
    %3951 = vmatprep.subr.bf16.mxu0 %v2779
    %3952 = vmatpush1.bf16.msra.mxu0 %v2778
    %3953 = vmatprep.subr.bf16.mxu0 %v2809
    %3954 = vmatpush2.bf16.msra.mxu0 %v2808
    %3955 = vmatprep.subr.bf16.mxu0 %v2807
    %3956 = vmatpush2.bf16.msra.mxu0 %v2806
    %3957 = vmatprep.subr.bf16.mxu0 %v2805
    %3958 = vmatpush2.bf16.msra.mxu0 %v2804
    %3959 = vmatprep.subr.bf16.mxu0 %v2803
    %3960 = vmatpush2.bf16.msra.mxu0 %v2802
    %3961 = vmatprep.subr.bf16.mxu0 %v2801
    %3962 = vmatpush2.bf16.msra.mxu0 %v2800
    %3963 = vmatprep.subr.bf16.mxu0 %v2799
    %3964 = vmatpush2.bf16.msra.mxu0 %v2798
    %3965 = vmatprep.subr.bf16.mxu0 %v2797
    %3966 = vmatpush2.bf16.msra.mxu0 %v2796
    %3967 = vmatprep.subr.bf16.mxu0 %v2795
    %3968 = vmatpush2.bf16.msra.mxu0 %v2794
    %3969 = vmatprep.mubr.bf16.mxu0 %v237
    %3970 = vmatmul.mubr.bf16.gmra.mxu0 %v236
    %v3971 = vpop.f32.mrf.mxu0
    %v3972 = vadd.f32 %v3931, %v3971
    %v3973 = vpop.f32.mrf.mxu0
    %v3974 = vadd.f32 %v3933, %v3973
    %v3975 = vpop.f32.mrf.mxu0
    %v3976 = vpop.f32.mrf.mxu0
    %3977 = vdwg.mxu0
    %v3978 = vmin.f32 %v3972, 0.0
    %v3979 = vmin.f32 %v3974, 0.0
    %v3980 = vmul.f32 %v3978, 1.442695
    %v3981 = vpow.pop %v3980
    %v3982 = vmul.f32 %v3979, 1.442695
    %v3983 = vpow.pop %v3982
    %v3984 = vsub.f32 %v3981, 1.0
    %v3985 = vsub.f32 %v3983, 1.0
    %v3986 = vmul.f32 %v3984, 1.6732632
    %v3987 = vmul.f32 %v3985, 1.6732632
    %vm3988 = vcmp.gt.f32.partialorder %v3972, 0.0
    %vm3989 = vcmp.gt.f32.partialorder %v3974, 0.0
    %v3990 = vsel %vm3988, %v3972, %v3986
    %v3991 = vsel %vm3989, %v3974, %v3987
    %v3992 = vmul.f32 %v3990, 1.050701
    %v3993 = vmul.f32 %v3991, 1.050701
    %v3994 = vpack.c.bf16 %v3992, %v3992
    %v3995 = vpack.c.bf16 %v3993, %v3993
    %v3996 = vld [vmem:[%s3] sm:$0xf]
    %v3997 = vld [vmem:[%s3 + $0x4] sm:$0xf]
    %v3998 = vld [vmem:[%s3 + $0x8] sm:$0xf]
    %v3999 = vld [vmem:[%s3 + $0xc] sm:$0xf]
    %v4000 = vld [vmem:[%s3 + $0x10] sm:$0xf]
    %v4001 = vld [vmem:[%s3 + $0x14] sm:$0xf]
    %v4002 = vld [vmem:[%s3 + $0x18] sm:$0xf]
    %v4003 = vld [vmem:[%s3 + $0x1c] sm:$0xf]
    %v4004 = vld [vmem:[%s3 + $0x20] sm:$0xf]
    %v4005 = vld [vmem:[%s3 + $0x24] sm:$0xf]
    %v4006 = vld [vmem:[%s3 + $0x28] sm:$0xf]
    %v4007 = vld [vmem:[%s3 + $0x2c] sm:$0xf]
    %v4008 = vld [vmem:[%s3 + $0x30] sm:$0xf]
    %v4009 = vld [vmem:[%s3 + $0x34] sm:$0xf]
    %v4010 = vld [vmem:[%s3 + $0x38] sm:$0xf]
    %v4011 = vld [vmem:[%s3 + $0x3c] sm:$0xf]
    %v4012 = vld [vmem:[%s3 + $0x40] sm:$0xf]
    %v4013 = vld [vmem:[%s3 + $0x44] sm:$0xf]
    %v4014 = vld [vmem:[%s3 + $0x48] sm:$0xf]
    %v4015 = vld [vmem:[%s3 + $0x4c] sm:$0xf]
    %v4016 = vld [vmem:[%s3 + $0x50] sm:$0xf]
    %v4017 = vld [vmem:[%s3 + $0x54] sm:$0xf]
    %v4018 = vld [vmem:[%s3 + $0x58] sm:$0xf]
    %v4019 = vld [vmem:[%s3 + $0x5c] sm:$0xf]
    %v4020 = vld [vmem:[%s3 + $0x60] sm:$0xf]
    %v4021 = vld [vmem:[%s3 + $0x64] sm:$0xf]
    %v4022 = vld [vmem:[%s3 + $0x68] sm:$0xf]
    %v4023 = vld [vmem:[%s3 + $0x6c] sm:$0xf]
    %v4024 = vld [vmem:[%s3 + $0x70] sm:$0xf]
    %v4025 = vld [vmem:[%s3 + $0x74] sm:$0xf]
    %v4026 = vld [vmem:[%s3 + $0x78] sm:$0xf]
    %v4027 = vld [vmem:[%s3 + $0x7c] sm:$0xf]
    %v4028 = vld [vmem:[%s4] sm:$0x1]
    %v4030 = vlaneseq
    %v4031 = vshrl.u32 %v4030, 7
    %v4032 = vsub.s32 0, %v4031
    %v4033 = vrot.slane %v4028, %v4032
    %v4067 = vunpack.c.l.b16 %v3996
    %v4068 = vunpack.c.l.b16 %v3997
    %v4069 = vunpack.c.l.b16 %v3998
    %v4070 = vunpack.c.l.b16 %v3999
    %v4071 = vunpack.c.l.b16 %v4000
    %v4072 = vunpack.c.l.b16 %v4001
    %v4073 = vunpack.c.l.b16 %v4002
    %v4074 = vunpack.c.l.b16 %v4003
    %v4075 = vunpack.c.l.b16 %v4004
    %v4076 = vunpack.c.l.b16 %v4005
    %v4077 = vunpack.c.l.b16 %v4006
    %v4078 = vunpack.c.l.b16 %v4007
    %v4079 = vunpack.c.l.b16 %v4008
    %v4080 = vunpack.c.l.b16 %v4009
    %v4081 = vunpack.c.l.b16 %v4010
    %v4082 = vunpack.c.l.b16 %v4011
    %v4083 = vunpack.c.l.b16 %v4012
    %v4084 = vunpack.c.l.b16 %v4013
    %v4085 = vunpack.c.l.b16 %v4014
    %v4086 = vunpack.c.l.b16 %v4015
    %v4087 = vunpack.c.l.b16 %v4016
    %v4088 = vunpack.c.l.b16 %v4017
    %v4089 = vunpack.c.l.b16 %v4018
    %v4090 = vunpack.c.l.b16 %v4019
    %v4091 = vunpack.c.l.b16 %v4020
    %v4092 = vunpack.c.l.b16 %v4021
    %v4093 = vunpack.c.l.b16 %v4022
    %v4094 = vunpack.c.l.b16 %v4023
    %v4095 = vunpack.c.l.b16 %v4024
    %v4096 = vunpack.c.l.b16 %v4025
    %v4097 = vunpack.c.l.b16 %v4026
    %v4098 = vunpack.c.l.b16 %v4027
    %v4099 = vpack.c.b16 %v4068, %v4067
    %v4100 = vpack.c.b16 %v4070, %v4069
    %v4101 = vpack.c.b16 %v4072, %v4071
    %v4102 = vpack.c.b16 %v4074, %v4073
    %v4103 = vpack.c.b16 %v4076, %v4075
    %v4104 = vpack.c.b16 %v4078, %v4077
    %v4105 = vpack.c.b16 %v4080, %v4079
    %v4106 = vpack.c.b16 %v4082, %v4081
    %v4107 = vpack.c.b16 %v4084, %v4083
    %v4108 = vpack.c.b16 %v4086, %v4085
    %v4109 = vpack.c.b16 %v4088, %v4087
    %v4110 = vpack.c.b16 %v4090, %v4089
    %v4111 = vpack.c.b16 %v4092, %v4091
    %v4112 = vpack.c.b16 %v4094, %v4093
    %v4113 = vpack.c.b16 %v4096, %v4095
    %v4114 = vpack.c.b16 %v4098, %v4097
    %4131 = vmatprep.subr.bf16.mxu0 0
    %4132 = vmatpush1.bf16.msra.mxu0 %v4106
    %4133 = vmatprep.subr.bf16.mxu0 0
    %4134 = vmatpush1.bf16.msra.mxu0 %v4105
    %4135 = vmatprep.subr.bf16.mxu0 0
    %4136 = vmatpush1.bf16.msra.mxu0 %v4104
    %4137 = vmatprep.subr.bf16.mxu0 0
    %4138 = vmatpush1.bf16.msra.mxu0 %v4103
    %4139 = vmatprep.subr.bf16.mxu0 0
    %4140 = vmatpush1.bf16.msra.mxu0 %v4102
    %4141 = vmatprep.subr.bf16.mxu0 0
    %4142 = vmatpush1.bf16.msra.mxu0 %v4101
    %4143 = vmatprep.subr.bf16.mxu0 0
    %4144 = vmatpush1.bf16.msra.mxu0 %v4100
    %4145 = vmatprep.subr.bf16.mxu0 0
    %4146 = vmatpush1.bf16.msra.mxu0 %v4099
    %4147 = vmatprep.subr.bf16.mxu0 0
    %4148 = vmatpush2.bf16.msra.mxu0 %v4114
    %4149 = vmatprep.subr.bf16.mxu0 0
    %4150 = vmatpush2.bf16.msra.mxu0 %v4113
    %4151 = vmatprep.subr.bf16.mxu0 0
    %4152 = vmatpush2.bf16.msra.mxu0 %v4112
    %4153 = vmatprep.subr.bf16.mxu0 0
    %4154 = vmatpush2.bf16.msra.mxu0 %v4111
    %4155 = vmatprep.subr.bf16.mxu0 0
    %4156 = vmatpush2.bf16.msra.mxu0 %v4110
    %4157 = vmatprep.subr.bf16.mxu0 0
    %4158 = vmatpush2.bf16.msra.mxu0 %v4109
    %4159 = vmatprep.subr.bf16.mxu0 0
    %4160 = vmatpush2.bf16.msra.mxu0 %v4108
    %4161 = vmatprep.subr.bf16.mxu0 0
    %4162 = vmatpush2.bf16.msra.mxu0 %v4107
    %4163 = vmatprep.mubr.bf16.mxu0 %v3995
    %4164 = vmatmul.mubr.bf16.gmra.mxu0 %v3994
    %v4165 = vpop.f32.mrf.mxu0
    %v4166 = vadd.f32 %v4033, %v4165
    %v4167 = vpop.f32.mrf.mxu0
    %v4168 = vpop.f32.mrf.mxu0
    %v4169 = vpop.f32.mrf.mxu0
    %4170 = vdwg.mxu0
    %vm4171 = vcmask 74752
    %4172 = vst.msk [vmem:[#allocation2] sm:$0x3] %vm4171, %v4166
    // Predicated region
    $region22: #{cnn_forward.5} parent=1 // pred_check
      _
    $region23: #{cnn_forward.5} parent=1 // pred_check_branch
      %4174 = sbr.rel (0) target = $region25
    $region24: #{cnn_forward.5} parent=1 // pred_region
      %s4176 = ssub.s32 32, 32
      %4177 = vsyncadd [#allocation3], %s4176
      %s4179 = sshll.u32 [#allocation2], 4
      %s4180 = int_to_ptr.vmem [resolvable:$true] %s4179
      %4182 = dma.vmem_to_hbm [thread:$0]  %s4180, 32, %s5, [#allocation3]
    $region25: #{cnn_forward.5} parent=1 // pred_fallthru
      _
    // Predicated region
    $region26: #{cnn_forward.5} parent=1 // pred_check
      _
    $region27: #{cnn_forward.5} parent=1 // pred_check_branch
      %4184 = sbr.rel (0) target = $region29
    $region28: #{cnn_forward.5} parent=1 // pred_region
      %4185 = dma.done [#allocation3], 32
    $region29: #{cnn_forward.5} parent=1 // pred_fallthru
      _
    %4186 = vsyncpa [#allocation3], 1

</llo_original>
